<compile_context>
chip_gen: v7x
topology: tpu7x:2x2x1
jax: 0.10.0
libtpu: 0.0.40
codegen_flags: <defaults>
</compile_context>

<pallas_src>
import functools

import jax
import jax.numpy as jnp
from jax import lax
from jax.experimental import pallas as pl
from jax.experimental.pallas import tpu as pltpu  # noqa: F401  (TPU backend assumed)

LATENT = 2
NUM_CLASSES = 10


# ----------------------------- Pallas kernels ------------------------------ #

def _matmul_bias_relu_kernel(x_ref, w_ref, b_ref, o_ref):
    """out = relu(x @ w + b); bf16 MXU operands, f32 accumulate / epilogue."""
    acc = jnp.dot(x_ref[...].astype(jnp.bfloat16), w_ref[...],
                  preferred_element_type=jnp.float32)
    o_ref[...] = jnp.maximum(acc + b_ref[...], 0.0)


def pallas_matmul_bias_relu(x, w, b):
    """x:(M,K) f32, w:(K,O) bf16, b:(1,O) f32 -> (M,O) f32 (single VMEM block).

    Used for both strided convs (im2col patches) and both transposed convs
    (super-patch formulation)."""
    M = x.shape[0]
    O = w.shape[1]
    return pl.pallas_call(
        _matmul_bias_relu_kernel,
        out_shape=jax.ShapeDtypeStruct((M, O), jnp.float32),
    )(x, w, b)


def _fc_core_kernel(h_ref, eps_ref, lbl_ref,
                    wfc1_ref, bfc1_ref, wmu_ref, bmu_ref, wlv_ref, blv_ref,
                    wd1z_ref, wd1y_ref, bd1_ref, wd2_ref, bd2_ref,
                    mu_ref, lv_ref, d_ref, *, num_classes):
    """Fused: encoder_fc1 -> mu/logvar -> reparameterize -> [z|one_hot] ->
    decoder_fc1 -> decoder_fc2.  All intermediates stay on-chip."""
    bf16, f32 = jnp.bfloat16, jnp.float32
    # encoder fc1 (3136 -> 100) + ReLU
    h1 = jnp.dot(h_ref[...].astype(bf16), wfc1_ref[...], preferred_element_type=f32)
    h1 = jnp.maximum(h1 + bfc1_ref[...], 0.0)
    h1b = h1.astype(bf16)
    # mu / logvar heads reuse the resident h1 (no second HBM pass)
    mu = jnp.dot(h1b, wmu_ref[...], preferred_element_type=f32) + bmu_ref[...]
    lv = jnp.dot(h1b, wlv_ref[...], preferred_element_type=f32) + blv_ref[...]
    mu_ref[...] = mu
    lv_ref[...] = lv
    # reparameterize: z = mu + eps * exp(0.5 * logvar)
    z = mu + eps_ref[...] * jnp.exp(0.5 * lv)
    # one-hot(labels) built in-kernel; decoder_fc1 as a split matmul
    # (z @ Wz + onehot @ Wy) so no in-kernel concat is required.
    n = z.shape[0]
    onehot = (lax.broadcasted_iota(jnp.int32, (n, num_classes), 1)
              == lbl_ref[...]).astype(f32)
    d1 = (jnp.dot(z.astype(bf16), wd1z_ref[...], preferred_element_type=f32)
          + jnp.dot(onehot.astype(bf16), wd1y_ref[...], preferred_element_type=f32)
          + bd1_ref[...])
    d1 = jnp.maximum(d1, 0.0)
    # decoder fc2 (100 -> 3136) + ReLU; lane-dense 3136-wide store
    d2 = jnp.dot(d1.astype(bf16), wd2_ref[...], preferred_element_type=f32)
    d_ref[...] = jnp.maximum(d2 + bd2_ref[...], 0.0)


def pallas_fc_core(h, eps, labels, pp):
    N = h.shape[0]
    latent = pp["mu_w"].shape[1]
    num_classes = pp["d1y_w"].shape[0]
    return pl.pallas_call(
        functools.partial(_fc_core_kernel, num_classes=num_classes),
        out_shape=(
            jax.ShapeDtypeStruct((N, latent), jnp.float32),               # mu
            jax.ShapeDtypeStruct((N, latent), jnp.float32),               # logvar
            jax.ShapeDtypeStruct((N, pp["d2_w"].shape[1]), jnp.float32),  # dec_fc2 act
        ),
    )(h, eps, labels,
      pp["fc1_w"], pp["fc1_b"], pp["mu_w"], pp["mu_b"], pp["lv_w"], pp["lv_b"],
      pp["d1z_w"], pp["d1y_w"], pp["d1_b"], pp["d2_w"], pp["d2_b"])


# --------------------------- layout glue (XLA) ------------------------------ #

def _conv_patches_s2k4p1(x_nhwc):
    """im2col for Conv2d(k=4, s=2, p=1). x:(N,H,W,C) -> ((N*Ho*Wo, 16*C), Ho, Wo).
    Feature order (kh, kw, C) matches the pre-packed conv weights."""
    N, H, W, C = x_nhwc.shape
    Ho, Wo = H // 2, W // 2
    xp = jnp.pad(x_nhwc, ((0, 0), (1, 1), (1, 1), (0, 0)))
    cols = [xp[:, i:i + 2 * Ho:2, j:j + 2 * Wo:2, :]
            for i in range(4) for j in range(4)]
    p = jnp.stack(cols, axis=3)                       # (N, Ho, Wo, 16, C)
    return p.reshape(N * Ho * Wo, 16 * C), Ho, Wo


def _tconv_superpatches(x_nhwc):
    """Super-patches for ConvTranspose2d(k=4, s=2, p=1).

    The 2x2 output block at (2a+r, 2b+c) only reads the 3x3 window of the
    1-padded input anchored at (a, b), for all four phases (r, c).  So one
    (N*H*W, 9*C) patch matrix serves one matmul producing all four phases.
    Feature order is (dr, dc, C)."""
    N, H, W, C = x_nhwc.shape
    xp = jnp.pad(x_nhwc, ((0, 0), (1, 1), (1, 1), (0, 0)))
    cols = [xp[:, dr:dr + H, dc:dc + W, :] for dr in range(3) for dc in range(3)]
    p = jnp.stack(cols, axis=3)                       # (N, H, W, 9, C)
    return p.reshape(N * H * W, 9 * C)


def _deblock_phases(out, N, H, W, O):
    """(N*H*W, 4*O) with column order (r, c, O) -> (N, 2H, 2W, O) NHWC."""
    o = out.reshape(N, H, W, 2, 2, O)                 # (n, a, b, r, c, O)
    o = o.transpose(0, 1, 3, 2, 4, 5)                 # (n, a, r, b, c, O)
    return o.reshape(N, 2 * H, 2 * W, O)


# ------------------------------- parameters -------------------------------- #

def init_params(key, latent=LATENT, num_classes=NUM_CLASSES):
    """PyTorch-layout parameters (same layout as ConvCVAE's state dict)."""
    def mk(k, shape, scale=0.05):
        return scale * jax.random.normal(k, shape, dtype=jnp.float32)

    ks = jax.random.split(key, 18)
    return {
        "enc_c1_w": mk(ks[0], (32, 2, 4, 4)),   "enc_c1_b": mk(ks[1], (32,)),
        "enc_c2_w": mk(ks[2], (64, 32, 4, 4)),  "enc_c2_b": mk(ks[3], (64,)),
        "enc_fc1_w": mk(ks[4], (100, 64 * 7 * 7)), "enc_fc1_b": mk(ks[5], (100,)),
        "enc_mu_w": mk(ks[6], (latent, 100)),   "enc_mu_b": mk(ks[7], (latent,)),
        "enc_lv_w": mk(ks[8], (latent, 100)),   "enc_lv_b": mk(ks[9], (latent,)),
        "dec_fc1_w": mk(ks[10], (100, latent + num_classes)), "dec_fc1_b": mk(ks[11], (100,)),
        "dec_fc2_w": mk(ks[12], (64 * 7 * 7, 100)), "dec_fc2_b": mk(ks[13], (64 * 7 * 7,)),
        "dec_t1_w": mk(ks[14], (64, 32, 4, 4)), "dec_t1_b": mk(ks[15], (32,)),
        "dec_t2_w": mk(ks[16], (32, 1, 4, 4)),  "dec_t2_b": mk(ks[17], (1,)),
    }


def prepare_params(params, latent=LATENT):
    """One-time weight packing (outside the jitted forward): matmul layouts,
    NHWC feature order, super-patch transposed-conv kernels, bf16 weights,
    f32 (1,O) biases."""
    bf16, f32 = jnp.bfloat16, jnp.float32

    def bias(b):
        return jnp.asarray(b, f32).reshape(1, -1)

    def pack_conv(w):                        # (O, C, kh, kw) -> (kh*kw*C, O)
        O, C, kh, kw = w.shape
        return w.transpose(2, 3, 1, 0).reshape(kh * kw * C, O).astype(bf16)

    def pack_tconv_superpatch(w):            # (C_in, C_out, 4, 4) -> (9*C_in, 4*C_out)
        # Output pixel (2a+r, 2b+c) reads padded-input offset (dr, dc) of the 3x3
        # super-patch with kernel tap (3+r-2*dr, 3+c-2*dc) when that tap is in
        # range; out-of-range taps are zero (they belong to the other phase).
        C_in, C_out = w.shape[:2]
        zeros = jnp.zeros((C_in, C_out), dtype=w.dtype)
        cols = []
        for r in range(2):
            for c in range(2):
                rows = []
                for dr in range(3):
                    for dc in range(3):
                        kh = 3 + r - 2 * dr
                        kw = 3 + c - 2 * dc
                        if 0 <= kh <= 3 and 0 <= kw <= 3:
                            rows.append(w[:, :, kh, kw])
                        else:
                            rows.append(zeros)
                cols.append(jnp.stack(rows, axis=0).reshape(9 * C_in, C_out))
        return jnp.concatenate(cols, axis=1).astype(bf16)

    def tconv_bias(b):                       # (C_out,) -> (1, 4*C_out), phase-tiled
        return jnp.tile(jnp.asarray(b, f32), 4).reshape(1, -1)

    # encoder fc1 consumes the NHWC-flattened conv2 output -> reorder (c,h,w)->(h,w,c)
    wfc1 = (params["enc_fc1_w"].reshape(100, 64, 7, 7).transpose(0, 2, 3, 1)
            .reshape(100, 3136).T)
    # decoder fc2 produces an NHWC-flattened activation -> same reorder on its output
    wd2 = (params["dec_fc2_w"].reshape(64, 7, 7, 100).transpose(1, 2, 0, 3)
           .reshape(3136, 100).T)
    bd2 = params["dec_fc2_b"].reshape(64, 7, 7).transpose(1, 2, 0).reshape(3136)
    wd1 = params["dec_fc1_w"].T              # (latent + num_classes, 100)

    return {
        "c1_w": pack_conv(params["enc_c1_w"]), "c1_b": bias(params["enc_c1_b"]),
        "c2_w": pack_conv(params["enc_c2_w"]), "c2_b": bias(params["enc_c2_b"]),
        "fc1_w": wfc1.astype(bf16), "fc1_b": bias(params["enc_fc1_b"]),
        "mu_w": params["enc_mu_w"].T.astype(bf16), "mu_b": bias(params["enc_mu_b"]),
        "lv_w": params["enc_lv_w"].T.astype(bf16), "lv_b": bias(params["enc_lv_b"]),
        "d1z_w": wd1[:latent].astype(bf16), "d1y_w": wd1[latent:].astype(bf16),
        "d1_b": bias(params["dec_fc1_b"]),
        "d2_w": wd2.astype(bf16), "d2_b": bias(bd2),
        "t1_w": pack_tconv_superpatch(params["dec_t1_w"]),
        "t1_b": tconv_bias(params["dec_t1_b"]),
        "t2_w": pack_tconv_superpatch(params["dec_t2_w"]),
        "t2_b": tconv_bias(params["dec_t2_b"]),
    }


# --------------------------------- forward --------------------------------- #

@jax.jit
def conv_cvae_forward(pp, x, labels, eps):
    """Mirrors ConvCVAE.forward: returns (pred, mu, logvar). x is NCHW."""
    N = x.shape[0]
    # encoder conditioning: extra channel filled with the raw label value
    x_nhwc = x.transpose(0, 2, 3, 1)                                  # (N,28,28,1)
    y = jnp.broadcast_to(labels.astype(jnp.float32)[:, None, None, None], x_nhwc.shape)
    h = jnp.concatenate([x_nhwc, y], axis=3)                          # (N,28,28,2)

    # ---- encoder convs (im2col + matmul/bias/ReLU kernels) ----
    p1, H1, W1 = _conv_patches_s2k4p1(h)                              # (N*196, 32)
    a1 = pallas_matmul_bias_relu(p1, pp["c1_w"], pp["c1_b"])          # (N*196, 32)
    a1 = a1.reshape(N, H1, W1, 32)                                    # (N,14,14,32) NHWC

    p2, H2, W2 = _conv_patches_s2k4p1(a1)                             # (N*49, 512)
    a2 = pallas_matmul_bias_relu(p2, pp["c2_w"], pp["c2_b"])          # (N*49, 64)
    h_flat = a2.reshape(N, H2 * W2 * 64)                              # (N, 3136) (h,w,c)

    # ---- fused FC core (fc1 -> mu/logvar -> reparam -> dec_fc1 -> dec_fc2) ----
    lbl = labels.astype(jnp.int32).reshape(N, 1)
    mu, logvar, d2 = pallas_fc_core(h_flat, eps, lbl, pp)

    # ---- decoder transposed convs: single super-patch matmul each ----
    d = d2.reshape(N, 7, 7, 64)                                       # NHWC
    o1 = pallas_matmul_bias_relu(_tconv_superpatches(d),
                                 pp["t1_w"], pp["t1_b"])              # (N*49, 128)
    a3 = _deblock_phases(o1, N, 7, 7, 32)                             # (N,14,14,32)

    o2 = pallas_matmul_bias_relu(_tconv_superpatches(a3),
                                 pp["t2_w"], pp["t2_b"])              # (N*196, 4)
    pred = _deblock_phases(o2, N, 14, 14, 1)                          # (N,28,28,1)
    return pred.transpose(0, 3, 1, 2), mu, logvar                     # NCHW


# ----------------------------- pure-JAX reference --------------------------- #

def reference_forward(params, x, labels, eps, num_classes=NUM_CLASSES):
    """f32 reference mirroring the PyTorch module (validation only)."""
    f32 = jnp.float32
    N = x.shape[0]
    dn = ("NCHW", "OIHW", "NCHW")
    y = jnp.ones_like(x) * labels.astype(f32)[:, None, None, None]
    h = jnp.concatenate([x, y], axis=1)
    h = jax.nn.relu(lax.conv_general_dilated(h, params["enc_c1_w"], (2, 2),
                                             [(1, 1), (1, 1)], dimension_numbers=dn)
                    + params["enc_c1_b"][None, :, None, None])
    h = jax.nn.relu(lax.conv_general_dilated(h, params["enc_c2_w"], (2, 2),
                                             [(1, 1), (1, 1)], dimension_numbers=dn)
                    + params["enc_c2_b"][None, :, None, None])
    h = h.reshape(N, -1)
    h = jax.nn.relu(h @ params["enc_fc1_w"].T + params["enc_fc1_b"])
    mu = h @ params["enc_mu_w"].T + params["enc_mu_b"]
    logvar = h @ params["enc_lv_w"].T + params["enc_lv_b"]
    z = mu + eps * jnp.exp(0.5 * logvar)
    z = jnp.concatenate([z, jax.nn.one_hot(labels, num_classes, dtype=f32)], axis=1)
    d = jax.nn.relu(z @ params["dec_fc1_w"].T + params["dec_fc1_b"])
    d = jax.nn.relu(d @ params["dec_fc2_w"].T + params["dec_fc2_b"])
    d = d.reshape(N, 64, 7, 7)

    def tconv(t, w, b):
        w_conv = jnp.flip(w, (2, 3)).transpose(1, 0, 2, 3)
        out = lax.conv_general_dilated(t, w_conv, (1, 1), [(2, 2), (2, 2)],
                                       lhs_dilation=(2, 2), dimension_numbers=dn)
        return jax.nn.relu(out + b[None, :, None, None])

    d = tconv(d, params["dec_t1_w"], params["dec_t1_b"])
    pred = tconv(d, params["dec_t2_w"], params["dec_t2_b"])
    return pred, mu, logvar


if __name__ == "__main__":
    key = jax.random.PRNGKey(0)
    kp, kx, kl, ke = jax.random.split(key, 4)

    params = init_params(kp)
    packed = prepare_params(params)          # one-time weight packing, outside jit

    N = 2
    # Linear(64*7*7, 100) pins the spatial size to 28x28 (MNIST-like).
    x = jax.random.normal(kx, (N, 1, 28, 28), dtype=jnp.float32)
    labels = jax.random.randint(kl, (N,), 0, NUM_CLASSES)
    eps = jax.random.normal(ke, (N, LATENT), dtype=jnp.float32)   # randn_like(std)

    pred, mu, logvar = conv_cvae_forward(packed, x, labels, eps)
    jax.block_until_ready((pred, mu, logvar))

    assert pred.shape == (N, 1, 28, 28)
    assert mu.shape == (N, LATENT) and logvar.shape == (N, LATENT)
    assert bool(jnp.all(pred >= 0.0))        # final ReLU per the reference module

    # validate against the pure-JAX f32 reference (loose tol: bf16 MXU operands)
    pred_r, mu_r, logvar_r = jax.jit(reference_forward)(params, x, labels, eps)
    for name, got, ref in (("pred", pred, pred_r), ("mu", mu, mu_r),
                           ("logvar", logvar, logvar_r)):
        tol = 5e-2 * (1.0 + float(jnp.max(jnp.abs(ref))))
        err = float(jnp.max(jnp.abs(got - ref)))
        assert err < tol, f"{name}: max abs err {err} > {tol}"

    print("KERNEL_OK")
</pallas_src>

<mosaic_0001>
module attributes {stable_mosaic.version = 11 : i64} {
  func.func @_matmul_bias_relu_kernel(%arg0: memref<392x32xf32, #tpu.memory_space<vmem>>, %arg1: memref<32x32xbf16, #tpu.memory_space<vmem>>, %arg2: memref<1x32xf32, #tpu.memory_space<vmem>>, %arg3: memref<392x32xf32, #tpu.memory_space<vmem>>) attributes {dimension_semantics = [], scalar_prefetch = 0 : i64, scratch_operands = 0 : i64, tpu.core_type = #tpu.core_type<tc>} {
    %c0 = arith.constant 0 : index
    %c0_0 = arith.constant 0 : index
    %0 = vector.load %arg0[%c0, %c0_0] : memref<392x32xf32, #tpu.memory_space<vmem>>, vector<392x32xf32>
    %1 = arith.truncf %0 : vector<392x32xf32> to vector<392x32xbf16>
    %c0_1 = arith.constant 0 : index
    %c0_2 = arith.constant 0 : index
    %2 = vector.load %arg1[%c0_1, %c0_2] : memref<32x32xbf16, #tpu.memory_space<vmem>>, vector<32x32xbf16>
    %cst = arith.constant dense<0.000000e+00> : vector<392x32xf32>
    %3 = tpu.matmul %1, %2, %cst {dimension_numbers = #tpu.dot_dimension_numbers<[1], [0], [0], [1], [0, 0, 1, 1], [], []>} : vector<392x32xbf16>, vector<32x32xbf16>, vector<392x32xf32> -> vector<392x32xf32>
    %c0_3 = arith.constant 0 : index
    %c0_4 = arith.constant 0 : index
    %4 = vector.load %arg2[%c0_3, %c0_4] : memref<1x32xf32, #tpu.memory_space<vmem>>, vector<1x32xf32>
    %5 = vector.broadcast %4 : vector<1x32xf32> to vector<392x32xf32>
    %6 = arith.addf %3, %5 : vector<392x32xf32>
    %cst_5 = arith.constant 0.000000e+00 : f32
    %7 = vector.broadcast %cst_5 : f32 to vector<392x32xf32>
    %8 = arith.maximumf %6, %7 : vector<392x32xf32>
    %c0_6 = arith.constant 0 : index
    %c0_7 = arith.constant 0 : index
    %9 = vector.load %arg3[%c0_6, %c0_7] : memref<392x32xf32, #tpu.memory_space<vmem>>, vector<392x32xf32>
    tpu.vector_store %arg3[%c0_6, %c0_7], %8 {strides = array<i32>} : memref<392x32xf32, #tpu.memory_space<vmem>>, vector<392x32xf32>,
    return
  }
}

module attributes {stable_mosaic.version = 11 : i64} {
  func.func @_matmul_bias_relu_kernel(%arg0: memref<98x512xf32, #tpu.memory_space<vmem>>, %arg1: memref<512x64xbf16, #tpu.memory_space<vmem>>, %arg2: memref<1x64xf32, #tpu.memory_space<vmem>>, %arg3: memref<98x64xf32, #tpu.memory_space<vmem>>) attributes {dimension_semantics = [], scalar_prefetch = 0 : i64, scratch_operands = 0 : i64, tpu.core_type = #tpu.core_type<tc>} {
    %c0 = arith.constant 0 : index
    %c0_0 = arith.constant 0 : index
    %0 = vector.load %arg0[%c0, %c0_0] : memref<98x512xf32, #tpu.memory_space<vmem>>, vector<98x512xf32>
    %1 = arith.truncf %0 : vector<98x512xf32> to vector<98x512xbf16>
    %c0_1 = arith.constant 0 : index
    %c0_2 = arith.constant 0 : index
    %2 = vector.load %arg1[%c0_1, %c0_2] : memref<512x64xbf16, #tpu.memory_space<vmem>>, vector<512x64xbf16>
    %cst = arith.constant dense<0.000000e+00> : vector<98x64xf32>
    %3 = tpu.matmul %1, %2, %cst {dimension_numbers = #tpu.dot_dimension_numbers<[1], [0], [0], [1], [0, 0, 1, 1], [], []>} : vector<98x512xbf16>, vector<512x64xbf16>, vector<98x64xf32> -> vector<98x64xf32>
    %c0_3 = arith.constant 0 : index
    %c0_4 = arith.constant 0 : index
    %4 = vector.load %arg2[%c0_3, %c0_4] : memref<1x64xf32, #tpu.memory_space<vmem>>, vector<1x64xf32>
    %5 = vector.broadcast %4 : vector<1x64xf32> to vector<98x64xf32>
    %6 = arith.addf %3, %5 : vector<98x64xf32>
    %cst_5 = arith.constant 0.000000e+00 : f32
    %7 = vector.broadcast %cst_5 : f32 to vector<98x64xf32>
    %8 = arith.maximumf %6, %7 : vector<98x64xf32>
    %c0_6 = arith.constant 0 : index
    %c0_7 = arith.constant 0 : index
    %9 = vector.load %arg3[%c0_6, %c0_7] : memref<98x64xf32, #tpu.memory_space<vmem>>, vector<98x64xf32>
    tpu.vector_store %arg3[%c0_6, %c0_7], %8 {strides = array<i32>} : memref<98x64xf32, #tpu.memory_space<vmem>>, vector<98x64xf32>,
    return
  }
}

module attributes {stable_mosaic.version = 11 : i64} {
  func.func @_fc_core_kernel(%arg0: memref<2x3136xf32, #tpu.memory_space<vmem>>, %arg1: memref<2x2xf32, #tpu.memory_space<vmem>>, %arg2: memref<2x1xi32, #tpu.memory_space<vmem>>, %arg3: memref<3136x100xbf16, #tpu.memory_space<vmem>>, %arg4: memref<1x100xf32, #tpu.memory_space<vmem>>, %arg5: memref<100x2xbf16, #tpu.memory_space<vmem>>, %arg6: memref<1x2xf32, #tpu.memory_space<vmem>>, %arg7: memref<100x2xbf16, #tpu.memory_space<vmem>>, %arg8: memref<1x2xf32, #tpu.memory_space<vmem>>, %arg9: memref<2x100xbf16, #tpu.memory_space<vmem>>, %arg10: memref<10x100xbf16, #tpu.memory_space<vmem>>, %arg11: memref<1x100xf32, #tpu.memory_space<vmem>>, %arg12: memref<100x3136xbf16, #tpu.memory_space<vmem>>, %arg13: memref<1x3136xf32, #tpu.memory_space<vmem>>, %arg14: memref<2x2xf32, #tpu.memory_space<vmem>>, %arg15: memref<2x2xf32, #tpu.memory_space<vmem>>, %arg16: memref<2x3136xf32, #tpu.memory_space<vmem>>) attributes {dimension_semantics = [], scalar_prefetch = 0 : i64, scratch_operands = 0 : i64, tpu.core_type = #tpu.core_type<tc>} {
    %c0 = arith.constant 0 : index
    %c0_0 = arith.constant 0 : index
    %0 = vector.load %arg0[%c0, %c0_0] : memref<2x3136xf32, #tpu.memory_space<vmem>>, vector<2x3136xf32>
    %1 = arith.truncf %0 : vector<2x3136xf32> to vector<2x3136xbf16>
    %c0_1 = arith.constant 0 : index
    %c0_2 = arith.constant 0 : index
    %2 = vector.load %arg3[%c0_1, %c0_2] : memref<3136x100xbf16, #tpu.memory_space<vmem>>, vector<3136x100xbf16>
    %cst = arith.constant dense<0.000000e+00> : vector<2x100xf32>
    %3 = tpu.matmul %1, %2, %cst {dimension_numbers = #tpu.dot_dimension_numbers<[1], [0], [0], [1], [0, 0, 1, 1], [], []>} : vector<2x3136xbf16>, vector<3136x100xbf16>, vector<2x100xf32> -> vector<2x100xf32>
    %c0_3 = arith.constant 0 : index
    %c0_4 = arith.constant 0 : index
    %4 = vector.load %arg4[%c0_3, %c0_4] : memref<1x100xf32, #tpu.memory_space<vmem>>, vector<1x100xf32>
    %5 = vector.broadcast %4 : vector<1x100xf32> to vector<2x100xf32>
    %6 = arith.addf %3, %5 : vector<2x100xf32>
    %cst_5 = arith.constant 0.000000e+00 : f32
    %7 = vector.broadcast %cst_5 : f32 to vector<2x100xf32>
    %8 = arith.maximumf %6, %7 : vector<2x100xf32>
    %9 = arith.truncf %8 : vector<2x100xf32> to vector<2x100xbf16>
    %c0_6 = arith.constant 0 : index
    %c0_7 = arith.constant 0 : index
    %10 = vector.load %arg5[%c0_6, %c0_7] : memref<100x2xbf16, #tpu.memory_space<vmem>>, vector<100x2xbf16>
    %cst_8 = arith.constant dense<0.000000e+00> : vector<2x2xf32>
    %11 = tpu.matmul %9, %10, %cst_8 {dimension_numbers = #tpu.dot_dimension_numbers<[1], [0], [0], [1], [0, 0, 1, 1], [], []>} : vector<2x100xbf16>, vector<100x2xbf16>, vector<2x2xf32> -> vector<2x2xf32>
    %c0_9 = arith.constant 0 : index
    %c0_10 = arith.constant 0 : index
    %12 = vector.load %arg6[%c0_9, %c0_10] : memref<1x2xf32, #tpu.memory_space<vmem>>, vector<1x2xf32>
    %13 = vector.broadcast %12 : vector<1x2xf32> to vector<2x2xf32>
    %14 = arith.addf %11, %13 : vector<2x2xf32>
    %c0_11 = arith.constant 0 : index
    %c0_12 = arith.constant 0 : index
    %15 = vector.load %arg7[%c0_11, %c0_12] : memref<100x2xbf16, #tpu.memory_space<vmem>>, vector<100x2xbf16>
    %cst_13 = arith.constant dense<0.000000e+00> : vector<2x2xf32>
    %16 = tpu.matmul %9, %15, %cst_13 {dimension_numbers = #tpu.dot_dimension_numbers<[1], [0], [0], [1], [0, 0, 1, 1], [], []>} : vector<2x100xbf16>, vector<100x2xbf16>, vector<2x2xf32> -> vector<2x2xf32>
    %c0_14 = arith.constant 0 : index
    %c0_15 = arith.constant 0 : index
    %17 = vector.load %arg8[%c0_14, %c0_15] : memref<1x2xf32, #tpu.memory_space<vmem>>, vector<1x2xf32>
    %18 = vector.broadcast %17 : vector<1x2xf32> to vector<2x2xf32>
    %19 = arith.addf %16, %18 : vector<2x2xf32>
    %c0_16 = arith.constant 0 : index
    %c0_17 = arith.constant 0 : index
    %20 = vector.load %arg14[%c0_16, %c0_17] : memref<2x2xf32, #tpu.memory_space<vmem>>, vector<2x2xf32>
    tpu.vector_store %arg14[%c0_16, %c0_17], %14 {strides = array<i32>} : memref<2x2xf32, #tpu.memory_space<vmem>>, vector<2x2xf32>,
    %c0_18 = arith.constant 0 : index
    %c0_19 = arith.constant 0 : index
    %21 = vector.load %arg15[%c0_18, %c0_19] : memref<2x2xf32, #tpu.memory_space<vmem>>, vector<2x2xf32>
    tpu.vector_store %arg15[%c0_18, %c0_19], %19 {strides = array<i32>} : memref<2x2xf32, #tpu.memory_space<vmem>>, vector<2x2xf32>,
    %c0_20 = arith.constant 0 : index
    %c0_21 = arith.constant 0 : index
    %22 = vector.load %arg1[%c0_20, %c0_21] : memref<2x2xf32, #tpu.memory_space<vmem>>, vector<2x2xf32>
    %cst_22 = arith.constant 5.000000e-01 : f32
    %23 = vector.broadcast %cst_22 : f32 to vector<2x2xf32>
    %24 = arith.mulf %23, %19 : vector<2x2xf32>
    %25 = math.exp %24 : vector<2x2xf32>
    %26 = arith.mulf %22, %25 : vector<2x2xf32>
    %27 = arith.addf %14, %26 : vector<2x2xf32>
    %28 = tpu.iota {dimensions = array<i32: 1>} : vector<2x10xi32>
    %c0_23 = arith.constant 0 : index
    %c0_24 = arith.constant 0 : index
    %29 = vector.load %arg2[%c0_23, %c0_24] : memref<2x1xi32, #tpu.memory_space<vmem>>, vector<2x1xi32>
    %30 = vector.broadcast %29 : vector<2x1xi32> to vector<2x10xi32>
    %31 = arith.cmpi eq, %28, %30 : vector<2x10xi32>
    %32 = arith.extui %31 : vector<2x10xi1> to vector<2x10xi32>
    %33 = arith.sitofp %32 : vector<2x10xi32> to vector<2x10xf32>
    %34 = arith.truncf %27 : vector<2x2xf32> to vector<2x2xbf16>
    %c0_25 = arith.constant 0 : index
    %c0_26 = arith.constant 0 : index
    %35 = vector.load %arg9[%c0_25, %c0_26] : memref<2x100xbf16, #tpu.memory_space<vmem>>, vector<2x100xbf16>
    %cst_27 = arith.constant dense<0.000000e+00> : vector<2x100xf32>
    %36 = tpu.matmul %34, %35, %cst_27 {dimension_numbers = #tpu.dot_dimension_numbers<[1], [0], [0], [1], [0, 0, 1, 1], [], []>} : vector<2x2xbf16>, vector<2x100xbf16>, vector<2x100xf32> -> vector<2x100xf32>
    %37 = arith.truncf %33 : vector<2x10xf32> to vector<2x10xbf16>
    %c0_28 = arith.constant 0 : index
    %c0_29 = arith.constant 0 : index
    %38 = vector.load %arg10[%c0_28, %c0_29] : memref<10x100xbf16, #tpu.memory_space<vmem>>, vector<10x100xbf16>
    %cst_30 = arith.constant dense<0.000000e+00> : vector<2x100xf32>
    %39 = tpu.matmul %37, %38, %cst_30 {dimension_numbers = #tpu.dot_dimension_numbers<[1], [0], [0], [1], [0, 0, 1, 1], [], []>} : vector<2x10xbf16>, vector<10x100xbf16>, vector<2x100xf32> -> vector<2x100xf32>
    %40 = arith.addf %36, %39 : vector<2x100xf32>
    %c0_31 = arith.constant 0 : index
    %c0_32 = arith.constant 0 : index
    %41 = vector.load %arg11[%c0_31, %c0_32] : memref<1x100xf32, #tpu.memory_space<vmem>>, vector<1x100xf32>
    %42 = vector.broadcast %41 : vector<1x100xf32> to vector<2x100xf32>
    %43 = arith.addf %40, %42 : vector<2x100xf32>
    %cst_33 = arith.constant 0.000000e+00 : f32
    %44 = vector.broadcast %cst_33 : f32 to vector<2x100xf32>
    %45 = arith.maximumf %43, %44 : vector<2x100xf32>
    %46 = arith.truncf %45 : vector<2x100xf32> to vector<2x100xbf16>
    %c0_34 = arith.constant 0 : index
    %c0_35 = arith.constant 0 : index
    %47 = vector.load %arg12[%c0_34, %c0_35] : memref<100x3136xbf16, #tpu.memory_space<vmem>>, vector<100x3136xbf16>
    %cst_36 = arith.constant dense<0.000000e+00> : vector<2x3136xf32>
    %48 = tpu.matmul %46, %47, %cst_36 {dimension_numbers = #tpu.dot_dimension_numbers<[1], [0], [0], [1], [0, 0, 1, 1], [], []>} : vector<2x100xbf16>, vector<100x3136xbf16>, vector<2x3136xf32> -> vector<2x3136xf32>
    %c0_37 = arith.constant 0 : index
    %c0_38 = arith.constant 0 : index
    %49 = vector.load %arg13[%c0_37, %c0_38] : memref<1x3136xf32, #tpu.memory_space<vmem>>, vector<1x3136xf32>
    %50 = vector.broadcast %49 : vector<1x3136xf32> to vector<2x3136xf32>
    %51 = arith.addf %48, %50 : vector<2x3136xf32>
    %cst_39 = arith.constant 0.000000e+00 : f32
    %52 = vector.broadcast %cst_39 : f32 to vector<2x3136xf32>
    %53 = arith.maximumf %51, %52 : vector<2x3136xf32>
    %c0_40 = arith.constant 0 : index
    %c0_41 = arith.constant 0 : index
    %54 = vector.load %arg16[%c0_40, %c0_41] : memref<2x3136xf32, #tpu.memory_space<vmem>>, vector<2x3136xf32>
    tpu.vector_store %arg16[%c0_40, %c0_41], %53 {strides = array<i32>} : memref<2x3136xf32, #tpu.memory_space<vmem>>, vector<2x3136xf32>,
    return
  }
}

module attributes {stable_mosaic.version = 11 : i64} {
  func.func @_matmul_bias_relu_kernel(%arg0: memref<98x576xf32, #tpu.memory_space<vmem>>, %arg1: memref<576x128xbf16, #tpu.memory_space<vmem>>, %arg2: memref<1x128xf32, #tpu.memory_space<vmem>>, %arg3: memref<98x128xf32, #tpu.memory_space<vmem>>) attributes {dimension_semantics = [], scalar_prefetch = 0 : i64, scratch_operands = 0 : i64, tpu.core_type = #tpu.core_type<tc>} {
    %c0 = arith.constant 0 : index
    %c0_0 = arith.constant 0 : index
    %0 = vector.load %arg0[%c0, %c0_0] : memref<98x576xf32, #tpu.memory_space<vmem>>, vector<98x576xf32>
    %1 = arith.truncf %0 : vector<98x576xf32> to vector<98x576xbf16>
    %c0_1 = arith.constant 0 : index
    %c0_2 = arith.constant 0 : index
    %2 = vector.load %arg1[%c0_1, %c0_2] : memref<576x128xbf16, #tpu.memory_space<vmem>>, vector<576x128xbf16>
    %cst = arith.constant dense<0.000000e+00> : vector<98x128xf32>
    %3 = tpu.matmul %1, %2, %cst {dimension_numbers = #tpu.dot_dimension_numbers<[1], [0], [0], [1], [0, 0, 1, 1], [], []>} : vector<98x576xbf16>, vector<576x128xbf16>, vector<98x128xf32> -> vector<98x128xf32>
    %c0_3 = arith.constant 0 : index
    %c0_4 = arith.constant 0 : index
    %4 = vector.load %arg2[%c0_3, %c0_4] : memref<1x128xf32, #tpu.memory_space<vmem>>, vector<1x128xf32>
    %5 = vector.broadcast %4 : vector<1x128xf32> to vector<98x128xf32>
    %6 = arith.addf %3, %5 : vector<98x128xf32>
    %cst_5 = arith.constant 0.000000e+00 : f32
    %7 = vector.broadcast %cst_5 : f32 to vector<98x128xf32>
    %8 = arith.maximumf %6, %7 : vector<98x128xf32>
    %c0_6 = arith.constant 0 : index
    %c0_7 = arith.constant 0 : index
    %9 = vector.load %arg3[%c0_6, %c0_7] : memref<98x128xf32, #tpu.memory_space<vmem>>, vector<98x128xf32>
    tpu.vector_store %arg3[%c0_6, %c0_7], %8 {strides = array<i32>} : memref<98x128xf32, #tpu.memory_space<vmem>>, vector<98x128xf32>,
    return
  }
}

module attributes {stable_mosaic.version = 11 : i64} {
  func.func @_matmul_bias_relu_kernel(%arg0: memref<392x288xf32, #tpu.memory_space<vmem>>, %arg1: memref<288x4xbf16, #tpu.memory_space<vmem>>, %arg2: memref<1x4xf32, #tpu.memory_space<vmem>>, %arg3: memref<392x4xf32, #tpu.memory_space<vmem>>) attributes {dimension_semantics = [], scalar_prefetch = 0 : i64, scratch_operands = 0 : i64, tpu.core_type = #tpu.core_type<tc>} {
    %c0 = arith.constant 0 : index
    %c0_0 = arith.constant 0 : index
    %0 = vector.load %arg0[%c0, %c0_0] : memref<392x288xf32, #tpu.memory_space<vmem>>, vector<392x288xf32>
    %1 = arith.truncf %0 : vector<392x288xf32> to vector<392x288xbf16>
    %c0_1 = arith.constant 0 : index
    %c0_2 = arith.constant 0 : index
    %2 = vector.load %arg1[%c0_1, %c0_2] : memref<288x4xbf16, #tpu.memory_space<vmem>>, vector<288x4xbf16>
    %cst = arith.constant dense<0.000000e+00> : vector<392x4xf32>
    %3 = tpu.matmul %1, %2, %cst {dimension_numbers = #tpu.dot_dimension_numbers<[1], [0], [0], [1], [0, 0, 1, 1], [], []>} : vector<392x288xbf16>, vector<288x4xbf16>, vector<392x4xf32> -> vector<392x4xf32>
    %c0_3 = arith.constant 0 : index
    %c0_4 = arith.constant 0 : index
    %4 = vector.load %arg2[%c0_3, %c0_4] : memref<1x4xf32, #tpu.memory_space<vmem>>, vector<1x4xf32>
    %5 = vector.broadcast %4 : vector<1x4xf32> to vector<392x4xf32>
    %6 = arith.addf %3, %5 : vector<392x4xf32>
    %cst_5 = arith.constant 0.000000e+00 : f32
    %7 = vector.broadcast %cst_5 : f32 to vector<392x4xf32>
    %8 = arith.maximumf %6, %7 : vector<392x4xf32>
    %c0_6 = arith.constant 0 : index
    %c0_7 = arith.constant 0 : index
    %9 = vector.load %arg3[%c0_6, %c0_7] : memref<392x4xf32, #tpu.memory_space<vmem>>, vector<392x4xf32>
    tpu.vector_store %arg3[%c0_6, %c0_7], %8 {strides = array<i32>} : memref<392x4xf32, #tpu.memory_space<vmem>>, vector<392x4xf32>,
    return
  }
}

</mosaic_0001>

<llo_original>
// kernel: conv_cvae_forward.5
$region0: #{conv_cvae_forward.5}
  #allocation0 [shape = 'u32[]', space=smem, size = 0x4, offset = 0x4, fixed_abs, tag = 'smem constant byte address 0x4 - core index']
  #allocation1 [shape = 'u32[144,128]{1,0:T(1,128)}', space=vmem, size = 0x12000, scoped, tag = 'internal scratch']
  %s0 = inlined_call_operand.vmem [shape: f32[392,32], index: 0, kind: input, shape index: {}]
  %s1 = inlined_call_operand.vmem [shape: bf16[32,32], index: 1, kind: input, shape index: {}]
  %s2 = inlined_call_operand.vmem [shape: f32[1,32], index: 2, kind: input, shape index: {}]
  %s3 = inlined_call_operand.vmem [shape: f32[392,32], index: 3, kind: output, shape index: {}]
  %s4 = sld [smem:[#allocation0]]
  $region22: #{conv_cvae_forward.5} parent=0
    _
  %s6 = ssub.s32 1, %s4
  %s7 = scalar_select 0, %s6, %s4
  // Predicated region
  $region2: #{conv_cvae_forward.5} parent=0 // pred_check
    _
  $region3: #{conv_cvae_forward.5} parent=0 // pred_check_branch
    %9 = sbr.rel (0) target = $region5
  $region4: #{conv_cvae_forward.5} parent=0 // pred_region
    _
  $region5: #{conv_cvae_forward.5} parent=0 // pred_fallthru
    _
  // Predicated region
  $region6: #{conv_cvae_forward.5} parent=0 // pred_check
    _
  $region7: #{conv_cvae_forward.5} parent=0 // pred_check_branch
    %11 = sbr.rel (0) target = $region9
  $region8: #{conv_cvae_forward.5} parent=0 // pred_region
    _
  $region9: #{conv_cvae_forward.5} parent=0 // pred_fallthru
    _
  // Predicated region
  $region10: #{conv_cvae_forward.5} parent=0 // pred_check
    _
  $region11: #{conv_cvae_forward.5} parent=0 // pred_check_branch
    %13 = sbr.rel (0) target = $region13
  $region12: #{conv_cvae_forward.5} parent=0 // pred_region
    _
  $region13: #{conv_cvae_forward.5} parent=0 // pred_fallthru
    _
  %v15 = vld [vmem:[%s0] sm:$0xff]
  %v16 = vld [vmem:[%s0 + $0x8] sm:$0xff]
  %v17 = vld [vmem:[%s0 + $0x10] sm:$0xff]
  %v18 = vld [vmem:[%s0 + $0x18] sm:$0xff]
  %v19 = vld [vmem:[%s0 + $0x20] sm:$0xff]
  %v20 = vld [vmem:[%s0 + $0x28] sm:$0xff]
  %v21 = vld [vmem:[%s0 + $0x30] sm:$0xff]
  %v22 = vld [vmem:[%s0 + $0x38] sm:$0xff]
  %v23 = vld [vmem:[%s0 + $0x40] sm:$0xff]
  %v24 = vld [vmem:[%s0 + $0x48] sm:$0xff]
  %v25 = vld [vmem:[%s0 + $0x50] sm:$0xff]
  %v26 = vld [vmem:[%s0 + $0x58] sm:$0xff]
  %v27 = vld [vmem:[%s0 + $0x60] sm:$0xff]
  %v28 = vld [vmem:[%s0 + $0x68] sm:$0xff]
  %v29 = vld [vmem:[%s0 + $0x70] sm:$0xff]
  %v30 = vld [vmem:[%s0 + $0x78] sm:$0xff]
  %v31 = vld [vmem:[%s0 + $0x80] sm:$0xff]
  %v32 = vld [vmem:[%s0 + $0x88] sm:$0xff]
  %v33 = vld [vmem:[%s0 + $0x90] sm:$0xff]
  %v34 = vld [vmem:[%s0 + $0x98] sm:$0xff]
  %v35 = vld [vmem:[%s0 + $0xa0] sm:$0xff]
  %v36 = vld [vmem:[%s0 + $0xa8] sm:$0xff]
  %v37 = vld [vmem:[%s0 + $0xb0] sm:$0xff]
  %v38 = vld [vmem:[%s0 + $0xb8] sm:$0xff]
  %v39 = vld [vmem:[%s0 + $0xc0] sm:$0xff]
  %v40 = vld [vmem:[%s0 + $0xc8] sm:$0xff]
  %v41 = vld [vmem:[%s0 + $0xd0] sm:$0xff]
  %v42 = vld [vmem:[%s0 + $0xd8] sm:$0xff]
  %v43 = vld [vmem:[%s0 + $0xe0] sm:$0xff]
  %v44 = vld [vmem:[%s0 + $0xe8] sm:$0xff]
  %v45 = vld [vmem:[%s0 + $0xf0] sm:$0xff]
  %v46 = vld [vmem:[%s0 + $0xf8] sm:$0xff]
  %v47 = vld [vmem:[%s0 + $0x100] sm:$0xff]
  %v48 = vld [vmem:[%s0 + $0x108] sm:$0xff]
  %v49 = vld [vmem:[%s0 + $0x110] sm:$0xff]
  %v50 = vld [vmem:[%s0 + $0x118] sm:$0xff]
  %v51 = vld [vmem:[%s0 + $0x120] sm:$0xff]
  %v52 = vld [vmem:[%s0 + $0x128] sm:$0xff]
  %v53 = vld [vmem:[%s0 + $0x130] sm:$0xff]
  %v54 = vld [vmem:[%s0 + $0x138] sm:$0xff]
  %v55 = vld [vmem:[%s0 + $0x140] sm:$0xff]
  %v56 = vld [vmem:[%s0 + $0x148] sm:$0xff]
  %v57 = vld [vmem:[%s0 + $0x150] sm:$0xff]
  %v58 = vld [vmem:[%s0 + $0x158] sm:$0xff]
  %v59 = vld [vmem:[%s0 + $0x160] sm:$0xff]
  %v60 = vld [vmem:[%s0 + $0x168] sm:$0xff]
  %v61 = vld [vmem:[%s0 + $0x170] sm:$0xff]
  %v62 = vld [vmem:[%s0 + $0x178] sm:$0xff]
  %v63 = vld [vmem:[%s0 + $0x180] sm:$0xff]
  %v64 = vpack.c.bf16 %v16, %v15
  %v65 = vpack.c.bf16 %v18, %v17
  %v66 = vpack.c.bf16 %v20, %v19
  %v67 = vpack.c.bf16 %v22, %v21
  %v68 = vpack.c.bf16 %v24, %v23
  %v69 = vpack.c.bf16 %v26, %v25
  %v70 = vpack.c.bf16 %v28, %v27
  %v71 = vpack.c.bf16 %v30, %v29
  %v72 = vpack.c.bf16 %v32, %v31
  %v73 = vpack.c.bf16 %v34, %v33
  %v74 = vpack.c.bf16 %v36, %v35
  %v75 = vpack.c.bf16 %v38, %v37
  %v76 = vpack.c.bf16 %v40, %v39
  %v77 = vpack.c.bf16 %v42, %v41
  %v78 = vpack.c.bf16 %v44, %v43
  %v79 = vpack.c.bf16 %v46, %v45
  %v80 = vpack.c.bf16 %v48, %v47
  %v81 = vpack.c.bf16 %v50, %v49
  %v82 = vpack.c.bf16 %v52, %v51
  %v83 = vpack.c.bf16 %v54, %v53
  %v84 = vpack.c.bf16 %v56, %v55
  %v85 = vpack.c.bf16 %v58, %v57
  %v86 = vpack.c.bf16 %v60, %v59
  %v87 = vpack.c.bf16 %v62, %v61
  %v88 = vpack.c.bf16 %v63, %v63
  %v89 = vld [vmem:[%s1] sm:$0xf]
  %v90 = vld [vmem:[%s1 + $0x4] sm:$0xf]
  %v91 = vld [vmem:[%s1 + $0x8] sm:$0xf]
  %v92 = vld [vmem:[%s1 + $0xc] sm:$0xf]
  %v93 = vld [vmem:[%s2] sm:$0x1]
  %v95 = vlaneseq
  %v96 = vshrl.u32 %v95, 7
  %v97 = vsub.s32 0, %v96
  %v98 = vrot.slane %v93, %v97
  %v104 = vunpack.c.l.b16 %v89
  %v105 = vunpack.c.l.b16 %v90
  %v106 = vunpack.c.l.b16 %v91
  %v107 = vunpack.c.l.b16 %v92
  %v108 = vpack.c.b16 %v105, %v104
  %v109 = vpack.c.b16 %v107, %v106
  %vm112 = vcmask 261120
  %v114 = vsel %vm112, %v64, 0
  %v117 = vsel %vm112, %v65, 0
  %v120 = vsel %vm112, %v66, 0
  %v123 = vsel %vm112, %v67, 0
  %v126 = vsel %vm112, %v68, 0
  %v129 = vsel %vm112, %v69, 0
  %v132 = vsel %vm112, %v70, 0
  %v135 = vsel %vm112, %v71, 0
  %v138 = vsel %vm112, %v72, 0
  %v141 = vsel %vm112, %v73, 0
  %v144 = vsel %vm112, %v74, 0
  %v147 = vsel %vm112, %v75, 0
  %v150 = vsel %vm112, %v76, 0
  %v153 = vsel %vm112, %v77, 0
  %v156 = vsel %vm112, %v78, 0
  %v159 = vsel %vm112, %v79, 0
  %v162 = vsel %vm112, %v80, 0
  %v165 = vsel %vm112, %v81, 0
  %v168 = vsel %vm112, %v82, 0
  %v171 = vsel %vm112, %v83, 0
  %v174 = vsel %vm112, %v84, 0
  %v177 = vsel %vm112, %v85, 0
  %v180 = vsel %vm112, %v86, 0
  %v183 = vsel %vm112, %v87, 0
  %v186 = vsel %vm112, %v88, 0
  %188 = vmatprep.subr.bf16.mxu0 0
  %189 = vmatpush1.bf16.msra.mxu0 %v108
  %190 = vmatprep.subr.bf16.mxu0 0
  %191 = vmatpush1.bf16.msra.mxu0 %v109
  %192 = vmatprep.subr.bf16.mxu0 0
  %193 = vmatpush1.bf16.msra.mxu0 0
  %194 = vmatprep.subr.bf16.mxu0 0
  %195 = vmatpush1.bf16.msra.mxu0 0
  %196 = vmatprep.subr.bf16.mxu0 0
  %197 = vmatpush1.bf16.msra.mxu0 0
  %198 = vmatprep.subr.bf16.mxu0 0
  %199 = vmatpush1.bf16.msra.mxu0 0
  %200 = vmatprep.subr.bf16.mxu0 0
  %201 = vmatpush1.bf16.msra.mxu0 0
  %202 = vmatprep.subr.bf16.mxu0 0
  %203 = vmatpush1.bf16.msra.mxu0 0
  %204 = vmatprep.subr.bf16.mxu0 0
  %205 = vmatpush1.bf16.msra.mxu0 0
  %206 = vmatprep.subr.bf16.mxu0 0
  %207 = vmatpush1.bf16.msra.mxu0 0
  %208 = vmatprep.subr.bf16.mxu0 0
  %209 = vmatpush1.bf16.msra.mxu0 0
  %210 = vmatprep.subr.bf16.mxu0 0
  %211 = vmatpush1.bf16.msra.mxu0 0
  %212 = vmatprep.subr.bf16.mxu0 0
  %213 = vmatpush1.bf16.msra.mxu0 0
  %214 = vmatprep.subr.bf16.mxu0 0
  %215 = vmatpush1.bf16.msra.mxu0 0
  %216 = vmatprep.subr.bf16.mxu0 0
  %217 = vmatpush1.bf16.msra.mxu0 0
  %218 = vmatprep.subr.bf16.mxu0 0
  %219 = vmatpush1.bf16.msra.mxu0 0
  %220 = vmatprep.mubr.bf16.mxu0 0
  %221 = vmatmul.mubr.bf16.gmra.mrb[0].mxu0 %v114
  %v222 = vpop.f32.mrb[0].mxu0
  %v223 = vadd.f32 %v98, %v222
  %v224 = vpop.f32.mrb[0].mxu0
  %v225 = vpop.f32.mrb[0].mxu0
  %v226 = vadd.f32 %v98, %v225
  %v227 = vpop.f32.mrb[0].mxu0
  %228 = vmatprep.mubr.bf16.mxu0 0
  %229 = vmatmul.mubr.bf16.gmra.mrb[0].mxu0 %v117
  %v230 = vpop.f32.mrb[0].mxu0
  %v231 = vadd.f32 %v98, %v230
  %v232 = vpop.f32.mrb[0].mxu0
  %v233 = vpop.f32.mrb[0].mxu0
  %v234 = vadd.f32 %v98, %v233
  %v235 = vpop.f32.mrb[0].mxu0
  %236 = vmatprep.mubr.bf16.mxu0 0
  %237 = vmatmul.mubr.bf16.gmra.mrb[0].mxu0 %v120
  %v238 = vpop.f32.mrb[0].mxu0
  %v239 = vadd.f32 %v98, %v238
  %v240 = vpop.f32.mrb[0].mxu0
  %v241 = vpop.f32.mrb[0].mxu0
  %v242 = vadd.f32 %v98, %v241
  %v243 = vpop.f32.mrb[0].mxu0
  %244 = vmatprep.mubr.bf16.mxu0 0
  %245 = vmatmul.mubr.bf16.gmra.mrb[0].mxu0 %v123
  %v246 = vpop.f32.mrb[0].mxu0
  %v247 = vadd.f32 %v98, %v246
  %v248 = vpop.f32.mrb[0].mxu0
  %v249 = vpop.f32.mrb[0].mxu0
  %v250 = vadd.f32 %v98, %v249
  %v251 = vpop.f32.mrb[0].mxu0
  %252 = vmatprep.mubr.bf16.mxu0 0
  %253 = vmatmul.mubr.bf16.gmra.mrb[0].mxu0 %v126
  %v254 = vpop.f32.mrb[0].mxu0
  %v255 = vadd.f32 %v98, %v254
  %v256 = vpop.f32.mrb[0].mxu0
  %v257 = vpop.f32.mrb[0].mxu0
  %v258 = vadd.f32 %v98, %v257
  %v259 = vpop.f32.mrb[0].mxu0
  %260 = vmatprep.mubr.bf16.mxu0 0
  %261 = vmatmul.mubr.bf16.gmra.mrb[0].mxu0 %v129
  %v262 = vpop.f32.mrb[0].mxu0
  %v263 = vadd.f32 %v98, %v262
  %v264 = vpop.f32.mrb[0].mxu0
  %v265 = vpop.f32.mrb[0].mxu0
  %v266 = vadd.f32 %v98, %v265
  %v267 = vpop.f32.mrb[0].mxu0
  %268 = vmatprep.mubr.bf16.mxu0 0
  %269 = vmatmul.mubr.bf16.gmra.mrb[0].mxu0 %v132
  %v270 = vpop.f32.mrb[0].mxu0
  %v271 = vadd.f32 %v98, %v270
  %v272 = vpop.f32.mrb[0].mxu0
  %v273 = vpop.f32.mrb[0].mxu0
  %v274 = vadd.f32 %v98, %v273
  %v275 = vpop.f32.mrb[0].mxu0
  %276 = vmatprep.mubr.bf16.mxu0 0
  %277 = vmatmul.mubr.bf16.gmra.mrb[0].mxu0 %v135
  %v278 = vpop.f32.mrb[0].mxu0
  %v279 = vadd.f32 %v98, %v278
  %v280 = vpop.f32.mrb[0].mxu0
  %v281 = vpop.f32.mrb[0].mxu0
  %v282 = vadd.f32 %v98, %v281
  %v283 = vpop.f32.mrb[0].mxu0
  %284 = vmatprep.mubr.bf16.mxu0 0
  %285 = vmatmul.mubr.bf16.gmra.mrb[0].mxu0 %v138
  %v286 = vpop.f32.mrb[0].mxu0
  %v287 = vadd.f32 %v98, %v286
  %v288 = vpop.f32.mrb[0].mxu0
  %v289 = vpop.f32.mrb[0].mxu0
  %v290 = vadd.f32 %v98, %v289
  %v291 = vpop.f32.mrb[0].mxu0
  %292 = vmatprep.mubr.bf16.mxu0 0
  %293 = vmatmul.mubr.bf16.gmra.mrb[0].mxu0 %v141
  %v294 = vpop.f32.mrb[0].mxu0
  %v295 = vadd.f32 %v98, %v294
  %v296 = vpop.f32.mrb[0].mxu0
  %v297 = vpop.f32.mrb[0].mxu0
  %v298 = vadd.f32 %v98, %v297
  %v299 = vpop.f32.mrb[0].mxu0
  %300 = vmatprep.mubr.bf16.mxu0 0
  %301 = vmatmul.mubr.bf16.gmra.mrb[0].mxu0 %v144
  %v302 = vpop.f32.mrb[0].mxu0
  %v303 = vadd.f32 %v98, %v302
  %v304 = vpop.f32.mrb[0].mxu0
  %v305 = vpop.f32.mrb[0].mxu0
  %v306 = vadd.f32 %v98, %v305
  %v307 = vpop.f32.mrb[0].mxu0
  %308 = vmatprep.mubr.bf16.mxu0 0
  %309 = vmatmul.mubr.bf16.gmra.mrb[0].mxu0 %v147
  %v310 = vpop.f32.mrb[0].mxu0
  %v311 = vadd.f32 %v98, %v310
  %v312 = vpop.f32.mrb[0].mxu0
  %v313 = vpop.f32.mrb[0].mxu0
  %v314 = vadd.f32 %v98, %v313
  %v315 = vpop.f32.mrb[0].mxu0
  %316 = vmatprep.mubr.bf16.mxu0 0
  %317 = vmatmul.mubr.bf16.gmra.mrb[0].mxu0 %v150
  %v318 = vpop.f32.mrb[0].mxu0
  %v319 = vadd.f32 %v98, %v318
  %v320 = vpop.f32.mrb[0].mxu0
  %v321 = vpop.f32.mrb[0].mxu0
  %v322 = vadd.f32 %v98, %v321
  %v323 = vpop.f32.mrb[0].mxu0
  %324 = vmatprep.mubr.bf16.mxu0 0
  %325 = vmatmul.mubr.bf16.gmra.mrb[0].mxu0 %v153
  %v326 = vpop.f32.mrb[0].mxu0
  %v327 = vadd.f32 %v98, %v326
  %v328 = vpop.f32.mrb[0].mxu0
  %v329 = vpop.f32.mrb[0].mxu0
  %v330 = vadd.f32 %v98, %v329
  %v331 = vpop.f32.mrb[0].mxu0
  %332 = vmatprep.mubr.bf16.mxu0 0
  %333 = vmatmul.mubr.bf16.gmra.mrb[0].mxu0 %v156
  %v334 = vpop.f32.mrb[0].mxu0
  %v335 = vadd.f32 %v98, %v334
  %v336 = vpop.f32.mrb[0].mxu0
  %v337 = vpop.f32.mrb[0].mxu0
  %v338 = vadd.f32 %v98, %v337
  %v339 = vpop.f32.mrb[0].mxu0
  %340 = vmatprep.mubr.bf16.mxu0 0
  %341 = vmatmul.mubr.bf16.gmra.mrb[0].mxu0 %v159
  %v342 = vpop.f32.mrb[0].mxu0
  %v343 = vadd.f32 %v98, %v342
  %v344 = vpop.f32.mrb[0].mxu0
  %v345 = vpop.f32.mrb[0].mxu0
  %v346 = vadd.f32 %v98, %v345
  %v347 = vpop.f32.mrb[0].mxu0
  %348 = vmatprep.mubr.bf16.mxu0 0
  %349 = vmatmul.mubr.bf16.gmra.mrb[0].mxu0 %v162
  %v350 = vpop.f32.mrb[0].mxu0
  %v351 = vadd.f32 %v98, %v350
  %v352 = vpop.f32.mrb[0].mxu0
  %v353 = vpop.f32.mrb[0].mxu0
  %v354 = vadd.f32 %v98, %v353
  %v355 = vpop.f32.mrb[0].mxu0
  %356 = vmatprep.mubr.bf16.mxu0 0
  %357 = vmatmul.mubr.bf16.gmra.mrb[0].mxu0 %v165
  %v358 = vpop.f32.mrb[0].mxu0
  %v359 = vadd.f32 %v98, %v358
  %v360 = vpop.f32.mrb[0].mxu0
  %v361 = vpop.f32.mrb[0].mxu0
  %v362 = vadd.f32 %v98, %v361
  %v363 = vpop.f32.mrb[0].mxu0
  %364 = vmatprep.mubr.bf16.mxu0 0
  %365 = vmatmul.mubr.bf16.gmra.mrb[0].mxu0 %v168
  %v366 = vpop.f32.mrb[0].mxu0
  %v367 = vadd.f32 %v98, %v366
  %v368 = vpop.f32.mrb[0].mxu0
  %v369 = vpop.f32.mrb[0].mxu0
  %v370 = vadd.f32 %v98, %v369
  %v371 = vpop.f32.mrb[0].mxu0
  %372 = vmatprep.mubr.bf16.mxu0 0
  %373 = vmatmul.mubr.bf16.gmra.mrb[0].mxu0 %v171
  %v374 = vpop.f32.mrb[0].mxu0
  %v375 = vadd.f32 %v98, %v374
  %v376 = vpop.f32.mrb[0].mxu0
  %v377 = vpop.f32.mrb[0].mxu0
  %v378 = vadd.f32 %v98, %v377
  %v379 = vpop.f32.mrb[0].mxu0
  %380 = vmatprep.mubr.bf16.mxu0 0
  %381 = vmatmul.mubr.bf16.gmra.mrb[0].mxu0 %v174
  %v382 = vpop.f32.mrb[0].mxu0
  %v383 = vadd.f32 %v98, %v382
  %v384 = vpop.f32.mrb[0].mxu0
  %v385 = vpop.f32.mrb[0].mxu0
  %v386 = vadd.f32 %v98, %v385
  %v387 = vpop.f32.mrb[0].mxu0
  %388 = vmatprep.mubr.bf16.mxu0 0
  %389 = vmatmul.mubr.bf16.gmra.mrb[0].mxu0 %v177
  %v390 = vpop.f32.mrb[0].mxu0
  %v391 = vadd.f32 %v98, %v390
  %v392 = vpop.f32.mrb[0].mxu0
  %v393 = vpop.f32.mrb[0].mxu0
  %v394 = vadd.f32 %v98, %v393
  %v395 = vpop.f32.mrb[0].mxu0
  %396 = vmatprep.mubr.bf16.mxu0 0
  %397 = vmatmul.mubr.bf16.gmra.mrb[0].mxu0 %v180
  %v398 = vpop.f32.mrb[0].mxu0
  %v399 = vadd.f32 %v98, %v398
  %v400 = vpop.f32.mrb[0].mxu0
  %v401 = vpop.f32.mrb[0].mxu0
  %v402 = vadd.f32 %v98, %v401
  %v403 = vpop.f32.mrb[0].mxu0
  %404 = vmatprep.mubr.bf16.mxu0 0
  %405 = vmatmul.mubr.bf16.gmra.mrb[0].mxu0 %v183
  %v406 = vpop.f32.mrb[0].mxu0
  %v407 = vadd.f32 %v98, %v406
  %v408 = vpop.f32.mrb[0].mxu0
  %v409 = vpop.f32.mrb[0].mxu0
  %v410 = vadd.f32 %v98, %v409
  %v411 = vpop.f32.mrb[0].mxu0
  %412 = vmatprep.mubr.bf16.mxu0 0
  %413 = vmatmul.mubr.bf16.gmra.mrb[0].mxu0 %v186
  %v414 = vpop.f32.mrb[0].mxu0
  %v415 = vadd.f32 %v98, %v414
  %v416 = vpop.f32.mrb[0].mxu0
  %v417 = vpop.f32.mrb[0].mxu0
  %v418 = vpop.f32.mrb[0].mxu0
  %419 = vdwg.mxu0
  %v420 = vmax.f32 %v223, 0.0
  %v421 = vmax.f32 %v226, 0.0
  %v422 = vmax.f32 %v231, 0.0
  %v423 = vmax.f32 %v234, 0.0
  %v424 = vmax.f32 %v239, 0.0
  %v425 = vmax.f32 %v242, 0.0
  %v426 = vmax.f32 %v247, 0.0
  %v427 = vmax.f32 %v250, 0.0
  %v428 = vmax.f32 %v255, 0.0
  %v429 = vmax.f32 %v258, 0.0
  %v430 = vmax.f32 %v263, 0.0
  %v431 = vmax.f32 %v266, 0.0
  %v432 = vmax.f32 %v271, 0.0
  %v433 = vmax.f32 %v274, 0.0
  %v434 = vmax.f32 %v279, 0.0
  %v435 = vmax.f32 %v282, 0.0
  %v436 = vmax.f32 %v287, 0.0
  %v437 = vmax.f32 %v290, 0.0
  %v438 = vmax.f32 %v295, 0.0
  %v439 = vmax.f32 %v298, 0.0
  %v440 = vmax.f32 %v303, 0.0
  %v441 = vmax.f32 %v306, 0.0
  %v442 = vmax.f32 %v311, 0.0
  %v443 = vmax.f32 %v314, 0.0
  %v444 = vmax.f32 %v319, 0.0
  %v445 = vmax.f32 %v322, 0.0
  %v446 = vmax.f32 %v327, 0.0
  %v447 = vmax.f32 %v330, 0.0
  %v448 = vmax.f32 %v335, 0.0
  %v449 = vmax.f32 %v338, 0.0
  %v450 = vmax.f32 %v343, 0.0
  %v451 = vmax.f32 %v346, 0.0
  %v452 = vmax.f32 %v351, 0.0
  %v453 = vmax.f32 %v354, 0.0
  %v454 = vmax.f32 %v359, 0.0
  %v455 = vmax.f32 %v362, 0.0
  %v456 = vmax.f32 %v367, 0.0
  %v457 = vmax.f32 %v370, 0.0
  %v458 = vmax.f32 %v375, 0.0
  %v459 = vmax.f32 %v378, 0.0
  %v460 = vmax.f32 %v383, 0.0
  %v461 = vmax.f32 %v386, 0.0
  %v462 = vmax.f32 %v391, 0.0
  %v463 = vmax.f32 %v394, 0.0
  %v464 = vmax.f32 %v399, 0.0
  %v465 = vmax.f32 %v402, 0.0
  %v466 = vmax.f32 %v407, 0.0
  %v467 = vmax.f32 %v410, 0.0
  %v468 = vmax.f32 %v415, 0.0
  %469 = vst.msk [vmem:[%s3] sm:$0xff] %vm112, %v420
  %470 = vst.msk [vmem:[%s3 + $0x8] sm:$0xff] %vm112, %v421
  %471 = vst.msk [vmem:[%s3 + $0x10] sm:$0xff] %vm112, %v422
  %472 = vst.msk [vmem:[%s3 + $0x18] sm:$0xff] %vm112, %v423
  %473 = vst.msk [vmem:[%s3 + $0x20] sm:$0xff] %vm112, %v424
  %474 = vst.msk [vmem:[%s3 + $0x28] sm:$0xff] %vm112, %v425
  %475 = vst.msk [vmem:[%s3 + $0x30] sm:$0xff] %vm112, %v426
  %476 = vst.msk [vmem:[%s3 + $0x38] sm:$0xff] %vm112, %v427
  %477 = vst.msk [vmem:[%s3 + $0x40] sm:$0xff] %vm112, %v428
  %478 = vst.msk [vmem:[%s3 + $0x48] sm:$0xff] %vm112, %v429
  %479 = vst.msk [vmem:[%s3 + $0x50] sm:$0xff] %vm112, %v430
  %480 = vst.msk [vmem:[%s3 + $0x58] sm:$0xff] %vm112, %v431
  %481 = vst.msk [vmem:[%s3 + $0x60] sm:$0xff] %vm112, %v432
  %482 = vst.msk [vmem:[%s3 + $0x68] sm:$0xff] %vm112, %v433
  %483 = vst.msk [vmem:[%s3 + $0x70] sm:$0xff] %vm112, %v434
  %484 = vst.msk [vmem:[%s3 + $0x78] sm:$0xff] %vm112, %v435
  %485 = vst.msk [vmem:[%s3 + $0x80] sm:$0xff] %vm112, %v436
  %486 = vst.msk [vmem:[%s3 + $0x88] sm:$0xff] %vm112, %v437
  %487 = vst.msk [vmem:[%s3 + $0x90] sm:$0xff] %vm112, %v438
  %488 = vst.msk [vmem:[%s3 + $0x98] sm:$0xff] %vm112, %v439
  %489 = vst.msk [vmem:[%s3 + $0xa0] sm:$0xff] %vm112, %v440
  %490 = vst.msk [vmem:[%s3 + $0xa8] sm:$0xff] %vm112, %v441
  %491 = vst.msk [vmem:[%s3 + $0xb0] sm:$0xff] %vm112, %v442
  %492 = vst.msk [vmem:[%s3 + $0xb8] sm:$0xff] %vm112, %v443
  %493 = vst.msk [vmem:[%s3 + $0xc0] sm:$0xff] %vm112, %v444
  %494 = vst.msk [vmem:[%s3 + $0xc8] sm:$0xff] %vm112, %v445
  %495 = vst.msk [vmem:[%s3 + $0xd0] sm:$0xff] %vm112, %v446
  %496 = vst.msk [vmem:[%s3 + $0xd8] sm:$0xff] %vm112, %v447
  %497 = vst.msk [vmem:[%s3 + $0xe0] sm:$0xff] %vm112, %v448
  %498 = vst.msk [vmem:[%s3 + $0xe8] sm:$0xff] %vm112, %v449
  %499 = vst.msk [vmem:[%s3 + $0xf0] sm:$0xff] %vm112, %v450
  %500 = vst.msk [vmem:[%s3 + $0xf8] sm:$0xff] %vm112, %v451
  %501 = vst.msk [vmem:[%s3 + $0x100] sm:$0xff] %vm112, %v452
  %502 = vst.msk [vmem:[%s3 + $0x108] sm:$0xff] %vm112, %v453
  %503 = vst.msk [vmem:[%s3 + $0x110] sm:$0xff] %vm112, %v454
  %504 = vst.msk [vmem:[%s3 + $0x118] sm:$0xff] %vm112, %v455
  %505 = vst.msk [vmem:[%s3 + $0x120] sm:$0xff] %vm112, %v456
  %506 = vst.msk [vmem:[%s3 + $0x128] sm:$0xff] %vm112, %v457
  %507 = vst.msk [vmem:[%s3 + $0x130] sm:$0xff] %vm112, %v458
  %508 = vst.msk [vmem:[%s3 + $0x138] sm:$0xff] %vm112, %v459
  %509 = vst.msk [vmem:[%s3 + $0x140] sm:$0xff] %vm112, %v460
  %510 = vst.msk [vmem:[%s3 + $0x148] sm:$0xff] %vm112, %v461
  %511 = vst.msk [vmem:[%s3 + $0x150] sm:$0xff] %vm112, %v462
  %512 = vst.msk [vmem:[%s3 + $0x158] sm:$0xff] %vm112, %v463
  %513 = vst.msk [vmem:[%s3 + $0x160] sm:$0xff] %vm112, %v464
  %514 = vst.msk [vmem:[%s3 + $0x168] sm:$0xff] %vm112, %v465
  %515 = vst.msk [vmem:[%s3 + $0x170] sm:$0xff] %vm112, %v466
  %516 = vst.msk [vmem:[%s3 + $0x178] sm:$0xff] %vm112, %v467
  %517 = vst.msk [vmem:[%s3 + $0x180] sm:$0xff] %vm112, %v468
  // Predicated region
  $region14: #{conv_cvae_forward.5} parent=0 // pred_check
    _
  $region15: #{conv_cvae_forward.5} parent=0 // pred_check_branch
    %519 = sbr.rel (0) target = $region17
  $region16: #{conv_cvae_forward.5} parent=0 // pred_region
    _
  $region17: #{conv_cvae_forward.5} parent=0 // pred_fallthru
    _
  // Predicated region
  $region18: #{conv_cvae_forward.5} parent=0 // pred_check
    _
  $region19: #{conv_cvae_forward.5} parent=0 // pred_check_branch
    %521 = sbr.rel (0) target = $region21
  $region20: #{conv_cvae_forward.5} parent=0 // pred_region
    _
  $region21: #{conv_cvae_forward.5} parent=0 // pred_fallthru
    _

// kernel: conv_cvae_forward.6
$region0: #{conv_cvae_forward.6}
  #allocation0 [shape = 'u32[]', space=smem, size = 0x4, offset = 0x4, fixed_abs, tag = 'smem constant byte address 0x4 - core index']
  #allocation1 [shape = 'u32[144,128]{1,0:T(1,128)}', space=vmem, size = 0x12000, scoped, tag = 'internal scratch']
  %s0 = inlined_call_operand.vmem [shape: f32[98,512], index: 0, kind: input, shape index: {}]
  %s1 = inlined_call_operand.vmem [shape: bf16[512,64], index: 1, kind: input, shape index: {}]
  %s2 = inlined_call_operand.vmem [shape: f32[1,64], index: 2, kind: input, shape index: {}]
  %s3 = inlined_call_operand.vmem [shape: f32[98,64], index: 3, kind: output, shape index: {}]
  %s4 = sld [smem:[#allocation0]]
  $region22: #{conv_cvae_forward.6} parent=0
    _
  %s6 = ssub.s32 1, %s4
  %s7 = scalar_select 0, %s6, %s4
  // Predicated region
  $region2: #{conv_cvae_forward.6} parent=0 // pred_check
    _
  $region3: #{conv_cvae_forward.6} parent=0 // pred_check_branch
    %9 = sbr.rel (0) target = $region5
  $region4: #{conv_cvae_forward.6} parent=0 // pred_region
    _
  $region5: #{conv_cvae_forward.6} parent=0 // pred_fallthru
    _
  // Predicated region
  $region6: #{conv_cvae_forward.6} parent=0 // pred_check
    _
  $region7: #{conv_cvae_forward.6} parent=0 // pred_check_branch
    %11 = sbr.rel (0) target = $region9
  $region8: #{conv_cvae_forward.6} parent=0 // pred_region
    _
  $region9: #{conv_cvae_forward.6} parent=0 // pred_fallthru
    _
  // Predicated region
  $region10: #{conv_cvae_forward.6} parent=0 // pred_check
    _
  $region11: #{conv_cvae_forward.6} parent=0 // pred_check_branch
    %13 = sbr.rel (0) target = $region13
  $region12: #{conv_cvae_forward.6} parent=0 // pred_region
    _
  $region13: #{conv_cvae_forward.6} parent=0 // pred_fallthru
    _
  %v15 = vld [vmem:[%s0] sm:$0xff]
  %v16 = vld [vmem:[%s0 + $0x8] sm:$0xff]
  %v17 = vld [vmem:[%s0 + $0x10] sm:$0xff]
  %v18 = vld [vmem:[%s0 + $0x18] sm:$0xff]
  %v19 = vld [vmem:[%s0 + $0x20] sm:$0xff]
  %v20 = vld [vmem:[%s0 + $0x28] sm:$0xff]
  %v21 = vld [vmem:[%s0 + $0x30] sm:$0xff]
  %v22 = vld [vmem:[%s0 + $0x38] sm:$0xff]
  %v23 = vld [vmem:[%s0 + $0x40] sm:$0xff]
  %v24 = vld [vmem:[%s0 + $0x48] sm:$0xff]
  %v25 = vld [vmem:[%s0 + $0x50] sm:$0xff]
  %v26 = vld [vmem:[%s0 + $0x58] sm:$0xff]
  %v27 = vld [vmem:[%s0 + $0x60] sm:$0xff]
  %v28 = vld [vmem:[%s0 + $0x68] sm:$0xff]
  %v29 = vld [vmem:[%s0 + $0x70] sm:$0xff]
  %v30 = vld [vmem:[%s0 + $0x78] sm:$0xff]
  %v31 = vld [vmem:[%s0 + $0x80] sm:$0xff]
  %v32 = vld [vmem:[%s0 + $0x88] sm:$0xff]
  %v33 = vld [vmem:[%s0 + $0x90] sm:$0xff]
  %v34 = vld [vmem:[%s0 + $0x98] sm:$0xff]
  %v35 = vld [vmem:[%s0 + $0xa0] sm:$0xff]
  %v36 = vld [vmem:[%s0 + $0xa8] sm:$0xff]
  %v37 = vld [vmem:[%s0 + $0xb0] sm:$0xff]
  %v38 = vld [vmem:[%s0 + $0xb8] sm:$0xff]
  %v39 = vld [vmem:[%s0 + $0xc0] sm:$0xff]
  %v40 = vld [vmem:[%s0 + $0xc8] sm:$0xff]
  %v41 = vld [vmem:[%s0 + $0xd0] sm:$0xff]
  %v42 = vld [vmem:[%s0 + $0xd8] sm:$0xff]
  %v43 = vld [vmem:[%s0 + $0xe0] sm:$0xff]
  %v44 = vld [vmem:[%s0 + $0xe8] sm:$0xff]
  %v45 = vld [vmem:[%s0 + $0xf0] sm:$0xff]
  %v46 = vld [vmem:[%s0 + $0xf8] sm:$0xff]
  %v47 = vld [vmem:[%s0 + $0x100] sm:$0xff]
  %v48 = vld [vmem:[%s0 + $0x108] sm:$0xff]
  %v49 = vld [vmem:[%s0 + $0x110] sm:$0xff]
  %v50 = vld [vmem:[%s0 + $0x118] sm:$0xff]
  %v51 = vld [vmem:[%s0 + $0x120] sm:$0xff]
  %v52 = vld [vmem:[%s0 + $0x128] sm:$0xff]
  %v53 = vld [vmem:[%s0 + $0x130] sm:$0xff]
  %v54 = vld [vmem:[%s0 + $0x138] sm:$0xff]
  %v55 = vld [vmem:[%s0 + $0x140] sm:$0xff]
  %v56 = vld [vmem:[%s0 + $0x148] sm:$0xff]
  %v57 = vld [vmem:[%s0 + $0x150] sm:$0xff]
  %v58 = vld [vmem:[%s0 + $0x158] sm:$0xff]
  %v59 = vld [vmem:[%s0 + $0x160] sm:$0xff]
  %v60 = vld [vmem:[%s0 + $0x168] sm:$0xff]
  %v61 = vld [vmem:[%s0 + $0x170] sm:$0xff]
  %v62 = vld [vmem:[%s0 + $0x178] sm:$0xff]
  %v63 = vld [vmem:[%s0 + $0x180] sm:$0x3]
  %v64 = vld [vmem:[%s0 + $0x188] sm:$0x3]
  %v65 = vld [vmem:[%s0 + $0x190] sm:$0x3]
  %v66 = vld [vmem:[%s0 + $0x198] sm:$0x3]
  %v67 = vpack.c.bf16 %v19, %v15
  %v68 = vpack.c.bf16 %v20, %v16
  %v69 = vpack.c.bf16 %v21, %v17
  %v70 = vpack.c.bf16 %v22, %v18
  %v71 = vpack.c.bf16 %v27, %v23
  %v72 = vpack.c.bf16 %v28, %v24
  %v73 = vpack.c.bf16 %v29, %v25
  %v74 = vpack.c.bf16 %v30, %v26
  %v75 = vpack.c.bf16 %v35, %v31
  %v76 = vpack.c.bf16 %v36, %v32
  %v77 = vpack.c.bf16 %v37, %v33
  %v78 = vpack.c.bf16 %v38, %v34
  %v79 = vpack.c.bf16 %v43, %v39
  %v80 = vpack.c.bf16 %v44, %v40
  %v81 = vpack.c.bf16 %v45, %v41
  %v82 = vpack.c.bf16 %v46, %v42
  %v83 = vpack.c.bf16 %v51, %v47
  %v84 = vpack.c.bf16 %v52, %v48
  %v85 = vpack.c.bf16 %v53, %v49
  %v86 = vpack.c.bf16 %v54, %v50
  %v87 = vpack.c.bf16 %v59, %v55
  %v88 = vpack.c.bf16 %v60, %v56
  %v89 = vpack.c.bf16 %v61, %v57
  %v90 = vpack.c.bf16 %v62, %v58
  %v91 = vpack.c.bf16 %v63, %v63
  %v92 = vpack.c.bf16 %v64, %v64
  %v93 = vpack.c.bf16 %v65, %v65
  %v94 = vpack.c.bf16 %v66, %v66
  %v95 = vld [vmem:[%s1] sm:$0xf]
  %v96 = vld [vmem:[%s1 + $0x4] sm:$0xf]
  %v97 = vld [vmem:[%s1 + $0x8] sm:$0xf]
  %v98 = vld [vmem:[%s1 + $0xc] sm:$0xf]
  %v99 = vld [vmem:[%s1 + $0x10] sm:$0xf]
  %v100 = vld [vmem:[%s1 + $0x14] sm:$0xf]
  %v101 = vld [vmem:[%s1 + $0x18] sm:$0xf]
  %v102 = vld [vmem:[%s1 + $0x1c] sm:$0xf]
  %v103 = vld [vmem:[%s1 + $0x20] sm:$0xf]
  %v104 = vld [vmem:[%s1 + $0x24] sm:$0xf]
  %v105 = vld [vmem:[%s1 + $0x28] sm:$0xf]
  %v106 = vld [vmem:[%s1 + $0x2c] sm:$0xf]
  %v107 = vld [vmem:[%s1 + $0x30] sm:$0xf]
  %v108 = vld [vmem:[%s1 + $0x34] sm:$0xf]
  %v109 = vld [vmem:[%s1 + $0x38] sm:$0xf]
  %v110 = vld [vmem:[%s1 + $0x3c] sm:$0xf]
  %v111 = vld [vmem:[%s1 + $0x40] sm:$0xf]
  %v112 = vld [vmem:[%s1 + $0x44] sm:$0xf]
  %v113 = vld [vmem:[%s1 + $0x48] sm:$0xf]
  %v114 = vld [vmem:[%s1 + $0x4c] sm:$0xf]
  %v115 = vld [vmem:[%s1 + $0x50] sm:$0xf]
  %v116 = vld [vmem:[%s1 + $0x54] sm:$0xf]
  %v117 = vld [vmem:[%s1 + $0x58] sm:$0xf]
  %v118 = vld [vmem:[%s1 + $0x5c] sm:$0xf]
  %v119 = vld [vmem:[%s1 + $0x60] sm:$0xf]
  %v120 = vld [vmem:[%s1 + $0x64] sm:$0xf]
  %v121 = vld [vmem:[%s1 + $0x68] sm:$0xf]
  %v122 = vld [vmem:[%s1 + $0x6c] sm:$0xf]
  %v123 = vld [vmem:[%s1 + $0x70] sm:$0xf]
  %v124 = vld [vmem:[%s1 + $0x74] sm:$0xf]
  %v125 = vld [vmem:[%s1 + $0x78] sm:$0xf]
  %v126 = vld [vmem:[%s1 + $0x7c] sm:$0xf]
  %v127 = vld [vmem:[%s1 + $0x80] sm:$0xf]
  %v128 = vld [vmem:[%s1 + $0x84] sm:$0xf]
  %v129 = vld [vmem:[%s1 + $0x88] sm:$0xf]
  %v130 = vld [vmem:[%s1 + $0x8c] sm:$0xf]
  %v131 = vld [vmem:[%s1 + $0x90] sm:$0xf]
  %v132 = vld [vmem:[%s1 + $0x94] sm:$0xf]
  %v133 = vld [vmem:[%s1 + $0x98] sm:$0xf]
  %v134 = vld [vmem:[%s1 + $0x9c] sm:$0xf]
  %v135 = vld [vmem:[%s1 + $0xa0] sm:$0xf]
  %v136 = vld [vmem:[%s1 + $0xa4] sm:$0xf]
  %v137 = vld [vmem:[%s1 + $0xa8] sm:$0xf]
  %v138 = vld [vmem:[%s1 + $0xac] sm:$0xf]
  %v139 = vld [vmem:[%s1 + $0xb0] sm:$0xf]
  %v140 = vld [vmem:[%s1 + $0xb4] sm:$0xf]
  %v141 = vld [vmem:[%s1 + $0xb8] sm:$0xf]
  %v142 = vld [vmem:[%s1 + $0xbc] sm:$0xf]
  %v143 = vld [vmem:[%s1 + $0xc0] sm:$0xf]
  %v144 = vld [vmem:[%s1 + $0xc4] sm:$0xf]
  %v145 = vld [vmem:[%s1 + $0xc8] sm:$0xf]
  %v146 = vld [vmem:[%s1 + $0xcc] sm:$0xf]
  %v147 = vld [vmem:[%s1 + $0xd0] sm:$0xf]
  %v148 = vld [vmem:[%s1 + $0xd4] sm:$0xf]
  %v149 = vld [vmem:[%s1 + $0xd8] sm:$0xf]
  %v150 = vld [vmem:[%s1 + $0xdc] sm:$0xf]
  %v151 = vld [vmem:[%s1 + $0xe0] sm:$0xf]
  %v152 = vld [vmem:[%s1 + $0xe4] sm:$0xf]
  %v153 = vld [vmem:[%s1 + $0xe8] sm:$0xf]
  %v154 = vld [vmem:[%s1 + $0xec] sm:$0xf]
  %v155 = vld [vmem:[%s1 + $0xf0] sm:$0xf]
  %v156 = vld [vmem:[%s1 + $0xf4] sm:$0xf]
  %v157 = vld [vmem:[%s1 + $0xf8] sm:$0xf]
  %v158 = vld [vmem:[%s1 + $0xfc] sm:$0xf]
  %v159 = vld [vmem:[%s2] sm:$0x1]
  %v161 = vlaneseq
  %v162 = vshrl.u32 %v161, 7
  %v163 = vsub.s32 0, %v162
  %v164 = vrot.slane %v159, %v163
  %v230 = vunpack.c.l.b16 %v95
  %v231 = vunpack.c.l.b16 %v96
  %v232 = vunpack.c.l.b16 %v97
  %v233 = vunpack.c.l.b16 %v98
  %v234 = vunpack.c.l.b16 %v99
  %v235 = vunpack.c.l.b16 %v100
  %v236 = vunpack.c.l.b16 %v101
  %v237 = vunpack.c.l.b16 %v102
  %v238 = vunpack.c.l.b16 %v103
  %v239 = vunpack.c.l.b16 %v104
  %v240 = vunpack.c.l.b16 %v105
  %v241 = vunpack.c.l.b16 %v106
  %v242 = vunpack.c.l.b16 %v107
  %v243 = vunpack.c.l.b16 %v108
  %v244 = vunpack.c.l.b16 %v109
  %v245 = vunpack.c.l.b16 %v110
  %v246 = vunpack.c.l.b16 %v111
  %v247 = vunpack.c.l.b16 %v112
  %v248 = vunpack.c.l.b16 %v113
  %v249 = vunpack.c.l.b16 %v114
  %v250 = vunpack.c.l.b16 %v115
  %v251 = vunpack.c.l.b16 %v116
  %v252 = vunpack.c.l.b16 %v117
  %v253 = vunpack.c.l.b16 %v118
  %v254 = vunpack.c.l.b16 %v119
  %v255 = vunpack.c.l.b16 %v120
  %v256 = vunpack.c.l.b16 %v121
  %v257 = vunpack.c.l.b16 %v122
  %v258 = vunpack.c.l.b16 %v123
  %v259 = vunpack.c.l.b16 %v124
  %v260 = vunpack.c.l.b16 %v125
  %v261 = vunpack.c.l.b16 %v126
  %v262 = vunpack.c.l.b16 %v127
  %v263 = vunpack.c.l.b16 %v128
  %v264 = vunpack.c.l.b16 %v129
  %v265 = vunpack.c.l.b16 %v130
  %v266 = vunpack.c.l.b16 %v131
  %v267 = vunpack.c.l.b16 %v132
  %v268 = vunpack.c.l.b16 %v133
  %v269 = vunpack.c.l.b16 %v134
  %v270 = vunpack.c.l.b16 %v135
  %v271 = vunpack.c.l.b16 %v136
  %v272 = vunpack.c.l.b16 %v137
  %v273 = vunpack.c.l.b16 %v138
  %v274 = vunpack.c.l.b16 %v139
  %v275 = vunpack.c.l.b16 %v140
  %v276 = vunpack.c.l.b16 %v141
  %v277 = vunpack.c.l.b16 %v142
  %v278 = vunpack.c.l.b16 %v143
  %v279 = vunpack.c.l.b16 %v144
  %v280 = vunpack.c.l.b16 %v145
  %v281 = vunpack.c.l.b16 %v146
  %v282 = vunpack.c.l.b16 %v147
  %v283 = vunpack.c.l.b16 %v148
  %v284 = vunpack.c.l.b16 %v149
  %v285 = vunpack.c.l.b16 %v150
  %v286 = vunpack.c.l.b16 %v151
  %v287 = vunpack.c.l.b16 %v152
  %v288 = vunpack.c.l.b16 %v153
  %v289 = vunpack.c.l.b16 %v154
  %v290 = vunpack.c.l.b16 %v155
  %v291 = vunpack.c.l.b16 %v156
  %v292 = vunpack.c.l.b16 %v157
  %v293 = vunpack.c.l.b16 %v158
  %v294 = vpack.c.b16 %v231, %v230
  %v295 = vpack.c.b16 %v233, %v232
  %v296 = vpack.c.b16 %v235, %v234
  %v297 = vpack.c.b16 %v237, %v236
  %v298 = vpack.c.b16 %v239, %v238
  %v299 = vpack.c.b16 %v241, %v240
  %v300 = vpack.c.b16 %v243, %v242
  %v301 = vpack.c.b16 %v245, %v244
  %v302 = vpack.c.b16 %v247, %v246
  %v303 = vpack.c.b16 %v249, %v248
  %v304 = vpack.c.b16 %v251, %v250
  %v305 = vpack.c.b16 %v253, %v252
  %v306 = vpack.c.b16 %v255, %v254
  %v307 = vpack.c.b16 %v257, %v256
  %v308 = vpack.c.b16 %v259, %v258
  %v309 = vpack.c.b16 %v261, %v260
  %v310 = vpack.c.b16 %v263, %v262
  %v311 = vpack.c.b16 %v265, %v264
  %v312 = vpack.c.b16 %v267, %v266
  %v313 = vpack.c.b16 %v269, %v268
  %v314 = vpack.c.b16 %v271, %v270
  %v315 = vpack.c.b16 %v273, %v272
  %v316 = vpack.c.b16 %v275, %v274
  %v317 = vpack.c.b16 %v277, %v276
  %v318 = vpack.c.b16 %v279, %v278
  %v319 = vpack.c.b16 %v281, %v280
  %v320 = vpack.c.b16 %v283, %v282
  %v321 = vpack.c.b16 %v285, %v284
  %v322 = vpack.c.b16 %v287, %v286
  %v323 = vpack.c.b16 %v289, %v288
  %v324 = vpack.c.b16 %v291, %v290
  %v325 = vpack.c.b16 %v293, %v292
  %358 = vmatprep.subr.bf16.mxu0 0
  %359 = vmatpush1.bf16.msra.mxu0 %v294
  %360 = vmatprep.subr.bf16.mxu0 0
  %361 = vmatpush1.bf16.msra.mxu0 %v295
  %362 = vmatprep.subr.bf16.mxu0 0
  %363 = vmatpush1.bf16.msra.mxu0 %v296
  %364 = vmatprep.subr.bf16.mxu0 0
  %365 = vmatpush1.bf16.msra.mxu0 %v297
  %366 = vmatprep.subr.bf16.mxu0 0
  %367 = vmatpush1.bf16.msra.mxu0 %v298
  %368 = vmatprep.subr.bf16.mxu0 0
  %369 = vmatpush1.bf16.msra.mxu0 %v299
  %370 = vmatprep.subr.bf16.mxu0 0
  %371 = vmatpush1.bf16.msra.mxu0 %v300
  %372 = vmatprep.subr.bf16.mxu0 0
  %373 = vmatpush1.bf16.msra.mxu0 %v301
  %374 = vmatprep.subr.bf16.mxu0 0
  %375 = vmatpush1.bf16.msra.mxu0 %v302
  %376 = vmatprep.subr.bf16.mxu0 0
  %377 = vmatpush1.bf16.msra.mxu0 %v303
  %378 = vmatprep.subr.bf16.mxu0 0
  %379 = vmatpush1.bf16.msra.mxu0 %v304
  %380 = vmatprep.subr.bf16.mxu0 0
  %381 = vmatpush1.bf16.msra.mxu0 %v305
  %382 = vmatprep.subr.bf16.mxu0 0
  %383 = vmatpush1.bf16.msra.mxu0 %v306
  %384 = vmatprep.subr.bf16.mxu0 0
  %385 = vmatpush1.bf16.msra.mxu0 %v307
  %386 = vmatprep.subr.bf16.mxu0 0
  %387 = vmatpush1.bf16.msra.mxu0 %v308
  %388 = vmatprep.subr.bf16.mxu0 0
  %389 = vmatpush1.bf16.msra.mxu0 %v309
  %390 = vmatprep.mubr.bf16.mxu0 %v68
  %391 = vmatmul.mubr.bf16.gmra.mrb[0].mxu0 %v67
  %v392 = vpop.f32.mrb[0].mxu0
  %v393 = vadd.f32 %v164, %v392
  %v394 = vpop.f32.mrb[0].mxu0
  %v395 = vpop.f32.mrb[0].mxu0
  %v396 = vadd.f32 %v164, %v395
  %v397 = vpop.f32.mrb[0].mxu0
  %398 = vmatprep.mubr.bf16.mxu0 %v72
  %399 = vmatmul.mubr.bf16.gmra.mrb[0].mxu0 %v71
  %v400 = vpop.f32.mrb[0].mxu0
  %v401 = vadd.f32 %v164, %v400
  %v402 = vpop.f32.mrb[0].mxu0
  %v403 = vpop.f32.mrb[0].mxu0
  %v404 = vadd.f32 %v164, %v403
  %v405 = vpop.f32.mrb[0].mxu0
  %406 = vmatprep.mubr.bf16.mxu0 %v76
  %407 = vmatmul.mubr.bf16.gmra.mrb[0].mxu0 %v75
  %v408 = vpop.f32.mrb[0].mxu0
  %v409 = vadd.f32 %v164, %v408
  %v410 = vpop.f32.mrb[0].mxu0
  %v411 = vpop.f32.mrb[0].mxu0
  %v412 = vadd.f32 %v164, %v411
  %v413 = vpop.f32.mrb[0].mxu0
  %414 = vmatprep.mubr.bf16.mxu0 %v80
  %415 = vmatmul.mubr.bf16.gmra.mrb[0].mxu0 %v79
  %v416 = vpop.f32.mrb[0].mxu0
  %v417 = vadd.f32 %v164, %v416
  %v418 = vpop.f32.mrb[0].mxu0
  %v419 = vpop.f32.mrb[0].mxu0
  %v420 = vadd.f32 %v164, %v419
  %v421 = vpop.f32.mrb[0].mxu0
  %422 = vmatprep.mubr.bf16.mxu0 %v84
  %423 = vmatmul.mubr.bf16.gmra.mrb[0].mxu0 %v83
  %v424 = vpop.f32.mrb[0].mxu0
  %v425 = vadd.f32 %v164, %v424
  %v426 = vpop.f32.mrb[0].mxu0
  %v427 = vpop.f32.mrb[0].mxu0
  %v428 = vadd.f32 %v164, %v427
  %v429 = vpop.f32.mrb[0].mxu0
  %430 = vmatprep.mubr.bf16.mxu0 %v88
  %431 = vmatmul.mubr.bf16.gmra.mrb[0].mxu0 %v87
  %v432 = vpop.f32.mrb[0].mxu0
  %v433 = vadd.f32 %v164, %v432
  %v434 = vpop.f32.mrb[0].mxu0
  %v435 = vpop.f32.mrb[0].mxu0
  %v436 = vadd.f32 %v164, %v435
  %v437 = vpop.f32.mrb[0].mxu0
  %438 = vmatprep.mubr.bf16.mxu0 %v92
  %439 = vmatmul.mubr.bf16.gmra.mrb[0].mxu0 %v91
  %v440 = vpop.f32.mrb[0].mxu0
  %v441 = vadd.f32 %v164, %v440
  %v442 = vpop.f32.mrb[0].mxu0
  %v443 = vpop.f32.mrb[0].mxu0
  %v444 = vpop.f32.mrb[0].mxu0
  %445 = vdwg.mxu0
  %446 = vmatprep.subr.bf16.mxu0 0
  %447 = vmatpush1.bf16.msra.mxu0 %v310
  %448 = vmatprep.subr.bf16.mxu0 0
  %449 = vmatpush1.bf16.msra.mxu0 %v311
  %450 = vmatprep.subr.bf16.mxu0 0
  %451 = vmatpush1.bf16.msra.mxu0 %v312
  %452 = vmatprep.subr.bf16.mxu0 0
  %453 = vmatpush1.bf16.msra.mxu0 %v313
  %454 = vmatprep.subr.bf16.mxu0 0
  %455 = vmatpush1.bf16.msra.mxu0 %v314
  %456 = vmatprep.subr.bf16.mxu0 0
  %457 = vmatpush1.bf16.msra.mxu0 %v315
  %458 = vmatprep.subr.bf16.mxu0 0
  %459 = vmatpush1.bf16.msra.mxu0 %v316
  %460 = vmatprep.subr.bf16.mxu0 0
  %461 = vmatpush1.bf16.msra.mxu0 %v317
  %462 = vmatprep.subr.bf16.mxu0 0
  %463 = vmatpush1.bf16.msra.mxu0 %v318
  %464 = vmatprep.subr.bf16.mxu0 0
  %465 = vmatpush1.bf16.msra.mxu0 %v319
  %466 = vmatprep.subr.bf16.mxu0 0
  %467 = vmatpush1.bf16.msra.mxu0 %v320
  %468 = vmatprep.subr.bf16.mxu0 0
  %469 = vmatpush1.bf16.msra.mxu0 %v321
  %470 = vmatprep.subr.bf16.mxu0 0
  %471 = vmatpush1.bf16.msra.mxu0 %v322
  %472 = vmatprep.subr.bf16.mxu0 0
  %473 = vmatpush1.bf16.msra.mxu0 %v323
  %474 = vmatprep.subr.bf16.mxu0 0
  %475 = vmatpush1.bf16.msra.mxu0 %v324
  %476 = vmatprep.subr.bf16.mxu0 0
  %477 = vmatpush1.bf16.msra.mxu0 %v325
  %478 = vmatprep.mubr.bf16.mxu0 %v70
  %479 = vmatmul.mubr.bf16.gmra.mrb[0].mxu0 %v69
  %v480 = vpop.f32.mrb[0].mxu0
  %v481 = vadd.f32 %v393, %v480
  %v482 = vpop.f32.mrb[0].mxu0
  %v483 = vpop.f32.mrb[0].mxu0
  %v484 = vadd.f32 %v396, %v483
  %v485 = vpop.f32.mrb[0].mxu0
  %486 = vmatprep.mubr.bf16.mxu0 %v74
  %487 = vmatmul.mubr.bf16.gmra.mrb[0].mxu0 %v73
  %v488 = vpop.f32.mrb[0].mxu0
  %v489 = vadd.f32 %v401, %v488
  %v490 = vpop.f32.mrb[0].mxu0
  %v491 = vpop.f32.mrb[0].mxu0
  %v492 = vadd.f32 %v404, %v491
  %v493 = vpop.f32.mrb[0].mxu0
  %494 = vmatprep.mubr.bf16.mxu0 %v78
  %495 = vmatmul.mubr.bf16.gmra.mrb[0].mxu0 %v77
  %v496 = vpop.f32.mrb[0].mxu0
  %v497 = vadd.f32 %v409, %v496
  %v498 = vpop.f32.mrb[0].mxu0
  %v499 = vpop.f32.mrb[0].mxu0
  %v500 = vadd.f32 %v412, %v499
  %v501 = vpop.f32.mrb[0].mxu0
  %502 = vmatprep.mubr.bf16.mxu0 %v82
  %503 = vmatmul.mubr.bf16.gmra.mrb[0].mxu0 %v81
  %v504 = vpop.f32.mrb[0].mxu0
  %v505 = vadd.f32 %v417, %v504
  %v506 = vpop.f32.mrb[0].mxu0
  %v507 = vpop.f32.mrb[0].mxu0
  %v508 = vadd.f32 %v420, %v507
  %v509 = vpop.f32.mrb[0].mxu0
  %510 = vmatprep.mubr.bf16.mxu0 %v86
  %511 = vmatmul.mubr.bf16.gmra.mrb[0].mxu0 %v85
  %v512 = vpop.f32.mrb[0].mxu0
  %v513 = vadd.f32 %v425, %v512
  %v514 = vpop.f32.mrb[0].mxu0
  %v515 = vpop.f32.mrb[0].mxu0
  %v516 = vadd.f32 %v428, %v515
  %v517 = vpop.f32.mrb[0].mxu0
  %518 = vmatprep.mubr.bf16.mxu0 %v90
  %519 = vmatmul.mubr.bf16.gmra.mrb[0].mxu0 %v89
  %v520 = vpop.f32.mrb[0].mxu0
  %v521 = vadd.f32 %v433, %v520
  %v522 = vpop.f32.mrb[0].mxu0
  %v523 = vpop.f32.mrb[0].mxu0
  %v524 = vadd.f32 %v436, %v523
  %v525 = vpop.f32.mrb[0].mxu0
  %526 = vmatprep.mubr.bf16.mxu0 %v94
  %527 = vmatmul.mubr.bf16.gmra.mrb[0].mxu0 %v93
  %v528 = vpop.f32.mrb[0].mxu0
  %v529 = vadd.f32 %v441, %v528
  %v530 = vpop.f32.mrb[0].mxu0
  %v531 = vpop.f32.mrb[0].mxu0
  %v532 = vpop.f32.mrb[0].mxu0
  %533 = vdwg.mxu0
  %v534 = vmax.f32 %v481, 0.0
  %v535 = vmax.f32 %v484, 0.0
  %v536 = vmax.f32 %v489, 0.0
  %v537 = vmax.f32 %v492, 0.0
  %v538 = vmax.f32 %v497, 0.0
  %v539 = vmax.f32 %v500, 0.0
  %v540 = vmax.f32 %v505, 0.0
  %v541 = vmax.f32 %v508, 0.0
  %v542 = vmax.f32 %v513, 0.0
  %v543 = vmax.f32 %v516, 0.0
  %v544 = vmax.f32 %v521, 0.0
  %v545 = vmax.f32 %v524, 0.0
  %v546 = vmax.f32 %v529, 0.0
  %vm547 = vcmask 523264
  %548 = vst.msk [vmem:[%s3] sm:$0xff] %vm547, %v534
  %549 = vst.msk [vmem:[%s3 + $0x8] sm:$0xff] %vm547, %v535
  %550 = vst.msk [vmem:[%s3 + $0x10] sm:$0xff] %vm547, %v536
  %551 = vst.msk [vmem:[%s3 + $0x18] sm:$0xff] %vm547, %v537
  %552 = vst.msk [vmem:[%s3 + $0x20] sm:$0xff] %vm547, %v538
  %553 = vst.msk [vmem:[%s3 + $0x28] sm:$0xff] %vm547, %v539
  %554 = vst.msk [vmem:[%s3 + $0x30] sm:$0xff] %vm547, %v540
  %555 = vst.msk [vmem:[%s3 + $0x38] sm:$0xff] %vm547, %v541
  %556 = vst.msk [vmem:[%s3 + $0x40] sm:$0xff] %vm547, %v542
  %557 = vst.msk [vmem:[%s3 + $0x48] sm:$0xff] %vm547, %v543
  %558 = vst.msk [vmem:[%s3 + $0x50] sm:$0xff] %vm547, %v544
  %559 = vst.msk [vmem:[%s3 + $0x58] sm:$0xff] %vm547, %v545
  %vm560 = vcmask 517120
  %561 = vst.msk [vmem:[%s3 + $0x60] sm:$0x3] %vm560, %v546
  // Predicated region
  $region14: #{conv_cvae_forward.6} parent=0 // pred_check
    _
  $region15: #{conv_cvae_forward.6} parent=0 // pred_check_branch
    %563 = sbr.rel (0) target = $region17
  $region16: #{conv_cvae_forward.6} parent=0 // pred_region
    _
  $region17: #{conv_cvae_forward.6} parent=0 // pred_fallthru
    _
  // Predicated region
  $region18: #{conv_cvae_forward.6} parent=0 // pred_check
    _
  $region19: #{conv_cvae_forward.6} parent=0 // pred_check_branch
    %565 = sbr.rel (0) target = $region21
  $region20: #{conv_cvae_forward.6} parent=0 // pred_region
    _
  $region21: #{conv_cvae_forward.6} parent=0 // pred_fallthru
    _

// kernel: conv_cvae_forward.8
$region0: #{conv_cvae_forward.8}
  #allocation0 [shape = 'u32[]', space=smem, size = 0x4, offset = 0x4, fixed_abs, tag = 'smem constant byte address 0x4 - core index']
  #allocation1 [shape = 'u32[144,128]{1,0:T(1,128)}', space=vmem, size = 0x12000, scoped, tag = 'internal scratch']
  %s0 = inlined_call_operand.vmem [shape: f32[98,576], index: 0, kind: input, shape index: {}]
  %s1 = inlined_call_operand.vmem [shape: bf16[576,128], index: 1, kind: input, shape index: {}]
  %s2 = inlined_call_operand.vmem [shape: f32[1,128], index: 2, kind: input, shape index: {}]
  %s3 = inlined_call_operand.vmem [shape: f32[98,128], index: 3, kind: output, shape index: {}]
  %s4 = sld [smem:[#allocation0]]
  $region22: #{conv_cvae_forward.8} parent=0
    _
  %s6 = ssub.s32 1, %s4
  %s7 = scalar_select 0, %s6, %s4
  // Predicated region
  $region2: #{conv_cvae_forward.8} parent=0 // pred_check
    _
  $region3: #{conv_cvae_forward.8} parent=0 // pred_check_branch
    %9 = sbr.rel (0) target = $region5
  $region4: #{conv_cvae_forward.8} parent=0 // pred_region
    _
  $region5: #{conv_cvae_forward.8} parent=0 // pred_fallthru
    _
  // Predicated region
  $region6: #{conv_cvae_forward.8} parent=0 // pred_check
    _
  $region7: #{conv_cvae_forward.8} parent=0 // pred_check_branch
    %11 = sbr.rel (0) target = $region9
  $region8: #{conv_cvae_forward.8} parent=0 // pred_region
    _
  $region9: #{conv_cvae_forward.8} parent=0 // pred_fallthru
    _
  // Predicated region
  $region10: #{conv_cvae_forward.8} parent=0 // pred_check
    _
  $region11: #{conv_cvae_forward.8} parent=0 // pred_check_branch
    %13 = sbr.rel (0) target = $region13
  $region12: #{conv_cvae_forward.8} parent=0 // pred_region
    _
  $region13: #{conv_cvae_forward.8} parent=0 // pred_fallthru
    _
  %v15 = vld [vmem:[%s0] sm:$0xff]
  %v16 = vld [vmem:[%s0 + $0x8] sm:$0xff]
  %v17 = vld [vmem:[%s0 + $0x10] sm:$0xff]
  %v18 = vld [vmem:[%s0 + $0x18] sm:$0xff]
  %v19 = vld [vmem:[%s0 + $0x20] sm:$0xff]
  %v20 = vld [vmem:[%s0 + $0x28] sm:$0xff]
  %v21 = vld [vmem:[%s0 + $0x30] sm:$0xff]
  %v22 = vld [vmem:[%s0 + $0x38] sm:$0xff]
  %v23 = vld [vmem:[%s0 + $0x40] sm:$0xff]
  %v24 = vld [vmem:[%s0 + $0x48] sm:$0xff]
  %v25 = vld [vmem:[%s0 + $0x50] sm:$0xff]
  %v26 = vld [vmem:[%s0 + $0x58] sm:$0xff]
  %v27 = vld [vmem:[%s0 + $0x60] sm:$0xff]
  %v28 = vld [vmem:[%s0 + $0x68] sm:$0xff]
  %v29 = vld [vmem:[%s0 + $0x70] sm:$0xff]
  %v30 = vld [vmem:[%s0 + $0x78] sm:$0xff]
  %v31 = vld [vmem:[%s0 + $0x80] sm:$0xff]
  %v32 = vld [vmem:[%s0 + $0x88] sm:$0xff]
  %v33 = vld [vmem:[%s0 + $0x90] sm:$0xff]
  %v34 = vld [vmem:[%s0 + $0x98] sm:$0xff]
  %v35 = vld [vmem:[%s0 + $0xa0] sm:$0xff]
  %v36 = vld [vmem:[%s0 + $0xa8] sm:$0xff]
  %v37 = vld [vmem:[%s0 + $0xb0] sm:$0xff]
  %v38 = vld [vmem:[%s0 + $0xb8] sm:$0xff]
  %v39 = vld [vmem:[%s0 + $0xc0] sm:$0xff]
  %v40 = vld [vmem:[%s0 + $0xc8] sm:$0xff]
  %v41 = vld [vmem:[%s0 + $0xd0] sm:$0xff]
  %v42 = vld [vmem:[%s0 + $0xd8] sm:$0xff]
  %v43 = vld [vmem:[%s0 + $0xe0] sm:$0xff]
  %v44 = vld [vmem:[%s0 + $0xe8] sm:$0xff]
  %v45 = vld [vmem:[%s0 + $0xf0] sm:$0xff]
  %v46 = vld [vmem:[%s0 + $0xf8] sm:$0xff]
  %v47 = vld [vmem:[%s0 + $0x100] sm:$0xff]
  %v48 = vld [vmem:[%s0 + $0x108] sm:$0xff]
  %v49 = vld [vmem:[%s0 + $0x110] sm:$0xff]
  %v50 = vld [vmem:[%s0 + $0x118] sm:$0xff]
  %v51 = vld [vmem:[%s0 + $0x120] sm:$0xff]
  %v52 = vld [vmem:[%s0 + $0x128] sm:$0xff]
  %v53 = vld [vmem:[%s0 + $0x130] sm:$0xff]
  %v54 = vld [vmem:[%s0 + $0x138] sm:$0xff]
  %v55 = vld [vmem:[%s0 + $0x140] sm:$0xff]
  %v56 = vld [vmem:[%s0 + $0x148] sm:$0xff]
  %v57 = vld [vmem:[%s0 + $0x150] sm:$0xff]
  %v58 = vld [vmem:[%s0 + $0x158] sm:$0xff]
  %v59 = vld [vmem:[%s0 + $0x160] sm:$0xff]
  %v60 = vld [vmem:[%s0 + $0x168] sm:$0xff]
  %v61 = vld [vmem:[%s0 + $0x170] sm:$0xff]
  %v62 = vld [vmem:[%s0 + $0x178] sm:$0xff]
  %v63 = vld [vmem:[%s0 + $0x180] sm:$0xff]
  %v64 = vld [vmem:[%s0 + $0x188] sm:$0xff]
  %v65 = vld [vmem:[%s0 + $0x190] sm:$0xff]
  %v66 = vld [vmem:[%s0 + $0x198] sm:$0xff]
  %v67 = vld [vmem:[%s0 + $0x1a0] sm:$0xff]
  %v68 = vld [vmem:[%s0 + $0x1a8] sm:$0xff]
  %v69 = vld [vmem:[%s0 + $0x1b0] sm:$0xff]
  %v70 = vld [vmem:[%s0 + $0x1b8] sm:$0xff]
  %v71 = vld [vmem:[%s0 + $0x1c0] sm:$0xff]
  %v72 = vld [vmem:[%s0 + $0x1c8] sm:$0xff]
  %v73 = vld [vmem:[%s0 + $0x1d0] sm:$0xff]
  %v74 = vld [vmem:[%s0 + $0x1d8] sm:$0xff]
  %v75 = vld [vmem:[%s0 + $0x1e0] sm:$0x3]
  %v76 = vld [vmem:[%s0 + $0x1e8] sm:$0x3]
  %v77 = vld [vmem:[%s0 + $0x1f0] sm:$0x3]
  %v78 = vld [vmem:[%s0 + $0x1f8] sm:$0x3]
  %v79 = vld [vmem:[%s0 + $0x200] sm:$0x3]
  %v80 = vpack.c.bf16 %v20, %v15
  %v81 = vpack.c.bf16 %v21, %v16
  %v82 = vpack.c.bf16 %v22, %v17
  %v83 = vpack.c.bf16 %v23, %v18
  %v84 = vpack.c.bf16 %v24, %v19
  %v85 = vpack.c.bf16 %v30, %v25
  %v86 = vpack.c.bf16 %v31, %v26
  %v87 = vpack.c.bf16 %v32, %v27
  %v88 = vpack.c.bf16 %v33, %v28
  %v89 = vpack.c.bf16 %v34, %v29
  %v90 = vpack.c.bf16 %v40, %v35
  %v91 = vpack.c.bf16 %v41, %v36
  %v92 = vpack.c.bf16 %v42, %v37
  %v93 = vpack.c.bf16 %v43, %v38
  %v94 = vpack.c.bf16 %v44, %v39
  %v95 = vpack.c.bf16 %v50, %v45
  %v96 = vpack.c.bf16 %v51, %v46
  %v97 = vpack.c.bf16 %v52, %v47
  %v98 = vpack.c.bf16 %v53, %v48
  %v99 = vpack.c.bf16 %v54, %v49
  %v100 = vpack.c.bf16 %v60, %v55
  %v101 = vpack.c.bf16 %v61, %v56
  %v102 = vpack.c.bf16 %v62, %v57
  %v103 = vpack.c.bf16 %v63, %v58
  %v104 = vpack.c.bf16 %v64, %v59
  %v105 = vpack.c.bf16 %v70, %v65
  %v106 = vpack.c.bf16 %v71, %v66
  %v107 = vpack.c.bf16 %v72, %v67
  %v108 = vpack.c.bf16 %v73, %v68
  %v109 = vpack.c.bf16 %v74, %v69
  %v110 = vpack.c.bf16 %v75, %v75
  %v111 = vpack.c.bf16 %v76, %v76
  %v112 = vpack.c.bf16 %v77, %v77
  %v113 = vpack.c.bf16 %v78, %v78
  %v114 = vpack.c.bf16 %v79, %v79
  %v115 = vld [vmem:[%s1] sm:$0xf]
  %v116 = vld [vmem:[%s1 + $0x4] sm:$0xf]
  %v117 = vld [vmem:[%s1 + $0x8] sm:$0xf]
  %v118 = vld [vmem:[%s1 + $0xc] sm:$0xf]
  %v119 = vld [vmem:[%s1 + $0x10] sm:$0xf]
  %v120 = vld [vmem:[%s1 + $0x14] sm:$0xf]
  %v121 = vld [vmem:[%s1 + $0x18] sm:$0xf]
  %v122 = vld [vmem:[%s1 + $0x1c] sm:$0xf]
  %v123 = vld [vmem:[%s1 + $0x20] sm:$0xf]
  %v124 = vld [vmem:[%s1 + $0x24] sm:$0xf]
  %v125 = vld [vmem:[%s1 + $0x28] sm:$0xf]
  %v126 = vld [vmem:[%s1 + $0x2c] sm:$0xf]
  %v127 = vld [vmem:[%s1 + $0x30] sm:$0xf]
  %v128 = vld [vmem:[%s1 + $0x34] sm:$0xf]
  %v129 = vld [vmem:[%s1 + $0x38] sm:$0xf]
  %v130 = vld [vmem:[%s1 + $0x3c] sm:$0xf]
  %v131 = vld [vmem:[%s1 + $0x40] sm:$0xf]
  %v132 = vld [vmem:[%s1 + $0x44] sm:$0xf]
  %v133 = vld [vmem:[%s1 + $0x48] sm:$0xf]
  %v134 = vld [vmem:[%s1 + $0x4c] sm:$0xf]
  %v135 = vld [vmem:[%s1 + $0x50] sm:$0xf]
  %v136 = vld [vmem:[%s1 + $0x54] sm:$0xf]
  %v137 = vld [vmem:[%s1 + $0x58] sm:$0xf]
  %v138 = vld [vmem:[%s1 + $0x5c] sm:$0xf]
  %v139 = vld [vmem:[%s1 + $0x60] sm:$0xf]
  %v140 = vld [vmem:[%s1 + $0x64] sm:$0xf]
  %v141 = vld [vmem:[%s1 + $0x68] sm:$0xf]
  %v142 = vld [vmem:[%s1 + $0x6c] sm:$0xf]
  %v143 = vld [vmem:[%s1 + $0x70] sm:$0xf]
  %v144 = vld [vmem:[%s1 + $0x74] sm:$0xf]
  %v145 = vld [vmem:[%s1 + $0x78] sm:$0xf]
  %v146 = vld [vmem:[%s1 + $0x7c] sm:$0xf]
  %v147 = vld [vmem:[%s1 + $0x80] sm:$0xf]
  %v148 = vld [vmem:[%s1 + $0x84] sm:$0xf]
  %v149 = vld [vmem:[%s1 + $0x88] sm:$0xf]
  %v150 = vld [vmem:[%s1 + $0x8c] sm:$0xf]
  %v151 = vld [vmem:[%s1 + $0x90] sm:$0xf]
  %v152 = vld [vmem:[%s1 + $0x94] sm:$0xf]
  %v153 = vld [vmem:[%s1 + $0x98] sm:$0xf]
  %v154 = vld [vmem:[%s1 + $0x9c] sm:$0xf]
  %v155 = vld [vmem:[%s1 + $0xa0] sm:$0xf]
  %v156 = vld [vmem:[%s1 + $0xa4] sm:$0xf]
  %v157 = vld [vmem:[%s1 + $0xa8] sm:$0xf]
  %v158 = vld [vmem:[%s1 + $0xac] sm:$0xf]
  %v159 = vld [vmem:[%s1 + $0xb0] sm:$0xf]
  %v160 = vld [vmem:[%s1 + $0xb4] sm:$0xf]
  %v161 = vld [vmem:[%s1 + $0xb8] sm:$0xf]
  %v162 = vld [vmem:[%s1 + $0xbc] sm:$0xf]
  %v163 = vld [vmem:[%s1 + $0xc0] sm:$0xf]
  %v164 = vld [vmem:[%s1 + $0xc4] sm:$0xf]
  %v165 = vld [vmem:[%s1 + $0xc8] sm:$0xf]
  %v166 = vld [vmem:[%s1 + $0xcc] sm:$0xf]
  %v167 = vld [vmem:[%s1 + $0xd0] sm:$0xf]
  %v168 = vld [vmem:[%s1 + $0xd4] sm:$0xf]
  %v169 = vld [vmem:[%s1 + $0xd8] sm:$0xf]
  %v170 = vld [vmem:[%s1 + $0xdc] sm:$0xf]
  %v171 = vld [vmem:[%s1 + $0xe0] sm:$0xf]
  %v172 = vld [vmem:[%s1 + $0xe4] sm:$0xf]
  %v173 = vld [vmem:[%s1 + $0xe8] sm:$0xf]
  %v174 = vld [vmem:[%s1 + $0xec] sm:$0xf]
  %v175 = vld [vmem:[%s1 + $0xf0] sm:$0xf]
  %v176 = vld [vmem:[%s1 + $0xf4] sm:$0xf]
  %v177 = vld [vmem:[%s1 + $0xf8] sm:$0xf]
  %v178 = vld [vmem:[%s1 + $0xfc] sm:$0xf]
  %v179 = vld [vmem:[%s1 + $0x100] sm:$0xf]
  %v180 = vld [vmem:[%s1 + $0x104] sm:$0xf]
  %v181 = vld [vmem:[%s1 + $0x108] sm:$0xf]
  %v182 = vld [vmem:[%s1 + $0x10c] sm:$0xf]
  %v183 = vld [vmem:[%s1 + $0x110] sm:$0xf]
  %v184 = vld [vmem:[%s1 + $0x114] sm:$0xf]
  %v185 = vld [vmem:[%s1 + $0x118] sm:$0xf]
  %v186 = vld [vmem:[%s1 + $0x11c] sm:$0xf]
  %v187 = vld [vmem:[%s2] sm:$0x1]
  %v189 = vlaneseq
  %v190 = vshrl.u32 %v189, 7
  %v191 = vsub.s32 0, %v190
  %v192 = vrot.slane %v187, %v191
  %v266 = vunpack.c.l.b16 %v115
  %v267 = vunpack.c.l.b16 %v116
  %v268 = vunpack.c.l.b16 %v117
  %v269 = vunpack.c.l.b16 %v118
  %v270 = vunpack.c.l.b16 %v119
  %v271 = vunpack.c.l.b16 %v120
  %v272 = vunpack.c.l.b16 %v121
  %v273 = vunpack.c.l.b16 %v122
  %v274 = vunpack.c.l.b16 %v123
  %v275 = vunpack.c.l.b16 %v124
  %v276 = vunpack.c.l.b16 %v125
  %v277 = vunpack.c.l.b16 %v126
  %v278 = vunpack.c.l.b16 %v127
  %v279 = vunpack.c.l.b16 %v128
  %v280 = vunpack.c.l.b16 %v129
  %v281 = vunpack.c.l.b16 %v130
  %v282 = vunpack.c.l.b16 %v131
  %v283 = vunpack.c.l.b16 %v132
  %v284 = vunpack.c.l.b16 %v133
  %v285 = vunpack.c.l.b16 %v134
  %v286 = vunpack.c.l.b16 %v135
  %v287 = vunpack.c.l.b16 %v136
  %v288 = vunpack.c.l.b16 %v137
  %v289 = vunpack.c.l.b16 %v138
  %v290 = vunpack.c.l.b16 %v139
  %v291 = vunpack.c.l.b16 %v140
  %v292 = vunpack.c.l.b16 %v141
  %v293 = vunpack.c.l.b16 %v142
  %v294 = vunpack.c.l.b16 %v143
  %v295 = vunpack.c.l.b16 %v144
  %v296 = vunpack.c.l.b16 %v145
  %v297 = vunpack.c.l.b16 %v146
  %v298 = vunpack.c.l.b16 %v147
  %v299 = vunpack.c.l.b16 %v148
  %v300 = vunpack.c.l.b16 %v149
  %v301 = vunpack.c.l.b16 %v150
  %v302 = vunpack.c.l.b16 %v151
  %v303 = vunpack.c.l.b16 %v152
  %v304 = vunpack.c.l.b16 %v153
  %v305 = vunpack.c.l.b16 %v154
  %v306 = vunpack.c.l.b16 %v155
  %v307 = vunpack.c.l.b16 %v156
  %v308 = vunpack.c.l.b16 %v157
  %v309 = vunpack.c.l.b16 %v158
  %v310 = vunpack.c.l.b16 %v159
  %v311 = vunpack.c.l.b16 %v160
  %v312 = vunpack.c.l.b16 %v161
  %v313 = vunpack.c.l.b16 %v162
  %v314 = vunpack.c.l.b16 %v163
  %v315 = vunpack.c.l.b16 %v164
  %v316 = vunpack.c.l.b16 %v165
  %v317 = vunpack.c.l.b16 %v166
  %v318 = vunpack.c.l.b16 %v167
  %v319 = vunpack.c.l.b16 %v168
  %v320 = vunpack.c.l.b16 %v169
  %v321 = vunpack.c.l.b16 %v170
  %v322 = vunpack.c.l.b16 %v171
  %v323 = vunpack.c.l.b16 %v172
  %v324 = vunpack.c.l.b16 %v173
  %v325 = vunpack.c.l.b16 %v174
  %v326 = vunpack.c.l.b16 %v175
  %v327 = vunpack.c.l.b16 %v176
  %v328 = vunpack.c.l.b16 %v177
  %v329 = vunpack.c.l.b16 %v178
  %v330 = vunpack.c.l.b16 %v179
  %v331 = vunpack.c.l.b16 %v180
  %v332 = vunpack.c.l.b16 %v181
  %v333 = vunpack.c.l.b16 %v182
  %v334 = vunpack.c.l.b16 %v183
  %v335 = vunpack.c.l.b16 %v184
  %v336 = vunpack.c.l.b16 %v185
  %v337 = vunpack.c.l.b16 %v186
  %v338 = vpack.c.b16 %v267, %v266
  %v339 = vpack.c.b16 %v269, %v268
  %v340 = vpack.c.b16 %v271, %v270
  %v341 = vpack.c.b16 %v273, %v272
  %v342 = vpack.c.b16 %v275, %v274
  %v343 = vpack.c.b16 %v277, %v276
  %v344 = vpack.c.b16 %v279, %v278
  %v345 = vpack.c.b16 %v281, %v280
  %v346 = vpack.c.b16 %v283, %v282
  %v347 = vpack.c.b16 %v285, %v284
  %v348 = vpack.c.b16 %v287, %v286
  %v349 = vpack.c.b16 %v289, %v288
  %v350 = vpack.c.b16 %v291, %v290
  %v351 = vpack.c.b16 %v293, %v292
  %v352 = vpack.c.b16 %v295, %v294
  %v353 = vpack.c.b16 %v297, %v296
  %v354 = vpack.c.b16 %v299, %v298
  %v355 = vpack.c.b16 %v301, %v300
  %v356 = vpack.c.b16 %v303, %v302
  %v357 = vpack.c.b16 %v305, %v304
  %v358 = vpack.c.b16 %v307, %v306
  %v359 = vpack.c.b16 %v309, %v308
  %v360 = vpack.c.b16 %v311, %v310
  %v361 = vpack.c.b16 %v313, %v312
  %v362 = vpack.c.b16 %v315, %v314
  %v363 = vpack.c.b16 %v317, %v316
  %v364 = vpack.c.b16 %v319, %v318
  %v365 = vpack.c.b16 %v321, %v320
  %v366 = vpack.c.b16 %v323, %v322
  %v367 = vpack.c.b16 %v325, %v324
  %v368 = vpack.c.b16 %v327, %v326
  %v369 = vpack.c.b16 %v329, %v328
  %v370 = vpack.c.b16 %v331, %v330
  %v371 = vpack.c.b16 %v333, %v332
  %v372 = vpack.c.b16 %v335, %v334
  %v373 = vpack.c.b16 %v337, %v336
  %vm410 = vcmask 523264
  %v412 = vsel %vm410, %v84, 0
  %v415 = vsel %vm410, %v89, 0
  %v418 = vsel %vm410, %v94, 0
  %v421 = vsel %vm410, %v99, 0
  %v424 = vsel %vm410, %v104, 0
  %v427 = vsel %vm410, %v109, 0
  %v430 = vsel %vm410, %v114, 0
  %432 = vmatprep.subr.bf16.mxu0 0
  %433 = vmatpush1.bf16.msra.mxu0 %v338
  %434 = vmatprep.subr.bf16.mxu0 0
  %435 = vmatpush1.bf16.msra.mxu0 %v339
  %436 = vmatprep.subr.bf16.mxu0 0
  %437 = vmatpush1.bf16.msra.mxu0 %v340
  %438 = vmatprep.subr.bf16.mxu0 0
  %439 = vmatpush1.bf16.msra.mxu0 %v341
  %440 = vmatprep.subr.bf16.mxu0 0
  %441 = vmatpush1.bf16.msra.mxu0 %v342
  %442 = vmatprep.subr.bf16.mxu0 0
  %443 = vmatpush1.bf16.msra.mxu0 %v343
  %444 = vmatprep.subr.bf16.mxu0 0
  %445 = vmatpush1.bf16.msra.mxu0 %v344
  %446 = vmatprep.subr.bf16.mxu0 0
  %447 = vmatpush1.bf16.msra.mxu0 %v345
  %448 = vmatprep.subr.bf16.mxu0 0
  %449 = vmatpush1.bf16.msra.mxu0 %v346
  %450 = vmatprep.subr.bf16.mxu0 0
  %451 = vmatpush1.bf16.msra.mxu0 %v347
  %452 = vmatprep.subr.bf16.mxu0 0
  %453 = vmatpush1.bf16.msra.mxu0 %v348
  %454 = vmatprep.subr.bf16.mxu0 0
  %455 = vmatpush1.bf16.msra.mxu0 %v349
  %456 = vmatprep.subr.bf16.mxu0 0
  %457 = vmatpush1.bf16.msra.mxu0 %v350
  %458 = vmatprep.subr.bf16.mxu0 0
  %459 = vmatpush1.bf16.msra.mxu0 %v351
  %460 = vmatprep.subr.bf16.mxu0 0
  %461 = vmatpush1.bf16.msra.mxu0 %v352
  %462 = vmatprep.subr.bf16.mxu0 0
  %463 = vmatpush1.bf16.msra.mxu0 %v353
  %464 = vmatprep.mubr.bf16.mxu0 %v81
  %465 = vmatmul.mubr.bf16.gmra.mrb[0].mxu0 %v80
  %v466 = vpop.f32.mrb[0].mxu0
  %v467 = vadd.f32 %v192, %v466
  %v468 = vpop.f32.mrb[0].mxu0
  %v469 = vpop.f32.mrb[0].mxu0
  %v470 = vadd.f32 %v192, %v469
  %v471 = vpop.f32.mrb[0].mxu0
  %472 = vmatprep.mubr.bf16.mxu0 %v86
  %473 = vmatmul.mubr.bf16.gmra.mrb[0].mxu0 %v85
  %v474 = vpop.f32.mrb[0].mxu0
  %v475 = vadd.f32 %v192, %v474
  %v476 = vpop.f32.mrb[0].mxu0
  %v477 = vpop.f32.mrb[0].mxu0
  %v478 = vadd.f32 %v192, %v477
  %v479 = vpop.f32.mrb[0].mxu0
  %480 = vmatprep.mubr.bf16.mxu0 %v91
  %481 = vmatmul.mubr.bf16.gmra.mrb[0].mxu0 %v90
  %v482 = vpop.f32.mrb[0].mxu0
  %v483 = vadd.f32 %v192, %v482
  %v484 = vpop.f32.mrb[0].mxu0
  %v485 = vpop.f32.mrb[0].mxu0
  %v486 = vadd.f32 %v192, %v485
  %v487 = vpop.f32.mrb[0].mxu0
  %488 = vmatprep.mubr.bf16.mxu0 %v96
  %489 = vmatmul.mubr.bf16.gmra.mrb[0].mxu0 %v95
  %v490 = vpop.f32.mrb[0].mxu0
  %v491 = vadd.f32 %v192, %v490
  %v492 = vpop.f32.mrb[0].mxu0
  %v493 = vpop.f32.mrb[0].mxu0
  %v494 = vadd.f32 %v192, %v493
  %v495 = vpop.f32.mrb[0].mxu0
  %496 = vmatprep.mubr.bf16.mxu0 %v101
  %497 = vmatmul.mubr.bf16.gmra.mrb[0].mxu0 %v100
  %v498 = vpop.f32.mrb[0].mxu0
  %v499 = vadd.f32 %v192, %v498
  %v500 = vpop.f32.mrb[0].mxu0
  %v501 = vpop.f32.mrb[0].mxu0
  %v502 = vadd.f32 %v192, %v501
  %v503 = vpop.f32.mrb[0].mxu0
  %504 = vmatprep.mubr.bf16.mxu0 %v106
  %505 = vmatmul.mubr.bf16.gmra.mrb[0].mxu0 %v105
  %v506 = vpop.f32.mrb[0].mxu0
  %v507 = vadd.f32 %v192, %v506
  %v508 = vpop.f32.mrb[0].mxu0
  %v509 = vpop.f32.mrb[0].mxu0
  %v510 = vadd.f32 %v192, %v509
  %v511 = vpop.f32.mrb[0].mxu0
  %512 = vmatprep.mubr.bf16.mxu0 %v111
  %513 = vmatmul.mubr.bf16.gmra.mrb[0].mxu0 %v110
  %v514 = vpop.f32.mrb[0].mxu0
  %v515 = vadd.f32 %v192, %v514
  %v516 = vpop.f32.mrb[0].mxu0
  %v517 = vpop.f32.mrb[0].mxu0
  %v518 = vpop.f32.mrb[0].mxu0
  %519 = vdwg.mxu0
  %520 = vmatprep.subr.bf16.mxu0 0
  %521 = vmatpush1.bf16.msra.mxu0 %v354
  %522 = vmatprep.subr.bf16.mxu0 0
  %523 = vmatpush1.bf16.msra.mxu0 %v355
  %524 = vmatprep.subr.bf16.mxu0 0
  %525 = vmatpush1.bf16.msra.mxu0 %v356
  %526 = vmatprep.subr.bf16.mxu0 0
  %527 = vmatpush1.bf16.msra.mxu0 %v357
  %528 = vmatprep.subr.bf16.mxu0 0
  %529 = vmatpush1.bf16.msra.mxu0 %v358
  %530 = vmatprep.subr.bf16.mxu0 0
  %531 = vmatpush1.bf16.msra.mxu0 %v359
  %532 = vmatprep.subr.bf16.mxu0 0
  %533 = vmatpush1.bf16.msra.mxu0 %v360
  %534 = vmatprep.subr.bf16.mxu0 0
  %535 = vmatpush1.bf16.msra.mxu0 %v361
  %536 = vmatprep.subr.bf16.mxu0 0
  %537 = vmatpush1.bf16.msra.mxu0 %v362
  %538 = vmatprep.subr.bf16.mxu0 0
  %539 = vmatpush1.bf16.msra.mxu0 %v363
  %540 = vmatprep.subr.bf16.mxu0 0
  %541 = vmatpush1.bf16.msra.mxu0 %v364
  %542 = vmatprep.subr.bf16.mxu0 0
  %543 = vmatpush1.bf16.msra.mxu0 %v365
  %544 = vmatprep.subr.bf16.mxu0 0
  %545 = vmatpush1.bf16.msra.mxu0 %v366
  %546 = vmatprep.subr.bf16.mxu0 0
  %547 = vmatpush1.bf16.msra.mxu0 %v367
  %548 = vmatprep.subr.bf16.mxu0 0
  %549 = vmatpush1.bf16.msra.mxu0 %v368
  %550 = vmatprep.subr.bf16.mxu0 0
  %551 = vmatpush1.bf16.msra.mxu0 %v369
  %552 = vmatprep.mubr.bf16.mxu0 %v83
  %553 = vmatmul.mubr.bf16.gmra.mrb[0].mxu0 %v82
  %v554 = vpop.f32.mrb[0].mxu0
  %v555 = vadd.f32 %v467, %v554
  %v556 = vpop.f32.mrb[0].mxu0
  %v557 = vpop.f32.mrb[0].mxu0
  %v558 = vadd.f32 %v470, %v557
  %v559 = vpop.f32.mrb[0].mxu0
  %560 = vmatprep.mubr.bf16.mxu0 %v88
  %561 = vmatmul.mubr.bf16.gmra.mrb[0].mxu0 %v87
  %v562 = vpop.f32.mrb[0].mxu0
  %v563 = vadd.f32 %v475, %v562
  %v564 = vpop.f32.mrb[0].mxu0
  %v565 = vpop.f32.mrb[0].mxu0
  %v566 = vadd.f32 %v478, %v565
  %v567 = vpop.f32.mrb[0].mxu0
  %568 = vmatprep.mubr.bf16.mxu0 %v93
  %569 = vmatmul.mubr.bf16.gmra.mrb[0].mxu0 %v92
  %v570 = vpop.f32.mrb[0].mxu0
  %v571 = vadd.f32 %v483, %v570
  %v572 = vpop.f32.mrb[0].mxu0
  %v573 = vpop.f32.mrb[0].mxu0
  %v574 = vadd.f32 %v486, %v573
  %v575 = vpop.f32.mrb[0].mxu0
  %576 = vmatprep.mubr.bf16.mxu0 %v98
  %577 = vmatmul.mubr.bf16.gmra.mrb[0].mxu0 %v97
  %v578 = vpop.f32.mrb[0].mxu0
  %v579 = vadd.f32 %v491, %v578
  %v580 = vpop.f32.mrb[0].mxu0
  %v581 = vpop.f32.mrb[0].mxu0
  %v582 = vadd.f32 %v494, %v581
  %v583 = vpop.f32.mrb[0].mxu0
  %584 = vmatprep.mubr.bf16.mxu0 %v103
  %585 = vmatmul.mubr.bf16.gmra.mrb[0].mxu0 %v102
  %v586 = vpop.f32.mrb[0].mxu0
  %v587 = vadd.f32 %v499, %v586
  %v588 = vpop.f32.mrb[0].mxu0
  %v589 = vpop.f32.mrb[0].mxu0
  %v590 = vadd.f32 %v502, %v589
  %v591 = vpop.f32.mrb[0].mxu0
  %592 = vmatprep.mubr.bf16.mxu0 %v108
  %593 = vmatmul.mubr.bf16.gmra.mrb[0].mxu0 %v107
  %v594 = vpop.f32.mrb[0].mxu0
  %v595 = vadd.f32 %v507, %v594
  %v596 = vpop.f32.mrb[0].mxu0
  %v597 = vpop.f32.mrb[0].mxu0
  %v598 = vadd.f32 %v510, %v597
  %v599 = vpop.f32.mrb[0].mxu0
  %600 = vmatprep.mubr.bf16.mxu0 %v113
  %601 = vmatmul.mubr.bf16.gmra.mrb[0].mxu0 %v112
  %v602 = vpop.f32.mrb[0].mxu0
  %v603 = vadd.f32 %v515, %v602
  %v604 = vpop.f32.mrb[0].mxu0
  %v605 = vpop.f32.mrb[0].mxu0
  %v606 = vpop.f32.mrb[0].mxu0
  %607 = vdwg.mxu0
  %608 = vmatprep.subr.bf16.mxu0 0
  %609 = vmatpush1.bf16.msra.mxu0 %v370
  %610 = vmatprep.subr.bf16.mxu0 0
  %611 = vmatpush1.bf16.msra.mxu0 %v371
  %612 = vmatprep.subr.bf16.mxu0 0
  %613 = vmatpush1.bf16.msra.mxu0 %v372
  %614 = vmatprep.subr.bf16.mxu0 0
  %615 = vmatpush1.bf16.msra.mxu0 %v373
  %616 = vmatprep.subr.bf16.mxu0 0
  %617 = vmatpush1.bf16.msra.mxu0 0
  %618 = vmatprep.subr.bf16.mxu0 0
  %619 = vmatpush1.bf16.msra.mxu0 0
  %620 = vmatprep.subr.bf16.mxu0 0
  %621 = vmatpush1.bf16.msra.mxu0 0
  %622 = vmatprep.subr.bf16.mxu0 0
  %623 = vmatpush1.bf16.msra.mxu0 0
  %624 = vmatprep.subr.bf16.mxu0 0
  %625 = vmatpush1.bf16.msra.mxu0 0
  %626 = vmatprep.subr.bf16.mxu0 0
  %627 = vmatpush1.bf16.msra.mxu0 0
  %628 = vmatprep.subr.bf16.mxu0 0
  %629 = vmatpush1.bf16.msra.mxu0 0
  %630 = vmatprep.subr.bf16.mxu0 0
  %631 = vmatpush1.bf16.msra.mxu0 0
  %632 = vmatprep.subr.bf16.mxu0 0
  %633 = vmatpush1.bf16.msra.mxu0 0
  %634 = vmatprep.subr.bf16.mxu0 0
  %635 = vmatpush1.bf16.msra.mxu0 0
  %636 = vmatprep.subr.bf16.mxu0 0
  %637 = vmatpush1.bf16.msra.mxu0 0
  %638 = vmatprep.subr.bf16.mxu0 0
  %639 = vmatpush1.bf16.msra.mxu0 0
  %640 = vmatprep.mubr.bf16.mxu0 0
  %641 = vmatmul.mubr.bf16.gmra.mrb[0].mxu0 %v412
  %v642 = vpop.f32.mrb[0].mxu0
  %v643 = vadd.f32 %v555, %v642
  %v644 = vpop.f32.mrb[0].mxu0
  %v645 = vpop.f32.mrb[0].mxu0
  %v646 = vadd.f32 %v558, %v645
  %v647 = vpop.f32.mrb[0].mxu0
  %648 = vmatprep.mubr.bf16.mxu0 0
  %649 = vmatmul.mubr.bf16.gmra.mrb[0].mxu0 %v415
  %v650 = vpop.f32.mrb[0].mxu0
  %v651 = vadd.f32 %v563, %v650
  %v652 = vpop.f32.mrb[0].mxu0
  %v653 = vpop.f32.mrb[0].mxu0
  %v654 = vadd.f32 %v566, %v653
  %v655 = vpop.f32.mrb[0].mxu0
  %656 = vmatprep.mubr.bf16.mxu0 0
  %657 = vmatmul.mubr.bf16.gmra.mrb[0].mxu0 %v418
  %v658 = vpop.f32.mrb[0].mxu0
  %v659 = vadd.f32 %v571, %v658
  %v660 = vpop.f32.mrb[0].mxu0
  %v661 = vpop.f32.mrb[0].mxu0
  %v662 = vadd.f32 %v574, %v661
  %v663 = vpop.f32.mrb[0].mxu0
  %664 = vmatprep.mubr.bf16.mxu0 0
  %665 = vmatmul.mubr.bf16.gmra.mrb[0].mxu0 %v421
  %v666 = vpop.f32.mrb[0].mxu0
  %v667 = vadd.f32 %v579, %v666
  %v668 = vpop.f32.mrb[0].mxu0
  %v669 = vpop.f32.mrb[0].mxu0
  %v670 = vadd.f32 %v582, %v669
  %v671 = vpop.f32.mrb[0].mxu0
  %672 = vmatprep.mubr.bf16.mxu0 0
  %673 = vmatmul.mubr.bf16.gmra.mrb[0].mxu0 %v424
  %v674 = vpop.f32.mrb[0].mxu0
  %v675 = vadd.f32 %v587, %v674
  %v676 = vpop.f32.mrb[0].mxu0
  %v677 = vpop.f32.mrb[0].mxu0
  %v678 = vadd.f32 %v590, %v677
  %v679 = vpop.f32.mrb[0].mxu0
  %680 = vmatprep.mubr.bf16.mxu0 0
  %681 = vmatmul.mubr.bf16.gmra.mrb[0].mxu0 %v427
  %v682 = vpop.f32.mrb[0].mxu0
  %v683 = vadd.f32 %v595, %v682
  %v684 = vpop.f32.mrb[0].mxu0
  %v685 = vpop.f32.mrb[0].mxu0
  %v686 = vadd.f32 %v598, %v685
  %v687 = vpop.f32.mrb[0].mxu0
  %688 = vmatprep.mubr.bf16.mxu0 0
  %689 = vmatmul.mubr.bf16.gmra.mrb[0].mxu0 %v430
  %v690 = vpop.f32.mrb[0].mxu0
  %v691 = vadd.f32 %v603, %v690
  %v692 = vpop.f32.mrb[0].mxu0
  %v693 = vpop.f32.mrb[0].mxu0
  %v694 = vpop.f32.mrb[0].mxu0
  %695 = vdwg.mxu0
  %v696 = vmax.f32 %v643, 0.0
  %v697 = vmax.f32 %v646, 0.0
  %v698 = vmax.f32 %v651, 0.0
  %v699 = vmax.f32 %v654, 0.0
  %v700 = vmax.f32 %v659, 0.0
  %v701 = vmax.f32 %v662, 0.0
  %v702 = vmax.f32 %v667, 0.0
  %v703 = vmax.f32 %v670, 0.0
  %v704 = vmax.f32 %v675, 0.0
  %v705 = vmax.f32 %v678, 0.0
  %v706 = vmax.f32 %v683, 0.0
  %v707 = vmax.f32 %v686, 0.0
  %v708 = vmax.f32 %v691, 0.0
  %709 = vst [vmem:[%s3] sm:$0xff] %v696
  %710 = vst [vmem:[%s3 + $0x8] sm:$0xff] %v697
  %711 = vst [vmem:[%s3 + $0x10] sm:$0xff] %v698
  %712 = vst [vmem:[%s3 + $0x18] sm:$0xff] %v699
  %713 = vst [vmem:[%s3 + $0x20] sm:$0xff] %v700
  %714 = vst [vmem:[%s3 + $0x28] sm:$0xff] %v701
  %715 = vst [vmem:[%s3 + $0x30] sm:$0xff] %v702
  %716 = vst [vmem:[%s3 + $0x38] sm:$0xff] %v703
  %717 = vst [vmem:[%s3 + $0x40] sm:$0xff] %v704
  %718 = vst [vmem:[%s3 + $0x48] sm:$0xff] %v705
  %719 = vst [vmem:[%s3 + $0x50] sm:$0xff] %v706
  %720 = vst [vmem:[%s3 + $0x58] sm:$0xff] %v707
  %721 = vst [vmem:[%s3 + $0x60] sm:$0x3] %v708
  // Predicated region
  $region14: #{conv_cvae_forward.8} parent=0 // pred_check
    _
  $region15: #{conv_cvae_forward.8} parent=0 // pred_check_branch
    %723 = sbr.rel (0) target = $region17
  $region16: #{conv_cvae_forward.8} parent=0 // pred_region
    _
  $region17: #{conv_cvae_forward.8} parent=0 // pred_fallthru
    _
  // Predicated region
  $region18: #{conv_cvae_forward.8} parent=0 // pred_check
    _
  $region19: #{conv_cvae_forward.8} parent=0 // pred_check_branch
    %725 = sbr.rel (0) target = $region21
  $region20: #{conv_cvae_forward.8} parent=0 // pred_region
    _
  $region21: #{conv_cvae_forward.8} parent=0 // pred_fallthru
    _

// kernel: conv_cvae_forward.7
$region0: #{conv_cvae_forward.7}
  #allocation0 [shape = 'u32[]', space=smem, size = 0x4, offset = 0x4, fixed_abs, tag = 'smem constant byte address 0x4 - core index']
  #allocation1 [shape = 'u32[144,128]{1,0:T(1,128)}', space=vmem, size = 0x12000, scoped, tag = 'internal scratch']
  %s0 = inlined_call_operand.vmem [shape: f32[2,3136], index: 0, kind: input, shape index: {}]
  %s1 = inlined_call_operand.vmem [shape: f32[2,2], index: 1, kind: input, shape index: {}]
  %s2 = inlined_call_operand.vmem [shape: s32[2,1], index: 2, kind: input, shape index: {}]
  %s3 = inlined_call_operand.vmem [shape: bf16[3136,100], index: 3, kind: input, shape index: {}]
  %s4 = inlined_call_operand.vmem [shape: f32[1,100], index: 4, kind: input, shape index: {}]
  %s5 = inlined_call_operand.vmem [shape: bf16[100,2], index: 5, kind: input, shape index: {}]
  %s6 = inlined_call_operand.vmem [shape: f32[1,2], index: 6, kind: input, shape index: {}]
  %s7 = inlined_call_operand.vmem [shape: bf16[100,2], index: 7, kind: input, shape index: {}]
  %s8 = inlined_call_operand.vmem [shape: f32[1,2], index: 8, kind: input, shape index: {}]
  %s9 = inlined_call_operand.vmem [shape: bf16[2,100], index: 9, kind: input, shape index: {}]
  %s10 = inlined_call_operand.vmem [shape: bf16[10,100], index: 10, kind: input, shape index: {}]
  %s11 = inlined_call_operand.vmem [shape: f32[1,100], index: 11, kind: input, shape index: {}]
  %s12 = inlined_call_operand.vmem [shape: bf16[100,3136], index: 12, kind: input, shape index: {}]
  %s13 = inlined_call_operand.vmem [shape: f32[1,3136], index: 13, kind: input, shape index: {}]
  %s14 = inlined_call_operand.hbm [shape: f32[2,2], index: 14, kind: output, shape index: {0}]
  %s15 = inlined_call_operand.hbm [shape: f32[2,2], index: 15, kind: output, shape index: {1}]
  %s16 = inlined_call_operand.vmem [shape: f32[2,3136], index: 16, kind: output, shape index: {2}]
  %17 = xla_tuple %s14, %s15, %s16
  %s18 = sld [smem:[#allocation0]]
  $region82: #{conv_cvae_forward.7} parent=0
    _
  %s20 = ssub.s32 1, %s18
  %s21 = scalar_select 0, %s20, %s18
  $region1: #{conv_cvae_forward.7} parent=0
    #allocation2 [shape = 'u8[1024]{0}', space=vmem, size = 0x400, scoped, tag = 'output window, operand 0, single buffered']
    #allocation3 [shape = 's32[1]{0}', space=sflag, size = 0x4, scoped, tag = 'scoped memory for conv_cvae_forward.7']
    #allocation4 [shape = 'u8[1024]{0}', space=vmem, size = 0x400, scoped, tag = 'output window, operand 1, single buffered']
    #allocation5 [shape = 's32[1]{0}', space=sflag, size = 0x4, scoped, tag = 'scoped memory for conv_cvae_forward.7']
    %22 = vsyncpa [#allocation3], 0
    %23 = vsyncpa [#allocation5], 0
    // Predicated region
    $region2: #{conv_cvae_forward.7} parent=1 // pred_check
      _
    $region3: #{conv_cvae_forward.7} parent=1 // pred_check_branch
      %25 = sbr.rel (0) target = $region5
    $region4: #{conv_cvae_forward.7} parent=1 // pred_region
      _
    $region5: #{conv_cvae_forward.7} parent=1 // pred_fallthru
      _
    // Predicated region
    $region6: #{conv_cvae_forward.7} parent=1 // pred_check
      _
    $region7: #{conv_cvae_forward.7} parent=1 // pred_check_branch
      %27 = sbr.rel (0) target = $region9
    $region8: #{conv_cvae_forward.7} parent=1 // pred_region
      _
    $region9: #{conv_cvae_forward.7} parent=1 // pred_fallthru
      _
    // Predicated region
    $region10: #{conv_cvae_forward.7} parent=1 // pred_check
      _
    $region11: #{conv_cvae_forward.7} parent=1 // pred_check_branch
      %29 = sbr.rel (0) target = $region13
    $region12: #{conv_cvae_forward.7} parent=1 // pred_region
      _
    $region13: #{conv_cvae_forward.7} parent=1 // pred_fallthru
      _
    // Predicated region
    $region14: #{conv_cvae_forward.7} parent=1 // pred_check
      _
    $region15: #{conv_cvae_forward.7} parent=1 // pred_check_branch
      %31 = sbr.rel (0) target = $region17
    $region16: #{conv_cvae_forward.7} parent=1 // pred_region
      _
    $region17: #{conv_cvae_forward.7} parent=1 // pred_fallthru
      _
    // Predicated region
    $region18: #{conv_cvae_forward.7} parent=1 // pred_check
      _
    $region19: #{conv_cvae_forward.7} parent=1 // pred_check_branch
      %33 = sbr.rel (0) target = $region21
    $region20: #{conv_cvae_forward.7} parent=1 // pred_region
      _
    $region21: #{conv_cvae_forward.7} parent=1 // pred_fallthru
      _
    // Predicated region
    $region22: #{conv_cvae_forward.7} parent=1 // pred_check
      _
    $region23: #{conv_cvae_forward.7} parent=1 // pred_check_branch
      %35 = sbr.rel (0) target = $region25
    $region24: #{conv_cvae_forward.7} parent=1 // pred_region
      _
    $region25: #{conv_cvae_forward.7} parent=1 // pred_fallthru
      _
    // Predicated region
    $region26: #{conv_cvae_forward.7} parent=1 // pred_check
      _
    $region27: #{conv_cvae_forward.7} parent=1 // pred_check_branch
      %37 = sbr.rel (0) target = $region29
    $region28: #{conv_cvae_forward.7} parent=1 // pred_region
      _
    $region29: #{conv_cvae_forward.7} parent=1 // pred_fallthru
      _
    // Predicated region
    $region30: #{conv_cvae_forward.7} parent=1 // pred_check
      _
    $region31: #{conv_cvae_forward.7} parent=1 // pred_check_branch
      %39 = sbr.rel (0) target = $region33
    $region32: #{conv_cvae_forward.7} parent=1 // pred_region
      _
    $region33: #{conv_cvae_forward.7} parent=1 // pred_fallthru
      _
    // Predicated region
    $region34: #{conv_cvae_forward.7} parent=1 // pred_check
      _
    $region35: #{conv_cvae_forward.7} parent=1 // pred_check_branch
      %41 = sbr.rel (0) target = $region37
    $region36: #{conv_cvae_forward.7} parent=1 // pred_region
      _
    $region37: #{conv_cvae_forward.7} parent=1 // pred_fallthru
      _
    // Predicated region
    $region38: #{conv_cvae_forward.7} parent=1 // pred_check
      _
    $region39: #{conv_cvae_forward.7} parent=1 // pred_check_branch
      %43 = sbr.rel (0) target = $region41
    $region40: #{conv_cvae_forward.7} parent=1 // pred_region
      _
    $region41: #{conv_cvae_forward.7} parent=1 // pred_fallthru
      _
    // Predicated region
    $region42: #{conv_cvae_forward.7} parent=1 // pred_check
      _
    $region43: #{conv_cvae_forward.7} parent=1 // pred_check_branch
      %45 = sbr.rel (0) target = $region45
    $region44: #{conv_cvae_forward.7} parent=1 // pred_region
      _
    $region45: #{conv_cvae_forward.7} parent=1 // pred_fallthru
      _
    // Predicated region
    $region46: #{conv_cvae_forward.7} parent=1 // pred_check
      _
    $region47: #{conv_cvae_forward.7} parent=1 // pred_check_branch
      %47 = sbr.rel (0) target = $region49
    $region48: #{conv_cvae_forward.7} parent=1 // pred_region
      _
    $region49: #{conv_cvae_forward.7} parent=1 // pred_fallthru
      _
    // Predicated region
    $region50: #{conv_cvae_forward.7} parent=1 // pred_check
      _
    $region51: #{conv_cvae_forward.7} parent=1 // pred_check_branch
      %49 = sbr.rel (0) target = $region53
    $region52: #{conv_cvae_forward.7} parent=1 // pred_region
      _
    $region53: #{conv_cvae_forward.7} parent=1 // pred_fallthru
      _
    // Predicated region
    $region54: #{conv_cvae_forward.7} parent=1 // pred_check
      _
    $region55: #{conv_cvae_forward.7} parent=1 // pred_check_branch
      %51 = sbr.rel (0) target = $region57
    $region56: #{conv_cvae_forward.7} parent=1 // pred_region
      _
    $region57: #{conv_cvae_forward.7} parent=1 // pred_fallthru
      _
    %v53 = vld [vmem:[%s0] sm:$0xff]
    %v54 = vld [vmem:[%s0 + $0x8] sm:$0xff]
    %v55 = vld [vmem:[%s0 + $0x10] sm:$0xff]
    %v56 = vld [vmem:[%s0 + $0x18] sm:$0xff]
    %v57 = vld [vmem:[%s0 + $0x20] sm:$0xff]
    %v58 = vld [vmem:[%s0 + $0x28] sm:$0xff]
    %v59 = vld [vmem:[%s0 + $0x30] sm:$0x3]
    %v67 = vcombine.high %v53, %v53
    %v69 = vunpack.c.l.s4 1983009808
    %v70 = vunpack.c.0.s8 %v69
    %v71 = vlaneseq
    %v72 = vshrl.u32 %v71, 7
    %v73 = vsub.s32 %v70, %v72
    %v74 = vrot.slane %v53, %v73
    %v76 = vunpack.c.l.s4 1983009808
    %v77 = vunpack.c.0.s8 %v76
    %v78 = vlaneseq
    %v79 = vshrl.u32 %v78, 7
    %v80 = vsub.s32 %v77, %v79
    %v81 = vrot.slane %v67, %v80
    %v82 = vcombine.high %v74, %v74
    %v83 = vcombine.high %v81, %v81
    %v84 = vcombine.high %v54, %v54
    %v86 = vunpack.c.l.s4 1983009808
    %v87 = vunpack.c.0.s8 %v86
    %v88 = vlaneseq
    %v89 = vshrl.u32 %v88, 7
    %v90 = vsub.s32 %v87, %v89
    %v91 = vrot.slane %v54, %v90
    %v93 = vunpack.c.l.s4 1983009808
    %v94 = vunpack.c.0.s8 %v93
    %v95 = vlaneseq
    %v96 = vshrl.u32 %v95, 7
    %v97 = vsub.s32 %v94, %v96
    %v98 = vrot.slane %v84, %v97
    %v99 = vcombine.high %v91, %v91
    %v100 = vcombine.high %v98, %v98
    %v101 = vcombine.high %v55, %v55
    %v103 = vunpack.c.l.s4 1983009808
    %v104 = vunpack.c.0.s8 %v103
    %v105 = vlaneseq
    %v106 = vshrl.u32 %v105, 7
    %v107 = vsub.s32 %v104, %v106
    %v108 = vrot.slane %v55, %v107
    %v110 = vunpack.c.l.s4 1983009808
    %v111 = vunpack.c.0.s8 %v110
    %v112 = vlaneseq
    %v113 = vshrl.u32 %v112, 7
    %v114 = vsub.s32 %v111, %v113
    %v115 = vrot.slane %v101, %v114
    %v116 = vcombine.high %v108, %v108
    %v117 = vcombine.high %v115, %v115
    %v118 = vcombine.high %v56, %v56
    %v120 = vunpack.c.l.s4 1983009808
    %v121 = vunpack.c.0.s8 %v120
    %v122 = vlaneseq
    %v123 = vshrl.u32 %v122, 7
    %v124 = vsub.s32 %v121, %v123
    %v125 = vrot.slane %v56, %v124
    %v127 = vunpack.c.l.s4 1983009808
    %v128 = vunpack.c.0.s8 %v127
    %v129 = vlaneseq
    %v130 = vshrl.u32 %v129, 7
    %v131 = vsub.s32 %v128, %v130
    %v132 = vrot.slane %v118, %v131
    %v133 = vcombine.high %v125, %v125
    %v134 = vcombine.high %v132, %v132
    %v135 = vcombine.high %v57, %v57
    %v137 = vunpack.c.l.s4 1983009808
    %v138 = vunpack.c.0.s8 %v137
    %v139 = vlaneseq
    %v140 = vshrl.u32 %v139, 7
    %v141 = vsub.s32 %v138, %v140
    %v142 = vrot.slane %v57, %v141
    %v144 = vunpack.c.l.s4 1983009808
    %v145 = vunpack.c.0.s8 %v144
    %v146 = vlaneseq
    %v147 = vshrl.u32 %v146, 7
    %v148 = vsub.s32 %v145, %v147
    %v149 = vrot.slane %v135, %v148
    %v150 = vcombine.high %v142, %v142
    %v151 = vcombine.high %v149, %v149
    %v152 = vcombine.high %v58, %v58
    %v154 = vunpack.c.l.s4 1983009808
    %v155 = vunpack.c.0.s8 %v154
    %v156 = vlaneseq
    %v157 = vshrl.u32 %v156, 7
    %v158 = vsub.s32 %v155, %v157
    %v159 = vrot.slane %v58, %v158
    %v161 = vunpack.c.l.s4 1983009808
    %v162 = vunpack.c.0.s8 %v161
    %v163 = vlaneseq
    %v164 = vshrl.u32 %v163, 7
    %v165 = vsub.s32 %v162, %v164
    %v166 = vrot.slane %v152, %v165
    %v167 = vcombine.high %v159, %v159
    %v168 = vcombine.high %v166, %v166
    %v170 = vunpack.c.l.s4 1983009808
    %v171 = vunpack.c.0.s8 %v170
    %v172 = vlaneseq
    %v173 = vshrl.u32 %v172, 7
    %v174 = vsub.s32 %v171, %v173
    %v175 = vrot.slane %v59, %v174
    %v201 = vpack.c.bf16 %v74, %v74
    %v202 = vpack.c.bf16 %v82, %v82
    %v203 = vpack.c.bf16 %v81, %v81
    %v204 = vpack.c.bf16 %v83, %v83
    %v205 = vpack.c.bf16 %v91, %v91
    %v206 = vpack.c.bf16 %v99, %v99
    %v207 = vpack.c.bf16 %v98, %v98
    %v208 = vpack.c.bf16 %v100, %v100
    %v209 = vpack.c.bf16 %v108, %v108
    %v210 = vpack.c.bf16 %v116, %v116
    %v211 = vpack.c.bf16 %v115, %v115
    %v212 = vpack.c.bf16 %v117, %v117
    %v213 = vpack.c.bf16 %v125, %v125
    %v214 = vpack.c.bf16 %v133, %v133
    %v215 = vpack.c.bf16 %v132, %v132
    %v216 = vpack.c.bf16 %v134, %v134
    %v217 = vpack.c.bf16 %v142, %v142
    %v218 = vpack.c.bf16 %v150, %v150
    %v219 = vpack.c.bf16 %v149, %v149
    %v220 = vpack.c.bf16 %v151, %v151
    %v221 = vpack.c.bf16 %v159, %v159
    %v222 = vpack.c.bf16 %v167, %v167
    %v223 = vpack.c.bf16 %v166, %v166
    %v224 = vpack.c.bf16 %v168, %v168
    %v225 = vpack.c.bf16 %v175, %v175
    %v226 = vld [vmem:[%s3] sm:$0xf]
    %v227 = vld [vmem:[%s3 + $0x4] sm:$0xf]
    %v228 = vld [vmem:[%s3 + $0x8] sm:$0xf]
    %v229 = vld [vmem:[%s3 + $0xc] sm:$0xf]
    %v230 = vld [vmem:[%s3 + $0x10] sm:$0xf]
    %v231 = vld [vmem:[%s3 + $0x14] sm:$0xf]
    %v232 = vld [vmem:[%s3 + $0x18] sm:$0xf]
    %v233 = vld [vmem:[%s3 + $0x1c] sm:$0xf]
    %v234 = vld [vmem:[%s3 + $0x20] sm:$0xf]
    %v235 = vld [vmem:[%s3 + $0x24] sm:$0xf]
    %v236 = vld [vmem:[%s3 + $0x28] sm:$0xf]
    %v237 = vld [vmem:[%s3 + $0x2c] sm:$0xf]
    %v238 = vld [vmem:[%s3 + $0x30] sm:$0xf]
    %v239 = vld [vmem:[%s3 + $0x34] sm:$0xf]
    %v240 = vld [vmem:[%s3 + $0x38] sm:$0xf]
    %v241 = vld [vmem:[%s3 + $0x3c] sm:$0xf]
    %v242 = vld [vmem:[%s3 + $0x40] sm:$0xf]
    %v243 = vld [vmem:[%s3 + $0x44] sm:$0xf]
    %v244 = vld [vmem:[%s3 + $0x48] sm:$0xf]
    %v245 = vld [vmem:[%s3 + $0x4c] sm:$0xf]
    %v246 = vld [vmem:[%s3 + $0x50] sm:$0xf]
    %v247 = vld [vmem:[%s3 + $0x54] sm:$0xf]
    %v248 = vld [vmem:[%s3 + $0x58] sm:$0xf]
    %v249 = vld [vmem:[%s3 + $0x5c] sm:$0xf]
    %v250 = vld [vmem:[%s3 + $0x60] sm:$0xf]
    %v251 = vld [vmem:[%s3 + $0x64] sm:$0xf]
    %v252 = vld [vmem:[%s3 + $0x68] sm:$0xf]
    %v253 = vld [vmem:[%s3 + $0x6c] sm:$0xf]
    %v254 = vld [vmem:[%s3 + $0x70] sm:$0xf]
    %v255 = vld [vmem:[%s3 + $0x74] sm:$0xf]
    %v256 = vld [vmem:[%s3 + $0x78] sm:$0xf]
    %v257 = vld [vmem:[%s3 + $0x7c] sm:$0xf]
    %v258 = vld [vmem:[%s3 + $0x80] sm:$0xf]
    %v259 = vld [vmem:[%s3 + $0x84] sm:$0xf]
    %v260 = vld [vmem:[%s3 + $0x88] sm:$0xf]
    %v261 = vld [vmem:[%s3 + $0x8c] sm:$0xf]
    %v262 = vld [vmem:[%s3 + $0x90] sm:$0xf]
    %v263 = vld [vmem:[%s3 + $0x94] sm:$0xf]
    %v264 = vld [vmem:[%s3 + $0x98] sm:$0xf]
    %v265 = vld [vmem:[%s3 + $0x9c] sm:$0xf]
    %v266 = vld [vmem:[%s3 + $0xa0] sm:$0xf]
    %v267 = vld [vmem:[%s3 + $0xa4] sm:$0xf]
    %v268 = vld [vmem:[%s3 + $0xa8] sm:$0xf]
    %v269 = vld [vmem:[%s3 + $0xac] sm:$0xf]
    %v270 = vld [vmem:[%s3 + $0xb0] sm:$0xf]
    %v271 = vld [vmem:[%s3 + $0xb4] sm:$0xf]
    %v272 = vld [vmem:[%s3 + $0xb8] sm:$0xf]
    %v273 = vld [vmem:[%s3 + $0xbc] sm:$0xf]
    %v274 = vld [vmem:[%s3 + $0xc0] sm:$0xf]
    %v275 = vld [vmem:[%s3 + $0xc4] sm:$0xf]
    %v276 = vld [vmem:[%s3 + $0xc8] sm:$0xf]
    %v277 = vld [vmem:[%s3 + $0xcc] sm:$0xf]
    %v278 = vld [vmem:[%s3 + $0xd0] sm:$0xf]
    %v279 = vld [vmem:[%s3 + $0xd4] sm:$0xf]
    %v280 = vld [vmem:[%s3 + $0xd8] sm:$0xf]
    %v281 = vld [vmem:[%s3 + $0xdc] sm:$0xf]
    %v282 = vld [vmem:[%s3 + $0xe0] sm:$0xf]
    %v283 = vld [vmem:[%s3 + $0xe4] sm:$0xf]
    %v284 = vld [vmem:[%s3 + $0xe8] sm:$0xf]
    %v285 = vld [vmem:[%s3 + $0xec] sm:$0xf]
    %v286 = vld [vmem:[%s3 + $0xf0] sm:$0xf]
    %v287 = vld [vmem:[%s3 + $0xf4] sm:$0xf]
    %v288 = vld [vmem:[%s3 + $0xf8] sm:$0xf]
    %v289 = vld [vmem:[%s3 + $0xfc] sm:$0xf]
    %v290 = vld [vmem:[%s3 + $0x100] sm:$0xf]
    %v291 = vld [vmem:[%s3 + $0x104] sm:$0xf]
    %v292 = vld [vmem:[%s3 + $0x108] sm:$0xf]
    %v293 = vld [vmem:[%s3 + $0x10c] sm:$0xf]
    %v294 = vld [vmem:[%s3 + $0x110] sm:$0xf]
    %v295 = vld [vmem:[%s3 + $0x114] sm:$0xf]
    %v296 = vld [vmem:[%s3 + $0x118] sm:$0xf]
    %v297 = vld [vmem:[%s3 + $0x11c] sm:$0xf]
    %v298 = vld [vmem:[%s3 + $0x120] sm:$0xf]
    %v299 = vld [vmem:[%s3 + $0x124] sm:$0xf]
    %v300 = vld [vmem:[%s3 + $0x128] sm:$0xf]
    %v301 = vld [vmem:[%s3 + $0x12c] sm:$0xf]
    %v302 = vld [vmem:[%s3 + $0x130] sm:$0xf]
    %v303 = vld [vmem:[%s3 + $0x134] sm:$0xf]
    %v304 = vld [vmem:[%s3 + $0x138] sm:$0xf]
    %v305 = vld [vmem:[%s3 + $0x13c] sm:$0xf]
    %v306 = vld [vmem:[%s3 + $0x140] sm:$0xf]
    %v307 = vld [vmem:[%s3 + $0x144] sm:$0xf]
    %v308 = vld [vmem:[%s3 + $0x148] sm:$0xf]
    %v309 = vld [vmem:[%s3 + $0x14c] sm:$0xf]
    %v310 = vld [vmem:[%s3 + $0x150] sm:$0xf]
    %v311 = vld [vmem:[%s3 + $0x154] sm:$0xf]
    %v312 = vld [vmem:[%s3 + $0x158] sm:$0xf]
    %v313 = vld [vmem:[%s3 + $0x15c] sm:$0xf]
    %v314 = vld [vmem:[%s3 + $0x160] sm:$0xf]
    %v315 = vld [vmem:[%s3 + $0x164] sm:$0xf]
    %v316 = vld [vmem:[%s3 + $0x168] sm:$0xf]
    %v317 = vld [vmem:[%s3 + $0x16c] sm:$0xf]
    %v318 = vld [vmem:[%s3 + $0x170] sm:$0xf]
    %v319 = vld [vmem:[%s3 + $0x174] sm:$0xf]
    %v320 = vld [vmem:[%s3 + $0x178] sm:$0xf]
    %v321 = vld [vmem:[%s3 + $0x17c] sm:$0xf]
    %v322 = vld [vmem:[%s3 + $0x180] sm:$0xf]
    %v323 = vld [vmem:[%s3 + $0x184] sm:$0xf]
    %v324 = vld [vmem:[%s3 + $0x188] sm:$0xf]
    %v325 = vld [vmem:[%s3 + $0x18c] sm:$0xf]
    %v326 = vld [vmem:[%s3 + $0x190] sm:$0xf]
    %v327 = vld [vmem:[%s3 + $0x194] sm:$0xf]
    %v328 = vld [vmem:[%s3 + $0x198] sm:$0xf]
    %v329 = vld [vmem:[%s3 + $0x19c] sm:$0xf]
    %v330 = vld [vmem:[%s3 + $0x1a0] sm:$0xf]
    %v331 = vld [vmem:[%s3 + $0x1a4] sm:$0xf]
    %v332 = vld [vmem:[%s3 + $0x1a8] sm:$0xf]
    %v333 = vld [vmem:[%s3 + $0x1ac] sm:$0xf]
    %v334 = vld [vmem:[%s3 + $0x1b0] sm:$0xf]
    %v335 = vld [vmem:[%s3 + $0x1b4] sm:$0xf]
    %v336 = vld [vmem:[%s3 + $0x1b8] sm:$0xf]
    %v337 = vld [vmem:[%s3 + $0x1bc] sm:$0xf]
    %v338 = vld [vmem:[%s3 + $0x1c0] sm:$0xf]
    %v339 = vld [vmem:[%s3 + $0x1c4] sm:$0xf]
    %v340 = vld [vmem:[%s3 + $0x1c8] sm:$0xf]
    %v341 = vld [vmem:[%s3 + $0x1cc] sm:$0xf]
    %v342 = vld [vmem:[%s3 + $0x1d0] sm:$0xf]
    %v343 = vld [vmem:[%s3 + $0x1d4] sm:$0xf]
    %v344 = vld [vmem:[%s3 + $0x1d8] sm:$0xf]
    %v345 = vld [vmem:[%s3 + $0x1dc] sm:$0xf]
    %v346 = vld [vmem:[%s3 + $0x1e0] sm:$0xf]
    %v347 = vld [vmem:[%s3 + $0x1e4] sm:$0xf]
    %v348 = vld [vmem:[%s3 + $0x1e8] sm:$0xf]
    %v349 = vld [vmem:[%s3 + $0x1ec] sm:$0xf]
    %v350 = vld [vmem:[%s3 + $0x1f0] sm:$0xf]
    %v351 = vld [vmem:[%s3 + $0x1f4] sm:$0xf]
    %v352 = vld [vmem:[%s3 + $0x1f8] sm:$0xf]
    %v353 = vld [vmem:[%s3 + $0x1fc] sm:$0xf]
    %v354 = vld [vmem:[%s3 + $0x200] sm:$0xf]
    %v355 = vld [vmem:[%s3 + $0x204] sm:$0xf]
    %v356 = vld [vmem:[%s3 + $0x208] sm:$0xf]
    %v357 = vld [vmem:[%s3 + $0x20c] sm:$0xf]
    %v358 = vld [vmem:[%s3 + $0x210] sm:$0xf]
    %v359 = vld [vmem:[%s3 + $0x214] sm:$0xf]
    %v360 = vld [vmem:[%s3 + $0x218] sm:$0xf]
    %v361 = vld [vmem:[%s3 + $0x21c] sm:$0xf]
    %v362 = vld [vmem:[%s3 + $0x220] sm:$0xf]
    %v363 = vld [vmem:[%s3 + $0x224] sm:$0xf]
    %v364 = vld [vmem:[%s3 + $0x228] sm:$0xf]
    %v365 = vld [vmem:[%s3 + $0x22c] sm:$0xf]
    %v366 = vld [vmem:[%s3 + $0x230] sm:$0xf]
    %v367 = vld [vmem:[%s3 + $0x234] sm:$0xf]
    %v368 = vld [vmem:[%s3 + $0x238] sm:$0xf]
    %v369 = vld [vmem:[%s3 + $0x23c] sm:$0xf]
    %v370 = vld [vmem:[%s3 + $0x240] sm:$0xf]
    %v371 = vld [vmem:[%s3 + $0x244] sm:$0xf]
    %v372 = vld [vmem:[%s3 + $0x248] sm:$0xf]
    %v373 = vld [vmem:[%s3 + $0x24c] sm:$0xf]
    %v374 = vld [vmem:[%s3 + $0x250] sm:$0xf]
    %v375 = vld [vmem:[%s3 + $0x254] sm:$0xf]
    %v376 = vld [vmem:[%s3 + $0x258] sm:$0xf]
    %v377 = vld [vmem:[%s3 + $0x25c] sm:$0xf]
    %v378 = vld [vmem:[%s3 + $0x260] sm:$0xf]
    %v379 = vld [vmem:[%s3 + $0x264] sm:$0xf]
    %v380 = vld [vmem:[%s3 + $0x268] sm:$0xf]
    %v381 = vld [vmem:[%s3 + $0x26c] sm:$0xf]
    %v382 = vld [vmem:[%s3 + $0x270] sm:$0xf]
    %v383 = vld [vmem:[%s3 + $0x274] sm:$0xf]
    %v384 = vld [vmem:[%s3 + $0x278] sm:$0xf]
    %v385 = vld [vmem:[%s3 + $0x27c] sm:$0xf]
    %v386 = vld [vmem:[%s3 + $0x280] sm:$0xf]
    %v387 = vld [vmem:[%s3 + $0x284] sm:$0xf]
    %v388 = vld [vmem:[%s3 + $0x288] sm:$0xf]
    %v389 = vld [vmem:[%s3 + $0x28c] sm:$0xf]
    %v390 = vld [vmem:[%s3 + $0x290] sm:$0xf]
    %v391 = vld [vmem:[%s3 + $0x294] sm:$0xf]
    %v392 = vld [vmem:[%s3 + $0x298] sm:$0xf]
    %v393 = vld [vmem:[%s3 + $0x29c] sm:$0xf]
    %v394 = vld [vmem:[%s3 + $0x2a0] sm:$0xf]
    %v395 = vld [vmem:[%s3 + $0x2a4] sm:$0xf]
    %v396 = vld [vmem:[%s3 + $0x2a8] sm:$0xf]
    %v397 = vld [vmem:[%s3 + $0x2ac] sm:$0xf]
    %v398 = vld [vmem:[%s3 + $0x2b0] sm:$0xf]
    %v399 = vld [vmem:[%s3 + $0x2b4] sm:$0xf]
    %v400 = vld [vmem:[%s3 + $0x2b8] sm:$0xf]
    %v401 = vld [vmem:[%s3 + $0x2bc] sm:$0xf]
    %v402 = vld [vmem:[%s3 + $0x2c0] sm:$0xf]
    %v403 = vld [vmem:[%s3 + $0x2c4] sm:$0xf]
    %v404 = vld [vmem:[%s3 + $0x2c8] sm:$0xf]
    %v405 = vld [vmem:[%s3 + $0x2cc] sm:$0xf]
    %v406 = vld [vmem:[%s3 + $0x2d0] sm:$0xf]
    %v407 = vld [vmem:[%s3 + $0x2d4] sm:$0xf]
    %v408 = vld [vmem:[%s3 + $0x2d8] sm:$0xf]
    %v409 = vld [vmem:[%s3 + $0x2dc] sm:$0xf]
    %v410 = vld [vmem:[%s3 + $0x2e0] sm:$0xf]
    %v411 = vld [vmem:[%s3 + $0x2e4] sm:$0xf]
    %v412 = vld [vmem:[%s3 + $0x2e8] sm:$0xf]
    %v413 = vld [vmem:[%s3 + $0x2ec] sm:$0xf]
    %v414 = vld [vmem:[%s3 + $0x2f0] sm:$0xf]
    %v415 = vld [vmem:[%s3 + $0x2f4] sm:$0xf]
    %v416 = vld [vmem:[%s3 + $0x2f8] sm:$0xf]
    %v417 = vld [vmem:[%s3 + $0x2fc] sm:$0xf]
    %v418 = vld [vmem:[%s3 + $0x300] sm:$0xf]
    %v419 = vld [vmem:[%s3 + $0x304] sm:$0xf]
    %v420 = vld [vmem:[%s3 + $0x308] sm:$0xf]
    %v421 = vld [vmem:[%s3 + $0x30c] sm:$0xf]
    %v422 = vld [vmem:[%s3 + $0x310] sm:$0xf]
    %v423 = vld [vmem:[%s3 + $0x314] sm:$0xf]
    %v424 = vld [vmem:[%s3 + $0x318] sm:$0xf]
    %v425 = vld [vmem:[%s3 + $0x31c] sm:$0xf]
    %v426 = vld [vmem:[%s3 + $0x320] sm:$0xf]
    %v427 = vld [vmem:[%s3 + $0x324] sm:$0xf]
    %v428 = vld [vmem:[%s3 + $0x328] sm:$0xf]
    %v429 = vld [vmem:[%s3 + $0x32c] sm:$0xf]
    %v430 = vld [vmem:[%s3 + $0x330] sm:$0xf]
    %v431 = vld [vmem:[%s3 + $0x334] sm:$0xf]
    %v432 = vld [vmem:[%s3 + $0x338] sm:$0xf]
    %v433 = vld [vmem:[%s3 + $0x33c] sm:$0xf]
    %v434 = vld [vmem:[%s3 + $0x340] sm:$0xf]
    %v435 = vld [vmem:[%s3 + $0x344] sm:$0xf]
    %v436 = vld [vmem:[%s3 + $0x348] sm:$0xf]
    %v437 = vld [vmem:[%s3 + $0x34c] sm:$0xf]
    %v438 = vld [vmem:[%s3 + $0x350] sm:$0xf]
    %v439 = vld [vmem:[%s3 + $0x354] sm:$0xf]
    %v440 = vld [vmem:[%s3 + $0x358] sm:$0xf]
    %v441 = vld [vmem:[%s3 + $0x35c] sm:$0xf]
    %v442 = vld [vmem:[%s3 + $0x360] sm:$0xf]
    %v443 = vld [vmem:[%s3 + $0x364] sm:$0xf]
    %v444 = vld [vmem:[%s3 + $0x368] sm:$0xf]
    %v445 = vld [vmem:[%s3 + $0x36c] sm:$0xf]
    %v446 = vld [vmem:[%s3 + $0x370] sm:$0xf]
    %v447 = vld [vmem:[%s3 + $0x374] sm:$0xf]
    %v448 = vld [vmem:[%s3 + $0x378] sm:$0xf]
    %v449 = vld [vmem:[%s3 + $0x37c] sm:$0xf]
    %v450 = vld [vmem:[%s3 + $0x380] sm:$0xf]
    %v451 = vld [vmem:[%s3 + $0x384] sm:$0xf]
    %v452 = vld [vmem:[%s3 + $0x388] sm:$0xf]
    %v453 = vld [vmem:[%s3 + $0x38c] sm:$0xf]
    %v454 = vld [vmem:[%s3 + $0x390] sm:$0xf]
    %v455 = vld [vmem:[%s3 + $0x394] sm:$0xf]
    %v456 = vld [vmem:[%s3 + $0x398] sm:$0xf]
    %v457 = vld [vmem:[%s3 + $0x39c] sm:$0xf]
    %v458 = vld [vmem:[%s3 + $0x3a0] sm:$0xf]
    %v459 = vld [vmem:[%s3 + $0x3a4] sm:$0xf]
    %v460 = vld [vmem:[%s3 + $0x3a8] sm:$0xf]
    %v461 = vld [vmem:[%s3 + $0x3ac] sm:$0xf]
    %v462 = vld [vmem:[%s3 + $0x3b0] sm:$0xf]
    %v463 = vld [vmem:[%s3 + $0x3b4] sm:$0xf]
    %v464 = vld [vmem:[%s3 + $0x3b8] sm:$0xf]
    %v465 = vld [vmem:[%s3 + $0x3bc] sm:$0xf]
    %v466 = vld [vmem:[%s3 + $0x3c0] sm:$0xf]
    %v467 = vld [vmem:[%s3 + $0x3c4] sm:$0xf]
    %v468 = vld [vmem:[%s3 + $0x3c8] sm:$0xf]
    %v469 = vld [vmem:[%s3 + $0x3cc] sm:$0xf]
    %v470 = vld [vmem:[%s3 + $0x3d0] sm:$0xf]
    %v471 = vld [vmem:[%s3 + $0x3d4] sm:$0xf]
    %v472 = vld [vmem:[%s3 + $0x3d8] sm:$0xf]
    %v473 = vld [vmem:[%s3 + $0x3dc] sm:$0xf]
    %v474 = vld [vmem:[%s3 + $0x3e0] sm:$0xf]
    %v475 = vld [vmem:[%s3 + $0x3e4] sm:$0xf]
    %v476 = vld [vmem:[%s3 + $0x3e8] sm:$0xf]
    %v477 = vld [vmem:[%s3 + $0x3ec] sm:$0xf]
    %v478 = vld [vmem:[%s3 + $0x3f0] sm:$0xf]
    %v479 = vld [vmem:[%s3 + $0x3f4] sm:$0xf]
    %v480 = vld [vmem:[%s3 + $0x3f8] sm:$0xf]
    %v481 = vld [vmem:[%s3 + $0x3fc] sm:$0xf]
    %v482 = vld [vmem:[%s3 + $0x400] sm:$0xf]
    %v483 = vld [vmem:[%s3 + $0x404] sm:$0xf]
    %v484 = vld [vmem:[%s3 + $0x408] sm:$0xf]
    %v485 = vld [vmem:[%s3 + $0x40c] sm:$0xf]
    %v486 = vld [vmem:[%s3 + $0x410] sm:$0xf]
    %v487 = vld [vmem:[%s3 + $0x414] sm:$0xf]
    %v488 = vld [vmem:[%s3 + $0x418] sm:$0xf]
    %v489 = vld [vmem:[%s3 + $0x41c] sm:$0xf]
    %v490 = vld [vmem:[%s3 + $0x420] sm:$0xf]
    %v491 = vld [vmem:[%s3 + $0x424] sm:$0xf]
    %v492 = vld [vmem:[%s3 + $0x428] sm:$0xf]
    %v493 = vld [vmem:[%s3 + $0x42c] sm:$0xf]
    %v494 = vld [vmem:[%s3 + $0x430] sm:$0xf]
    %v495 = vld [vmem:[%s3 + $0x434] sm:$0xf]
    %v496 = vld [vmem:[%s3 + $0x438] sm:$0xf]
    %v497 = vld [vmem:[%s3 + $0x43c] sm:$0xf]
    %v498 = vld [vmem:[%s3 + $0x440] sm:$0xf]
    %v499 = vld [vmem:[%s3 + $0x444] sm:$0xf]
    %v500 = vld [vmem:[%s3 + $0x448] sm:$0xf]
    %v501 = vld [vmem:[%s3 + $0x44c] sm:$0xf]
    %v502 = vld [vmem:[%s3 + $0x450] sm:$0xf]
    %v503 = vld [vmem:[%s3 + $0x454] sm:$0xf]
    %v504 = vld [vmem:[%s3 + $0x458] sm:$0xf]
    %v505 = vld [vmem:[%s3 + $0x45c] sm:$0xf]
    %v506 = vld [vmem:[%s3 + $0x460] sm:$0xf]
    %v507 = vld [vmem:[%s3 + $0x464] sm:$0xf]
    %v508 = vld [vmem:[%s3 + $0x468] sm:$0xf]
    %v509 = vld [vmem:[%s3 + $0x46c] sm:$0xf]
    %v510 = vld [vmem:[%s3 + $0x470] sm:$0xf]
    %v511 = vld [vmem:[%s3 + $0x474] sm:$0xf]
    %v512 = vld [vmem:[%s3 + $0x478] sm:$0xf]
    %v513 = vld [vmem:[%s3 + $0x47c] sm:$0xf]
    %v514 = vld [vmem:[%s3 + $0x480] sm:$0xf]
    %v515 = vld [vmem:[%s3 + $0x484] sm:$0xf]
    %v516 = vld [vmem:[%s3 + $0x488] sm:$0xf]
    %v517 = vld [vmem:[%s3 + $0x48c] sm:$0xf]
    %v518 = vld [vmem:[%s3 + $0x490] sm:$0xf]
    %v519 = vld [vmem:[%s3 + $0x494] sm:$0xf]
    %v520 = vld [vmem:[%s3 + $0x498] sm:$0xf]
    %v521 = vld [vmem:[%s3 + $0x49c] sm:$0xf]
    %v522 = vld [vmem:[%s3 + $0x4a0] sm:$0xf]
    %v523 = vld [vmem:[%s3 + $0x4a4] sm:$0xf]
    %v524 = vld [vmem:[%s3 + $0x4a8] sm:$0xf]
    %v525 = vld [vmem:[%s3 + $0x4ac] sm:$0xf]
    %v526 = vld [vmem:[%s3 + $0x4b0] sm:$0xf]
    %v527 = vld [vmem:[%s3 + $0x4b4] sm:$0xf]
    %v528 = vld [vmem:[%s3 + $0x4b8] sm:$0xf]
    %v529 = vld [vmem:[%s3 + $0x4bc] sm:$0xf]
    %v530 = vld [vmem:[%s3 + $0x4c0] sm:$0xf]
    %v531 = vld [vmem:[%s3 + $0x4c4] sm:$0xf]
    %v532 = vld [vmem:[%s3 + $0x4c8] sm:$0xf]
    %v533 = vld [vmem:[%s3 + $0x4cc] sm:$0xf]
    %v534 = vld [vmem:[%s3 + $0x4d0] sm:$0xf]
    %v535 = vld [vmem:[%s3 + $0x4d4] sm:$0xf]
    %v536 = vld [vmem:[%s3 + $0x4d8] sm:$0xf]
    %v537 = vld [vmem:[%s3 + $0x4dc] sm:$0xf]
    %v538 = vld [vmem:[%s3 + $0x4e0] sm:$0xf]
    %v539 = vld [vmem:[%s3 + $0x4e4] sm:$0xf]
    %v540 = vld [vmem:[%s3 + $0x4e8] sm:$0xf]
    %v541 = vld [vmem:[%s3 + $0x4ec] sm:$0xf]
    %v542 = vld [vmem:[%s3 + $0x4f0] sm:$0xf]
    %v543 = vld [vmem:[%s3 + $0x4f4] sm:$0xf]
    %v544 = vld [vmem:[%s3 + $0x4f8] sm:$0xf]
    %v545 = vld [vmem:[%s3 + $0x4fc] sm:$0xf]
    %v546 = vld [vmem:[%s3 + $0x500] sm:$0xf]
    %v547 = vld [vmem:[%s3 + $0x504] sm:$0xf]
    %v548 = vld [vmem:[%s3 + $0x508] sm:$0xf]
    %v549 = vld [vmem:[%s3 + $0x50c] sm:$0xf]
    %v550 = vld [vmem:[%s3 + $0x510] sm:$0xf]
    %v551 = vld [vmem:[%s3 + $0x514] sm:$0xf]
    %v552 = vld [vmem:[%s3 + $0x518] sm:$0xf]
    %v553 = vld [vmem:[%s3 + $0x51c] sm:$0xf]
    %v554 = vld [vmem:[%s3 + $0x520] sm:$0xf]
    %v555 = vld [vmem:[%s3 + $0x524] sm:$0xf]
    %v556 = vld [vmem:[%s3 + $0x528] sm:$0xf]
    %v557 = vld [vmem:[%s3 + $0x52c] sm:$0xf]
    %v558 = vld [vmem:[%s3 + $0x530] sm:$0xf]
    %v559 = vld [vmem:[%s3 + $0x534] sm:$0xf]
    %v560 = vld [vmem:[%s3 + $0x538] sm:$0xf]
    %v561 = vld [vmem:[%s3 + $0x53c] sm:$0xf]
    %v562 = vld [vmem:[%s3 + $0x540] sm:$0xf]
    %v563 = vld [vmem:[%s3 + $0x544] sm:$0xf]
    %v564 = vld [vmem:[%s3 + $0x548] sm:$0xf]
    %v565 = vld [vmem:[%s3 + $0x54c] sm:$0xf]
    %v566 = vld [vmem:[%s3 + $0x550] sm:$0xf]
    %v567 = vld [vmem:[%s3 + $0x554] sm:$0xf]
    %v568 = vld [vmem:[%s3 + $0x558] sm:$0xf]
    %v569 = vld [vmem:[%s3 + $0x55c] sm:$0xf]
    %v570 = vld [vmem:[%s3 + $0x560] sm:$0xf]
    %v571 = vld [vmem:[%s3 + $0x564] sm:$0xf]
    %v572 = vld [vmem:[%s3 + $0x568] sm:$0xf]
    %v573 = vld [vmem:[%s3 + $0x56c] sm:$0xf]
    %v574 = vld [vmem:[%s3 + $0x570] sm:$0xf]
    %v575 = vld [vmem:[%s3 + $0x574] sm:$0xf]
    %v576 = vld [vmem:[%s3 + $0x578] sm:$0xf]
    %v577 = vld [vmem:[%s3 + $0x57c] sm:$0xf]
    %v578 = vld [vmem:[%s3 + $0x580] sm:$0xf]
    %v579 = vld [vmem:[%s3 + $0x584] sm:$0xf]
    %v580 = vld [vmem:[%s3 + $0x588] sm:$0xf]
    %v581 = vld [vmem:[%s3 + $0x58c] sm:$0xf]
    %v582 = vld [vmem:[%s3 + $0x590] sm:$0xf]
    %v583 = vld [vmem:[%s3 + $0x594] sm:$0xf]
    %v584 = vld [vmem:[%s3 + $0x598] sm:$0xf]
    %v585 = vld [vmem:[%s3 + $0x59c] sm:$0xf]
    %v586 = vld [vmem:[%s3 + $0x5a0] sm:$0xf]
    %v587 = vld [vmem:[%s3 + $0x5a4] sm:$0xf]
    %v588 = vld [vmem:[%s3 + $0x5a8] sm:$0xf]
    %v589 = vld [vmem:[%s3 + $0x5ac] sm:$0xf]
    %v590 = vld [vmem:[%s3 + $0x5b0] sm:$0xf]
    %v591 = vld [vmem:[%s3 + $0x5b4] sm:$0xf]
    %v592 = vld [vmem:[%s3 + $0x5b8] sm:$0xf]
    %v593 = vld [vmem:[%s3 + $0x5bc] sm:$0xf]
    %v594 = vld [vmem:[%s3 + $0x5c0] sm:$0xf]
    %v595 = vld [vmem:[%s3 + $0x5c4] sm:$0xf]
    %v596 = vld [vmem:[%s3 + $0x5c8] sm:$0xf]
    %v597 = vld [vmem:[%s3 + $0x5cc] sm:$0xf]
    %v598 = vld [vmem:[%s3 + $0x5d0] sm:$0xf]
    %v599 = vld [vmem:[%s3 + $0x5d4] sm:$0xf]
    %v600 = vld [vmem:[%s3 + $0x5d8] sm:$0xf]
    %v601 = vld [vmem:[%s3 + $0x5dc] sm:$0xf]
    %v602 = vld [vmem:[%s3 + $0x5e0] sm:$0xf]
    %v603 = vld [vmem:[%s3 + $0x5e4] sm:$0xf]
    %v604 = vld [vmem:[%s3 + $0x5e8] sm:$0xf]
    %v605 = vld [vmem:[%s3 + $0x5ec] sm:$0xf]
    %v606 = vld [vmem:[%s3 + $0x5f0] sm:$0xf]
    %v607 = vld [vmem:[%s3 + $0x5f4] sm:$0xf]
    %v608 = vld [vmem:[%s3 + $0x5f8] sm:$0xf]
    %v609 = vld [vmem:[%s3 + $0x5fc] sm:$0xf]
    %v610 = vld [vmem:[%s3 + $0x600] sm:$0xf]
    %v611 = vld [vmem:[%s3 + $0x604] sm:$0xf]
    %v612 = vld [vmem:[%s3 + $0x608] sm:$0xf]
    %v613 = vld [vmem:[%s3 + $0x60c] sm:$0xf]
    %v614 = vld [vmem:[%s3 + $0x610] sm:$0xf]
    %v615 = vld [vmem:[%s3 + $0x614] sm:$0xf]
    %v616 = vld [vmem:[%s3 + $0x618] sm:$0xf]
    %v617 = vld [vmem:[%s3 + $0x61c] sm:$0xf]
    %v618 = vld [vmem:[%s4] sm:$0x1]
    %v620 = vlaneseq
    %v621 = vshrl.u32 %v620, 7
    %v622 = vsub.s32 0, %v621
    %v623 = vrot.slane %v618, %v622
    %v1017 = vunpack.c.l.b16 %v226
    %v1018 = vunpack.c.l.b16 %v227
    %v1019 = vunpack.c.l.b16 %v228
    %v1020 = vunpack.c.l.b16 %v229
    %v1021 = vunpack.c.l.b16 %v230
    %v1022 = vunpack.c.l.b16 %v231
    %v1023 = vunpack.c.l.b16 %v232
    %v1024 = vunpack.c.l.b16 %v233
    %v1025 = vunpack.c.l.b16 %v234
    %v1026 = vunpack.c.l.b16 %v235
    %v1027 = vunpack.c.l.b16 %v236
    %v1028 = vunpack.c.l.b16 %v237
    %v1029 = vunpack.c.l.b16 %v238
    %v1030 = vunpack.c.l.b16 %v239
    %v1031 = vunpack.c.l.b16 %v240
    %v1032 = vunpack.c.l.b16 %v241
    %v1033 = vunpack.c.l.b16 %v242
    %v1034 = vunpack.c.l.b16 %v243
    %v1035 = vunpack.c.l.b16 %v244
    %v1036 = vunpack.c.l.b16 %v245
    %v1037 = vunpack.c.l.b16 %v246
    %v1038 = vunpack.c.l.b16 %v247
    %v1039 = vunpack.c.l.b16 %v248
    %v1040 = vunpack.c.l.b16 %v249
    %v1041 = vunpack.c.l.b16 %v250
    %v1042 = vunpack.c.l.b16 %v251
    %v1043 = vunpack.c.l.b16 %v252
    %v1044 = vunpack.c.l.b16 %v253
    %v1045 = vunpack.c.l.b16 %v254
    %v1046 = vunpack.c.l.b16 %v255
    %v1047 = vunpack.c.l.b16 %v256
    %v1048 = vunpack.c.l.b16 %v257
    %v1049 = vunpack.c.l.b16 %v258
    %v1050 = vunpack.c.l.b16 %v259
    %v1051 = vunpack.c.l.b16 %v260
    %v1052 = vunpack.c.l.b16 %v261
    %v1053 = vunpack.c.l.b16 %v262
    %v1054 = vunpack.c.l.b16 %v263
    %v1055 = vunpack.c.l.b16 %v264
    %v1056 = vunpack.c.l.b16 %v265
    %v1057 = vunpack.c.l.b16 %v266
    %v1058 = vunpack.c.l.b16 %v267
    %v1059 = vunpack.c.l.b16 %v268
    %v1060 = vunpack.c.l.b16 %v269
    %v1061 = vunpack.c.l.b16 %v270
    %v1062 = vunpack.c.l.b16 %v271
    %v1063 = vunpack.c.l.b16 %v272
    %v1064 = vunpack.c.l.b16 %v273
    %v1065 = vunpack.c.l.b16 %v274
    %v1066 = vunpack.c.l.b16 %v275
    %v1067 = vunpack.c.l.b16 %v276
    %v1068 = vunpack.c.l.b16 %v277
    %v1069 = vunpack.c.l.b16 %v278
    %v1070 = vunpack.c.l.b16 %v279
    %v1071 = vunpack.c.l.b16 %v280
    %v1072 = vunpack.c.l.b16 %v281
    %v1073 = vunpack.c.l.b16 %v282
    %v1074 = vunpack.c.l.b16 %v283
    %v1075 = vunpack.c.l.b16 %v284
    %v1076 = vunpack.c.l.b16 %v285
    %v1077 = vunpack.c.l.b16 %v286
    %v1078 = vunpack.c.l.b16 %v287
    %v1079 = vunpack.c.l.b16 %v288
    %v1080 = vunpack.c.l.b16 %v289
    %v1081 = vunpack.c.l.b16 %v290
    %v1082 = vunpack.c.l.b16 %v291
    %v1083 = vunpack.c.l.b16 %v292
    %v1084 = vunpack.c.l.b16 %v293
    %v1085 = vunpack.c.l.b16 %v294
    %v1086 = vunpack.c.l.b16 %v295
    %v1087 = vunpack.c.l.b16 %v296
    %v1088 = vunpack.c.l.b16 %v297
    %v1089 = vunpack.c.l.b16 %v298
    %v1090 = vunpack.c.l.b16 %v299
    %v1091 = vunpack.c.l.b16 %v300
    %v1092 = vunpack.c.l.b16 %v301
    %v1093 = vunpack.c.l.b16 %v302
    %v1094 = vunpack.c.l.b16 %v303
    %v1095 = vunpack.c.l.b16 %v304
    %v1096 = vunpack.c.l.b16 %v305
    %v1097 = vunpack.c.l.b16 %v306
    %v1098 = vunpack.c.l.b16 %v307
    %v1099 = vunpack.c.l.b16 %v308
    %v1100 = vunpack.c.l.b16 %v309
    %v1101 = vunpack.c.l.b16 %v310
    %v1102 = vunpack.c.l.b16 %v311
    %v1103 = vunpack.c.l.b16 %v312
    %v1104 = vunpack.c.l.b16 %v313
    %v1105 = vunpack.c.l.b16 %v314
    %v1106 = vunpack.c.l.b16 %v315
    %v1107 = vunpack.c.l.b16 %v316
    %v1108 = vunpack.c.l.b16 %v317
    %v1109 = vunpack.c.l.b16 %v318
    %v1110 = vunpack.c.l.b16 %v319
    %v1111 = vunpack.c.l.b16 %v320
    %v1112 = vunpack.c.l.b16 %v321
    %v1113 = vunpack.c.l.b16 %v322
    %v1114 = vunpack.c.l.b16 %v323
    %v1115 = vunpack.c.l.b16 %v324
    %v1116 = vunpack.c.l.b16 %v325
    %v1117 = vunpack.c.l.b16 %v326
    %v1118 = vunpack.c.l.b16 %v327
    %v1119 = vunpack.c.l.b16 %v328
    %v1120 = vunpack.c.l.b16 %v329
    %v1121 = vunpack.c.l.b16 %v330
    %v1122 = vunpack.c.l.b16 %v331
    %v1123 = vunpack.c.l.b16 %v332
    %v1124 = vunpack.c.l.b16 %v333
    %v1125 = vunpack.c.l.b16 %v334
    %v1126 = vunpack.c.l.b16 %v335
    %v1127 = vunpack.c.l.b16 %v336
    %v1128 = vunpack.c.l.b16 %v337
    %v1129 = vunpack.c.l.b16 %v338
    %v1130 = vunpack.c.l.b16 %v339
    %v1131 = vunpack.c.l.b16 %v340
    %v1132 = vunpack.c.l.b16 %v341
    %v1133 = vunpack.c.l.b16 %v342
    %v1134 = vunpack.c.l.b16 %v343
    %v1135 = vunpack.c.l.b16 %v344
    %v1136 = vunpack.c.l.b16 %v345
    %v1137 = vunpack.c.l.b16 %v346
    %v1138 = vunpack.c.l.b16 %v347
    %v1139 = vunpack.c.l.b16 %v348
    %v1140 = vunpack.c.l.b16 %v349
    %v1141 = vunpack.c.l.b16 %v350
    %v1142 = vunpack.c.l.b16 %v351
    %v1143 = vunpack.c.l.b16 %v352
    %v1144 = vunpack.c.l.b16 %v353
    %v1145 = vunpack.c.l.b16 %v354
    %v1146 = vunpack.c.l.b16 %v355
    %v1147 = vunpack.c.l.b16 %v356
    %v1148 = vunpack.c.l.b16 %v357
    %v1149 = vunpack.c.l.b16 %v358
    %v1150 = vunpack.c.l.b16 %v359
    %v1151 = vunpack.c.l.b16 %v360
    %v1152 = vunpack.c.l.b16 %v361
    %v1153 = vunpack.c.l.b16 %v362
    %v1154 = vunpack.c.l.b16 %v363
    %v1155 = vunpack.c.l.b16 %v364
    %v1156 = vunpack.c.l.b16 %v365
    %v1157 = vunpack.c.l.b16 %v366
    %v1158 = vunpack.c.l.b16 %v367
    %v1159 = vunpack.c.l.b16 %v368
    %v1160 = vunpack.c.l.b16 %v369
    %v1161 = vunpack.c.l.b16 %v370
    %v1162 = vunpack.c.l.b16 %v371
    %v1163 = vunpack.c.l.b16 %v372
    %v1164 = vunpack.c.l.b16 %v373
    %v1165 = vunpack.c.l.b16 %v374
    %v1166 = vunpack.c.l.b16 %v375
    %v1167 = vunpack.c.l.b16 %v376
    %v1168 = vunpack.c.l.b16 %v377
    %v1169 = vunpack.c.l.b16 %v378
    %v1170 = vunpack.c.l.b16 %v379
    %v1171 = vunpack.c.l.b16 %v380
    %v1172 = vunpack.c.l.b16 %v381
    %v1173 = vunpack.c.l.b16 %v382
    %v1174 = vunpack.c.l.b16 %v383
    %v1175 = vunpack.c.l.b16 %v384
    %v1176 = vunpack.c.l.b16 %v385
    %v1177 = vunpack.c.l.b16 %v386
    %v1178 = vunpack.c.l.b16 %v387
    %v1179 = vunpack.c.l.b16 %v388
    %v1180 = vunpack.c.l.b16 %v389
    %v1181 = vunpack.c.l.b16 %v390
    %v1182 = vunpack.c.l.b16 %v391
    %v1183 = vunpack.c.l.b16 %v392
    %v1184 = vunpack.c.l.b16 %v393
    %v1185 = vunpack.c.l.b16 %v394
    %v1186 = vunpack.c.l.b16 %v395
    %v1187 = vunpack.c.l.b16 %v396
    %v1188 = vunpack.c.l.b16 %v397
    %v1189 = vunpack.c.l.b16 %v398
    %v1190 = vunpack.c.l.b16 %v399
    %v1191 = vunpack.c.l.b16 %v400
    %v1192 = vunpack.c.l.b16 %v401
    %v1193 = vunpack.c.l.b16 %v402
    %v1194 = vunpack.c.l.b16 %v403
    %v1195 = vunpack.c.l.b16 %v404
    %v1196 = vunpack.c.l.b16 %v405
    %v1197 = vunpack.c.l.b16 %v406
    %v1198 = vunpack.c.l.b16 %v407
    %v1199 = vunpack.c.l.b16 %v408
    %v1200 = vunpack.c.l.b16 %v409
    %v1201 = vunpack.c.l.b16 %v410
    %v1202 = vunpack.c.l.b16 %v411
    %v1203 = vunpack.c.l.b16 %v412
    %v1204 = vunpack.c.l.b16 %v413
    %v1205 = vunpack.c.l.b16 %v414
    %v1206 = vunpack.c.l.b16 %v415
    %v1207 = vunpack.c.l.b16 %v416
    %v1208 = vunpack.c.l.b16 %v417
    %v1209 = vunpack.c.l.b16 %v418
    %v1210 = vunpack.c.l.b16 %v419
    %v1211 = vunpack.c.l.b16 %v420
    %v1212 = vunpack.c.l.b16 %v421
    %v1213 = vunpack.c.l.b16 %v422
    %v1214 = vunpack.c.l.b16 %v423
    %v1215 = vunpack.c.l.b16 %v424
    %v1216 = vunpack.c.l.b16 %v425
    %v1217 = vunpack.c.l.b16 %v426
    %v1218 = vunpack.c.l.b16 %v427
    %v1219 = vunpack.c.l.b16 %v428
    %v1220 = vunpack.c.l.b16 %v429
    %v1221 = vunpack.c.l.b16 %v430
    %v1222 = vunpack.c.l.b16 %v431
    %v1223 = vunpack.c.l.b16 %v432
    %v1224 = vunpack.c.l.b16 %v433
    %v1225 = vunpack.c.l.b16 %v434
    %v1226 = vunpack.c.l.b16 %v435
    %v1227 = vunpack.c.l.b16 %v436
    %v1228 = vunpack.c.l.b16 %v437
    %v1229 = vunpack.c.l.b16 %v438
    %v1230 = vunpack.c.l.b16 %v439
    %v1231 = vunpack.c.l.b16 %v440
    %v1232 = vunpack.c.l.b16 %v441
    %v1233 = vunpack.c.l.b16 %v442
    %v1234 = vunpack.c.l.b16 %v443
    %v1235 = vunpack.c.l.b16 %v444
    %v1236 = vunpack.c.l.b16 %v445
    %v1237 = vunpack.c.l.b16 %v446
    %v1238 = vunpack.c.l.b16 %v447
    %v1239 = vunpack.c.l.b16 %v448
    %v1240 = vunpack.c.l.b16 %v449
    %v1241 = vunpack.c.l.b16 %v450
    %v1242 = vunpack.c.l.b16 %v451
    %v1243 = vunpack.c.l.b16 %v452
    %v1244 = vunpack.c.l.b16 %v453
    %v1245 = vunpack.c.l.b16 %v454
    %v1246 = vunpack.c.l.b16 %v455
    %v1247 = vunpack.c.l.b16 %v456
    %v1248 = vunpack.c.l.b16 %v457
    %v1249 = vunpack.c.l.b16 %v458
    %v1250 = vunpack.c.l.b16 %v459
    %v1251 = vunpack.c.l.b16 %v460
    %v1252 = vunpack.c.l.b16 %v461
    %v1253 = vunpack.c.l.b16 %v462
    %v1254 = vunpack.c.l.b16 %v463
    %v1255 = vunpack.c.l.b16 %v464
    %v1256 = vunpack.c.l.b16 %v465
    %v1257 = vunpack.c.l.b16 %v466
    %v1258 = vunpack.c.l.b16 %v467
    %v1259 = vunpack.c.l.b16 %v468
    %v1260 = vunpack.c.l.b16 %v469
    %v1261 = vunpack.c.l.b16 %v470
    %v1262 = vunpack.c.l.b16 %v471
    %v1263 = vunpack.c.l.b16 %v472
    %v1264 = vunpack.c.l.b16 %v473
    %v1265 = vunpack.c.l.b16 %v474
    %v1266 = vunpack.c.l.b16 %v475
    %v1267 = vunpack.c.l.b16 %v476
    %v1268 = vunpack.c.l.b16 %v477
    %v1269 = vunpack.c.l.b16 %v478
    %v1270 = vunpack.c.l.b16 %v479
    %v1271 = vunpack.c.l.b16 %v480
    %v1272 = vunpack.c.l.b16 %v481
    %v1273 = vunpack.c.l.b16 %v482
    %v1274 = vunpack.c.l.b16 %v483
    %v1275 = vunpack.c.l.b16 %v484
    %v1276 = vunpack.c.l.b16 %v485
    %v1277 = vunpack.c.l.b16 %v486
    %v1278 = vunpack.c.l.b16 %v487
    %v1279 = vunpack.c.l.b16 %v488
    %v1280 = vunpack.c.l.b16 %v489
    %v1281 = vunpack.c.l.b16 %v490
    %v1282 = vunpack.c.l.b16 %v491
    %v1283 = vunpack.c.l.b16 %v492
    %v1284 = vunpack.c.l.b16 %v493
    %v1285 = vunpack.c.l.b16 %v494
    %v1286 = vunpack.c.l.b16 %v495
    %v1287 = vunpack.c.l.b16 %v496
    %v1288 = vunpack.c.l.b16 %v497
    %v1289 = vunpack.c.l.b16 %v498
    %v1290 = vunpack.c.l.b16 %v499
    %v1291 = vunpack.c.l.b16 %v500
    %v1292 = vunpack.c.l.b16 %v501
    %v1293 = vunpack.c.l.b16 %v502
    %v1294 = vunpack.c.l.b16 %v503
    %v1295 = vunpack.c.l.b16 %v504
    %v1296 = vunpack.c.l.b16 %v505
    %v1297 = vunpack.c.l.b16 %v506
    %v1298 = vunpack.c.l.b16 %v507
    %v1299 = vunpack.c.l.b16 %v508
    %v1300 = vunpack.c.l.b16 %v509
    %v1301 = vunpack.c.l.b16 %v510
    %v1302 = vunpack.c.l.b16 %v511
    %v1303 = vunpack.c.l.b16 %v512
    %v1304 = vunpack.c.l.b16 %v513
    %v1305 = vunpack.c.l.b16 %v514
    %v1306 = vunpack.c.l.b16 %v515
    %v1307 = vunpack.c.l.b16 %v516
    %v1308 = vunpack.c.l.b16 %v517
    %v1309 = vunpack.c.l.b16 %v518
    %v1310 = vunpack.c.l.b16 %v519
    %v1311 = vunpack.c.l.b16 %v520
    %v1312 = vunpack.c.l.b16 %v521
    %v1313 = vunpack.c.l.b16 %v522
    %v1314 = vunpack.c.l.b16 %v523
    %v1315 = vunpack.c.l.b16 %v524
    %v1316 = vunpack.c.l.b16 %v525
    %v1317 = vunpack.c.l.b16 %v526
    %v1318 = vunpack.c.l.b16 %v527
    %v1319 = vunpack.c.l.b16 %v528
    %v1320 = vunpack.c.l.b16 %v529
    %v1321 = vunpack.c.l.b16 %v530
    %v1322 = vunpack.c.l.b16 %v531
    %v1323 = vunpack.c.l.b16 %v532
    %v1324 = vunpack.c.l.b16 %v533
    %v1325 = vunpack.c.l.b16 %v534
    %v1326 = vunpack.c.l.b16 %v535
    %v1327 = vunpack.c.l.b16 %v536
    %v1328 = vunpack.c.l.b16 %v537
    %v1329 = vunpack.c.l.b16 %v538
    %v1330 = vunpack.c.l.b16 %v539
    %v1331 = vunpack.c.l.b16 %v540
    %v1332 = vunpack.c.l.b16 %v541
    %v1333 = vunpack.c.l.b16 %v542
    %v1334 = vunpack.c.l.b16 %v543
    %v1335 = vunpack.c.l.b16 %v544
    %v1336 = vunpack.c.l.b16 %v545
    %v1337 = vunpack.c.l.b16 %v546
    %v1338 = vunpack.c.l.b16 %v547
    %v1339 = vunpack.c.l.b16 %v548
    %v1340 = vunpack.c.l.b16 %v549
    %v1341 = vunpack.c.l.b16 %v550
    %v1342 = vunpack.c.l.b16 %v551
    %v1343 = vunpack.c.l.b16 %v552
    %v1344 = vunpack.c.l.b16 %v553
    %v1345 = vunpack.c.l.b16 %v554
    %v1346 = vunpack.c.l.b16 %v555
    %v1347 = vunpack.c.l.b16 %v556
    %v1348 = vunpack.c.l.b16 %v557
    %v1349 = vunpack.c.l.b16 %v558
    %v1350 = vunpack.c.l.b16 %v559
    %v1351 = vunpack.c.l.b16 %v560
    %v1352 = vunpack.c.l.b16 %v561
    %v1353 = vunpack.c.l.b16 %v562
    %v1354 = vunpack.c.l.b16 %v563
    %v1355 = vunpack.c.l.b16 %v564
    %v1356 = vunpack.c.l.b16 %v565
    %v1357 = vunpack.c.l.b16 %v566
    %v1358 = vunpack.c.l.b16 %v567
    %v1359 = vunpack.c.l.b16 %v568
    %v1360 = vunpack.c.l.b16 %v569
    %v1361 = vunpack.c.l.b16 %v570
    %v1362 = vunpack.c.l.b16 %v571
    %v1363 = vunpack.c.l.b16 %v572
    %v1364 = vunpack.c.l.b16 %v573
    %v1365 = vunpack.c.l.b16 %v574
    %v1366 = vunpack.c.l.b16 %v575
    %v1367 = vunpack.c.l.b16 %v576
    %v1368 = vunpack.c.l.b16 %v577
    %v1369 = vunpack.c.l.b16 %v578
    %v1370 = vunpack.c.l.b16 %v579
    %v1371 = vunpack.c.l.b16 %v580
    %v1372 = vunpack.c.l.b16 %v581
    %v1373 = vunpack.c.l.b16 %v582
    %v1374 = vunpack.c.l.b16 %v583
    %v1375 = vunpack.c.l.b16 %v584
    %v1376 = vunpack.c.l.b16 %v585
    %v1377 = vunpack.c.l.b16 %v586
    %v1378 = vunpack.c.l.b16 %v587
    %v1379 = vunpack.c.l.b16 %v588
    %v1380 = vunpack.c.l.b16 %v589
    %v1381 = vunpack.c.l.b16 %v590
    %v1382 = vunpack.c.l.b16 %v591
    %v1383 = vunpack.c.l.b16 %v592
    %v1384 = vunpack.c.l.b16 %v593
    %v1385 = vunpack.c.l.b16 %v594
    %v1386 = vunpack.c.l.b16 %v595
    %v1387 = vunpack.c.l.b16 %v596
    %v1388 = vunpack.c.l.b16 %v597
    %v1389 = vunpack.c.l.b16 %v598
    %v1390 = vunpack.c.l.b16 %v599
    %v1391 = vunpack.c.l.b16 %v600
    %v1392 = vunpack.c.l.b16 %v601
    %v1393 = vunpack.c.l.b16 %v602
    %v1394 = vunpack.c.l.b16 %v603
    %v1395 = vunpack.c.l.b16 %v604
    %v1396 = vunpack.c.l.b16 %v605
    %v1397 = vunpack.c.l.b16 %v606
    %v1398 = vunpack.c.l.b16 %v607
    %v1399 = vunpack.c.l.b16 %v608
    %v1400 = vunpack.c.l.b16 %v609
    %v1401 = vunpack.c.l.b16 %v610
    %v1402 = vunpack.c.l.b16 %v611
    %v1403 = vunpack.c.l.b16 %v612
    %v1404 = vunpack.c.l.b16 %v613
    %v1405 = vunpack.c.l.b16 %v614
    %v1406 = vunpack.c.l.b16 %v615
    %v1407 = vunpack.c.l.b16 %v616
    %v1408 = vunpack.c.l.b16 %v617
    %v1409 = vpack.c.b16 %v1018, %v1017
    %v1410 = vpack.c.b16 %v1020, %v1019
    %v1411 = vpack.c.b16 %v1022, %v1021
    %v1412 = vpack.c.b16 %v1024, %v1023
    %v1413 = vpack.c.b16 %v1026, %v1025
    %v1414 = vpack.c.b16 %v1028, %v1027
    %v1415 = vpack.c.b16 %v1030, %v1029
    %v1416 = vpack.c.b16 %v1032, %v1031
    %v1417 = vpack.c.b16 %v1034, %v1033
    %v1418 = vpack.c.b16 %v1036, %v1035
    %v1419 = vpack.c.b16 %v1038, %v1037
    %v1420 = vpack.c.b16 %v1040, %v1039
    %v1421 = vpack.c.b16 %v1042, %v1041
    %v1422 = vpack.c.b16 %v1044, %v1043
    %v1423 = vpack.c.b16 %v1046, %v1045
    %v1424 = vpack.c.b16 %v1048, %v1047
    %v1425 = vpack.c.b16 %v1050, %v1049
    %v1426 = vpack.c.b16 %v1052, %v1051
    %v1427 = vpack.c.b16 %v1054, %v1053
    %v1428 = vpack.c.b16 %v1056, %v1055
    %v1429 = vpack.c.b16 %v1058, %v1057
    %v1430 = vpack.c.b16 %v1060, %v1059
    %v1431 = vpack.c.b16 %v1062, %v1061
    %v1432 = vpack.c.b16 %v1064, %v1063
    %v1433 = vpack.c.b16 %v1066, %v1065
    %v1434 = vpack.c.b16 %v1068, %v1067
    %v1435 = vpack.c.b16 %v1070, %v1069
    %v1436 = vpack.c.b16 %v1072, %v1071
    %v1437 = vpack.c.b16 %v1074, %v1073
    %v1438 = vpack.c.b16 %v1076, %v1075
    %v1439 = vpack.c.b16 %v1078, %v1077
    %v1440 = vpack.c.b16 %v1080, %v1079
    %v1441 = vpack.c.b16 %v1082, %v1081
    %v1442 = vpack.c.b16 %v1084, %v1083
    %v1443 = vpack.c.b16 %v1086, %v1085
    %v1444 = vpack.c.b16 %v1088, %v1087
    %v1445 = vpack.c.b16 %v1090, %v1089
    %v1446 = vpack.c.b16 %v1092, %v1091
    %v1447 = vpack.c.b16 %v1094, %v1093
    %v1448 = vpack.c.b16 %v1096, %v1095
    %v1449 = vpack.c.b16 %v1098, %v1097
    %v1450 = vpack.c.b16 %v1100, %v1099
    %v1451 = vpack.c.b16 %v1102, %v1101
    %v1452 = vpack.c.b16 %v1104, %v1103
    %v1453 = vpack.c.b16 %v1106, %v1105
    %v1454 = vpack.c.b16 %v1108, %v1107
    %v1455 = vpack.c.b16 %v1110, %v1109
    %v1456 = vpack.c.b16 %v1112, %v1111
    %v1457 = vpack.c.b16 %v1114, %v1113
    %v1458 = vpack.c.b16 %v1116, %v1115
    %v1459 = vpack.c.b16 %v1118, %v1117
    %v1460 = vpack.c.b16 %v1120, %v1119
    %v1461 = vpack.c.b16 %v1122, %v1121
    %v1462 = vpack.c.b16 %v1124, %v1123
    %v1463 = vpack.c.b16 %v1126, %v1125
    %v1464 = vpack.c.b16 %v1128, %v1127
    %v1465 = vpack.c.b16 %v1130, %v1129
    %v1466 = vpack.c.b16 %v1132, %v1131
    %v1467 = vpack.c.b16 %v1134, %v1133
    %v1468 = vpack.c.b16 %v1136, %v1135
    %v1469 = vpack.c.b16 %v1138, %v1137
    %v1470 = vpack.c.b16 %v1140, %v1139
    %v1471 = vpack.c.b16 %v1142, %v1141
    %v1472 = vpack.c.b16 %v1144, %v1143
    %v1473 = vpack.c.b16 %v1146, %v1145
    %v1474 = vpack.c.b16 %v1148, %v1147
    %v1475 = vpack.c.b16 %v1150, %v1149
    %v1476 = vpack.c.b16 %v1152, %v1151
    %v1477 = vpack.c.b16 %v1154, %v1153
    %v1478 = vpack.c.b16 %v1156, %v1155
    %v1479 = vpack.c.b16 %v1158, %v1157
    %v1480 = vpack.c.b16 %v1160, %v1159
    %v1481 = vpack.c.b16 %v1162, %v1161
    %v1482 = vpack.c.b16 %v1164, %v1163
    %v1483 = vpack.c.b16 %v1166, %v1165
    %v1484 = vpack.c.b16 %v1168, %v1167
    %v1485 = vpack.c.b16 %v1170, %v1169
    %v1486 = vpack.c.b16 %v1172, %v1171
    %v1487 = vpack.c.b16 %v1174, %v1173
    %v1488 = vpack.c.b16 %v1176, %v1175
    %v1489 = vpack.c.b16 %v1178, %v1177
    %v1490 = vpack.c.b16 %v1180, %v1179
    %v1491 = vpack.c.b16 %v1182, %v1181
    %v1492 = vpack.c.b16 %v1184, %v1183
    %v1493 = vpack.c.b16 %v1186, %v1185
    %v1494 = vpack.c.b16 %v1188, %v1187
    %v1495 = vpack.c.b16 %v1190, %v1189
    %v1496 = vpack.c.b16 %v1192, %v1191
    %v1497 = vpack.c.b16 %v1194, %v1193
    %v1498 = vpack.c.b16 %v1196, %v1195
    %v1499 = vpack.c.b16 %v1198, %v1197
    %v1500 = vpack.c.b16 %v1200, %v1199
    %v1501 = vpack.c.b16 %v1202, %v1201
    %v1502 = vpack.c.b16 %v1204, %v1203
    %v1503 = vpack.c.b16 %v1206, %v1205
    %v1504 = vpack.c.b16 %v1208, %v1207
    %v1505 = vpack.c.b16 %v1210, %v1209
    %v1506 = vpack.c.b16 %v1212, %v1211
    %v1507 = vpack.c.b16 %v1214, %v1213
    %v1508 = vpack.c.b16 %v1216, %v1215
    %v1509 = vpack.c.b16 %v1218, %v1217
    %v1510 = vpack.c.b16 %v1220, %v1219
    %v1511 = vpack.c.b16 %v1222, %v1221
    %v1512 = vpack.c.b16 %v1224, %v1223
    %v1513 = vpack.c.b16 %v1226, %v1225
    %v1514 = vpack.c.b16 %v1228, %v1227
    %v1515 = vpack.c.b16 %v1230, %v1229
    %v1516 = vpack.c.b16 %v1232, %v1231
    %v1517 = vpack.c.b16 %v1234, %v1233
    %v1518 = vpack.c.b16 %v1236, %v1235
    %v1519 = vpack.c.b16 %v1238, %v1237
    %v1520 = vpack.c.b16 %v1240, %v1239
    %v1521 = vpack.c.b16 %v1242, %v1241
    %v1522 = vpack.c.b16 %v1244, %v1243
    %v1523 = vpack.c.b16 %v1246, %v1245
    %v1524 = vpack.c.b16 %v1248, %v1247
    %v1525 = vpack.c.b16 %v1250, %v1249
    %v1526 = vpack.c.b16 %v1252, %v1251
    %v1527 = vpack.c.b16 %v1254, %v1253
    %v1528 = vpack.c.b16 %v1256, %v1255
    %v1529 = vpack.c.b16 %v1258, %v1257
    %v1530 = vpack.c.b16 %v1260, %v1259
    %v1531 = vpack.c.b16 %v1262, %v1261
    %v1532 = vpack.c.b16 %v1264, %v1263
    %v1533 = vpack.c.b16 %v1266, %v1265
    %v1534 = vpack.c.b16 %v1268, %v1267
    %v1535 = vpack.c.b16 %v1270, %v1269
    %v1536 = vpack.c.b16 %v1272, %v1271
    %v1537 = vpack.c.b16 %v1274, %v1273
    %v1538 = vpack.c.b16 %v1276, %v1275
    %v1539 = vpack.c.b16 %v1278, %v1277
    %v1540 = vpack.c.b16 %v1280, %v1279
    %v1541 = vpack.c.b16 %v1282, %v1281
    %v1542 = vpack.c.b16 %v1284, %v1283
    %v1543 = vpack.c.b16 %v1286, %v1285
    %v1544 = vpack.c.b16 %v1288, %v1287
    %v1545 = vpack.c.b16 %v1290, %v1289
    %v1546 = vpack.c.b16 %v1292, %v1291
    %v1547 = vpack.c.b16 %v1294, %v1293
    %v1548 = vpack.c.b16 %v1296, %v1295
    %v1549 = vpack.c.b16 %v1298, %v1297
    %v1550 = vpack.c.b16 %v1300, %v1299
    %v1551 = vpack.c.b16 %v1302, %v1301
    %v1552 = vpack.c.b16 %v1304, %v1303
    %v1553 = vpack.c.b16 %v1306, %v1305
    %v1554 = vpack.c.b16 %v1308, %v1307
    %v1555 = vpack.c.b16 %v1310, %v1309
    %v1556 = vpack.c.b16 %v1312, %v1311
    %v1557 = vpack.c.b16 %v1314, %v1313
    %v1558 = vpack.c.b16 %v1316, %v1315
    %v1559 = vpack.c.b16 %v1318, %v1317
    %v1560 = vpack.c.b16 %v1320, %v1319
    %v1561 = vpack.c.b16 %v1322, %v1321
    %v1562 = vpack.c.b16 %v1324, %v1323
    %v1563 = vpack.c.b16 %v1326, %v1325
    %v1564 = vpack.c.b16 %v1328, %v1327
    %v1565 = vpack.c.b16 %v1330, %v1329
    %v1566 = vpack.c.b16 %v1332, %v1331
    %v1567 = vpack.c.b16 %v1334, %v1333
    %v1568 = vpack.c.b16 %v1336, %v1335
    %v1569 = vpack.c.b16 %v1338, %v1337
    %v1570 = vpack.c.b16 %v1340, %v1339
    %v1571 = vpack.c.b16 %v1342, %v1341
    %v1572 = vpack.c.b16 %v1344, %v1343
    %v1573 = vpack.c.b16 %v1346, %v1345
    %v1574 = vpack.c.b16 %v1348, %v1347
    %v1575 = vpack.c.b16 %v1350, %v1349
    %v1576 = vpack.c.b16 %v1352, %v1351
    %v1577 = vpack.c.b16 %v1354, %v1353
    %v1578 = vpack.c.b16 %v1356, %v1355
    %v1579 = vpack.c.b16 %v1358, %v1357
    %v1580 = vpack.c.b16 %v1360, %v1359
    %v1581 = vpack.c.b16 %v1362, %v1361
    %v1582 = vpack.c.b16 %v1364, %v1363
    %v1583 = vpack.c.b16 %v1366, %v1365
    %v1584 = vpack.c.b16 %v1368, %v1367
    %v1585 = vpack.c.b16 %v1370, %v1369
    %v1586 = vpack.c.b16 %v1372, %v1371
    %v1587 = vpack.c.b16 %v1374, %v1373
    %v1588 = vpack.c.b16 %v1376, %v1375
    %v1589 = vpack.c.b16 %v1378, %v1377
    %v1590 = vpack.c.b16 %v1380, %v1379
    %v1591 = vpack.c.b16 %v1382, %v1381
    %v1592 = vpack.c.b16 %v1384, %v1383
    %v1593 = vpack.c.b16 %v1386, %v1385
    %v1594 = vpack.c.b16 %v1388, %v1387
    %v1595 = vpack.c.b16 %v1390, %v1389
    %v1596 = vpack.c.b16 %v1392, %v1391
    %v1597 = vpack.c.b16 %v1394, %v1393
    %v1598 = vpack.c.b16 %v1396, %v1395
    %v1599 = vpack.c.b16 %v1398, %v1397
    %v1600 = vpack.c.b16 %v1400, %v1399
    %v1601 = vpack.c.b16 %v1402, %v1401
    %v1602 = vpack.c.b16 %v1404, %v1403
    %v1603 = vpack.c.b16 %v1406, %v1405
    %v1604 = vpack.c.b16 %v1408, %v1407
    %vm1801 = vcmask 523264
    %v1803 = vsel %vm1801, %v225, 0
    %1805 = vmatprep.subr.bf16.mxu0 0
    %1806 = vmatpush1.bf16.msra.mxu0 %v1409
    %1807 = vmatprep.subr.bf16.mxu0 0
    %1808 = vmatpush1.bf16.msra.mxu0 %v1410
    %1809 = vmatprep.subr.bf16.mxu0 0
    %1810 = vmatpush1.bf16.msra.mxu0 %v1411
    %1811 = vmatprep.subr.bf16.mxu0 0
    %1812 = vmatpush1.bf16.msra.mxu0 %v1412
    %1813 = vmatprep.subr.bf16.mxu0 0
    %1814 = vmatpush1.bf16.msra.mxu0 %v1413
    %1815 = vmatprep.subr.bf16.mxu0 0
    %1816 = vmatpush1.bf16.msra.mxu0 %v1414
    %1817 = vmatprep.subr.bf16.mxu0 0
    %1818 = vmatpush1.bf16.msra.mxu0 %v1415
    %1819 = vmatprep.subr.bf16.mxu0 0
    %1820 = vmatpush1.bf16.msra.mxu0 %v1416
    %1821 = vmatprep.subr.bf16.mxu0 0
    %1822 = vmatpush1.bf16.msra.mxu0 %v1417
    %1823 = vmatprep.subr.bf16.mxu0 0
    %1824 = vmatpush1.bf16.msra.mxu0 %v1418
    %1825 = vmatprep.subr.bf16.mxu0 0
    %1826 = vmatpush1.bf16.msra.mxu0 %v1419
    %1827 = vmatprep.subr.bf16.mxu0 0
    %1828 = vmatpush1.bf16.msra.mxu0 %v1420
    %1829 = vmatprep.subr.bf16.mxu0 0
    %1830 = vmatpush1.bf16.msra.mxu0 %v1421
    %1831 = vmatprep.subr.bf16.mxu0 0
    %1832 = vmatpush1.bf16.msra.mxu0 %v1422
    %1833 = vmatprep.subr.bf16.mxu0 0
    %1834 = vmatpush1.bf16.msra.mxu0 %v1423
    %1835 = vmatprep.subr.bf16.mxu0 0
    %1836 = vmatpush1.bf16.msra.mxu0 %v1424
    %1837 = vmatprep.mubr.bf16.mxu0 %v202
    %1838 = vmatmul.mubr.bf16.gmra.mrb[0].mxu0 %v201
    %v1839 = vpop.f32.mrb[0].mxu0
    %v1840 = vadd.f32 %v623, %v1839
    %v1841 = vpop.f32.mrb[0].mxu0
    %v1842 = vpop.f32.mrb[0].mxu0
    %v1843 = vpop.f32.mrb[0].mxu0
    %1844 = vdwg.mxu0
    %1845 = vmatprep.subr.bf16.mxu0 0
    %1846 = vmatpush1.bf16.msra.mxu0 %v1425
    %1847 = vmatprep.subr.bf16.mxu0 0
    %1848 = vmatpush1.bf16.msra.mxu0 %v1426
    %1849 = vmatprep.subr.bf16.mxu0 0
    %1850 = vmatpush1.bf16.msra.mxu0 %v1427
    %1851 = vmatprep.subr.bf16.mxu0 0
    %1852 = vmatpush1.bf16.msra.mxu0 %v1428
    %1853 = vmatprep.subr.bf16.mxu0 0
    %1854 = vmatpush1.bf16.msra.mxu0 %v1429
    %1855 = vmatprep.subr.bf16.mxu0 0
    %1856 = vmatpush1.bf16.msra.mxu0 %v1430
    %1857 = vmatprep.subr.bf16.mxu0 0
    %1858 = vmatpush1.bf16.msra.mxu0 %v1431
    %1859 = vmatprep.subr.bf16.mxu0 0
    %1860 = vmatpush1.bf16.msra.mxu0 %v1432
    %1861 = vmatprep.subr.bf16.mxu0 0
    %1862 = vmatpush1.bf16.msra.mxu0 %v1433
    %1863 = vmatprep.subr.bf16.mxu0 0
    %1864 = vmatpush1.bf16.msra.mxu0 %v1434
    %1865 = vmatprep.subr.bf16.mxu0 0
    %1866 = vmatpush1.bf16.msra.mxu0 %v1435
    %1867 = vmatprep.subr.bf16.mxu0 0
    %1868 = vmatpush1.bf16.msra.mxu0 %v1436
    %1869 = vmatprep.subr.bf16.mxu0 0
    %1870 = vmatpush1.bf16.msra.mxu0 %v1437
    %1871 = vmatprep.subr.bf16.mxu0 0
    %1872 = vmatpush1.bf16.msra.mxu0 %v1438
    %1873 = vmatprep.subr.bf16.mxu0 0
    %1874 = vmatpush1.bf16.msra.mxu0 %v1439
    %1875 = vmatprep.subr.bf16.mxu0 0
    %1876 = vmatpush1.bf16.msra.mxu0 %v1440
    %1877 = vmatprep.mubr.bf16.mxu0 %v204
    %1878 = vmatmul.mubr.bf16.gmra.mrb[0].mxu0 %v203
    %v1879 = vpop.f32.mrb[0].mxu0
    %v1880 = vadd.f32 %v1840, %v1879
    %v1881 = vpop.f32.mrb[0].mxu0
    %v1882 = vpop.f32.mrb[0].mxu0
    %v1883 = vpop.f32.mrb[0].mxu0
    %1884 = vdwg.mxu0
    %1885 = vmatprep.subr.bf16.mxu0 0
    %1886 = vmatpush1.bf16.msra.mxu0 %v1441
    %1887 = vmatprep.subr.bf16.mxu0 0
    %1888 = vmatpush1.bf16.msra.mxu0 %v1442
    %1889 = vmatprep.subr.bf16.mxu0 0
    %1890 = vmatpush1.bf16.msra.mxu0 %v1443
    %1891 = vmatprep.subr.bf16.mxu0 0
    %1892 = vmatpush1.bf16.msra.mxu0 %v1444
    %1893 = vmatprep.subr.bf16.mxu0 0
    %1894 = vmatpush1.bf16.msra.mxu0 %v1445
    %1895 = vmatprep.subr.bf16.mxu0 0
    %1896 = vmatpush1.bf16.msra.mxu0 %v1446
    %1897 = vmatprep.subr.bf16.mxu0 0
    %1898 = vmatpush1.bf16.msra.mxu0 %v1447
    %1899 = vmatprep.subr.bf16.mxu0 0
    %1900 = vmatpush1.bf16.msra.mxu0 %v1448
    %1901 = vmatprep.subr.bf16.mxu0 0
    %1902 = vmatpush1.bf16.msra.mxu0 %v1449
    %1903 = vmatprep.subr.bf16.mxu0 0
    %1904 = vmatpush1.bf16.msra.mxu0 %v1450
    %1905 = vmatprep.subr.bf16.mxu0 0
    %1906 = vmatpush1.bf16.msra.mxu0 %v1451
    %1907 = vmatprep.subr.bf16.mxu0 0
    %1908 = vmatpush1.bf16.msra.mxu0 %v1452
    %1909 = vmatprep.subr.bf16.mxu0 0
    %1910 = vmatpush1.bf16.msra.mxu0 %v1453
    %1911 = vmatprep.subr.bf16.mxu0 0
    %1912 = vmatpush1.bf16.msra.mxu0 %v1454
    %1913 = vmatprep.subr.bf16.mxu0 0
    %1914 = vmatpush1.bf16.msra.mxu0 %v1455
    %1915 = vmatprep.subr.bf16.mxu0 0
    %1916 = vmatpush1.bf16.msra.mxu0 %v1456
    %1917 = vmatprep.mubr.bf16.mxu0 %v206
    %1918 = vmatmul.mubr.bf16.gmra.mrb[0].mxu0 %v205
    %v1919 = vpop.f32.mrb[0].mxu0
    %v1920 = vadd.f32 %v1880, %v1919
    %v1921 = vpop.f32.mrb[0].mxu0
    %v1922 = vpop.f32.mrb[0].mxu0
    %v1923 = vpop.f32.mrb[0].mxu0
    %1924 = vdwg.mxu0
    %1925 = vmatprep.subr.bf16.mxu0 0
    %1926 = vmatpush1.bf16.msra.mxu0 %v1457
    %1927 = vmatprep.subr.bf16.mxu0 0
    %1928 = vmatpush1.bf16.msra.mxu0 %v1458
    %1929 = vmatprep.subr.bf16.mxu0 0
    %1930 = vmatpush1.bf16.msra.mxu0 %v1459
    %1931 = vmatprep.subr.bf16.mxu0 0
    %1932 = vmatpush1.bf16.msra.mxu0 %v1460
    %1933 = vmatprep.subr.bf16.mxu0 0
    %1934 = vmatpush1.bf16.msra.mxu0 %v1461
    %1935 = vmatprep.subr.bf16.mxu0 0
    %1936 = vmatpush1.bf16.msra.mxu0 %v1462
    %1937 = vmatprep.subr.bf16.mxu0 0
    %1938 = vmatpush1.bf16.msra.mxu0 %v1463
    %1939 = vmatprep.subr.bf16.mxu0 0
    %1940 = vmatpush1.bf16.msra.mxu0 %v1464
    %1941 = vmatprep.subr.bf16.mxu0 0
    %1942 = vmatpush1.bf16.msra.mxu0 %v1465
    %1943 = vmatprep.subr.bf16.mxu0 0
    %1944 = vmatpush1.bf16.msra.mxu0 %v1466
    %1945 = vmatprep.subr.bf16.mxu0 0
    %1946 = vmatpush1.bf16.msra.mxu0 %v1467
    %1947 = vmatprep.subr.bf16.mxu0 0
    %1948 = vmatpush1.bf16.msra.mxu0 %v1468
    %1949 = vmatprep.subr.bf16.mxu0 0
    %1950 = vmatpush1.bf16.msra.mxu0 %v1469
    %1951 = vmatprep.subr.bf16.mxu0 0
    %1952 = vmatpush1.bf16.msra.mxu0 %v1470
    %1953 = vmatprep.subr.bf16.mxu0 0
    %1954 = vmatpush1.bf16.msra.mxu0 %v1471
    %1955 = vmatprep.subr.bf16.mxu0 0
    %1956 = vmatpush1.bf16.msra.mxu0 %v1472
    %1957 = vmatprep.mubr.bf16.mxu0 %v208
    %1958 = vmatmul.mubr.bf16.gmra.mrb[0].mxu0 %v207
    %v1959 = vpop.f32.mrb[0].mxu0
    %v1960 = vadd.f32 %v1920, %v1959
    %v1961 = vpop.f32.mrb[0].mxu0
    %v1962 = vpop.f32.mrb[0].mxu0
    %v1963 = vpop.f32.mrb[0].mxu0
    %1964 = vdwg.mxu0
    %1965 = vmatprep.subr.bf16.mxu0 0
    %1966 = vmatpush1.bf16.msra.mxu0 %v1473
    %1967 = vmatprep.subr.bf16.mxu0 0
    %1968 = vmatpush1.bf16.msra.mxu0 %v1474
    %1969 = vmatprep.subr.bf16.mxu0 0
    %1970 = vmatpush1.bf16.msra.mxu0 %v1475
    %1971 = vmatprep.subr.bf16.mxu0 0
    %1972 = vmatpush1.bf16.msra.mxu0 %v1476
    %1973 = vmatprep.subr.bf16.mxu0 0
    %1974 = vmatpush1.bf16.msra.mxu0 %v1477
    %1975 = vmatprep.subr.bf16.mxu0 0
    %1976 = vmatpush1.bf16.msra.mxu0 %v1478
    %1977 = vmatprep.subr.bf16.mxu0 0
    %1978 = vmatpush1.bf16.msra.mxu0 %v1479
    %1979 = vmatprep.subr.bf16.mxu0 0
    %1980 = vmatpush1.bf16.msra.mxu0 %v1480
    %1981 = vmatprep.subr.bf16.mxu0 0
    %1982 = vmatpush1.bf16.msra.mxu0 %v1481
    %1983 = vmatprep.subr.bf16.mxu0 0
    %1984 = vmatpush1.bf16.msra.mxu0 %v1482
    %1985 = vmatprep.subr.bf16.mxu0 0
    %1986 = vmatpush1.bf16.msra.mxu0 %v1483
    %1987 = vmatprep.subr.bf16.mxu0 0
    %1988 = vmatpush1.bf16.msra.mxu0 %v1484
    %1989 = vmatprep.subr.bf16.mxu0 0
    %1990 = vmatpush1.bf16.msra.mxu0 %v1485
    %1991 = vmatprep.subr.bf16.mxu0 0
    %1992 = vmatpush1.bf16.msra.mxu0 %v1486
    %1993 = vmatprep.subr.bf16.mxu0 0
    %1994 = vmatpush1.bf16.msra.mxu0 %v1487
    %1995 = vmatprep.subr.bf16.mxu0 0
    %1996 = vmatpush1.bf16.msra.mxu0 %v1488
    %1997 = vmatprep.mubr.bf16.mxu0 %v210
    %1998 = vmatmul.mubr.bf16.gmra.mrb[0].mxu0 %v209
    %v1999 = vpop.f32.mrb[0].mxu0
    %v2000 = vadd.f32 %v1960, %v1999
    %v2001 = vpop.f32.mrb[0].mxu0
    %v2002 = vpop.f32.mrb[0].mxu0
    %v2003 = vpop.f32.mrb[0].mxu0
    %2004 = vdwg.mxu0
    %2005 = vmatprep.subr.bf16.mxu0 0
    %2006 = vmatpush1.bf16.msra.mxu0 %v1489
    %2007 = vmatprep.subr.bf16.mxu0 0
    %2008 = vmatpush1.bf16.msra.mxu0 %v1490
    %2009 = vmatprep.subr.bf16.mxu0 0
    %2010 = vmatpush1.bf16.msra.mxu0 %v1491
    %2011 = vmatprep.subr.bf16.mxu0 0
    %2012 = vmatpush1.bf16.msra.mxu0 %v1492
    %2013 = vmatprep.subr.bf16.mxu0 0
    %2014 = vmatpush1.bf16.msra.mxu0 %v1493
    %2015 = vmatprep.subr.bf16.mxu0 0
    %2016 = vmatpush1.bf16.msra.mxu0 %v1494
    %2017 = vmatprep.subr.bf16.mxu0 0
    %2018 = vmatpush1.bf16.msra.mxu0 %v1495
    %2019 = vmatprep.subr.bf16.mxu0 0
    %2020 = vmatpush1.bf16.msra.mxu0 %v1496
    %2021 = vmatprep.subr.bf16.mxu0 0
    %2022 = vmatpush1.bf16.msra.mxu0 %v1497
    %2023 = vmatprep.subr.bf16.mxu0 0
    %2024 = vmatpush1.bf16.msra.mxu0 %v1498
    %2025 = vmatprep.subr.bf16.mxu0 0
    %2026 = vmatpush1.bf16.msra.mxu0 %v1499
    %2027 = vmatprep.subr.bf16.mxu0 0
    %2028 = vmatpush1.bf16.msra.mxu0 %v1500
    %2029 = vmatprep.subr.bf16.mxu0 0
    %2030 = vmatpush1.bf16.msra.mxu0 %v1501
    %2031 = vmatprep.subr.bf16.mxu0 0
    %2032 = vmatpush1.bf16.msra.mxu0 %v1502
    %2033 = vmatprep.subr.bf16.mxu0 0
    %2034 = vmatpush1.bf16.msra.mxu0 %v1503
    %2035 = vmatprep.subr.bf16.mxu0 0
    %2036 = vmatpush1.bf16.msra.mxu0 %v1504
    %2037 = vmatprep.mubr.bf16.mxu0 %v212
    %2038 = vmatmul.mubr.bf16.gmra.mrb[0].mxu0 %v211
    %v2039 = vpop.f32.mrb[0].mxu0
    %v2040 = vadd.f32 %v2000, %v2039
    %v2041 = vpop.f32.mrb[0].mxu0
    %v2042 = vpop.f32.mrb[0].mxu0
    %v2043 = vpop.f32.mrb[0].mxu0
    %2044 = vdwg.mxu0
    %2045 = vmatprep.subr.bf16.mxu0 0
    %2046 = vmatpush1.bf16.msra.mxu0 %v1505
    %2047 = vmatprep.subr.bf16.mxu0 0
    %2048 = vmatpush1.bf16.msra.mxu0 %v1506
    %2049 = vmatprep.subr.bf16.mxu0 0
    %2050 = vmatpush1.bf16.msra.mxu0 %v1507
    %2051 = vmatprep.subr.bf16.mxu0 0
    %2052 = vmatpush1.bf16.msra.mxu0 %v1508
    %2053 = vmatprep.subr.bf16.mxu0 0
    %2054 = vmatpush1.bf16.msra.mxu0 %v1509
    %2055 = vmatprep.subr.bf16.mxu0 0
    %2056 = vmatpush1.bf16.msra.mxu0 %v1510
    %2057 = vmatprep.subr.bf16.mxu0 0
    %2058 = vmatpush1.bf16.msra.mxu0 %v1511
    %2059 = vmatprep.subr.bf16.mxu0 0
    %2060 = vmatpush1.bf16.msra.mxu0 %v1512
    %2061 = vmatprep.subr.bf16.mxu0 0
    %2062 = vmatpush1.bf16.msra.mxu0 %v1513
    %2063 = vmatprep.subr.bf16.mxu0 0
    %2064 = vmatpush1.bf16.msra.mxu0 %v1514
    %2065 = vmatprep.subr.bf16.mxu0 0
    %2066 = vmatpush1.bf16.msra.mxu0 %v1515
    %2067 = vmatprep.subr.bf16.mxu0 0
    %2068 = vmatpush1.bf16.msra.mxu0 %v1516
    %2069 = vmatprep.subr.bf16.mxu0 0
    %2070 = vmatpush1.bf16.msra.mxu0 %v1517
    %2071 = vmatprep.subr.bf16.mxu0 0
    %2072 = vmatpush1.bf16.msra.mxu0 %v1518
    %2073 = vmatprep.subr.bf16.mxu0 0
    %2074 = vmatpush1.bf16.msra.mxu0 %v1519
    %2075 = vmatprep.subr.bf16.mxu0 0
    %2076 = vmatpush1.bf16.msra.mxu0 %v1520
    %2077 = vmatprep.mubr.bf16.mxu0 %v214
    %2078 = vmatmul.mubr.bf16.gmra.mrb[0].mxu0 %v213
    %v2079 = vpop.f32.mrb[0].mxu0
    %v2080 = vadd.f32 %v2040, %v2079
    %v2081 = vpop.f32.mrb[0].mxu0
    %v2082 = vpop.f32.mrb[0].mxu0
    %v2083 = vpop.f32.mrb[0].mxu0
    %2084 = vdwg.mxu0
    %2085 = vmatprep.subr.bf16.mxu0 0
    %2086 = vmatpush1.bf16.msra.mxu0 %v1521
    %2087 = vmatprep.subr.bf16.mxu0 0
    %2088 = vmatpush1.bf16.msra.mxu0 %v1522
    %2089 = vmatprep.subr.bf16.mxu0 0
    %2090 = vmatpush1.bf16.msra.mxu0 %v1523
    %2091 = vmatprep.subr.bf16.mxu0 0
    %2092 = vmatpush1.bf16.msra.mxu0 %v1524
    %2093 = vmatprep.subr.bf16.mxu0 0
    %2094 = vmatpush1.bf16.msra.mxu0 %v1525
    %2095 = vmatprep.subr.bf16.mxu0 0
    %2096 = vmatpush1.bf16.msra.mxu0 %v1526
    %2097 = vmatprep.subr.bf16.mxu0 0
    %2098 = vmatpush1.bf16.msra.mxu0 %v1527
    %2099 = vmatprep.subr.bf16.mxu0 0
    %2100 = vmatpush1.bf16.msra.mxu0 %v1528
    %2101 = vmatprep.subr.bf16.mxu0 0
    %2102 = vmatpush1.bf16.msra.mxu0 %v1529
    %2103 = vmatprep.subr.bf16.mxu0 0
    %2104 = vmatpush1.bf16.msra.mxu0 %v1530
    %2105 = vmatprep.subr.bf16.mxu0 0
    %2106 = vmatpush1.bf16.msra.mxu0 %v1531
    %2107 = vmatprep.subr.bf16.mxu0 0
    %2108 = vmatpush1.bf16.msra.mxu0 %v1532
    %2109 = vmatprep.subr.bf16.mxu0 0
    %2110 = vmatpush1.bf16.msra.mxu0 %v1533
    %2111 = vmatprep.subr.bf16.mxu0 0
    %2112 = vmatpush1.bf16.msra.mxu0 %v1534
    %2113 = vmatprep.subr.bf16.mxu0 0
    %2114 = vmatpush1.bf16.msra.mxu0 %v1535
    %2115 = vmatprep.subr.bf16.mxu0 0
    %2116 = vmatpush1.bf16.msra.mxu0 %v1536
    %2117 = vmatprep.mubr.bf16.mxu0 %v216
    %2118 = vmatmul.mubr.bf16.gmra.mrb[0].mxu0 %v215
    %v2119 = vpop.f32.mrb[0].mxu0
    %v2120 = vadd.f32 %v2080, %v2119
    %v2121 = vpop.f32.mrb[0].mxu0
    %v2122 = vpop.f32.mrb[0].mxu0
    %v2123 = vpop.f32.mrb[0].mxu0
    %2124 = vdwg.mxu0
    %2125 = vmatprep.subr.bf16.mxu0 0
    %2126 = vmatpush1.bf16.msra.mxu0 %v1537
    %2127 = vmatprep.subr.bf16.mxu0 0
    %2128 = vmatpush1.bf16.msra.mxu0 %v1538
    %2129 = vmatprep.subr.bf16.mxu0 0
    %2130 = vmatpush1.bf16.msra.mxu0 %v1539
    %2131 = vmatprep.subr.bf16.mxu0 0
    %2132 = vmatpush1.bf16.msra.mxu0 %v1540
    %2133 = vmatprep.subr.bf16.mxu0 0
    %2134 = vmatpush1.bf16.msra.mxu0 %v1541
    %2135 = vmatprep.subr.bf16.mxu0 0
    %2136 = vmatpush1.bf16.msra.mxu0 %v1542
    %2137 = vmatprep.subr.bf16.mxu0 0
    %2138 = vmatpush1.bf16.msra.mxu0 %v1543
    %2139 = vmatprep.subr.bf16.mxu0 0
    %2140 = vmatpush1.bf16.msra.mxu0 %v1544
    %2141 = vmatprep.subr.bf16.mxu0 0
    %2142 = vmatpush1.bf16.msra.mxu0 %v1545
    %2143 = vmatprep.subr.bf16.mxu0 0
    %2144 = vmatpush1.bf16.msra.mxu0 %v1546
    %2145 = vmatprep.subr.bf16.mxu0 0
    %2146 = vmatpush1.bf16.msra.mxu0 %v1547
    %2147 = vmatprep.subr.bf16.mxu0 0
    %2148 = vmatpush1.bf16.msra.mxu0 %v1548
    %2149 = vmatprep.subr.bf16.mxu0 0
    %2150 = vmatpush1.bf16.msra.mxu0 %v1549
    %2151 = vmatprep.subr.bf16.mxu0 0
    %2152 = vmatpush1.bf16.msra.mxu0 %v1550
    %2153 = vmatprep.subr.bf16.mxu0 0
    %2154 = vmatpush1.bf16.msra.mxu0 %v1551
    %2155 = vmatprep.subr.bf16.mxu0 0
    %2156 = vmatpush1.bf16.msra.mxu0 %v1552
    %2157 = vmatprep.mubr.bf16.mxu0 %v218
    %2158 = vmatmul.mubr.bf16.gmra.mrb[0].mxu0 %v217
    %v2159 = vpop.f32.mrb[0].mxu0
    %v2160 = vadd.f32 %v2120, %v2159
    %v2161 = vpop.f32.mrb[0].mxu0
    %v2162 = vpop.f32.mrb[0].mxu0
    %v2163 = vpop.f32.mrb[0].mxu0
    %2164 = vdwg.mxu0
    %2165 = vmatprep.subr.bf16.mxu0 0
    %2166 = vmatpush1.bf16.msra.mxu0 %v1553
    %2167 = vmatprep.subr.bf16.mxu0 0
    %2168 = vmatpush1.bf16.msra.mxu0 %v1554
    %2169 = vmatprep.subr.bf16.mxu0 0
    %2170 = vmatpush1.bf16.msra.mxu0 %v1555
    %2171 = vmatprep.subr.bf16.mxu0 0
    %2172 = vmatpush1.bf16.msra.mxu0 %v1556
    %2173 = vmatprep.subr.bf16.mxu0 0
    %2174 = vmatpush1.bf16.msra.mxu0 %v1557
    %2175 = vmatprep.subr.bf16.mxu0 0
    %2176 = vmatpush1.bf16.msra.mxu0 %v1558
    %2177 = vmatprep.subr.bf16.mxu0 0
    %2178 = vmatpush1.bf16.msra.mxu0 %v1559
    %2179 = vmatprep.subr.bf16.mxu0 0
    %2180 = vmatpush1.bf16.msra.mxu0 %v1560
    %2181 = vmatprep.subr.bf16.mxu0 0
    %2182 = vmatpush1.bf16.msra.mxu0 %v1561
    %2183 = vmatprep.subr.bf16.mxu0 0
    %2184 = vmatpush1.bf16.msra.mxu0 %v1562
    %2185 = vmatprep.subr.bf16.mxu0 0
    %2186 = vmatpush1.bf16.msra.mxu0 %v1563
    %2187 = vmatprep.subr.bf16.mxu0 0
    %2188 = vmatpush1.bf16.msra.mxu0 %v1564
    %2189 = vmatprep.subr.bf16.mxu0 0
    %2190 = vmatpush1.bf16.msra.mxu0 %v1565
    %2191 = vmatprep.subr.bf16.mxu0 0
    %2192 = vmatpush1.bf16.msra.mxu0 %v1566
    %2193 = vmatprep.subr.bf16.mxu0 0
    %2194 = vmatpush1.bf16.msra.mxu0 %v1567
    %2195 = vmatprep.subr.bf16.mxu0 0
    %2196 = vmatpush1.bf16.msra.mxu0 %v1568
    %2197 = vmatprep.mubr.bf16.mxu0 %v220
    %2198 = vmatmul.mubr.bf16.gmra.mrb[0].mxu0 %v219
    %v2199 = vpop.f32.mrb[0].mxu0
    %v2200 = vadd.f32 %v2160, %v2199
    %v2201 = vpop.f32.mrb[0].mxu0
    %v2202 = vpop.f32.mrb[0].mxu0
    %v2203 = vpop.f32.mrb[0].mxu0
    %2204 = vdwg.mxu0
    %2205 = vmatprep.subr.bf16.mxu0 0
    %2206 = vmatpush1.bf16.msra.mxu0 %v1569
    %2207 = vmatprep.subr.bf16.mxu0 0
    %2208 = vmatpush1.bf16.msra.mxu0 %v1570
    %2209 = vmatprep.subr.bf16.mxu0 0
    %2210 = vmatpush1.bf16.msra.mxu0 %v1571
    %2211 = vmatprep.subr.bf16.mxu0 0
    %2212 = vmatpush1.bf16.msra.mxu0 %v1572
    %2213 = vmatprep.subr.bf16.mxu0 0
    %2214 = vmatpush1.bf16.msra.mxu0 %v1573
    %2215 = vmatprep.subr.bf16.mxu0 0
    %2216 = vmatpush1.bf16.msra.mxu0 %v1574
    %2217 = vmatprep.subr.bf16.mxu0 0
    %2218 = vmatpush1.bf16.msra.mxu0 %v1575
    %2219 = vmatprep.subr.bf16.mxu0 0
    %2220 = vmatpush1.bf16.msra.mxu0 %v1576
    %2221 = vmatprep.subr.bf16.mxu0 0
    %2222 = vmatpush1.bf16.msra.mxu0 %v1577
    %2223 = vmatprep.subr.bf16.mxu0 0
    %2224 = vmatpush1.bf16.msra.mxu0 %v1578
    %2225 = vmatprep.subr.bf16.mxu0 0
    %2226 = vmatpush1.bf16.msra.mxu0 %v1579
    %2227 = vmatprep.subr.bf16.mxu0 0
    %2228 = vmatpush1.bf16.msra.mxu0 %v1580
    %2229 = vmatprep.subr.bf16.mxu0 0
    %2230 = vmatpush1.bf16.msra.mxu0 %v1581
    %2231 = vmatprep.subr.bf16.mxu0 0
    %2232 = vmatpush1.bf16.msra.mxu0 %v1582
    %2233 = vmatprep.subr.bf16.mxu0 0
    %2234 = vmatpush1.bf16.msra.mxu0 %v1583
    %2235 = vmatprep.subr.bf16.mxu0 0
    %2236 = vmatpush1.bf16.msra.mxu0 %v1584
    %2237 = vmatprep.mubr.bf16.mxu0 %v222
    %2238 = vmatmul.mubr.bf16.gmra.mrb[0].mxu0 %v221
    %v2239 = vpop.f32.mrb[0].mxu0
    %v2240 = vadd.f32 %v2200, %v2239
    %v2241 = vpop.f32.mrb[0].mxu0
    %v2242 = vpop.f32.mrb[0].mxu0
    %v2243 = vpop.f32.mrb[0].mxu0
    %2244 = vdwg.mxu0
    %2245 = vmatprep.subr.bf16.mxu0 0
    %2246 = vmatpush1.bf16.msra.mxu0 %v1585
    %2247 = vmatprep.subr.bf16.mxu0 0
    %2248 = vmatpush1.bf16.msra.mxu0 %v1586
    %2249 = vmatprep.subr.bf16.mxu0 0
    %2250 = vmatpush1.bf16.msra.mxu0 %v1587
    %2251 = vmatprep.subr.bf16.mxu0 0
    %2252 = vmatpush1.bf16.msra.mxu0 %v1588
    %2253 = vmatprep.subr.bf16.mxu0 0
    %2254 = vmatpush1.bf16.msra.mxu0 %v1589
    %2255 = vmatprep.subr.bf16.mxu0 0
    %2256 = vmatpush1.bf16.msra.mxu0 %v1590
    %2257 = vmatprep.subr.bf16.mxu0 0
    %2258 = vmatpush1.bf16.msra.mxu0 %v1591
    %2259 = vmatprep.subr.bf16.mxu0 0
    %2260 = vmatpush1.bf16.msra.mxu0 %v1592
    %2261 = vmatprep.subr.bf16.mxu0 0
    %2262 = vmatpush1.bf16.msra.mxu0 %v1593
    %2263 = vmatprep.subr.bf16.mxu0 0
    %2264 = vmatpush1.bf16.msra.mxu0 %v1594
    %2265 = vmatprep.subr.bf16.mxu0 0
    %2266 = vmatpush1.bf16.msra.mxu0 %v1595
    %2267 = vmatprep.subr.bf16.mxu0 0
    %2268 = vmatpush1.bf16.msra.mxu0 %v1596
    %2269 = vmatprep.subr.bf16.mxu0 0
    %2270 = vmatpush1.bf16.msra.mxu0 %v1597
    %2271 = vmatprep.subr.bf16.mxu0 0
    %2272 = vmatpush1.bf16.msra.mxu0 %v1598
    %2273 = vmatprep.subr.bf16.mxu0 0
    %2274 = vmatpush1.bf16.msra.mxu0 %v1599
    %2275 = vmatprep.subr.bf16.mxu0 0
    %2276 = vmatpush1.bf16.msra.mxu0 %v1600
    %2277 = vmatprep.mubr.bf16.mxu0 %v224
    %2278 = vmatmul.mubr.bf16.gmra.mrb[0].mxu0 %v223
    %v2279 = vpop.f32.mrb[0].mxu0
    %v2280 = vadd.f32 %v2240, %v2279
    %v2281 = vpop.f32.mrb[0].mxu0
    %v2282 = vpop.f32.mrb[0].mxu0
    %v2283 = vpop.f32.mrb[0].mxu0
    %2284 = vdwg.mxu0
    %2285 = vmatprep.subr.bf16.mxu0 0
    %2286 = vmatpush1.bf16.msra.mxu0 %v1601
    %2287 = vmatprep.subr.bf16.mxu0 0
    %2288 = vmatpush1.bf16.msra.mxu0 %v1602
    %2289 = vmatprep.subr.bf16.mxu0 0
    %2290 = vmatpush1.bf16.msra.mxu0 %v1603
    %2291 = vmatprep.subr.bf16.mxu0 0
    %2292 = vmatpush1.bf16.msra.mxu0 %v1604
    %2293 = vmatprep.subr.bf16.mxu0 0
    %2294 = vmatpush1.bf16.msra.mxu0 0
    %2295 = vmatprep.subr.bf16.mxu0 0
    %2296 = vmatpush1.bf16.msra.mxu0 0
    %2297 = vmatprep.subr.bf16.mxu0 0
    %2298 = vmatpush1.bf16.msra.mxu0 0
    %2299 = vmatprep.subr.bf16.mxu0 0
    %2300 = vmatpush1.bf16.msra.mxu0 0
    %2301 = vmatprep.subr.bf16.mxu0 0
    %2302 = vmatpush1.bf16.msra.mxu0 0
    %2303 = vmatprep.subr.bf16.mxu0 0
    %2304 = vmatpush1.bf16.msra.mxu0 0
    %2305 = vmatprep.subr.bf16.mxu0 0
    %2306 = vmatpush1.bf16.msra.mxu0 0
    %2307 = vmatprep.subr.bf16.mxu0 0
    %2308 = vmatpush1.bf16.msra.mxu0 0
    %2309 = vmatprep.subr.bf16.mxu0 0
    %2310 = vmatpush1.bf16.msra.mxu0 0
    %2311 = vmatprep.subr.bf16.mxu0 0
    %2312 = vmatpush1.bf16.msra.mxu0 0
    %2313 = vmatprep.subr.bf16.mxu0 0
    %2314 = vmatpush1.bf16.msra.mxu0 0
    %2315 = vmatprep.subr.bf16.mxu0 0
    %2316 = vmatpush1.bf16.msra.mxu0 0
    %2317 = vmatprep.mubr.bf16.mxu0 0
    %2318 = vmatmul.mubr.bf16.gmra.mrb[0].mxu0 %v1803
    %v2319 = vpop.f32.mrb[0].mxu0
    %v2320 = vadd.f32 %v2280, %v2319
    %v2321 = vpop.f32.mrb[0].mxu0
    %v2322 = vpop.f32.mrb[0].mxu0
    %v2323 = vpop.f32.mrb[0].mxu0
    %2324 = vdwg.mxu0
    %v2325 = vmax.f32 %v2320, 0.0
    %v2326 = vpack.c.bf16 %v2325, %v2325
    %v2327 = vld [vmem:[%s5] sm:$0xf]
    %v2328 = vld [vmem:[%s5 + $0x4] sm:$0xf]
    %v2329 = vld [vmem:[%s5 + $0x8] sm:$0xf]
    %v2330 = vld [vmem:[%s5 + $0xc] sm:$0xf]
    %v2331 = vld [vmem:[%s5 + $0x10] sm:$0xf]
    %v2332 = vld [vmem:[%s5 + $0x14] sm:$0xf]
    %v2333 = vld [vmem:[%s5 + $0x18] sm:$0xf]
    %v2334 = vld [vmem:[%s5 + $0x1c] sm:$0xf]
    %v2335 = vld [vmem:[%s5 + $0x20] sm:$0xf]
    %v2336 = vld [vmem:[%s5 + $0x24] sm:$0xf]
    %v2337 = vld [vmem:[%s5 + $0x28] sm:$0xf]
    %v2338 = vld [vmem:[%s5 + $0x2c] sm:$0xf]
    %v2339 = vld [vmem:[%s5 + $0x30] sm:$0x3]
    %v2340 = vld [vmem:[%s6] sm:$0x1]
    %v2342 = vlaneseq
    %v2343 = vshrl.u32 %v2342, 7
    %v2344 = vsub.s32 0, %v2343
    %v2345 = vrot.slane %v2340, %v2344
    %v2360 = vunpack.c.l.b16 %v2327
    %v2361 = vunpack.c.l.b16 %v2328
    %v2362 = vunpack.c.l.b16 %v2329
    %v2363 = vunpack.c.l.b16 %v2330
    %v2364 = vunpack.c.l.b16 %v2331
    %v2365 = vunpack.c.l.b16 %v2332
    %v2366 = vunpack.c.l.b16 %v2333
    %v2367 = vunpack.c.l.b16 %v2334
    %v2368 = vunpack.c.l.b16 %v2335
    %v2369 = vunpack.c.l.b16 %v2336
    %v2370 = vunpack.c.l.b16 %v2337
    %v2371 = vunpack.c.l.b16 %v2338
    %v2372 = vunpack.c.l.b16 %v2339
    %v2373 = vpack.c.b16 %v2361, %v2360
    %v2374 = vpack.c.b16 %v2363, %v2362
    %v2375 = vpack.c.b16 %v2365, %v2364
    %v2376 = vpack.c.b16 %v2367, %v2366
    %v2377 = vpack.c.b16 %v2369, %v2368
    %v2378 = vpack.c.b16 %v2371, %v2370
    %v2379 = vpack.c.b16 %v2372, %v2372
    %vm2386 = vcmask 818176
    %v2388 = vsel %vm2386, %v2326, 0
    %vm2390 = vcmask 1041408
    %v2392 = vsel %vm2390, %v2379, 0
    %2394 = vmatprep.subr.bf16.mxu0 0
    %2395 = vmatpush1.bf16.msra.mxu0 %v2373
    %2396 = vmatprep.subr.bf16.mxu0 0
    %2397 = vmatpush1.bf16.msra.mxu0 %v2374
    %2398 = vmatprep.subr.bf16.mxu0 0
    %2399 = vmatpush1.bf16.msra.mxu0 %v2375
    %2400 = vmatprep.subr.bf16.mxu0 0
    %2401 = vmatpush1.bf16.msra.mxu0 %v2376
    %2402 = vmatprep.subr.bf16.mxu0 0
    %2403 = vmatpush1.bf16.msra.mxu0 %v2377
    %2404 = vmatprep.subr.bf16.mxu0 0
    %2405 = vmatpush1.bf16.msra.mxu0 %v2378
    %2406 = vmatprep.subr.bf16.mxu0 0
    %2407 = vmatpush1.bf16.msra.mxu0 %v2392
    %2408 = vmatprep.subr.bf16.mxu0 0
    %2409 = vmatpush1.bf16.msra.mxu0 0
    %2410 = vmatprep.subr.bf16.mxu0 0
    %2411 = vmatpush1.bf16.msra.mxu0 0
    %2412 = vmatprep.subr.bf16.mxu0 0
    %2413 = vmatpush1.bf16.msra.mxu0 0
    %2414 = vmatprep.subr.bf16.mxu0 0
    %2415 = vmatpush1.bf16.msra.mxu0 0
    %2416 = vmatprep.subr.bf16.mxu0 0
    %2417 = vmatpush1.bf16.msra.mxu0 0
    %2418 = vmatprep.subr.bf16.mxu0 0
    %2419 = vmatpush1.bf16.msra.mxu0 0
    %2420 = vmatprep.subr.bf16.mxu0 0
    %2421 = vmatpush1.bf16.msra.mxu0 0
    %2422 = vmatprep.subr.bf16.mxu0 0
    %2423 = vmatpush1.bf16.msra.mxu0 0
    %2424 = vmatprep.subr.bf16.mxu0 0
    %2425 = vmatpush1.bf16.msra.mxu0 0
    %2426 = vmatprep.mubr.bf16.mxu0 0
    %2427 = vmatmul.mubr.bf16.gmra.mrb[0].mxu0 %v2388
    %v2428 = vpop.f32.mrb[0].mxu0
    %v2429 = vadd.f32 %v2345, %v2428
    %v2430 = vpop.f32.mrb[0].mxu0
    %v2431 = vpop.f32.mrb[0].mxu0
    %v2432 = vpop.f32.mrb[0].mxu0
    %2433 = vdwg.mxu0
    %v2434 = vld [vmem:[%s7] sm:$0xf]
    %v2435 = vld [vmem:[%s7 + $0x4] sm:$0xf]
    %v2436 = vld [vmem:[%s7 + $0x8] sm:$0xf]
    %v2437 = vld [vmem:[%s7 + $0xc] sm:$0xf]
    %v2438 = vld [vmem:[%s7 + $0x10] sm:$0xf]
    %v2439 = vld [vmem:[%s7 + $0x14] sm:$0xf]
    %v2440 = vld [vmem:[%s7 + $0x18] sm:$0xf]
    %v2441 = vld [vmem:[%s7 + $0x1c] sm:$0xf]
    %v2442 = vld [vmem:[%s7 + $0x20] sm:$0xf]
    %v2443 = vld [vmem:[%s7 + $0x24] sm:$0xf]
    %v2444 = vld [vmem:[%s7 + $0x28] sm:$0xf]
    %v2445 = vld [vmem:[%s7 + $0x2c] sm:$0xf]
    %v2446 = vld [vmem:[%s7 + $0x30] sm:$0x3]
    %v2447 = vld [vmem:[%s8] sm:$0x1]
    %v2449 = vlaneseq
    %v2450 = vshrl.u32 %v2449, 7
    %v2451 = vsub.s32 0, %v2450
    %v2452 = vrot.slane %v2447, %v2451
    %v2467 = vunpack.c.l.b16 %v2434
    %v2468 = vunpack.c.l.b16 %v2435
    %v2469 = vunpack.c.l.b16 %v2436
    %v2470 = vunpack.c.l.b16 %v2437
    %v2471 = vunpack.c.l.b16 %v2438
    %v2472 = vunpack.c.l.b16 %v2439
    %v2473 = vunpack.c.l.b16 %v2440
    %v2474 = vunpack.c.l.b16 %v2441
    %v2475 = vunpack.c.l.b16 %v2442
    %v2476 = vunpack.c.l.b16 %v2443
    %v2477 = vunpack.c.l.b16 %v2444
    %v2478 = vunpack.c.l.b16 %v2445
    %v2479 = vunpack.c.l.b16 %v2446
    %v2480 = vpack.c.b16 %v2468, %v2467
    %v2481 = vpack.c.b16 %v2470, %v2469
    %v2482 = vpack.c.b16 %v2472, %v2471
    %v2483 = vpack.c.b16 %v2474, %v2473
    %v2484 = vpack.c.b16 %v2476, %v2475
    %v2485 = vpack.c.b16 %v2478, %v2477
    %v2486 = vpack.c.b16 %v2479, %v2479
    %v2494 = vsel %vm2390, %v2486, 0
    %2496 = vmatprep.subr.bf16.mxu0 0
    %2497 = vmatpush1.bf16.msra.mxu0 %v2480
    %2498 = vmatprep.subr.bf16.mxu0 0
    %2499 = vmatpush1.bf16.msra.mxu0 %v2481
    %2500 = vmatprep.subr.bf16.mxu0 0
    %2501 = vmatpush1.bf16.msra.mxu0 %v2482
    %2502 = vmatprep.subr.bf16.mxu0 0
    %2503 = vmatpush1.bf16.msra.mxu0 %v2483
    %2504 = vmatprep.subr.bf16.mxu0 0
    %2505 = vmatpush1.bf16.msra.mxu0 %v2484
    %2506 = vmatprep.subr.bf16.mxu0 0
    %2507 = vmatpush1.bf16.msra.mxu0 %v2485
    %2508 = vmatprep.subr.bf16.mxu0 0
    %2509 = vmatpush1.bf16.msra.mxu0 %v2494
    %2510 = vmatprep.subr.bf16.mxu0 0
    %2511 = vmatpush1.bf16.msra.mxu0 0
    %2512 = vmatprep.subr.bf16.mxu0 0
    %2513 = vmatpush1.bf16.msra.mxu0 0
    %2514 = vmatprep.subr.bf16.mxu0 0
    %2515 = vmatpush1.bf16.msra.mxu0 0
    %2516 = vmatprep.subr.bf16.mxu0 0
    %2517 = vmatpush1.bf16.msra.mxu0 0
    %2518 = vmatprep.subr.bf16.mxu0 0
    %2519 = vmatpush1.bf16.msra.mxu0 0
    %2520 = vmatprep.subr.bf16.mxu0 0
    %2521 = vmatpush1.bf16.msra.mxu0 0
    %2522 = vmatprep.subr.bf16.mxu0 0
    %2523 = vmatpush1.bf16.msra.mxu0 0
    %2524 = vmatprep.subr.bf16.mxu0 0
    %2525 = vmatpush1.bf16.msra.mxu0 0
    %2526 = vmatprep.subr.bf16.mxu0 0
    %2527 = vmatpush1.bf16.msra.mxu0 0
    %2528 = vmatprep.mubr.bf16.mxu0 0
    %2529 = vmatmul.mubr.bf16.gmra.mrb[0].mxu0 %v2388
    %v2530 = vpop.f32.mrb[0].mxu0
    %v2531 = vadd.f32 %v2452, %v2530
    %v2532 = vpop.f32.mrb[0].mxu0
    %v2533 = vpop.f32.mrb[0].mxu0
    %v2534 = vpop.f32.mrb[0].mxu0
    %2535 = vdwg.mxu0
    %vm2536 = vcmask 9216
    %2537 = vst.msk [vmem:[#allocation2] sm:$0x3] %vm2536, %v2429
    %2538 = vst.msk [vmem:[#allocation4] sm:$0x3] %vm2536, %v2531
    %v2539 = vld [vmem:[%s1] sm:$0x3]
    %v2540 = vmul.f32 %v2531, 0.5
    %v2541 = vmul.f32 %v2540, 1.442695
    %v2542 = vpow.pop %v2541
    %v2543 = vmul.f32 %v2539, %v2542
    %v2544 = vadd.f32 %v2429, %v2543
    %v2545 = vlaneseq
    %v2546 = vand.u32 %v2545, 127
    %v2547 = vld [vmem:[%s2] sm:$0x3]
    %2548 = vset.pattern.permute.xlu0 0
    %2549 = vperm.xlu0 %2548, %v2547
    %v2550 = vpop.permute.xlu0 %2549
    %vm2551 = vcmp.eq.s32.totalorder %v2546, %v2550
    %v2552 = vpack.c.bf16 %v2544, %v2544
    %v2553 = vld [vmem:[%s9] sm:$0x1]
    %v2554 = vsel %vm2551, 1, 0
    %v2555 = vcvt.s32.f32 %v2554
    %v2556 = vpack.c.bf16 %v2555, %v2555
    %v2557 = vld [vmem:[%s10] sm:$0xf]
    %v2558 = vld [vmem:[%s10 + $0x4] sm:$0x1]
    %v2561 = vunpack.c.l.b16 %v2557
    %v2562 = vunpack.c.l.b16 %v2558
    %v2563 = vpack.c.b16 %v2562, %v2561
    %vm2564 = vcmask 80896
    %v2566 = vsel %vm2564, %v2556, 0
    %vm2568 = vcmask 1044480
    %v2570 = vsel %vm2568, %v2563, 0
    %2572 = vmatprep.subr.bf16.mxu0 0
    %2573 = vmatpush1.bf16.msra.mxu0 %v2570
    %2574 = vmatprep.subr.bf16.mxu0 0
    %2575 = vmatpush1.bf16.msra.mxu0 0
    %2576 = vmatprep.subr.bf16.mxu0 0
    %2577 = vmatpush1.bf16.msra.mxu0 0
    %2578 = vmatprep.subr.bf16.mxu0 0
    %2579 = vmatpush1.bf16.msra.mxu0 0
    %2580 = vmatprep.subr.bf16.mxu0 0
    %2581 = vmatpush1.bf16.msra.mxu0 0
    %2582 = vmatprep.subr.bf16.mxu0 0
    %2583 = vmatpush1.bf16.msra.mxu0 0
    %2584 = vmatprep.subr.bf16.mxu0 0
    %2585 = vmatpush1.bf16.msra.mxu0 0
    %2586 = vmatprep.subr.bf16.mxu0 0
    %2587 = vmatpush1.bf16.msra.mxu0 0
    %2588 = vmatprep.subr.bf16.mxu0 0
    %2589 = vmatpush1.bf16.msra.mxu0 0
    %2590 = vmatprep.subr.bf16.mxu0 0
    %2591 = vmatpush1.bf16.msra.mxu0 0
    %2592 = vmatprep.subr.bf16.mxu0 0
    %2593 = vmatpush1.bf16.msra.mxu0 0
    %2594 = vmatprep.subr.bf16.mxu0 0
    %2595 = vmatpush1.bf16.msra.mxu0 0
    %2596 = vmatprep.subr.bf16.mxu0 0
    %2597 = vmatpush1.bf16.msra.mxu0 0
    %2598 = vmatprep.subr.bf16.mxu0 0
    %2599 = vmatpush1.bf16.msra.mxu0 0
    %2600 = vmatprep.subr.bf16.mxu0 0
    %2601 = vmatpush1.bf16.msra.mxu0 0
    %2602 = vmatprep.subr.bf16.mxu0 0
    %2603 = vmatpush1.bf16.msra.mxu0 0
    %2604 = vmatprep.mubr.bf16.mxu0 0
    %2605 = vmatmul.mubr.bf16.gmra.mrb[0].mxu0 %v2566
    %v2606 = vpop.f32.mrb[0].mxu0
    %v2607 = vadd.f32 0.0, %v2606
    %v2608 = vpop.f32.mrb[0].mxu0
    %v2609 = vpop.f32.mrb[0].mxu0
    %v2610 = vpop.f32.mrb[0].mxu0
    %2611 = vdwg.mxu0
    %vm2612 = vcmask 15360
    %v2614 = vsel %vm2612, %v2552, 0
    %vm2616 = vcmask 1040384
    %v2618 = vsel %vm2616, %v2553, 0
    %2620 = vmatprep.subr.bf16.mxu0 0
    %2621 = vmatpush1.bf16.msra.mxu0 %v2618
    %2622 = vmatprep.subr.bf16.mxu0 0
    %2623 = vmatpush1.bf16.msra.mxu0 0
    %2624 = vmatprep.subr.bf16.mxu0 0
    %2625 = vmatpush1.bf16.msra.mxu0 0
    %2626 = vmatprep.subr.bf16.mxu0 0
    %2627 = vmatpush1.bf16.msra.mxu0 0
    %2628 = vmatprep.subr.bf16.mxu0 0
    %2629 = vmatpush1.bf16.msra.mxu0 0
    %2630 = vmatprep.subr.bf16.mxu0 0
    %2631 = vmatpush1.bf16.msra.mxu0 0
    %2632 = vmatprep.subr.bf16.mxu0 0
    %2633 = vmatpush1.bf16.msra.mxu0 0
    %2634 = vmatprep.subr.bf16.mxu0 0
    %2635 = vmatpush1.bf16.msra.mxu0 0
    %2636 = vmatprep.subr.bf16.mxu0 0
    %2637 = vmatpush1.bf16.msra.mxu0 0
    %2638 = vmatprep.subr.bf16.mxu0 0
    %2639 = vmatpush1.bf16.msra.mxu0 0
    %2640 = vmatprep.subr.bf16.mxu0 0
    %2641 = vmatpush1.bf16.msra.mxu0 0
    %2642 = vmatprep.subr.bf16.mxu0 0
    %2643 = vmatpush1.bf16.msra.mxu0 0
    %2644 = vmatprep.subr.bf16.mxu0 0
    %2645 = vmatpush1.bf16.msra.mxu0 0
    %2646 = vmatprep.subr.bf16.mxu0 0
    %2647 = vmatpush1.bf16.msra.mxu0 0
    %2648 = vmatprep.subr.bf16.mxu0 0
    %2649 = vmatpush1.bf16.msra.mxu0 0
    %2650 = vmatprep.subr.bf16.mxu0 0
    %2651 = vmatpush1.bf16.msra.mxu0 0
    %2652 = vmatprep.mubr.bf16.mxu0 0
    %2653 = vmatmul.mubr.bf16.gmra.mrb[0].mxu0 %v2614
    %v2654 = vpop.f32.mrb[0].mxu0
    %v2655 = vadd.f32 %v2607, %v2654
    %v2656 = vpop.f32.mrb[0].mxu0
    %v2657 = vpop.f32.mrb[0].mxu0
    %v2658 = vpop.f32.mrb[0].mxu0
    %2659 = vdwg.mxu0
    %v2660 = vld [vmem:[%s11] sm:$0x1]
    %v2662 = vlaneseq
    %v2663 = vshrl.u32 %v2662, 7
    %v2664 = vsub.s32 0, %v2663
    %v2665 = vrot.slane %v2660, %v2664
    %v2667 = vadd.f32 %v2655, %v2665
    %v2668 = vmax.f32 %v2667, 0.0
    %v2669 = vpack.c.bf16 %v2668, %v2668
    %v2670 = vld [vmem:[%s12] sm:$0xff]
    %v2671 = vld [vmem:[%s12 + $0x8] sm:$0xff]
    %v2672 = vld [vmem:[%s12 + $0x10] sm:$0xff]
    %v2673 = vld [vmem:[%s12 + $0x18] sm:$0xff]
    %v2674 = vld [vmem:[%s12 + $0x20] sm:$0xff]
    %v2675 = vld [vmem:[%s12 + $0x28] sm:$0xff]
    %v2676 = vld [vmem:[%s12 + $0x30] sm:$0xff]
    %v2677 = vld [vmem:[%s12 + $0x38] sm:$0xff]
    %v2678 = vld [vmem:[%s12 + $0x40] sm:$0xff]
    %v2679 = vld [vmem:[%s12 + $0x48] sm:$0xff]
    %v2680 = vld [vmem:[%s12 + $0x50] sm:$0xff]
    %v2681 = vld [vmem:[%s12 + $0x58] sm:$0xff]
    %v2682 = vld [vmem:[%s12 + $0x60] sm:$0xf]
    %v2683 = vld [vmem:[%s12 + $0x64] sm:$0xff]
    %v2684 = vld [vmem:[%s12 + $0x6c] sm:$0xff]
    %v2685 = vld [vmem:[%s12 + $0x74] sm:$0xff]
    %v2686 = vld [vmem:[%s12 + $0x7c] sm:$0xff]
    %v2687 = vld [vmem:[%s12 + $0x84] sm:$0xff]
    %v2688 = vld [vmem:[%s12 + $0x8c] sm:$0xff]
    %v2689 = vld [vmem:[%s12 + $0x94] sm:$0xff]
    %v2690 = vld [vmem:[%s12 + $0x9c] sm:$0xff]
    %v2691 = vld [vmem:[%s12 + $0xa4] sm:$0xff]
    %v2692 = vld [vmem:[%s12 + $0xac] sm:$0xff]
    %v2693 = vld [vmem:[%s12 + $0xb4] sm:$0xff]
    %v2694 = vld [vmem:[%s12 + $0xbc] sm:$0xff]
    %v2695 = vld [vmem:[%s12 + $0xc4] sm:$0xf]
    %v2696 = vld [vmem:[%s12 + $0xc8] sm:$0xff]
    %v2697 = vld [vmem:[%s12 + $0xd0] sm:$0xff]
    %v2698 = vld [vmem:[%s12 + $0xd8] sm:$0xff]
    %v2699 = vld [vmem:[%s12 + $0xe0] sm:$0xff]
    %v2700 = vld [vmem:[%s12 + $0xe8] sm:$0xff]
    %v2701 = vld [vmem:[%s12 + $0xf0] sm:$0xff]
    %v2702 = vld [vmem:[%s12 + $0xf8] sm:$0xff]
    %v2703 = vld [vmem:[%s12 + $0x100] sm:$0xff]
    %v2704 = vld [vmem:[%s12 + $0x108] sm:$0xff]
    %v2705 = vld [vmem:[%s12 + $0x110] sm:$0xff]
    %v2706 = vld [vmem:[%s12 + $0x118] sm:$0xff]
    %v2707 = vld [vmem:[%s12 + $0x120] sm:$0xff]
    %v2708 = vld [vmem:[%s12 + $0x128] sm:$0xf]
    %v2709 = vld [vmem:[%s12 + $0x12c] sm:$0xff]
    %v2710 = vld [vmem:[%s12 + $0x134] sm:$0xff]
    %v2711 = vld [vmem:[%s12 + $0x13c] sm:$0xff]
    %v2712 = vld [vmem:[%s12 + $0x144] sm:$0xff]
    %v2713 = vld [vmem:[%s12 + $0x14c] sm:$0xff]
    %v2714 = vld [vmem:[%s12 + $0x154] sm:$0xff]
    %v2715 = vld [vmem:[%s12 + $0x15c] sm:$0xff]
    %v2716 = vld [vmem:[%s12 + $0x164] sm:$0xff]
    %v2717 = vld [vmem:[%s12 + $0x16c] sm:$0xff]
    %v2718 = vld [vmem:[%s12 + $0x174] sm:$0xff]
    %v2719 = vld [vmem:[%s12 + $0x17c] sm:$0xff]
    %v2720 = vld [vmem:[%s12 + $0x184] sm:$0xff]
    %v2721 = vld [vmem:[%s12 + $0x18c] sm:$0xf]
    %v2722 = vld [vmem:[%s12 + $0x190] sm:$0xff]
    %v2723 = vld [vmem:[%s12 + $0x198] sm:$0xff]
    %v2724 = vld [vmem:[%s12 + $0x1a0] sm:$0xff]
    %v2725 = vld [vmem:[%s12 + $0x1a8] sm:$0xff]
    %v2726 = vld [vmem:[%s12 + $0x1b0] sm:$0xff]
    %v2727 = vld [vmem:[%s12 + $0x1b8] sm:$0xff]
    %v2728 = vld [vmem:[%s12 + $0x1c0] sm:$0xff]
    %v2729 = vld [vmem:[%s12 + $0x1c8] sm:$0xff]
    %v2730 = vld [vmem:[%s12 + $0x1d0] sm:$0xff]
    %v2731 = vld [vmem:[%s12 + $0x1d8] sm:$0xff]
    %v2732 = vld [vmem:[%s12 + $0x1e0] sm:$0xff]
    %v2733 = vld [vmem:[%s12 + $0x1e8] sm:$0xff]
    %v2734 = vld [vmem:[%s12 + $0x1f0] sm:$0xf]
    %v2735 = vld [vmem:[%s12 + $0x1f4] sm:$0xff]
    %v2736 = vld [vmem:[%s12 + $0x1fc] sm:$0xff]
    %v2737 = vld [vmem:[%s12 + $0x204] sm:$0xff]
    %v2738 = vld [vmem:[%s12 + $0x20c] sm:$0xff]
    %v2739 = vld [vmem:[%s12 + $0x214] sm:$0xff]
    %v2740 = vld [vmem:[%s12 + $0x21c] sm:$0xff]
    %v2741 = vld [vmem:[%s12 + $0x224] sm:$0xff]
    %v2742 = vld [vmem:[%s12 + $0x22c] sm:$0xff]
    %v2743 = vld [vmem:[%s12 + $0x234] sm:$0xff]
    %v2744 = vld [vmem:[%s12 + $0x23c] sm:$0xff]
    %v2745 = vld [vmem:[%s12 + $0x244] sm:$0xff]
    %v2746 = vld [vmem:[%s12 + $0x24c] sm:$0xff]
    %v2747 = vld [vmem:[%s12 + $0x254] sm:$0xf]
    %v2748 = vld [vmem:[%s12 + $0x258] sm:$0xff]
    %v2749 = vld [vmem:[%s12 + $0x260] sm:$0xff]
    %v2750 = vld [vmem:[%s12 + $0x268] sm:$0xff]
    %v2751 = vld [vmem:[%s12 + $0x270] sm:$0xff]
    %v2752 = vld [vmem:[%s12 + $0x278] sm:$0xff]
    %v2753 = vld [vmem:[%s12 + $0x280] sm:$0xff]
    %v2754 = vld [vmem:[%s12 + $0x288] sm:$0xff]
    %v2755 = vld [vmem:[%s12 + $0x290] sm:$0xff]
    %v2756 = vld [vmem:[%s12 + $0x298] sm:$0xff]
    %v2757 = vld [vmem:[%s12 + $0x2a0] sm:$0xff]
    %v2758 = vld [vmem:[%s12 + $0x2a8] sm:$0xff]
    %v2759 = vld [vmem:[%s12 + $0x2b0] sm:$0xff]
    %v2760 = vld [vmem:[%s12 + $0x2b8] sm:$0xf]
    %v2761 = vld [vmem:[%s12 + $0x2bc] sm:$0xff]
    %v2762 = vld [vmem:[%s12 + $0x2c4] sm:$0xff]
    %v2763 = vld [vmem:[%s12 + $0x2cc] sm:$0xff]
    %v2764 = vld [vmem:[%s12 + $0x2d4] sm:$0xff]
    %v2765 = vld [vmem:[%s12 + $0x2dc] sm:$0xff]
    %v2766 = vld [vmem:[%s12 + $0x2e4] sm:$0xff]
    %v2767 = vld [vmem:[%s12 + $0x2ec] sm:$0xff]
    %v2768 = vld [vmem:[%s12 + $0x2f4] sm:$0xff]
    %v2769 = vld [vmem:[%s12 + $0x2fc] sm:$0xff]
    %v2770 = vld [vmem:[%s12 + $0x304] sm:$0xff]
    %v2771 = vld [vmem:[%s12 + $0x30c] sm:$0xff]
    %v2772 = vld [vmem:[%s12 + $0x314] sm:$0xff]
    %v2773 = vld [vmem:[%s12 + $0x31c] sm:$0xf]
    %v2774 = vld [vmem:[%s12 + $0x320] sm:$0xff]
    %v2775 = vld [vmem:[%s12 + $0x328] sm:$0xff]
    %v2776 = vld [vmem:[%s12 + $0x330] sm:$0xff]
    %v2777 = vld [vmem:[%s12 + $0x338] sm:$0xff]
    %v2778 = vld [vmem:[%s12 + $0x340] sm:$0xff]
    %v2779 = vld [vmem:[%s12 + $0x348] sm:$0xff]
    %v2780 = vld [vmem:[%s12 + $0x350] sm:$0xff]
    %v2781 = vld [vmem:[%s12 + $0x358] sm:$0xff]
    %v2782 = vld [vmem:[%s12 + $0x360] sm:$0xff]
    %v2783 = vld [vmem:[%s12 + $0x368] sm:$0xff]
    %v2784 = vld [vmem:[%s12 + $0x370] sm:$0xff]
    %v2785 = vld [vmem:[%s12 + $0x378] sm:$0xff]
    %v2786 = vld [vmem:[%s12 + $0x380] sm:$0xf]
    %v2787 = vld [vmem:[%s12 + $0x384] sm:$0xff]
    %v2788 = vld [vmem:[%s12 + $0x38c] sm:$0xff]
    %v2789 = vld [vmem:[%s12 + $0x394] sm:$0xff]
    %v2790 = vld [vmem:[%s12 + $0x39c] sm:$0xff]
    %v2791 = vld [vmem:[%s12 + $0x3a4] sm:$0xff]
    %v2792 = vld [vmem:[%s12 + $0x3ac] sm:$0xff]
    %v2793 = vld [vmem:[%s12 + $0x3b4] sm:$0xff]
    %v2794 = vld [vmem:[%s12 + $0x3bc] sm:$0xff]
    %v2795 = vld [vmem:[%s12 + $0x3c4] sm:$0xff]
    %v2796 = vld [vmem:[%s12 + $0x3cc] sm:$0xff]
    %v2797 = vld [vmem:[%s12 + $0x3d4] sm:$0xff]
    %v2798 = vld [vmem:[%s12 + $0x3dc] sm:$0xff]
    %v2799 = vld [vmem:[%s12 + $0x3e4] sm:$0xf]
    %v2800 = vld [vmem:[%s12 + $0x3e8] sm:$0xff]
    %v2801 = vld [vmem:[%s12 + $0x3f0] sm:$0xff]
    %v2802 = vld [vmem:[%s12 + $0x3f8] sm:$0xff]
    %v2803 = vld [vmem:[%s12 + $0x400] sm:$0xff]
    %v2804 = vld [vmem:[%s12 + $0x408] sm:$0xff]
    %v2805 = vld [vmem:[%s12 + $0x410] sm:$0xff]
    %v2806 = vld [vmem:[%s12 + $0x418] sm:$0xff]
    %v2807 = vld [vmem:[%s12 + $0x420] sm:$0xff]
    %v2808 = vld [vmem:[%s12 + $0x428] sm:$0xff]
    %v2809 = vld [vmem:[%s12 + $0x430] sm:$0xff]
    %v2810 = vld [vmem:[%s12 + $0x438] sm:$0xff]
    %v2811 = vld [vmem:[%s12 + $0x440] sm:$0xff]
    %v2812 = vld [vmem:[%s12 + $0x448] sm:$0xf]
    %v2813 = vld [vmem:[%s12 + $0x44c] sm:$0xff]
    %v2814 = vld [vmem:[%s12 + $0x454] sm:$0xff]
    %v2815 = vld [vmem:[%s12 + $0x45c] sm:$0xff]
    %v2816 = vld [vmem:[%s12 + $0x464] sm:$0xff]
    %v2817 = vld [vmem:[%s12 + $0x46c] sm:$0xff]
    %v2818 = vld [vmem:[%s12 + $0x474] sm:$0xff]
    %v2819 = vld [vmem:[%s12 + $0x47c] sm:$0xff]
    %v2820 = vld [vmem:[%s12 + $0x484] sm:$0xff]
    %v2821 = vld [vmem:[%s12 + $0x48c] sm:$0xff]
    %v2822 = vld [vmem:[%s12 + $0x494] sm:$0xff]
    %v2823 = vld [vmem:[%s12 + $0x49c] sm:$0xff]
    %v2824 = vld [vmem:[%s12 + $0x4a4] sm:$0xff]
    %v2825 = vld [vmem:[%s12 + $0x4ac] sm:$0xf]
    %v2826 = vld [vmem:[%s12 + $0x4b0] sm:$0x33]
    %v2827 = vld [vmem:[%s12 + $0x4b8] sm:$0x33]
    %v2828 = vld [vmem:[%s12 + $0x4c0] sm:$0x33]
    %v2829 = vld [vmem:[%s12 + $0x4c8] sm:$0x33]
    %v2830 = vld [vmem:[%s12 + $0x4d0] sm:$0x33]
    %v2831 = vld [vmem:[%s12 + $0x4d8] sm:$0x33]
    %v2832 = vld [vmem:[%s12 + $0x4e0] sm:$0x33]
    %v2833 = vld [vmem:[%s12 + $0x4e8] sm:$0x33]
    %v2834 = vld [vmem:[%s12 + $0x4f0] sm:$0x33]
    %v2835 = vld [vmem:[%s12 + $0x4f8] sm:$0x33]
    %v2836 = vld [vmem:[%s12 + $0x500] sm:$0x33]
    %v2837 = vld [vmem:[%s12 + $0x508] sm:$0x33]
    %v2838 = vld [vmem:[%s12 + $0x510] sm:$0x3]
    %v2839 = vld [vmem:[%s13] sm:$0xff]
    %v2840 = vld [vmem:[%s13 + $0x8] sm:$0xff]
    %v2841 = vld [vmem:[%s13 + $0x10] sm:$0xff]
    %v2842 = vld [vmem:[%s13 + $0x18] sm:$0x1]
    %v2847 = vlaneseq
    %v2848 = vshrl.u32 %v2847, 7
    %v2849 = vsub.s32 0, %v2848
    %v2850 = vrot.slane %v2839, %v2849
    %v2851 = vlaneseq
    %v2852 = vshrl.u32 %v2851, 7
    %v2853 = vsub.s32 1, %v2852
    %v2854 = vrot.slane %v2839, %v2853
    %v2855 = vlaneseq
    %v2856 = vshrl.u32 %v2855, 7
    %v2857 = vsub.s32 2, %v2856
    %v2858 = vrot.slane %v2839, %v2857
    %v2859 = vlaneseq
    %v2860 = vshrl.u32 %v2859, 7
    %v2861 = vsub.s32 3, %v2860
    %v2862 = vrot.slane %v2839, %v2861
    %v2863 = vlaneseq
    %v2864 = vshrl.u32 %v2863, 7
    %v2865 = vsub.s32 4, %v2864
    %v2866 = vrot.slane %v2839, %v2865
    %v2867 = vlaneseq
    %v2868 = vshrl.u32 %v2867, 7
    %v2869 = vsub.s32 5, %v2868
    %v2870 = vrot.slane %v2839, %v2869
    %v2871 = vlaneseq
    %v2872 = vshrl.u32 %v2871, 7
    %v2873 = vsub.s32 6, %v2872
    %v2874 = vrot.slane %v2839, %v2873
    %v2875 = vlaneseq
    %v2876 = vshrl.u32 %v2875, 7
    %v2877 = vsub.s32 7, %v2876
    %v2878 = vrot.slane %v2839, %v2877
    %v2879 = vlaneseq
    %v2880 = vshrl.u32 %v2879, 7
    %v2881 = vsub.s32 0, %v2880
    %v2882 = vrot.slane %v2840, %v2881
    %v2883 = vlaneseq
    %v2884 = vshrl.u32 %v2883, 7
    %v2885 = vsub.s32 1, %v2884
    %v2886 = vrot.slane %v2840, %v2885
    %v2887 = vlaneseq
    %v2888 = vshrl.u32 %v2887, 7
    %v2889 = vsub.s32 2, %v2888
    %v2890 = vrot.slane %v2840, %v2889
    %v2891 = vlaneseq
    %v2892 = vshrl.u32 %v2891, 7
    %v2893 = vsub.s32 3, %v2892
    %v2894 = vrot.slane %v2840, %v2893
    %v2895 = vlaneseq
    %v2896 = vshrl.u32 %v2895, 7
    %v2897 = vsub.s32 4, %v2896
    %v2898 = vrot.slane %v2840, %v2897
    %v2899 = vlaneseq
    %v2900 = vshrl.u32 %v2899, 7
    %v2901 = vsub.s32 5, %v2900
    %v2902 = vrot.slane %v2840, %v2901
    %v2903 = vlaneseq
    %v2904 = vshrl.u32 %v2903, 7
    %v2905 = vsub.s32 6, %v2904
    %v2906 = vrot.slane %v2840, %v2905
    %v2907 = vlaneseq
    %v2908 = vshrl.u32 %v2907, 7
    %v2909 = vsub.s32 7, %v2908
    %v2910 = vrot.slane %v2840, %v2909
    %v2911 = vlaneseq
    %v2912 = vshrl.u32 %v2911, 7
    %v2913 = vsub.s32 0, %v2912
    %v2914 = vrot.slane %v2841, %v2913
    %v2915 = vlaneseq
    %v2916 = vshrl.u32 %v2915, 7
    %v2917 = vsub.s32 1, %v2916
    %v2918 = vrot.slane %v2841, %v2917
    %v2919 = vlaneseq
    %v2920 = vshrl.u32 %v2919, 7
    %v2921 = vsub.s32 2, %v2920
    %v2922 = vrot.slane %v2841, %v2921
    %v2923 = vlaneseq
    %v2924 = vshrl.u32 %v2923, 7
    %v2925 = vsub.s32 3, %v2924
    %v2926 = vrot.slane %v2841, %v2925
    %v2927 = vlaneseq
    %v2928 = vshrl.u32 %v2927, 7
    %v2929 = vsub.s32 4, %v2928
    %v2930 = vrot.slane %v2841, %v2929
    %v2931 = vlaneseq
    %v2932 = vshrl.u32 %v2931, 7
    %v2933 = vsub.s32 5, %v2932
    %v2934 = vrot.slane %v2841, %v2933
    %v2935 = vlaneseq
    %v2936 = vshrl.u32 %v2935, 7
    %v2937 = vsub.s32 6, %v2936
    %v2938 = vrot.slane %v2841, %v2937
    %v2939 = vlaneseq
    %v2940 = vshrl.u32 %v2939, 7
    %v2941 = vsub.s32 7, %v2940
    %v2942 = vrot.slane %v2841, %v2941
    %v2943 = vlaneseq
    %v2944 = vshrl.u32 %v2943, 7
    %v2945 = vsub.s32 0, %v2944
    %v2946 = vrot.slane %v2842, %v2945
    %v3141 = vunpack.c.l.b16 %v2670
    %v3142 = vunpack.c.h.b16 %v2670
    %v3143 = vunpack.c.l.b16 %v2671
    %v3144 = vunpack.c.h.b16 %v2671
    %v3145 = vunpack.c.l.b16 %v2672
    %v3146 = vunpack.c.h.b16 %v2672
    %v3147 = vunpack.c.l.b16 %v2673
    %v3148 = vunpack.c.h.b16 %v2673
    %v3149 = vunpack.c.l.b16 %v2674
    %v3150 = vunpack.c.h.b16 %v2674
    %v3151 = vunpack.c.l.b16 %v2675
    %v3152 = vunpack.c.h.b16 %v2675
    %v3153 = vunpack.c.l.b16 %v2676
    %v3154 = vunpack.c.h.b16 %v2676
    %v3155 = vunpack.c.l.b16 %v2677
    %v3156 = vunpack.c.h.b16 %v2677
    %v3157 = vunpack.c.l.b16 %v2678
    %v3158 = vunpack.c.h.b16 %v2678
    %v3159 = vunpack.c.l.b16 %v2679
    %v3160 = vunpack.c.h.b16 %v2679
    %v3161 = vunpack.c.l.b16 %v2680
    %v3162 = vunpack.c.h.b16 %v2680
    %v3163 = vunpack.c.l.b16 %v2681
    %v3164 = vunpack.c.h.b16 %v2681
    %v3165 = vunpack.c.l.b16 %v2682
    %v3166 = vunpack.c.l.b16 %v2683
    %v3167 = vunpack.c.h.b16 %v2683
    %v3168 = vunpack.c.l.b16 %v2684
    %v3169 = vunpack.c.h.b16 %v2684
    %v3170 = vunpack.c.l.b16 %v2685
    %v3171 = vunpack.c.h.b16 %v2685
    %v3172 = vunpack.c.l.b16 %v2686
    %v3173 = vunpack.c.h.b16 %v2686
    %v3174 = vunpack.c.l.b16 %v2687
    %v3175 = vunpack.c.h.b16 %v2687
    %v3176 = vunpack.c.l.b16 %v2688
    %v3177 = vunpack.c.h.b16 %v2688
    %v3178 = vunpack.c.l.b16 %v2689
    %v3179 = vunpack.c.h.b16 %v2689
    %v3180 = vunpack.c.l.b16 %v2690
    %v3181 = vunpack.c.h.b16 %v2690
    %v3182 = vunpack.c.l.b16 %v2691
    %v3183 = vunpack.c.h.b16 %v2691
    %v3184 = vunpack.c.l.b16 %v2692
    %v3185 = vunpack.c.h.b16 %v2692
    %v3186 = vunpack.c.l.b16 %v2693
    %v3187 = vunpack.c.h.b16 %v2693
    %v3188 = vunpack.c.l.b16 %v2694
    %v3189 = vunpack.c.h.b16 %v2694
    %v3190 = vunpack.c.l.b16 %v2695
    %v3191 = vunpack.c.l.b16 %v2696
    %v3192 = vunpack.c.h.b16 %v2696
    %v3193 = vunpack.c.l.b16 %v2697
    %v3194 = vunpack.c.h.b16 %v2697
    %v3195 = vunpack.c.l.b16 %v2698
    %v3196 = vunpack.c.h.b16 %v2698
    %v3197 = vunpack.c.l.b16 %v2699
    %v3198 = vunpack.c.h.b16 %v2699
    %v3199 = vunpack.c.l.b16 %v2700
    %v3200 = vunpack.c.h.b16 %v2700
    %v3201 = vunpack.c.l.b16 %v2701
    %v3202 = vunpack.c.h.b16 %v2701
    %v3203 = vunpack.c.l.b16 %v2702
    %v3204 = vunpack.c.h.b16 %v2702
    %v3205 = vunpack.c.l.b16 %v2703
    %v3206 = vunpack.c.h.b16 %v2703
    %v3207 = vunpack.c.l.b16 %v2704
    %v3208 = vunpack.c.h.b16 %v2704
    %v3209 = vunpack.c.l.b16 %v2705
    %v3210 = vunpack.c.h.b16 %v2705
    %v3211 = vunpack.c.l.b16 %v2706
    %v3212 = vunpack.c.h.b16 %v2706
    %v3213 = vunpack.c.l.b16 %v2707
    %v3214 = vunpack.c.h.b16 %v2707
    %v3215 = vunpack.c.l.b16 %v2708
    %v3216 = vunpack.c.l.b16 %v2709
    %v3217 = vunpack.c.h.b16 %v2709
    %v3218 = vunpack.c.l.b16 %v2710
    %v3219 = vunpack.c.h.b16 %v2710
    %v3220 = vunpack.c.l.b16 %v2711
    %v3221 = vunpack.c.h.b16 %v2711
    %v3222 = vunpack.c.l.b16 %v2712
    %v3223 = vunpack.c.h.b16 %v2712
    %v3224 = vunpack.c.l.b16 %v2713
    %v3225 = vunpack.c.h.b16 %v2713
    %v3226 = vunpack.c.l.b16 %v2714
    %v3227 = vunpack.c.h.b16 %v2714
    %v3228 = vunpack.c.l.b16 %v2715
    %v3229 = vunpack.c.h.b16 %v2715
    %v3230 = vunpack.c.l.b16 %v2716
    %v3231 = vunpack.c.h.b16 %v2716
    %v3232 = vunpack.c.l.b16 %v2717
    %v3233 = vunpack.c.h.b16 %v2717
    %v3234 = vunpack.c.l.b16 %v2718
    %v3235 = vunpack.c.h.b16 %v2718
    %v3236 = vunpack.c.l.b16 %v2719
    %v3237 = vunpack.c.h.b16 %v2719
    %v3238 = vunpack.c.l.b16 %v2720
    %v3239 = vunpack.c.h.b16 %v2720
    %v3240 = vunpack.c.l.b16 %v2721
    %v3241 = vunpack.c.l.b16 %v2722
    %v3242 = vunpack.c.h.b16 %v2722
    %v3243 = vunpack.c.l.b16 %v2723
    %v3244 = vunpack.c.h.b16 %v2723
    %v3245 = vunpack.c.l.b16 %v2724
    %v3246 = vunpack.c.h.b16 %v2724
    %v3247 = vunpack.c.l.b16 %v2725
    %v3248 = vunpack.c.h.b16 %v2725
    %v3249 = vunpack.c.l.b16 %v2726
    %v3250 = vunpack.c.h.b16 %v2726
    %v3251 = vunpack.c.l.b16 %v2727
    %v3252 = vunpack.c.h.b16 %v2727
    %v3253 = vunpack.c.l.b16 %v2728
    %v3254 = vunpack.c.h.b16 %v2728
    %v3255 = vunpack.c.l.b16 %v2729
    %v3256 = vunpack.c.h.b16 %v2729
    %v3257 = vunpack.c.l.b16 %v2730
    %v3258 = vunpack.c.h.b16 %v2730
    %v3259 = vunpack.c.l.b16 %v2731
    %v3260 = vunpack.c.h.b16 %v2731
    %v3261 = vunpack.c.l.b16 %v2732
    %v3262 = vunpack.c.h.b16 %v2732
    %v3263 = vunpack.c.l.b16 %v2733
    %v3264 = vunpack.c.h.b16 %v2733
    %v3265 = vunpack.c.l.b16 %v2734
    %v3266 = vunpack.c.l.b16 %v2735
    %v3267 = vunpack.c.h.b16 %v2735
    %v3268 = vunpack.c.l.b16 %v2736
    %v3269 = vunpack.c.h.b16 %v2736
    %v3270 = vunpack.c.l.b16 %v2737
    %v3271 = vunpack.c.h.b16 %v2737
    %v3272 = vunpack.c.l.b16 %v2738
    %v3273 = vunpack.c.h.b16 %v2738
    %v3274 = vunpack.c.l.b16 %v2739
    %v3275 = vunpack.c.h.b16 %v2739
    %v3276 = vunpack.c.l.b16 %v2740
    %v3277 = vunpack.c.h.b16 %v2740
    %v3278 = vunpack.c.l.b16 %v2741
    %v3279 = vunpack.c.h.b16 %v2741
    %v3280 = vunpack.c.l.b16 %v2742
    %v3281 = vunpack.c.h.b16 %v2742
    %v3282 = vunpack.c.l.b16 %v2743
    %v3283 = vunpack.c.h.b16 %v2743
    %v3284 = vunpack.c.l.b16 %v2744
    %v3285 = vunpack.c.h.b16 %v2744
    %v3286 = vunpack.c.l.b16 %v2745
    %v3287 = vunpack.c.h.b16 %v2745
    %v3288 = vunpack.c.l.b16 %v2746
    %v3289 = vunpack.c.h.b16 %v2746
    %v3290 = vunpack.c.l.b16 %v2747
    %v3291 = vunpack.c.l.b16 %v2748
    %v3292 = vunpack.c.h.b16 %v2748
    %v3293 = vunpack.c.l.b16 %v2749
    %v3294 = vunpack.c.h.b16 %v2749
    %v3295 = vunpack.c.l.b16 %v2750
    %v3296 = vunpack.c.h.b16 %v2750
    %v3297 = vunpack.c.l.b16 %v2751
    %v3298 = vunpack.c.h.b16 %v2751
    %v3299 = vunpack.c.l.b16 %v2752
    %v3300 = vunpack.c.h.b16 %v2752
    %v3301 = vunpack.c.l.b16 %v2753
    %v3302 = vunpack.c.h.b16 %v2753
    %v3303 = vunpack.c.l.b16 %v2754
    %v3304 = vunpack.c.h.b16 %v2754
    %v3305 = vunpack.c.l.b16 %v2755
    %v3306 = vunpack.c.h.b16 %v2755
    %v3307 = vunpack.c.l.b16 %v2756
    %v3308 = vunpack.c.h.b16 %v2756
    %v3309 = vunpack.c.l.b16 %v2757
    %v3310 = vunpack.c.h.b16 %v2757
    %v3311 = vunpack.c.l.b16 %v2758
    %v3312 = vunpack.c.h.b16 %v2758
    %v3313 = vunpack.c.l.b16 %v2759
    %v3314 = vunpack.c.h.b16 %v2759
    %v3315 = vunpack.c.l.b16 %v2760
    %v3316 = vunpack.c.l.b16 %v2761
    %v3317 = vunpack.c.h.b16 %v2761
    %v3318 = vunpack.c.l.b16 %v2762
    %v3319 = vunpack.c.h.b16 %v2762
    %v3320 = vunpack.c.l.b16 %v2763
    %v3321 = vunpack.c.h.b16 %v2763
    %v3322 = vunpack.c.l.b16 %v2764
    %v3323 = vunpack.c.h.b16 %v2764
    %v3324 = vunpack.c.l.b16 %v2765
    %v3325 = vunpack.c.h.b16 %v2765
    %v3326 = vunpack.c.l.b16 %v2766
    %v3327 = vunpack.c.h.b16 %v2766
    %v3328 = vunpack.c.l.b16 %v2767
    %v3329 = vunpack.c.h.b16 %v2767
    %v3330 = vunpack.c.l.b16 %v2768
    %v3331 = vunpack.c.h.b16 %v2768
    %v3332 = vunpack.c.l.b16 %v2769
    %v3333 = vunpack.c.h.b16 %v2769
    %v3334 = vunpack.c.l.b16 %v2770
    %v3335 = vunpack.c.h.b16 %v2770
    %v3336 = vunpack.c.l.b16 %v2771
    %v3337 = vunpack.c.h.b16 %v2771
    %v3338 = vunpack.c.l.b16 %v2772
    %v3339 = vunpack.c.h.b16 %v2772
    %v3340 = vunpack.c.l.b16 %v2773
    %v3341 = vunpack.c.l.b16 %v2774
    %v3342 = vunpack.c.h.b16 %v2774
    %v3343 = vunpack.c.l.b16 %v2775
    %v3344 = vunpack.c.h.b16 %v2775
    %v3345 = vunpack.c.l.b16 %v2776
    %v3346 = vunpack.c.h.b16 %v2776
    %v3347 = vunpack.c.l.b16 %v2777
    %v3348 = vunpack.c.h.b16 %v2777
    %v3349 = vunpack.c.l.b16 %v2778
    %v3350 = vunpack.c.h.b16 %v2778
    %v3351 = vunpack.c.l.b16 %v2779
    %v3352 = vunpack.c.h.b16 %v2779
    %v3353 = vunpack.c.l.b16 %v2780
    %v3354 = vunpack.c.h.b16 %v2780
    %v3355 = vunpack.c.l.b16 %v2781
    %v3356 = vunpack.c.h.b16 %v2781
    %v3357 = vunpack.c.l.b16 %v2782
    %v3358 = vunpack.c.h.b16 %v2782
    %v3359 = vunpack.c.l.b16 %v2783
    %v3360 = vunpack.c.h.b16 %v2783
    %v3361 = vunpack.c.l.b16 %v2784
    %v3362 = vunpack.c.h.b16 %v2784
    %v3363 = vunpack.c.l.b16 %v2785
    %v3364 = vunpack.c.h.b16 %v2785
    %v3365 = vunpack.c.l.b16 %v2786
    %v3366 = vunpack.c.l.b16 %v2787
    %v3367 = vunpack.c.h.b16 %v2787
    %v3368 = vunpack.c.l.b16 %v2788
    %v3369 = vunpack.c.h.b16 %v2788
    %v3370 = vunpack.c.l.b16 %v2789
    %v3371 = vunpack.c.h.b16 %v2789
    %v3372 = vunpack.c.l.b16 %v2790
    %v3373 = vunpack.c.h.b16 %v2790
    %v3374 = vunpack.c.l.b16 %v2791
    %v3375 = vunpack.c.h.b16 %v2791
    %v3376 = vunpack.c.l.b16 %v2792
    %v3377 = vunpack.c.h.b16 %v2792
    %v3378 = vunpack.c.l.b16 %v2793
    %v3379 = vunpack.c.h.b16 %v2793
    %v3380 = vunpack.c.l.b16 %v2794
    %v3381 = vunpack.c.h.b16 %v2794
    %v3382 = vunpack.c.l.b16 %v2795
    %v3383 = vunpack.c.h.b16 %v2795
    %v3384 = vunpack.c.l.b16 %v2796
    %v3385 = vunpack.c.h.b16 %v2796
    %v3386 = vunpack.c.l.b16 %v2797
    %v3387 = vunpack.c.h.b16 %v2797
    %v3388 = vunpack.c.l.b16 %v2798
    %v3389 = vunpack.c.h.b16 %v2798
    %v3390 = vunpack.c.l.b16 %v2799
    %v3391 = vunpack.c.l.b16 %v2800
    %v3392 = vunpack.c.h.b16 %v2800
    %v3393 = vunpack.c.l.b16 %v2801
    %v3394 = vunpack.c.h.b16 %v2801
    %v3395 = vunpack.c.l.b16 %v2802
    %v3396 = vunpack.c.h.b16 %v2802
    %v3397 = vunpack.c.l.b16 %v2803
    %v3398 = vunpack.c.h.b16 %v2803
    %v3399 = vunpack.c.l.b16 %v2804
    %v3400 = vunpack.c.h.b16 %v2804
    %v3401 = vunpack.c.l.b16 %v2805
    %v3402 = vunpack.c.h.b16 %v2805
    %v3403 = vunpack.c.l.b16 %v2806
    %v3404 = vunpack.c.h.b16 %v2806
    %v3405 = vunpack.c.l.b16 %v2807
    %v3406 = vunpack.c.h.b16 %v2807
    %v3407 = vunpack.c.l.b16 %v2808
    %v3408 = vunpack.c.h.b16 %v2808
    %v3409 = vunpack.c.l.b16 %v2809
    %v3410 = vunpack.c.h.b16 %v2809
    %v3411 = vunpack.c.l.b16 %v2810
    %v3412 = vunpack.c.h.b16 %v2810
    %v3413 = vunpack.c.l.b16 %v2811
    %v3414 = vunpack.c.h.b16 %v2811
    %v3415 = vunpack.c.l.b16 %v2812
    %v3416 = vunpack.c.l.b16 %v2813
    %v3417 = vunpack.c.h.b16 %v2813
    %v3418 = vunpack.c.l.b16 %v2814
    %v3419 = vunpack.c.h.b16 %v2814
    %v3420 = vunpack.c.l.b16 %v2815
    %v3421 = vunpack.c.h.b16 %v2815
    %v3422 = vunpack.c.l.b16 %v2816
    %v3423 = vunpack.c.h.b16 %v2816
    %v3424 = vunpack.c.l.b16 %v2817
    %v3425 = vunpack.c.h.b16 %v2817
    %v3426 = vunpack.c.l.b16 %v2818
    %v3427 = vunpack.c.h.b16 %v2818
    %v3428 = vunpack.c.l.b16 %v2819
    %v3429 = vunpack.c.h.b16 %v2819
    %v3430 = vunpack.c.l.b16 %v2820
    %v3431 = vunpack.c.h.b16 %v2820
    %v3432 = vunpack.c.l.b16 %v2821
    %v3433 = vunpack.c.h.b16 %v2821
    %v3434 = vunpack.c.l.b16 %v2822
    %v3435 = vunpack.c.h.b16 %v2822
    %v3436 = vunpack.c.l.b16 %v2823
    %v3437 = vunpack.c.h.b16 %v2823
    %v3438 = vunpack.c.l.b16 %v2824
    %v3439 = vunpack.c.h.b16 %v2824
    %v3440 = vunpack.c.l.b16 %v2825
    %v3441 = vunpack.c.l.b16 %v2826
    %v3442 = vunpack.c.h.b16 %v2826
    %v3443 = vunpack.c.l.b16 %v2827
    %v3444 = vunpack.c.h.b16 %v2827
    %v3445 = vunpack.c.l.b16 %v2828
    %v3446 = vunpack.c.h.b16 %v2828
    %v3447 = vunpack.c.l.b16 %v2829
    %v3448 = vunpack.c.h.b16 %v2829
    %v3449 = vunpack.c.l.b16 %v2830
    %v3450 = vunpack.c.h.b16 %v2830
    %v3451 = vunpack.c.l.b16 %v2831
    %v3452 = vunpack.c.h.b16 %v2831
    %v3453 = vunpack.c.l.b16 %v2832
    %v3454 = vunpack.c.h.b16 %v2832
    %v3455 = vunpack.c.l.b16 %v2833
    %v3456 = vunpack.c.h.b16 %v2833
    %v3457 = vunpack.c.l.b16 %v2834
    %v3458 = vunpack.c.h.b16 %v2834
    %v3459 = vunpack.c.l.b16 %v2835
    %v3460 = vunpack.c.h.b16 %v2835
    %v3461 = vunpack.c.l.b16 %v2836
    %v3462 = vunpack.c.h.b16 %v2836
    %v3463 = vunpack.c.l.b16 %v2837
    %v3464 = vunpack.c.h.b16 %v2837
    %v3465 = vunpack.c.l.b16 %v2838
    %v3466 = vpack.c.b16 %v3166, %v3141
    %v3467 = vpack.c.b16 %v3167, %v3142
    %v3468 = vpack.c.b16 %v3168, %v3143
    %v3469 = vpack.c.b16 %v3169, %v3144
    %v3470 = vpack.c.b16 %v3170, %v3145
    %v3471 = vpack.c.b16 %v3171, %v3146
    %v3472 = vpack.c.b16 %v3172, %v3147
    %v3473 = vpack.c.b16 %v3173, %v3148
    %v3474 = vpack.c.b16 %v3174, %v3149
    %v3475 = vpack.c.b16 %v3175, %v3150
    %v3476 = vpack.c.b16 %v3176, %v3151
    %v3477 = vpack.c.b16 %v3177, %v3152
    %v3478 = vpack.c.b16 %v3178, %v3153
    %v3479 = vpack.c.b16 %v3179, %v3154
    %v3480 = vpack.c.b16 %v3180, %v3155
    %v3481 = vpack.c.b16 %v3181, %v3156
    %v3482 = vpack.c.b16 %v3182, %v3157
    %v3483 = vpack.c.b16 %v3183, %v3158
    %v3484 = vpack.c.b16 %v3184, %v3159
    %v3485 = vpack.c.b16 %v3185, %v3160
    %v3486 = vpack.c.b16 %v3186, %v3161
    %v3487 = vpack.c.b16 %v3187, %v3162
    %v3488 = vpack.c.b16 %v3188, %v3163
    %v3489 = vpack.c.b16 %v3189, %v3164
    %v3490 = vpack.c.b16 %v3190, %v3165
    %v3491 = vpack.c.b16 %v3216, %v3191
    %v3492 = vpack.c.b16 %v3217, %v3192
    %v3493 = vpack.c.b16 %v3218, %v3193
    %v3494 = vpack.c.b16 %v3219, %v3194
    %v3495 = vpack.c.b16 %v3220, %v3195
    %v3496 = vpack.c.b16 %v3221, %v3196
    %v3497 = vpack.c.b16 %v3222, %v3197
    %v3498 = vpack.c.b16 %v3223, %v3198
    %v3499 = vpack.c.b16 %v3224, %v3199
    %v3500 = vpack.c.b16 %v3225, %v3200
    %v3501 = vpack.c.b16 %v3226, %v3201
    %v3502 = vpack.c.b16 %v3227, %v3202
    %v3503 = vpack.c.b16 %v3228, %v3203
    %v3504 = vpack.c.b16 %v3229, %v3204
    %v3505 = vpack.c.b16 %v3230, %v3205
    %v3506 = vpack.c.b16 %v3231, %v3206
    %v3507 = vpack.c.b16 %v3232, %v3207
    %v3508 = vpack.c.b16 %v3233, %v3208
    %v3509 = vpack.c.b16 %v3234, %v3209
    %v3510 = vpack.c.b16 %v3235, %v3210
    %v3511 = vpack.c.b16 %v3236, %v3211
    %v3512 = vpack.c.b16 %v3237, %v3212
    %v3513 = vpack.c.b16 %v3238, %v3213
    %v3514 = vpack.c.b16 %v3239, %v3214
    %v3515 = vpack.c.b16 %v3240, %v3215
    %v3516 = vpack.c.b16 %v3266, %v3241
    %v3517 = vpack.c.b16 %v3267, %v3242
    %v3518 = vpack.c.b16 %v3268, %v3243
    %v3519 = vpack.c.b16 %v3269, %v3244
    %v3520 = vpack.c.b16 %v3270, %v3245
    %v3521 = vpack.c.b16 %v3271, %v3246
    %v3522 = vpack.c.b16 %v3272, %v3247
    %v3523 = vpack.c.b16 %v3273, %v3248
    %v3524 = vpack.c.b16 %v3274, %v3249
    %v3525 = vpack.c.b16 %v3275, %v3250
    %v3526 = vpack.c.b16 %v3276, %v3251
    %v3527 = vpack.c.b16 %v3277, %v3252
    %v3528 = vpack.c.b16 %v3278, %v3253
    %v3529 = vpack.c.b16 %v3279, %v3254
    %v3530 = vpack.c.b16 %v3280, %v3255
    %v3531 = vpack.c.b16 %v3281, %v3256
    %v3532 = vpack.c.b16 %v3282, %v3257
    %v3533 = vpack.c.b16 %v3283, %v3258
    %v3534 = vpack.c.b16 %v3284, %v3259
    %v3535 = vpack.c.b16 %v3285, %v3260
    %v3536 = vpack.c.b16 %v3286, %v3261
    %v3537 = vpack.c.b16 %v3287, %v3262
    %v3538 = vpack.c.b16 %v3288, %v3263
    %v3539 = vpack.c.b16 %v3289, %v3264
    %v3540 = vpack.c.b16 %v3290, %v3265
    %v3541 = vpack.c.b16 %v3316, %v3291
    %v3542 = vpack.c.b16 %v3317, %v3292
    %v3543 = vpack.c.b16 %v3318, %v3293
    %v3544 = vpack.c.b16 %v3319, %v3294
    %v3545 = vpack.c.b16 %v3320, %v3295
    %v3546 = vpack.c.b16 %v3321, %v3296
    %v3547 = vpack.c.b16 %v3322, %v3297
    %v3548 = vpack.c.b16 %v3323, %v3298
    %v3549 = vpack.c.b16 %v3324, %v3299
    %v3550 = vpack.c.b16 %v3325, %v3300
    %v3551 = vpack.c.b16 %v3326, %v3301
    %v3552 = vpack.c.b16 %v3327, %v3302
    %v3553 = vpack.c.b16 %v3328, %v3303
    %v3554 = vpack.c.b16 %v3329, %v3304
    %v3555 = vpack.c.b16 %v3330, %v3305
    %v3556 = vpack.c.b16 %v3331, %v3306
    %v3557 = vpack.c.b16 %v3332, %v3307
    %v3558 = vpack.c.b16 %v3333, %v3308
    %v3559 = vpack.c.b16 %v3334, %v3309
    %v3560 = vpack.c.b16 %v3335, %v3310
    %v3561 = vpack.c.b16 %v3336, %v3311
    %v3562 = vpack.c.b16 %v3337, %v3312
    %v3563 = vpack.c.b16 %v3338, %v3313
    %v3564 = vpack.c.b16 %v3339, %v3314
    %v3565 = vpack.c.b16 %v3340, %v3315
    %v3566 = vpack.c.b16 %v3366, %v3341
    %v3567 = vpack.c.b16 %v3367, %v3342
    %v3568 = vpack.c.b16 %v3368, %v3343
    %v3569 = vpack.c.b16 %v3369, %v3344
    %v3570 = vpack.c.b16 %v3370, %v3345
    %v3571 = vpack.c.b16 %v3371, %v3346
    %v3572 = vpack.c.b16 %v3372, %v3347
    %v3573 = vpack.c.b16 %v3373, %v3348
    %v3574 = vpack.c.b16 %v3374, %v3349
    %v3575 = vpack.c.b16 %v3375, %v3350
    %v3576 = vpack.c.b16 %v3376, %v3351
    %v3577 = vpack.c.b16 %v3377, %v3352
    %v3578 = vpack.c.b16 %v3378, %v3353
    %v3579 = vpack.c.b16 %v3379, %v3354
    %v3580 = vpack.c.b16 %v3380, %v3355
    %v3581 = vpack.c.b16 %v3381, %v3356
    %v3582 = vpack.c.b16 %v3382, %v3357
    %v3583 = vpack.c.b16 %v3383, %v3358
    %v3584 = vpack.c.b16 %v3384, %v3359
    %v3585 = vpack.c.b16 %v3385, %v3360
    %v3586 = vpack.c.b16 %v3386, %v3361
    %v3587 = vpack.c.b16 %v3387, %v3362
    %v3588 = vpack.c.b16 %v3388, %v3363
    %v3589 = vpack.c.b16 %v3389, %v3364
    %v3590 = vpack.c.b16 %v3390, %v3365
    %v3591 = vpack.c.b16 %v3416, %v3391
    %v3592 = vpack.c.b16 %v3417, %v3392
    %v3593 = vpack.c.b16 %v3418, %v3393
    %v3594 = vpack.c.b16 %v3419, %v3394
    %v3595 = vpack.c.b16 %v3420, %v3395
    %v3596 = vpack.c.b16 %v3421, %v3396
    %v3597 = vpack.c.b16 %v3422, %v3397
    %v3598 = vpack.c.b16 %v3423, %v3398
    %v3599 = vpack.c.b16 %v3424, %v3399
    %v3600 = vpack.c.b16 %v3425, %v3400
    %v3601 = vpack.c.b16 %v3426, %v3401
    %v3602 = vpack.c.b16 %v3427, %v3402
    %v3603 = vpack.c.b16 %v3428, %v3403
    %v3604 = vpack.c.b16 %v3429, %v3404
    %v3605 = vpack.c.b16 %v3430, %v3405
    %v3606 = vpack.c.b16 %v3431, %v3406
    %v3607 = vpack.c.b16 %v3432, %v3407
    %v3608 = vpack.c.b16 %v3433, %v3408
    %v3609 = vpack.c.b16 %v3434, %v3409
    %v3610 = vpack.c.b16 %v3435, %v3410
    %v3611 = vpack.c.b16 %v3436, %v3411
    %v3612 = vpack.c.b16 %v3437, %v3412
    %v3613 = vpack.c.b16 %v3438, %v3413
    %v3614 = vpack.c.b16 %v3439, %v3414
    %v3615 = vpack.c.b16 %v3440, %v3415
    %v3616 = vpack.c.b16 %v3441, %v3441
    %v3617 = vpack.c.b16 %v3442, %v3442
    %v3618 = vpack.c.b16 %v3443, %v3443
    %v3619 = vpack.c.b16 %v3444, %v3444
    %v3620 = vpack.c.b16 %v3445, %v3445
    %v3621 = vpack.c.b16 %v3446, %v3446
    %v3622 = vpack.c.b16 %v3447, %v3447
    %v3623 = vpack.c.b16 %v3448, %v3448
    %v3624 = vpack.c.b16 %v3449, %v3449
    %v3625 = vpack.c.b16 %v3450, %v3450
    %v3626 = vpack.c.b16 %v3451, %v3451
    %v3627 = vpack.c.b16 %v3452, %v3452
    %v3628 = vpack.c.b16 %v3453, %v3453
    %v3629 = vpack.c.b16 %v3454, %v3454
    %v3630 = vpack.c.b16 %v3455, %v3455
    %v3631 = vpack.c.b16 %v3456, %v3456
    %v3632 = vpack.c.b16 %v3457, %v3457
    %v3633 = vpack.c.b16 %v3458, %v3458
    %v3634 = vpack.c.b16 %v3459, %v3459
    %v3635 = vpack.c.b16 %v3460, %v3460
    %v3636 = vpack.c.b16 %v3461, %v3461
    %v3637 = vpack.c.b16 %v3462, %v3462
    %v3638 = vpack.c.b16 %v3463, %v3463
    %v3639 = vpack.c.b16 %v3464, %v3464
    %v3640 = vpack.c.b16 %v3465, %v3465
    %v3792 = vsel %vm2386, %v2669, 0
    %v3795 = vsel %vm2390, %v3616, 0
    %v3798 = vsel %vm2390, %v3617, 0
    %v3801 = vsel %vm2390, %v3618, 0
    %v3804 = vsel %vm2390, %v3619, 0
    %v3807 = vsel %vm2390, %v3620, 0
    %v3810 = vsel %vm2390, %v3621, 0
    %v3813 = vsel %vm2390, %v3622, 0
    %v3816 = vsel %vm2390, %v3623, 0
    %v3819 = vsel %vm2390, %v3624, 0
    %v3822 = vsel %vm2390, %v3625, 0
    %v3825 = vsel %vm2390, %v3626, 0
    %v3828 = vsel %vm2390, %v3627, 0
    %v3831 = vsel %vm2390, %v3628, 0
    %v3834 = vsel %vm2390, %v3629, 0
    %v3837 = vsel %vm2390, %v3630, 0
    %v3840 = vsel %vm2390, %v3631, 0
    %v3843 = vsel %vm2390, %v3632, 0
    %v3846 = vsel %vm2390, %v3633, 0
    %v3849 = vsel %vm2390, %v3634, 0
    %v3852 = vsel %vm2390, %v3635, 0
    %v3855 = vsel %vm2390, %v3636, 0
    %v3858 = vsel %vm2390, %v3637, 0
    %v3861 = vsel %vm2390, %v3638, 0
    %v3864 = vsel %vm2390, %v3639, 0
    %v3867 = vsel %vm2390, %v3640, 0
    %3869 = vmatprep.subr.bf16.mxu0 %v3467
    %3870 = vmatpush1.bf16.msra.mxu0 %v3466
    %3871 = vmatprep.subr.bf16.mxu0 %v3492
    %3872 = vmatpush1.bf16.msra.mxu0 %v3491
    %3873 = vmatprep.subr.bf16.mxu0 %v3517
    %3874 = vmatpush1.bf16.msra.mxu0 %v3516
    %3875 = vmatprep.subr.bf16.mxu0 %v3542
    %3876 = vmatpush1.bf16.msra.mxu0 %v3541
    %3877 = vmatprep.subr.bf16.mxu0 %v3567
    %3878 = vmatpush1.bf16.msra.mxu0 %v3566
    %3879 = vmatprep.subr.bf16.mxu0 %v3592
    %3880 = vmatpush1.bf16.msra.mxu0 %v3591
    %3881 = vmatprep.subr.bf16.mxu0 %v3798
    %3882 = vmatpush1.bf16.msra.mxu0 %v3795
    %3883 = vmatprep.subr.bf16.mxu0 0
    %3884 = vmatpush1.bf16.msra.mxu0 0
    %3885 = vmatprep.subr.bf16.mxu0 0
    %3886 = vmatpush1.bf16.msra.mxu0 0
    %3887 = vmatprep.subr.bf16.mxu0 0
    %3888 = vmatpush1.bf16.msra.mxu0 0
    %3889 = vmatprep.subr.bf16.mxu0 0
    %3890 = vmatpush1.bf16.msra.mxu0 0
    %3891 = vmatprep.subr.bf16.mxu0 0
    %3892 = vmatpush1.bf16.msra.mxu0 0
    %3893 = vmatprep.subr.bf16.mxu0 0
    %3894 = vmatpush1.bf16.msra.mxu0 0
    %3895 = vmatprep.subr.bf16.mxu0 0
    %3896 = vmatpush1.bf16.msra.mxu0 0
    %3897 = vmatprep.subr.bf16.mxu0 0
    %3898 = vmatpush1.bf16.msra.mxu0 0
    %3899 = vmatprep.subr.bf16.mxu0 0
    %3900 = vmatpush1.bf16.msra.mxu0 0
    %3901 = vmatprep.mubr.bf16.mxu0 0
    %3902 = vmatmul.mubr.bf16.gmra.mrb[0].mxu0 %v3792
    %v3903 = vpop.f32.mrb[0].mxu0
    %v3904 = vadd.f32 %v2850, %v3903
    %v3905 = vpop.f32.mrb[0].mxu0
    %v3906 = vadd.f32 %v2854, %v3905
    %v3907 = vpop.f32.mrb[0].mxu0
    %v3908 = vpop.f32.mrb[0].mxu0
    %3909 = vdwg.mxu0
    %3910 = vmatprep.subr.bf16.mxu0 %v3469
    %3911 = vmatpush1.bf16.msra.mxu0 %v3468
    %3912 = vmatprep.subr.bf16.mxu0 %v3494
    %3913 = vmatpush1.bf16.msra.mxu0 %v3493
    %3914 = vmatprep.subr.bf16.mxu0 %v3519
    %3915 = vmatpush1.bf16.msra.mxu0 %v3518
    %3916 = vmatprep.subr.bf16.mxu0 %v3544
    %3917 = vmatpush1.bf16.msra.mxu0 %v3543
    %3918 = vmatprep.subr.bf16.mxu0 %v3569
    %3919 = vmatpush1.bf16.msra.mxu0 %v3568
    %3920 = vmatprep.subr.bf16.mxu0 %v3594
    %3921 = vmatpush1.bf16.msra.mxu0 %v3593
    %3922 = vmatprep.subr.bf16.mxu0 %v3804
    %3923 = vmatpush1.bf16.msra.mxu0 %v3801
    %3924 = vmatprep.subr.bf16.mxu0 0
    %3925 = vmatpush1.bf16.msra.mxu0 0
    %3926 = vmatprep.subr.bf16.mxu0 0
    %3927 = vmatpush1.bf16.msra.mxu0 0
    %3928 = vmatprep.subr.bf16.mxu0 0
    %3929 = vmatpush1.bf16.msra.mxu0 0
    %3930 = vmatprep.subr.bf16.mxu0 0
    %3931 = vmatpush1.bf16.msra.mxu0 0
    %3932 = vmatprep.subr.bf16.mxu0 0
    %3933 = vmatpush1.bf16.msra.mxu0 0
    %3934 = vmatprep.subr.bf16.mxu0 0
    %3935 = vmatpush1.bf16.msra.mxu0 0
    %3936 = vmatprep.subr.bf16.mxu0 0
    %3937 = vmatpush1.bf16.msra.mxu0 0
    %3938 = vmatprep.subr.bf16.mxu0 0
    %3939 = vmatpush1.bf16.msra.mxu0 0
    %3940 = vmatprep.subr.bf16.mxu0 0
    %3941 = vmatpush1.bf16.msra.mxu0 0
    %3942 = vmatprep.mubr.bf16.mxu0 0
    %3943 = vmatmul.mubr.bf16.gmra.mrb[0].mxu0 %v3792
    %v3944 = vpop.f32.mrb[0].mxu0
    %v3945 = vadd.f32 %v2858, %v3944
    %v3946 = vpop.f32.mrb[0].mxu0
    %v3947 = vadd.f32 %v2862, %v3946
    %v3948 = vpop.f32.mrb[0].mxu0
    %v3949 = vpop.f32.mrb[0].mxu0
    %3950 = vdwg.mxu0
    %3951 = vmatprep.subr.bf16.mxu0 %v3471
    %3952 = vmatpush1.bf16.msra.mxu0 %v3470
    %3953 = vmatprep.subr.bf16.mxu0 %v3496
    %3954 = vmatpush1.bf16.msra.mxu0 %v3495
    %3955 = vmatprep.subr.bf16.mxu0 %v3521
    %3956 = vmatpush1.bf16.msra.mxu0 %v3520
    %3957 = vmatprep.subr.bf16.mxu0 %v3546
    %3958 = vmatpush1.bf16.msra.mxu0 %v3545
    %3959 = vmatprep.subr.bf16.mxu0 %v3571
    %3960 = vmatpush1.bf16.msra.mxu0 %v3570
    %3961 = vmatprep.subr.bf16.mxu0 %v3596
    %3962 = vmatpush1.bf16.msra.mxu0 %v3595
    %3963 = vmatprep.subr.bf16.mxu0 %v3810
    %3964 = vmatpush1.bf16.msra.mxu0 %v3807
    %3965 = vmatprep.subr.bf16.mxu0 0
    %3966 = vmatpush1.bf16.msra.mxu0 0
    %3967 = vmatprep.subr.bf16.mxu0 0
    %3968 = vmatpush1.bf16.msra.mxu0 0
    %3969 = vmatprep.subr.bf16.mxu0 0
    %3970 = vmatpush1.bf16.msra.mxu0 0
    %3971 = vmatprep.subr.bf16.mxu0 0
    %3972 = vmatpush1.bf16.msra.mxu0 0
    %3973 = vmatprep.subr.bf16.mxu0 0
    %3974 = vmatpush1.bf16.msra.mxu0 0
    %3975 = vmatprep.subr.bf16.mxu0 0
    %3976 = vmatpush1.bf16.msra.mxu0 0
    %3977 = vmatprep.subr.bf16.mxu0 0
    %3978 = vmatpush1.bf16.msra.mxu0 0
    %3979 = vmatprep.subr.bf16.mxu0 0
    %3980 = vmatpush1.bf16.msra.mxu0 0
    %3981 = vmatprep.subr.bf16.mxu0 0
    %3982 = vmatpush1.bf16.msra.mxu0 0
    %3983 = vmatprep.mubr.bf16.mxu0 0
    %3984 = vmatmul.mubr.bf16.gmra.mrb[0].mxu0 %v3792
    %v3985 = vpop.f32.mrb[0].mxu0
    %v3986 = vadd.f32 %v2866, %v3985
    %v3987 = vpop.f32.mrb[0].mxu0
    %v3988 = vadd.f32 %v2870, %v3987
    %v3989 = vpop.f32.mrb[0].mxu0
    %v3990 = vpop.f32.mrb[0].mxu0
    %3991 = vdwg.mxu0
    %3992 = vmatprep.subr.bf16.mxu0 %v3473
    %3993 = vmatpush1.bf16.msra.mxu0 %v3472
    %3994 = vmatprep.subr.bf16.mxu0 %v3498
    %3995 = vmatpush1.bf16.msra.mxu0 %v3497
    %3996 = vmatprep.subr.bf16.mxu0 %v3523
    %3997 = vmatpush1.bf16.msra.mxu0 %v3522
    %3998 = vmatprep.subr.bf16.mxu0 %v3548
    %3999 = vmatpush1.bf16.msra.mxu0 %v3547
    %4000 = vmatprep.subr.bf16.mxu0 %v3573
    %4001 = vmatpush1.bf16.msra.mxu0 %v3572
    %4002 = vmatprep.subr.bf16.mxu0 %v3598
    %4003 = vmatpush1.bf16.msra.mxu0 %v3597
    %4004 = vmatprep.subr.bf16.mxu0 %v3816
    %4005 = vmatpush1.bf16.msra.mxu0 %v3813
    %4006 = vmatprep.subr.bf16.mxu0 0
    %4007 = vmatpush1.bf16.msra.mxu0 0
    %4008 = vmatprep.subr.bf16.mxu0 0
    %4009 = vmatpush1.bf16.msra.mxu0 0
    %4010 = vmatprep.subr.bf16.mxu0 0
    %4011 = vmatpush1.bf16.msra.mxu0 0
    %4012 = vmatprep.subr.bf16.mxu0 0
    %4013 = vmatpush1.bf16.msra.mxu0 0
    %4014 = vmatprep.subr.bf16.mxu0 0
    %4015 = vmatpush1.bf16.msra.mxu0 0
    %4016 = vmatprep.subr.bf16.mxu0 0
    %4017 = vmatpush1.bf16.msra.mxu0 0
    %4018 = vmatprep.subr.bf16.mxu0 0
    %4019 = vmatpush1.bf16.msra.mxu0 0
    %4020 = vmatprep.subr.bf16.mxu0 0
    %4021 = vmatpush1.bf16.msra.mxu0 0
    %4022 = vmatprep.subr.bf16.mxu0 0
    %4023 = vmatpush1.bf16.msra.mxu0 0
    %4024 = vmatprep.mubr.bf16.mxu0 0
    %4025 = vmatmul.mubr.bf16.gmra.mrb[0].mxu0 %v3792
    %v4026 = vpop.f32.mrb[0].mxu0
    %v4027 = vadd.f32 %v2874, %v4026
    %v4028 = vpop.f32.mrb[0].mxu0
    %v4029 = vadd.f32 %v2878, %v4028
    %v4030 = vpop.f32.mrb[0].mxu0
    %v4031 = vpop.f32.mrb[0].mxu0
    %4032 = vdwg.mxu0
    %4033 = vmatprep.subr.bf16.mxu0 %v3475
    %4034 = vmatpush1.bf16.msra.mxu0 %v3474
    %4035 = vmatprep.subr.bf16.mxu0 %v3500
    %4036 = vmatpush1.bf16.msra.mxu0 %v3499
    %4037 = vmatprep.subr.bf16.mxu0 %v3525
    %4038 = vmatpush1.bf16.msra.mxu0 %v3524
    %4039 = vmatprep.subr.bf16.mxu0 %v3550
    %4040 = vmatpush1.bf16.msra.mxu0 %v3549
    %4041 = vmatprep.subr.bf16.mxu0 %v3575
    %4042 = vmatpush1.bf16.msra.mxu0 %v3574
    %4043 = vmatprep.subr.bf16.mxu0 %v3600
    %4044 = vmatpush1.bf16.msra.mxu0 %v3599
    %4045 = vmatprep.subr.bf16.mxu0 %v3822
    %4046 = vmatpush1.bf16.msra.mxu0 %v3819
    %4047 = vmatprep.subr.bf16.mxu0 0
    %4048 = vmatpush1.bf16.msra.mxu0 0
    %4049 = vmatprep.subr.bf16.mxu0 0
    %4050 = vmatpush1.bf16.msra.mxu0 0
    %4051 = vmatprep.subr.bf16.mxu0 0
    %4052 = vmatpush1.bf16.msra.mxu0 0
    %4053 = vmatprep.subr.bf16.mxu0 0
    %4054 = vmatpush1.bf16.msra.mxu0 0
    %4055 = vmatprep.subr.bf16.mxu0 0
    %4056 = vmatpush1.bf16.msra.mxu0 0
    %4057 = vmatprep.subr.bf16.mxu0 0
    %4058 = vmatpush1.bf16.msra.mxu0 0
    %4059 = vmatprep.subr.bf16.mxu0 0
    %4060 = vmatpush1.bf16.msra.mxu0 0
    %4061 = vmatprep.subr.bf16.mxu0 0
    %4062 = vmatpush1.bf16.msra.mxu0 0
    %4063 = vmatprep.subr.bf16.mxu0 0
    %4064 = vmatpush1.bf16.msra.mxu0 0
    %4065 = vmatprep.mubr.bf16.mxu0 0
    %4066 = vmatmul.mubr.bf16.gmra.mrb[0].mxu0 %v3792
    %v4067 = vpop.f32.mrb[0].mxu0
    %v4068 = vadd.f32 %v2882, %v4067
    %v4069 = vpop.f32.mrb[0].mxu0
    %v4070 = vadd.f32 %v2886, %v4069
    %v4071 = vpop.f32.mrb[0].mxu0
    %v4072 = vpop.f32.mrb[0].mxu0
    %4073 = vdwg.mxu0
    %4074 = vmatprep.subr.bf16.mxu0 %v3477
    %4075 = vmatpush1.bf16.msra.mxu0 %v3476
    %4076 = vmatprep.subr.bf16.mxu0 %v3502
    %4077 = vmatpush1.bf16.msra.mxu0 %v3501
    %4078 = vmatprep.subr.bf16.mxu0 %v3527
    %4079 = vmatpush1.bf16.msra.mxu0 %v3526
    %4080 = vmatprep.subr.bf16.mxu0 %v3552
    %4081 = vmatpush1.bf16.msra.mxu0 %v3551
    %4082 = vmatprep.subr.bf16.mxu0 %v3577
    %4083 = vmatpush1.bf16.msra.mxu0 %v3576
    %4084 = vmatprep.subr.bf16.mxu0 %v3602
    %4085 = vmatpush1.bf16.msra.mxu0 %v3601
    %4086 = vmatprep.subr.bf16.mxu0 %v3828
    %4087 = vmatpush1.bf16.msra.mxu0 %v3825
    %4088 = vmatprep.subr.bf16.mxu0 0
    %4089 = vmatpush1.bf16.msra.mxu0 0
    %4090 = vmatprep.subr.bf16.mxu0 0
    %4091 = vmatpush1.bf16.msra.mxu0 0
    %4092 = vmatprep.subr.bf16.mxu0 0
    %4093 = vmatpush1.bf16.msra.mxu0 0
    %4094 = vmatprep.subr.bf16.mxu0 0
    %4095 = vmatpush1.bf16.msra.mxu0 0
    %4096 = vmatprep.subr.bf16.mxu0 0
    %4097 = vmatpush1.bf16.msra.mxu0 0
    %4098 = vmatprep.subr.bf16.mxu0 0
    %4099 = vmatpush1.bf16.msra.mxu0 0
    %4100 = vmatprep.subr.bf16.mxu0 0
    %4101 = vmatpush1.bf16.msra.mxu0 0
    %4102 = vmatprep.subr.bf16.mxu0 0
    %4103 = vmatpush1.bf16.msra.mxu0 0
    %4104 = vmatprep.subr.bf16.mxu0 0
    %4105 = vmatpush1.bf16.msra.mxu0 0
    %4106 = vmatprep.mubr.bf16.mxu0 0
    %4107 = vmatmul.mubr.bf16.gmra.mrb[0].mxu0 %v3792
    %v4108 = vpop.f32.mrb[0].mxu0
    %v4109 = vadd.f32 %v2890, %v4108
    %v4110 = vpop.f32.mrb[0].mxu0
    %v4111 = vadd.f32 %v2894, %v4110
    %v4112 = vpop.f32.mrb[0].mxu0
    %v4113 = vpop.f32.mrb[0].mxu0
    %4114 = vdwg.mxu0
    %4115 = vmatprep.subr.bf16.mxu0 %v3479
    %4116 = vmatpush1.bf16.msra.mxu0 %v3478
    %4117 = vmatprep.subr.bf16.mxu0 %v3504
    %4118 = vmatpush1.bf16.msra.mxu0 %v3503
    %4119 = vmatprep.subr.bf16.mxu0 %v3529
    %4120 = vmatpush1.bf16.msra.mxu0 %v3528
    %4121 = vmatprep.subr.bf16.mxu0 %v3554
    %4122 = vmatpush1.bf16.msra.mxu0 %v3553
    %4123 = vmatprep.subr.bf16.mxu0 %v3579
    %4124 = vmatpush1.bf16.msra.mxu0 %v3578
    %4125 = vmatprep.subr.bf16.mxu0 %v3604
    %4126 = vmatpush1.bf16.msra.mxu0 %v3603
    %4127 = vmatprep.subr.bf16.mxu0 %v3834
    %4128 = vmatpush1.bf16.msra.mxu0 %v3831
    %4129 = vmatprep.subr.bf16.mxu0 0
    %4130 = vmatpush1.bf16.msra.mxu0 0
    %4131 = vmatprep.subr.bf16.mxu0 0
    %4132 = vmatpush1.bf16.msra.mxu0 0
    %4133 = vmatprep.subr.bf16.mxu0 0
    %4134 = vmatpush1.bf16.msra.mxu0 0
    %4135 = vmatprep.subr.bf16.mxu0 0
    %4136 = vmatpush1.bf16.msra.mxu0 0
    %4137 = vmatprep.subr.bf16.mxu0 0
    %4138 = vmatpush1.bf16.msra.mxu0 0
    %4139 = vmatprep.subr.bf16.mxu0 0
    %4140 = vmatpush1.bf16.msra.mxu0 0
    %4141 = vmatprep.subr.bf16.mxu0 0
    %4142 = vmatpush1.bf16.msra.mxu0 0
    %4143 = vmatprep.subr.bf16.mxu0 0
    %4144 = vmatpush1.bf16.msra.mxu0 0
    %4145 = vmatprep.subr.bf16.mxu0 0
    %4146 = vmatpush1.bf16.msra.mxu0 0
    %4147 = vmatprep.mubr.bf16.mxu0 0
    %4148 = vmatmul.mubr.bf16.gmra.mrb[0].mxu0 %v3792
    %v4149 = vpop.f32.mrb[0].mxu0
    %v4150 = vadd.f32 %v2898, %v4149
    %v4151 = vpop.f32.mrb[0].mxu0
    %v4152 = vadd.f32 %v2902, %v4151
    %v4153 = vpop.f32.mrb[0].mxu0
    %v4154 = vpop.f32.mrb[0].mxu0
    %4155 = vdwg.mxu0
    %4156 = vmatprep.subr.bf16.mxu0 %v3481
    %4157 = vmatpush1.bf16.msra.mxu0 %v3480
    %4158 = vmatprep.subr.bf16.mxu0 %v3506
    %4159 = vmatpush1.bf16.msra.mxu0 %v3505
    %4160 = vmatprep.subr.bf16.mxu0 %v3531
    %4161 = vmatpush1.bf16.msra.mxu0 %v3530
    %4162 = vmatprep.subr.bf16.mxu0 %v3556
    %4163 = vmatpush1.bf16.msra.mxu0 %v3555
    %4164 = vmatprep.subr.bf16.mxu0 %v3581
    %4165 = vmatpush1.bf16.msra.mxu0 %v3580
    %4166 = vmatprep.subr.bf16.mxu0 %v3606
    %4167 = vmatpush1.bf16.msra.mxu0 %v3605
    %4168 = vmatprep.subr.bf16.mxu0 %v3840
    %4169 = vmatpush1.bf16.msra.mxu0 %v3837
    %4170 = vmatprep.subr.bf16.mxu0 0
    %4171 = vmatpush1.bf16.msra.mxu0 0
    %4172 = vmatprep.subr.bf16.mxu0 0
    %4173 = vmatpush1.bf16.msra.mxu0 0
    %4174 = vmatprep.subr.bf16.mxu0 0
    %4175 = vmatpush1.bf16.msra.mxu0 0
    %4176 = vmatprep.subr.bf16.mxu0 0
    %4177 = vmatpush1.bf16.msra.mxu0 0
    %4178 = vmatprep.subr.bf16.mxu0 0
    %4179 = vmatpush1.bf16.msra.mxu0 0
    %4180 = vmatprep.subr.bf16.mxu0 0
    %4181 = vmatpush1.bf16.msra.mxu0 0
    %4182 = vmatprep.subr.bf16.mxu0 0
    %4183 = vmatpush1.bf16.msra.mxu0 0
    %4184 = vmatprep.subr.bf16.mxu0 0
    %4185 = vmatpush1.bf16.msra.mxu0 0
    %4186 = vmatprep.subr.bf16.mxu0 0
    %4187 = vmatpush1.bf16.msra.mxu0 0
    %4188 = vmatprep.mubr.bf16.mxu0 0
    %4189 = vmatmul.mubr.bf16.gmra.mrb[0].mxu0 %v3792
    %v4190 = vpop.f32.mrb[0].mxu0
    %v4191 = vadd.f32 %v2906, %v4190
    %v4192 = vpop.f32.mrb[0].mxu0
    %v4193 = vadd.f32 %v2910, %v4192
    %v4194 = vpop.f32.mrb[0].mxu0
    %v4195 = vpop.f32.mrb[0].mxu0
    %4196 = vdwg.mxu0
    %4197 = vmatprep.subr.bf16.mxu0 %v3483
    %4198 = vmatpush1.bf16.msra.mxu0 %v3482
    %4199 = vmatprep.subr.bf16.mxu0 %v3508
    %4200 = vmatpush1.bf16.msra.mxu0 %v3507
    %4201 = vmatprep.subr.bf16.mxu0 %v3533
    %4202 = vmatpush1.bf16.msra.mxu0 %v3532
    %4203 = vmatprep.subr.bf16.mxu0 %v3558
    %4204 = vmatpush1.bf16.msra.mxu0 %v3557
    %4205 = vmatprep.subr.bf16.mxu0 %v3583
    %4206 = vmatpush1.bf16.msra.mxu0 %v3582
    %4207 = vmatprep.subr.bf16.mxu0 %v3608
    %4208 = vmatpush1.bf16.msra.mxu0 %v3607
    %4209 = vmatprep.subr.bf16.mxu0 %v3846
    %4210 = vmatpush1.bf16.msra.mxu0 %v3843
    %4211 = vmatprep.subr.bf16.mxu0 0
    %4212 = vmatpush1.bf16.msra.mxu0 0
    %4213 = vmatprep.subr.bf16.mxu0 0
    %4214 = vmatpush1.bf16.msra.mxu0 0
    %4215 = vmatprep.subr.bf16.mxu0 0
    %4216 = vmatpush1.bf16.msra.mxu0 0
    %4217 = vmatprep.subr.bf16.mxu0 0
    %4218 = vmatpush1.bf16.msra.mxu0 0
    %4219 = vmatprep.subr.bf16.mxu0 0
    %4220 = vmatpush1.bf16.msra.mxu0 0
    %4221 = vmatprep.subr.bf16.mxu0 0
    %4222 = vmatpush1.bf16.msra.mxu0 0
    %4223 = vmatprep.subr.bf16.mxu0 0
    %4224 = vmatpush1.bf16.msra.mxu0 0
    %4225 = vmatprep.subr.bf16.mxu0 0
    %4226 = vmatpush1.bf16.msra.mxu0 0
    %4227 = vmatprep.subr.bf16.mxu0 0
    %4228 = vmatpush1.bf16.msra.mxu0 0
    %4229 = vmatprep.mubr.bf16.mxu0 0
    %4230 = vmatmul.mubr.bf16.gmra.mrb[0].mxu0 %v3792
    %v4231 = vpop.f32.mrb[0].mxu0
    %v4232 = vadd.f32 %v2914, %v4231
    %v4233 = vpop.f32.mrb[0].mxu0
    %v4234 = vadd.f32 %v2918, %v4233
    %v4235 = vpop.f32.mrb[0].mxu0
    %v4236 = vpop.f32.mrb[0].mxu0
    %4237 = vdwg.mxu0
    %4238 = vmatprep.subr.bf16.mxu0 %v3485
    %4239 = vmatpush1.bf16.msra.mxu0 %v3484
    %4240 = vmatprep.subr.bf16.mxu0 %v3510
    %4241 = vmatpush1.bf16.msra.mxu0 %v3509
    %4242 = vmatprep.subr.bf16.mxu0 %v3535
    %4243 = vmatpush1.bf16.msra.mxu0 %v3534
    %4244 = vmatprep.subr.bf16.mxu0 %v3560
    %4245 = vmatpush1.bf16.msra.mxu0 %v3559
    %4246 = vmatprep.subr.bf16.mxu0 %v3585
    %4247 = vmatpush1.bf16.msra.mxu0 %v3584
    %4248 = vmatprep.subr.bf16.mxu0 %v3610
    %4249 = vmatpush1.bf16.msra.mxu0 %v3609
    %4250 = vmatprep.subr.bf16.mxu0 %v3852
    %4251 = vmatpush1.bf16.msra.mxu0 %v3849
    %4252 = vmatprep.subr.bf16.mxu0 0
    %4253 = vmatpush1.bf16.msra.mxu0 0
    %4254 = vmatprep.subr.bf16.mxu0 0
    %4255 = vmatpush1.bf16.msra.mxu0 0
    %4256 = vmatprep.subr.bf16.mxu0 0
    %4257 = vmatpush1.bf16.msra.mxu0 0
    %4258 = vmatprep.subr.bf16.mxu0 0
    %4259 = vmatpush1.bf16.msra.mxu0 0
    %4260 = vmatprep.subr.bf16.mxu0 0
    %4261 = vmatpush1.bf16.msra.mxu0 0
    %4262 = vmatprep.subr.bf16.mxu0 0
    %4263 = vmatpush1.bf16.msra.mxu0 0
    %4264 = vmatprep.subr.bf16.mxu0 0
    %4265 = vmatpush1.bf16.msra.mxu0 0
    %4266 = vmatprep.subr.bf16.mxu0 0
    %4267 = vmatpush1.bf16.msra.mxu0 0
    %4268 = vmatprep.subr.bf16.mxu0 0
    %4269 = vmatpush1.bf16.msra.mxu0 0
    %4270 = vmatprep.mubr.bf16.mxu0 0
    %4271 = vmatmul.mubr.bf16.gmra.mrb[0].mxu0 %v3792
    %v4272 = vpop.f32.mrb[0].mxu0
    %v4273 = vadd.f32 %v2922, %v4272
    %v4274 = vpop.f32.mrb[0].mxu0
    %v4275 = vadd.f32 %v2926, %v4274
    %v4276 = vpop.f32.mrb[0].mxu0
    %v4277 = vpop.f32.mrb[0].mxu0
    %4278 = vdwg.mxu0
    %4279 = vmatprep.subr.bf16.mxu0 %v3487
    %4280 = vmatpush1.bf16.msra.mxu0 %v3486
    %4281 = vmatprep.subr.bf16.mxu0 %v3512
    %4282 = vmatpush1.bf16.msra.mxu0 %v3511
    %4283 = vmatprep.subr.bf16.mxu0 %v3537
    %4284 = vmatpush1.bf16.msra.mxu0 %v3536
    %4285 = vmatprep.subr.bf16.mxu0 %v3562
    %4286 = vmatpush1.bf16.msra.mxu0 %v3561
    %4287 = vmatprep.subr.bf16.mxu0 %v3587
    %4288 = vmatpush1.bf16.msra.mxu0 %v3586
    %4289 = vmatprep.subr.bf16.mxu0 %v3612
    %4290 = vmatpush1.bf16.msra.mxu0 %v3611
    %4291 = vmatprep.subr.bf16.mxu0 %v3858
    %4292 = vmatpush1.bf16.msra.mxu0 %v3855
    %4293 = vmatprep.subr.bf16.mxu0 0
    %4294 = vmatpush1.bf16.msra.mxu0 0
    %4295 = vmatprep.subr.bf16.mxu0 0
    %4296 = vmatpush1.bf16.msra.mxu0 0
    %4297 = vmatprep.subr.bf16.mxu0 0
    %4298 = vmatpush1.bf16.msra.mxu0 0
    %4299 = vmatprep.subr.bf16.mxu0 0
    %4300 = vmatpush1.bf16.msra.mxu0 0
    %4301 = vmatprep.subr.bf16.mxu0 0
    %4302 = vmatpush1.bf16.msra.mxu0 0
    %4303 = vmatprep.subr.bf16.mxu0 0
    %4304 = vmatpush1.bf16.msra.mxu0 0
    %4305 = vmatprep.subr.bf16.mxu0 0
    %4306 = vmatpush1.bf16.msra.mxu0 0
    %4307 = vmatprep.subr.bf16.mxu0 0
    %4308 = vmatpush1.bf16.msra.mxu0 0
    %4309 = vmatprep.subr.bf16.mxu0 0
    %4310 = vmatpush1.bf16.msra.mxu0 0
    %4311 = vmatprep.mubr.bf16.mxu0 0
    %4312 = vmatmul.mubr.bf16.gmra.mrb[0].mxu0 %v3792
    %v4313 = vpop.f32.mrb[0].mxu0
    %v4314 = vadd.f32 %v2930, %v4313
    %v4315 = vpop.f32.mrb[0].mxu0
    %v4316 = vadd.f32 %v2934, %v4315
    %v4317 = vpop.f32.mrb[0].mxu0
    %v4318 = vpop.f32.mrb[0].mxu0
    %4319 = vdwg.mxu0
    %4320 = vmatprep.subr.bf16.mxu0 %v3489
    %4321 = vmatpush1.bf16.msra.mxu0 %v3488
    %4322 = vmatprep.subr.bf16.mxu0 %v3514
    %4323 = vmatpush1.bf16.msra.mxu0 %v3513
    %4324 = vmatprep.subr.bf16.mxu0 %v3539
    %4325 = vmatpush1.bf16.msra.mxu0 %v3538
    %4326 = vmatprep.subr.bf16.mxu0 %v3564
    %4327 = vmatpush1.bf16.msra.mxu0 %v3563
    %4328 = vmatprep.subr.bf16.mxu0 %v3589
    %4329 = vmatpush1.bf16.msra.mxu0 %v3588
    %4330 = vmatprep.subr.bf16.mxu0 %v3614
    %4331 = vmatpush1.bf16.msra.mxu0 %v3613
    %4332 = vmatprep.subr.bf16.mxu0 %v3864
    %4333 = vmatpush1.bf16.msra.mxu0 %v3861
    %4334 = vmatprep.subr.bf16.mxu0 0
    %4335 = vmatpush1.bf16.msra.mxu0 0
    %4336 = vmatprep.subr.bf16.mxu0 0
    %4337 = vmatpush1.bf16.msra.mxu0 0
    %4338 = vmatprep.subr.bf16.mxu0 0
    %4339 = vmatpush1.bf16.msra.mxu0 0
    %4340 = vmatprep.subr.bf16.mxu0 0
    %4341 = vmatpush1.bf16.msra.mxu0 0
    %4342 = vmatprep.subr.bf16.mxu0 0
    %4343 = vmatpush1.bf16.msra.mxu0 0
    %4344 = vmatprep.subr.bf16.mxu0 0
    %4345 = vmatpush1.bf16.msra.mxu0 0
    %4346 = vmatprep.subr.bf16.mxu0 0
    %4347 = vmatpush1.bf16.msra.mxu0 0
    %4348 = vmatprep.subr.bf16.mxu0 0
    %4349 = vmatpush1.bf16.msra.mxu0 0
    %4350 = vmatprep.subr.bf16.mxu0 0
    %4351 = vmatpush1.bf16.msra.mxu0 0
    %4352 = vmatprep.mubr.bf16.mxu0 0
    %4353 = vmatmul.mubr.bf16.gmra.mrb[0].mxu0 %v3792
    %v4354 = vpop.f32.mrb[0].mxu0
    %v4355 = vadd.f32 %v2938, %v4354
    %v4356 = vpop.f32.mrb[0].mxu0
    %v4357 = vadd.f32 %v2942, %v4356
    %v4358 = vpop.f32.mrb[0].mxu0
    %v4359 = vpop.f32.mrb[0].mxu0
    %4360 = vdwg.mxu0
    %4361 = vmatprep.subr.bf16.mxu0 0
    %4362 = vmatpush1.bf16.msra.mxu0 %v3490
    %4363 = vmatprep.subr.bf16.mxu0 0
    %4364 = vmatpush1.bf16.msra.mxu0 %v3515
    %4365 = vmatprep.subr.bf16.mxu0 0
    %4366 = vmatpush1.bf16.msra.mxu0 %v3540
    %4367 = vmatprep.subr.bf16.mxu0 0
    %4368 = vmatpush1.bf16.msra.mxu0 %v3565
    %4369 = vmatprep.subr.bf16.mxu0 0
    %4370 = vmatpush1.bf16.msra.mxu0 %v3590
    %4371 = vmatprep.subr.bf16.mxu0 0
    %4372 = vmatpush1.bf16.msra.mxu0 %v3615
    %4373 = vmatprep.subr.bf16.mxu0 0
    %4374 = vmatpush1.bf16.msra.mxu0 %v3867
    %4375 = vmatprep.subr.bf16.mxu0 0
    %4376 = vmatpush1.bf16.msra.mxu0 0
    %4377 = vmatprep.subr.bf16.mxu0 0
    %4378 = vmatpush1.bf16.msra.mxu0 0
    %4379 = vmatprep.subr.bf16.mxu0 0
    %4380 = vmatpush1.bf16.msra.mxu0 0
    %4381 = vmatprep.subr.bf16.mxu0 0
    %4382 = vmatpush1.bf16.msra.mxu0 0
    %4383 = vmatprep.subr.bf16.mxu0 0
    %4384 = vmatpush1.bf16.msra.mxu0 0
    %4385 = vmatprep.subr.bf16.mxu0 0
    %4386 = vmatpush1.bf16.msra.mxu0 0
    %4387 = vmatprep.subr.bf16.mxu0 0
    %4388 = vmatpush1.bf16.msra.mxu0 0
    %4389 = vmatprep.subr.bf16.mxu0 0
    %4390 = vmatpush1.bf16.msra.mxu0 0
    %4391 = vmatprep.subr.bf16.mxu0 0
    %4392 = vmatpush1.bf16.msra.mxu0 0
    %4393 = vmatprep.mubr.bf16.mxu0 0
    %4394 = vmatmul.mubr.bf16.gmra.mrb[0].mxu0 %v3792
    %v4395 = vpop.f32.mrb[0].mxu0
    %v4396 = vadd.f32 %v2946, %v4395
    %v4397 = vpop.f32.mrb[0].mxu0
    %v4398 = vpop.f32.mrb[0].mxu0
    %v4399 = vpop.f32.mrb[0].mxu0
    %4400 = vdwg.mxu0
    %v4401 = vmax.f32 %v3904, 0.0
    %v4402 = vmax.f32 %v3906, 0.0
    %v4403 = vmax.f32 %v3945, 0.0
    %v4404 = vmax.f32 %v3947, 0.0
    %v4405 = vmax.f32 %v3986, 0.0
    %v4406 = vmax.f32 %v3988, 0.0
    %v4407 = vmax.f32 %v4027, 0.0
    %v4408 = vmax.f32 %v4029, 0.0
    %v4409 = vmax.f32 %v4068, 0.0
    %v4410 = vmax.f32 %v4070, 0.0
    %v4411 = vmax.f32 %v4109, 0.0
    %v4412 = vmax.f32 %v4111, 0.0
    %v4413 = vmax.f32 %v4150, 0.0
    %v4414 = vmax.f32 %v4152, 0.0
    %v4415 = vmax.f32 %v4191, 0.0
    %v4416 = vmax.f32 %v4193, 0.0
    %v4417 = vmax.f32 %v4232, 0.0
    %v4418 = vmax.f32 %v4234, 0.0
    %v4419 = vmax.f32 %v4273, 0.0
    %v4420 = vmax.f32 %v4275, 0.0
    %v4421 = vmax.f32 %v4314, 0.0
    %v4422 = vmax.f32 %v4316, 0.0
    %v4423 = vmax.f32 %v4355, 0.0
    %v4424 = vmax.f32 %v4357, 0.0
    %v4425 = vmax.f32 %v4396, 0.0
    %v4451 = vcombine.low %v4401, %v4402
    %v4452 = vcombine.low %v4403, %v4404
    %v4454 = vunpack.c.l.s4 1983009808
    %v4455 = vunpack.c.0.s8 %v4454
    %v4456 = vlaneseq
    %v4457 = vshrl.u32 %v4456, 7
    %v4458 = vsub.s32 %v4455, %v4457
    %v4459 = vrot.slane %v4451, %v4458
    %v4461 = vunpack.c.l.s4 1983009808
    %v4462 = vunpack.c.0.s8 %v4461
    %v4463 = vlaneseq
    %v4464 = vshrl.u32 %v4463, 7
    %v4465 = vsub.s32 %v4462, %v4464
    %v4466 = vrot.slane %v4452, %v4465
    %v4467 = vcombine.low %v4459, %v4466
    %v4468 = vcombine.low %v4405, %v4406
    %v4469 = vcombine.low %v4407, %v4408
    %v4471 = vunpack.c.l.s4 1983009808
    %v4472 = vunpack.c.0.s8 %v4471
    %v4473 = vlaneseq
    %v4474 = vshrl.u32 %v4473, 7
    %v4475 = vsub.s32 %v4472, %v4474
    %v4476 = vrot.slane %v4468, %v4475
    %v4478 = vunpack.c.l.s4 1983009808
    %v4479 = vunpack.c.0.s8 %v4478
    %v4480 = vlaneseq
    %v4481 = vshrl.u32 %v4480, 7
    %v4482 = vsub.s32 %v4479, %v4481
    %v4483 = vrot.slane %v4469, %v4482
    %v4484 = vcombine.low %v4476, %v4483
    %v4485 = vcombine.low %v4409, %v4410
    %v4486 = vcombine.low %v4411, %v4412
    %v4488 = vunpack.c.l.s4 1983009808
    %v4489 = vunpack.c.0.s8 %v4488
    %v4490 = vlaneseq
    %v4491 = vshrl.u32 %v4490, 7
    %v4492 = vsub.s32 %v4489, %v4491
    %v4493 = vrot.slane %v4485, %v4492
    %v4495 = vunpack.c.l.s4 1983009808
    %v4496 = vunpack.c.0.s8 %v4495
    %v4497 = vlaneseq
    %v4498 = vshrl.u32 %v4497, 7
    %v4499 = vsub.s32 %v4496, %v4498
    %v4500 = vrot.slane %v4486, %v4499
    %v4501 = vcombine.low %v4493, %v4500
    %v4502 = vcombine.low %v4413, %v4414
    %v4503 = vcombine.low %v4415, %v4416
    %v4505 = vunpack.c.l.s4 1983009808
    %v4506 = vunpack.c.0.s8 %v4505
    %v4507 = vlaneseq
    %v4508 = vshrl.u32 %v4507, 7
    %v4509 = vsub.s32 %v4506, %v4508
    %v4510 = vrot.slane %v4502, %v4509
    %v4512 = vunpack.c.l.s4 1983009808
    %v4513 = vunpack.c.0.s8 %v4512
    %v4514 = vlaneseq
    %v4515 = vshrl.u32 %v4514, 7
    %v4516 = vsub.s32 %v4513, %v4515
    %v4517 = vrot.slane %v4503, %v4516
    %v4518 = vcombine.low %v4510, %v4517
    %v4519 = vcombine.low %v4417, %v4418
    %v4520 = vcombine.low %v4419, %v4420
    %v4522 = vunpack.c.l.s4 1983009808
    %v4523 = vunpack.c.0.s8 %v4522
    %v4524 = vlaneseq
    %v4525 = vshrl.u32 %v4524, 7
    %v4526 = vsub.s32 %v4523, %v4525
    %v4527 = vrot.slane %v4519, %v4526
    %v4529 = vunpack.c.l.s4 1983009808
    %v4530 = vunpack.c.0.s8 %v4529
    %v4531 = vlaneseq
    %v4532 = vshrl.u32 %v4531, 7
    %v4533 = vsub.s32 %v4530, %v4532
    %v4534 = vrot.slane %v4520, %v4533
    %v4535 = vcombine.low %v4527, %v4534
    %v4536 = vcombine.low %v4421, %v4422
    %v4537 = vcombine.low %v4423, %v4424
    %v4539 = vunpack.c.l.s4 1983009808
    %v4540 = vunpack.c.0.s8 %v4539
    %v4541 = vlaneseq
    %v4542 = vshrl.u32 %v4541, 7
    %v4543 = vsub.s32 %v4540, %v4542
    %v4544 = vrot.slane %v4536, %v4543
    %v4546 = vunpack.c.l.s4 1983009808
    %v4547 = vunpack.c.0.s8 %v4546
    %v4548 = vlaneseq
    %v4549 = vshrl.u32 %v4548, 7
    %v4550 = vsub.s32 %v4547, %v4549
    %v4551 = vrot.slane %v4537, %v4550
    %v4552 = vcombine.low %v4544, %v4551
    %v4554 = vunpack.c.l.s4 1983009808
    %v4555 = vunpack.c.0.s8 %v4554
    %v4556 = vlaneseq
    %v4557 = vshrl.u32 %v4556, 7
    %v4558 = vsub.s32 %v4555, %v4557
    %v4559 = vrot.slane %v4425, %v4558
    %4567 = vst [vmem:[%s16] sm:$0xff] %v4467
    %4568 = vst [vmem:[%s16 + $0x8] sm:$0xff] %v4484
    %4569 = vst [vmem:[%s16 + $0x10] sm:$0xff] %v4501
    %4570 = vst [vmem:[%s16 + $0x18] sm:$0xff] %v4518
    %4571 = vst [vmem:[%s16 + $0x20] sm:$0xff] %v4535
    %4572 = vst [vmem:[%s16 + $0x28] sm:$0xff] %v4552
    %vm4573 = vcmask 517120
    %4574 = vst.msk [vmem:[%s16 + $0x30] sm:$0x3] %vm4573, %v4559
    // Predicated region
    $region58: #{conv_cvae_forward.7} parent=1 // pred_check
      _
    $region59: #{conv_cvae_forward.7} parent=1 // pred_check_branch
      %4576 = sbr.rel (0) target = $region61
    $region60: #{conv_cvae_forward.7} parent=1 // pred_region
      %s4578 = ssub.s32 32, 32
      %4579 = vsyncadd [#allocation3], %s4578
      %s4581 = sshll.u32 [#allocation2], 4
      %s4582 = int_to_ptr.vmem [resolvable:$true] %s4581
      %4584 = dma.vmem_to_hbm [thread:$0]  %s4582, 32, %s14, [#allocation3]
    $region61: #{conv_cvae_forward.7} parent=1 // pred_fallthru
      _
    // Predicated region
    $region62: #{conv_cvae_forward.7} parent=1 // pred_check
      _
    $region63: #{conv_cvae_forward.7} parent=1 // pred_check_branch
      %4586 = sbr.rel (0) target = $region65
    $region64: #{conv_cvae_forward.7} parent=1 // pred_region
      %s4588 = ssub.s32 32, 32
      %4589 = vsyncadd [#allocation5], %s4588
      %s4591 = sshll.u32 [#allocation4], 4
      %s4592 = int_to_ptr.vmem [resolvable:$true] %s4591
      %4594 = dma.vmem_to_hbm [thread:$0]  %s4592, 32, %s15, [#allocation5]
    $region65: #{conv_cvae_forward.7} parent=1 // pred_fallthru
      _
    // Predicated region
    $region66: #{conv_cvae_forward.7} parent=1 // pred_check
      _
    $region67: #{conv_cvae_forward.7} parent=1 // pred_check_branch
      %4596 = sbr.rel (0) target = $region69
    $region68: #{conv_cvae_forward.7} parent=1 // pred_region
      _
    $region69: #{conv_cvae_forward.7} parent=1 // pred_fallthru
      _
    // Predicated region
    $region70: #{conv_cvae_forward.7} parent=1 // pred_check
      _
    $region71: #{conv_cvae_forward.7} parent=1 // pred_check_branch
      %4598 = sbr.rel (0) target = $region73
    $region72: #{conv_cvae_forward.7} parent=1 // pred_region
      %4599 = dma.done [#allocation3], 32
    $region73: #{conv_cvae_forward.7} parent=1 // pred_fallthru
      _
    // Predicated region
    $region74: #{conv_cvae_forward.7} parent=1 // pred_check
      _
    $region75: #{conv_cvae_forward.7} parent=1 // pred_check_branch
      %4601 = sbr.rel (0) target = $region77
    $region76: #{conv_cvae_forward.7} parent=1 // pred_region
      %4602 = dma.done [#allocation5], 32
    $region77: #{conv_cvae_forward.7} parent=1 // pred_fallthru
      _
    // Predicated region
    $region78: #{conv_cvae_forward.7} parent=1 // pred_check
      _
    $region79: #{conv_cvae_forward.7} parent=1 // pred_check_branch
      %4604 = sbr.rel (0) target = $region81
    $region80: #{conv_cvae_forward.7} parent=1 // pred_region
      _
    $region81: #{conv_cvae_forward.7} parent=1 // pred_fallthru
      _
    %4605 = vsyncpa [#allocation3], 1
    %4606 = vsyncpa [#allocation5], 1

// kernel: conv_cvae_forward.9
$region0: #{conv_cvae_forward.9}
  #allocation0 [shape = 'u32[]', space=smem, size = 0x4, offset = 0x4, fixed_abs, tag = 'smem constant byte address 0x4 - core index']
  #allocation1 [shape = 'u32[144,128]{1,0:T(1,128)}', space=vmem, size = 0x12000, scoped, tag = 'internal scratch']
  %s0 = inlined_call_operand.vmem [shape: f32[392,288], index: 0, kind: input, shape index: {}]
  %s1 = inlined_call_operand.vmem [shape: bf16[288,4], index: 1, kind: input, shape index: {}]
  %s2 = inlined_call_operand.vmem [shape: f32[1,4], index: 2, kind: input, shape index: {}]
  %s3 = inlined_call_operand.vmem [shape: f32[392,4], index: 3, kind: output, shape index: {}]
  %s4 = sld [smem:[#allocation0]]
  $region22: #{conv_cvae_forward.9} parent=0
    _
  %s6 = ssub.s32 1, %s4
  %s7 = scalar_select 0, %s6, %s4
  // Predicated region
  $region2: #{conv_cvae_forward.9} parent=0 // pred_check
    _
  $region3: #{conv_cvae_forward.9} parent=0 // pred_check_branch
    %9 = sbr.rel (0) target = $region5
  $region4: #{conv_cvae_forward.9} parent=0 // pred_region
    _
  $region5: #{conv_cvae_forward.9} parent=0 // pred_fallthru
    _
  // Predicated region
  $region6: #{conv_cvae_forward.9} parent=0 // pred_check
    _
  $region7: #{conv_cvae_forward.9} parent=0 // pred_check_branch
    %11 = sbr.rel (0) target = $region9
  $region8: #{conv_cvae_forward.9} parent=0 // pred_region
    _
  $region9: #{conv_cvae_forward.9} parent=0 // pred_fallthru
    _
  // Predicated region
  $region10: #{conv_cvae_forward.9} parent=0 // pred_check
    _
  $region11: #{conv_cvae_forward.9} parent=0 // pred_check_branch
    %13 = sbr.rel (0) target = $region13
  $region12: #{conv_cvae_forward.9} parent=0 // pred_region
    _
  $region13: #{conv_cvae_forward.9} parent=0 // pred_fallthru
    _
  %v15 = vld [vmem:[%s0] sm:$0xff]
  %v16 = vld [vmem:[%s0 + $0x8] sm:$0xff]
  %v17 = vld [vmem:[%s0 + $0x10] sm:$0xff]
  %v18 = vld [vmem:[%s0 + $0x18] sm:$0xff]
  %v19 = vld [vmem:[%s0 + $0x20] sm:$0xff]
  %v20 = vld [vmem:[%s0 + $0x28] sm:$0xff]
  %v21 = vld [vmem:[%s0 + $0x30] sm:$0xff]
  %v22 = vld [vmem:[%s0 + $0x38] sm:$0xff]
  %v23 = vld [vmem:[%s0 + $0x40] sm:$0xff]
  %v24 = vld [vmem:[%s0 + $0x48] sm:$0xff]
  %v25 = vld [vmem:[%s0 + $0x50] sm:$0xff]
  %v26 = vld [vmem:[%s0 + $0x58] sm:$0xff]
  %v27 = vld [vmem:[%s0 + $0x60] sm:$0xff]
  %v28 = vld [vmem:[%s0 + $0x68] sm:$0xff]
  %v29 = vld [vmem:[%s0 + $0x70] sm:$0xff]
  %v30 = vld [vmem:[%s0 + $0x78] sm:$0xff]
  %v31 = vld [vmem:[%s0 + $0x80] sm:$0xff]
  %v32 = vld [vmem:[%s0 + $0x88] sm:$0xff]
  %v33 = vld [vmem:[%s0 + $0x90] sm:$0xff]
  %v34 = vld [vmem:[%s0 + $0x98] sm:$0xff]
  %v35 = vld [vmem:[%s0 + $0xa0] sm:$0xff]
  %v36 = vld [vmem:[%s0 + $0xa8] sm:$0xff]
  %v37 = vld [vmem:[%s0 + $0xb0] sm:$0xff]
  %v38 = vld [vmem:[%s0 + $0xb8] sm:$0xff]
  %v39 = vld [vmem:[%s0 + $0xc0] sm:$0xff]
  %v40 = vld [vmem:[%s0 + $0xc8] sm:$0xff]
  %v41 = vld [vmem:[%s0 + $0xd0] sm:$0xff]
  %v42 = vld [vmem:[%s0 + $0xd8] sm:$0xff]
  %v43 = vld [vmem:[%s0 + $0xe0] sm:$0xff]
  %v44 = vld [vmem:[%s0 + $0xe8] sm:$0xff]
  %v45 = vld [vmem:[%s0 + $0xf0] sm:$0xff]
  %v46 = vld [vmem:[%s0 + $0xf8] sm:$0xff]
  %v47 = vld [vmem:[%s0 + $0x100] sm:$0xff]
  %v48 = vld [vmem:[%s0 + $0x108] sm:$0xff]
  %v49 = vld [vmem:[%s0 + $0x110] sm:$0xff]
  %v50 = vld [vmem:[%s0 + $0x118] sm:$0xff]
  %v51 = vld [vmem:[%s0 + $0x120] sm:$0xff]
  %v52 = vld [vmem:[%s0 + $0x128] sm:$0xff]
  %v53 = vld [vmem:[%s0 + $0x130] sm:$0xff]
  %v54 = vld [vmem:[%s0 + $0x138] sm:$0xff]
  %v55 = vld [vmem:[%s0 + $0x140] sm:$0xff]
  %v56 = vld [vmem:[%s0 + $0x148] sm:$0xff]
  %v57 = vld [vmem:[%s0 + $0x150] sm:$0xff]
  %v58 = vld [vmem:[%s0 + $0x158] sm:$0xff]
  %v59 = vld [vmem:[%s0 + $0x160] sm:$0xff]
  %v60 = vld [vmem:[%s0 + $0x168] sm:$0xff]
  %v61 = vld [vmem:[%s0 + $0x170] sm:$0xff]
  %v62 = vld [vmem:[%s0 + $0x178] sm:$0xff]
  %v63 = vld [vmem:[%s0 + $0x180] sm:$0xff]
  %v64 = vld [vmem:[%s0 + $0x188] sm:$0xff]
  %v65 = vld [vmem:[%s0 + $0x190] sm:$0xff]
  %v66 = vld [vmem:[%s0 + $0x198] sm:$0xff]
  %v67 = vld [vmem:[%s0 + $0x1a0] sm:$0xff]
  %v68 = vld [vmem:[%s0 + $0x1a8] sm:$0xff]
  %v69 = vld [vmem:[%s0 + $0x1b0] sm:$0xff]
  %v70 = vld [vmem:[%s0 + $0x1b8] sm:$0xff]
  %v71 = vld [vmem:[%s0 + $0x1c0] sm:$0xff]
  %v72 = vld [vmem:[%s0 + $0x1c8] sm:$0xff]
  %v73 = vld [vmem:[%s0 + $0x1d0] sm:$0xff]
  %v74 = vld [vmem:[%s0 + $0x1d8] sm:$0xff]
  %v75 = vld [vmem:[%s0 + $0x1e0] sm:$0xff]
  %v76 = vld [vmem:[%s0 + $0x1e8] sm:$0xff]
  %v77 = vld [vmem:[%s0 + $0x1f0] sm:$0xff]
  %v78 = vld [vmem:[%s0 + $0x1f8] sm:$0xff]
  %v79 = vld [vmem:[%s0 + $0x200] sm:$0xff]
  %v80 = vld [vmem:[%s0 + $0x208] sm:$0xff]
  %v81 = vld [vmem:[%s0 + $0x210] sm:$0xff]
  %v82 = vld [vmem:[%s0 + $0x218] sm:$0xff]
  %v83 = vld [vmem:[%s0 + $0x220] sm:$0xff]
  %v84 = vld [vmem:[%s0 + $0x228] sm:$0xff]
  %v85 = vld [vmem:[%s0 + $0x230] sm:$0xff]
  %v86 = vld [vmem:[%s0 + $0x238] sm:$0xff]
  %v87 = vld [vmem:[%s0 + $0x240] sm:$0xff]
  %v88 = vld [vmem:[%s0 + $0x248] sm:$0xff]
  %v89 = vld [vmem:[%s0 + $0x250] sm:$0xff]
  %v90 = vld [vmem:[%s0 + $0x258] sm:$0xff]
  %v91 = vld [vmem:[%s0 + $0x260] sm:$0xff]
  %v92 = vld [vmem:[%s0 + $0x268] sm:$0xff]
  %v93 = vld [vmem:[%s0 + $0x270] sm:$0xff]
  %v94 = vld [vmem:[%s0 + $0x278] sm:$0xff]
  %v95 = vld [vmem:[%s0 + $0x280] sm:$0xff]
  %v96 = vld [vmem:[%s0 + $0x288] sm:$0xff]
  %v97 = vld [vmem:[%s0 + $0x290] sm:$0xff]
  %v98 = vld [vmem:[%s0 + $0x298] sm:$0xff]
  %v99 = vld [vmem:[%s0 + $0x2a0] sm:$0xff]
  %v100 = vld [vmem:[%s0 + $0x2a8] sm:$0xff]
  %v101 = vld [vmem:[%s0 + $0x2b0] sm:$0xff]
  %v102 = vld [vmem:[%s0 + $0x2b8] sm:$0xff]
  %v103 = vld [vmem:[%s0 + $0x2c0] sm:$0xff]
  %v104 = vld [vmem:[%s0 + $0x2c8] sm:$0xff]
  %v105 = vld [vmem:[%s0 + $0x2d0] sm:$0xff]
  %v106 = vld [vmem:[%s0 + $0x2d8] sm:$0xff]
  %v107 = vld [vmem:[%s0 + $0x2e0] sm:$0xff]
  %v108 = vld [vmem:[%s0 + $0x2e8] sm:$0xff]
  %v109 = vld [vmem:[%s0 + $0x2f0] sm:$0xff]
  %v110 = vld [vmem:[%s0 + $0x2f8] sm:$0xff]
  %v111 = vld [vmem:[%s0 + $0x300] sm:$0xff]
  %v112 = vld [vmem:[%s0 + $0x308] sm:$0xff]
  %v113 = vld [vmem:[%s0 + $0x310] sm:$0xff]
  %v114 = vld [vmem:[%s0 + $0x318] sm:$0xff]
  %v115 = vld [vmem:[%s0 + $0x320] sm:$0xff]
  %v116 = vld [vmem:[%s0 + $0x328] sm:$0xff]
  %v117 = vld [vmem:[%s0 + $0x330] sm:$0xff]
  %v118 = vld [vmem:[%s0 + $0x338] sm:$0xff]
  %v119 = vld [vmem:[%s0 + $0x340] sm:$0xff]
  %v120 = vld [vmem:[%s0 + $0x348] sm:$0xff]
  %v121 = vld [vmem:[%s0 + $0x350] sm:$0xff]
  %v122 = vld [vmem:[%s0 + $0x358] sm:$0xff]
  %v123 = vld [vmem:[%s0 + $0x360] sm:$0xff]
  %v124 = vld [vmem:[%s0 + $0x368] sm:$0xff]
  %v125 = vld [vmem:[%s0 + $0x370] sm:$0xff]
  %v126 = vld [vmem:[%s0 + $0x378] sm:$0xff]
  %v127 = vld [vmem:[%s0 + $0x380] sm:$0xff]
  %v128 = vld [vmem:[%s0 + $0x388] sm:$0xff]
  %v129 = vld [vmem:[%s0 + $0x390] sm:$0xff]
  %v130 = vld [vmem:[%s0 + $0x398] sm:$0xff]
  %v131 = vld [vmem:[%s0 + $0x3a0] sm:$0xff]
  %v132 = vld [vmem:[%s0 + $0x3a8] sm:$0xff]
  %v133 = vld [vmem:[%s0 + $0x3b0] sm:$0xff]
  %v134 = vld [vmem:[%s0 + $0x3b8] sm:$0xff]
  %v135 = vld [vmem:[%s0 + $0x3c0] sm:$0xff]
  %v136 = vld [vmem:[%s0 + $0x3c8] sm:$0xff]
  %v137 = vld [vmem:[%s0 + $0x3d0] sm:$0xff]
  %v138 = vld [vmem:[%s0 + $0x3d8] sm:$0xff]
  %v139 = vld [vmem:[%s0 + $0x3e0] sm:$0xff]
  %v140 = vld [vmem:[%s0 + $0x3e8] sm:$0xff]
  %v141 = vld [vmem:[%s0 + $0x3f0] sm:$0xff]
  %v142 = vld [vmem:[%s0 + $0x3f8] sm:$0xff]
  %v143 = vld [vmem:[%s0 + $0x400] sm:$0xff]
  %v144 = vld [vmem:[%s0 + $0x408] sm:$0xff]
  %v145 = vld [vmem:[%s0 + $0x410] sm:$0xff]
  %v146 = vld [vmem:[%s0 + $0x418] sm:$0xff]
  %v147 = vld [vmem:[%s0 + $0x420] sm:$0xff]
  %v148 = vld [vmem:[%s0 + $0x428] sm:$0xff]
  %v149 = vld [vmem:[%s0 + $0x430] sm:$0xff]
  %v150 = vld [vmem:[%s0 + $0x438] sm:$0xff]
  %v151 = vld [vmem:[%s0 + $0x440] sm:$0xff]
  %v152 = vld [vmem:[%s0 + $0x448] sm:$0xff]
  %v153 = vld [vmem:[%s0 + $0x450] sm:$0xff]
  %v154 = vld [vmem:[%s0 + $0x458] sm:$0xff]
  %v155 = vld [vmem:[%s0 + $0x460] sm:$0xff]
  %v156 = vld [vmem:[%s0 + $0x468] sm:$0xff]
  %v157 = vld [vmem:[%s0 + $0x470] sm:$0xff]
  %v158 = vld [vmem:[%s0 + $0x478] sm:$0xff]
  %v159 = vld [vmem:[%s0 + $0x480] sm:$0xff]
  %v160 = vld [vmem:[%s0 + $0x488] sm:$0xff]
  %v161 = vld [vmem:[%s0 + $0x490] sm:$0xff]
  %v162 = vpack.c.bf16 %v18, %v15
  %v163 = vpack.c.bf16 %v19, %v16
  %v164 = vpack.c.bf16 %v20, %v17
  %v165 = vpack.c.bf16 %v24, %v21
  %v166 = vpack.c.bf16 %v25, %v22
  %v167 = vpack.c.bf16 %v26, %v23
  %v168 = vpack.c.bf16 %v30, %v27
  %v169 = vpack.c.bf16 %v31, %v28
  %v170 = vpack.c.bf16 %v32, %v29
  %v171 = vpack.c.bf16 %v36, %v33
  %v172 = vpack.c.bf16 %v37, %v34
  %v173 = vpack.c.bf16 %v38, %v35
  %v174 = vpack.c.bf16 %v42, %v39
  %v175 = vpack.c.bf16 %v43, %v40
  %v176 = vpack.c.bf16 %v44, %v41
  %v177 = vpack.c.bf16 %v48, %v45
  %v178 = vpack.c.bf16 %v49, %v46
  %v179 = vpack.c.bf16 %v50, %v47
  %v180 = vpack.c.bf16 %v54, %v51
  %v181 = vpack.c.bf16 %v55, %v52
  %v182 = vpack.c.bf16 %v56, %v53
  %v183 = vpack.c.bf16 %v60, %v57
  %v184 = vpack.c.bf16 %v61, %v58
  %v185 = vpack.c.bf16 %v62, %v59
  %v186 = vpack.c.bf16 %v66, %v63
  %v187 = vpack.c.bf16 %v67, %v64
  %v188 = vpack.c.bf16 %v68, %v65
  %v189 = vpack.c.bf16 %v72, %v69
  %v190 = vpack.c.bf16 %v73, %v70
  %v191 = vpack.c.bf16 %v74, %v71
  %v192 = vpack.c.bf16 %v78, %v75
  %v193 = vpack.c.bf16 %v79, %v76
  %v194 = vpack.c.bf16 %v80, %v77
  %v195 = vpack.c.bf16 %v84, %v81
  %v196 = vpack.c.bf16 %v85, %v82
  %v197 = vpack.c.bf16 %v86, %v83
  %v198 = vpack.c.bf16 %v90, %v87
  %v199 = vpack.c.bf16 %v91, %v88
  %v200 = vpack.c.bf16 %v92, %v89
  %v201 = vpack.c.bf16 %v96, %v93
  %v202 = vpack.c.bf16 %v97, %v94
  %v203 = vpack.c.bf16 %v98, %v95
  %v204 = vpack.c.bf16 %v102, %v99
  %v205 = vpack.c.bf16 %v103, %v100
  %v206 = vpack.c.bf16 %v104, %v101
  %v207 = vpack.c.bf16 %v108, %v105
  %v208 = vpack.c.bf16 %v109, %v106
  %v209 = vpack.c.bf16 %v110, %v107
  %v210 = vpack.c.bf16 %v114, %v111
  %v211 = vpack.c.bf16 %v115, %v112
  %v212 = vpack.c.bf16 %v116, %v113
  %v213 = vpack.c.bf16 %v120, %v117
  %v214 = vpack.c.bf16 %v121, %v118
  %v215 = vpack.c.bf16 %v122, %v119
  %v216 = vpack.c.bf16 %v126, %v123
  %v217 = vpack.c.bf16 %v127, %v124
  %v218 = vpack.c.bf16 %v128, %v125
  %v219 = vpack.c.bf16 %v132, %v129
  %v220 = vpack.c.bf16 %v133, %v130
  %v221 = vpack.c.bf16 %v134, %v131
  %v222 = vpack.c.bf16 %v138, %v135
  %v223 = vpack.c.bf16 %v139, %v136
  %v224 = vpack.c.bf16 %v140, %v137
  %v225 = vpack.c.bf16 %v144, %v141
  %v226 = vpack.c.bf16 %v145, %v142
  %v227 = vpack.c.bf16 %v146, %v143
  %v228 = vpack.c.bf16 %v150, %v147
  %v229 = vpack.c.bf16 %v151, %v148
  %v230 = vpack.c.bf16 %v152, %v149
  %v231 = vpack.c.bf16 %v156, %v153
  %v232 = vpack.c.bf16 %v157, %v154
  %v233 = vpack.c.bf16 %v158, %v155
  %v234 = vpack.c.bf16 %v159, %v159
  %v235 = vpack.c.bf16 %v160, %v160
  %v236 = vpack.c.bf16 %v161, %v161
  %v237 = vld [vmem:[%s1] sm:$0xf]
  %v238 = vld [vmem:[%s1 + $0x4] sm:$0xf]
  %v239 = vld [vmem:[%s1 + $0x8] sm:$0xf]
  %v240 = vld [vmem:[%s1 + $0xc] sm:$0xf]
  %v241 = vld [vmem:[%s1 + $0x10] sm:$0xf]
  %v242 = vld [vmem:[%s1 + $0x14] sm:$0xf]
  %v243 = vld [vmem:[%s1 + $0x18] sm:$0xf]
  %v244 = vld [vmem:[%s1 + $0x1c] sm:$0xf]
  %v245 = vld [vmem:[%s1 + $0x20] sm:$0xf]
  %v246 = vld [vmem:[%s1 + $0x24] sm:$0xf]
  %v247 = vld [vmem:[%s1 + $0x28] sm:$0xf]
  %v248 = vld [vmem:[%s1 + $0x2c] sm:$0xf]
  %v249 = vld [vmem:[%s1 + $0x30] sm:$0xf]
  %v250 = vld [vmem:[%s1 + $0x34] sm:$0xf]
  %v251 = vld [vmem:[%s1 + $0x38] sm:$0xf]
  %v252 = vld [vmem:[%s1 + $0x3c] sm:$0xf]
  %v253 = vld [vmem:[%s1 + $0x40] sm:$0xf]
  %v254 = vld [vmem:[%s1 + $0x44] sm:$0xf]
  %v255 = vld [vmem:[%s1 + $0x48] sm:$0xf]
  %v256 = vld [vmem:[%s1 + $0x4c] sm:$0xf]
  %v257 = vld [vmem:[%s1 + $0x50] sm:$0xf]
  %v258 = vld [vmem:[%s1 + $0x54] sm:$0xf]
  %v259 = vld [vmem:[%s1 + $0x58] sm:$0xf]
  %v260 = vld [vmem:[%s1 + $0x5c] sm:$0xf]
  %v261 = vld [vmem:[%s1 + $0x60] sm:$0xf]
  %v262 = vld [vmem:[%s1 + $0x64] sm:$0xf]
  %v263 = vld [vmem:[%s1 + $0x68] sm:$0xf]
  %v264 = vld [vmem:[%s1 + $0x6c] sm:$0xf]
  %v265 = vld [vmem:[%s1 + $0x70] sm:$0xf]
  %v266 = vld [vmem:[%s1 + $0x74] sm:$0xf]
  %v267 = vld [vmem:[%s1 + $0x78] sm:$0xf]
  %v268 = vld [vmem:[%s1 + $0x7c] sm:$0xf]
  %v269 = vld [vmem:[%s1 + $0x80] sm:$0xf]
  %v270 = vld [vmem:[%s1 + $0x84] sm:$0xf]
  %v271 = vld [vmem:[%s1 + $0x88] sm:$0xf]
  %v272 = vld [vmem:[%s1 + $0x8c] sm:$0xf]
  %v273 = vld [vmem:[%s2] sm:$0x1]
  %v275 = vlaneseq
  %v276 = vshrl.u32 %v275, 7
  %v277 = vsub.s32 0, %v276
  %v278 = vrot.slane %v273, %v277
  %v316 = vunpack.c.l.b16 %v237
  %v317 = vunpack.c.l.b16 %v238
  %v318 = vunpack.c.l.b16 %v239
  %v319 = vunpack.c.l.b16 %v240
  %v320 = vunpack.c.l.b16 %v241
  %v321 = vunpack.c.l.b16 %v242
  %v322 = vunpack.c.l.b16 %v243
  %v323 = vunpack.c.l.b16 %v244
  %v324 = vunpack.c.l.b16 %v245
  %v325 = vunpack.c.l.b16 %v246
  %v326 = vunpack.c.l.b16 %v247
  %v327 = vunpack.c.l.b16 %v248
  %v328 = vunpack.c.l.b16 %v249
  %v329 = vunpack.c.l.b16 %v250
  %v330 = vunpack.c.l.b16 %v251
  %v331 = vunpack.c.l.b16 %v252
  %v332 = vunpack.c.l.b16 %v253
  %v333 = vunpack.c.l.b16 %v254
  %v334 = vunpack.c.l.b16 %v255
  %v335 = vunpack.c.l.b16 %v256
  %v336 = vunpack.c.l.b16 %v257
  %v337 = vunpack.c.l.b16 %v258
  %v338 = vunpack.c.l.b16 %v259
  %v339 = vunpack.c.l.b16 %v260
  %v340 = vunpack.c.l.b16 %v261
  %v341 = vunpack.c.l.b16 %v262
  %v342 = vunpack.c.l.b16 %v263
  %v343 = vunpack.c.l.b16 %v264
  %v344 = vunpack.c.l.b16 %v265
  %v345 = vunpack.c.l.b16 %v266
  %v346 = vunpack.c.l.b16 %v267
  %v347 = vunpack.c.l.b16 %v268
  %v348 = vunpack.c.l.b16 %v269
  %v349 = vunpack.c.l.b16 %v270
  %v350 = vunpack.c.l.b16 %v271
  %v351 = vunpack.c.l.b16 %v272
  %v352 = vpack.c.b16 %v317, %v316
  %v353 = vpack.c.b16 %v319, %v318
  %v354 = vpack.c.b16 %v321, %v320
  %v355 = vpack.c.b16 %v323, %v322
  %v356 = vpack.c.b16 %v325, %v324
  %v357 = vpack.c.b16 %v327, %v326
  %v358 = vpack.c.b16 %v329, %v328
  %v359 = vpack.c.b16 %v331, %v330
  %v360 = vpack.c.b16 %v333, %v332
  %v361 = vpack.c.b16 %v335, %v334
  %v362 = vpack.c.b16 %v337, %v336
  %v363 = vpack.c.b16 %v339, %v338
  %v364 = vpack.c.b16 %v341, %v340
  %v365 = vpack.c.b16 %v343, %v342
  %v366 = vpack.c.b16 %v345, %v344
  %v367 = vpack.c.b16 %v347, %v346
  %v368 = vpack.c.b16 %v349, %v348
  %v369 = vpack.c.b16 %v351, %v350
  %vm388 = vcmask 261120
  %v390 = vsel %vm388, %v164, 0
  %v393 = vsel %vm388, %v167, 0
  %v396 = vsel %vm388, %v170, 0
  %v399 = vsel %vm388, %v173, 0
  %v402 = vsel %vm388, %v176, 0
  %v405 = vsel %vm388, %v179, 0
  %v408 = vsel %vm388, %v182, 0
  %v411 = vsel %vm388, %v185, 0
  %v414 = vsel %vm388, %v188, 0
  %v417 = vsel %vm388, %v191, 0
  %v420 = vsel %vm388, %v194, 0
  %v423 = vsel %vm388, %v197, 0
  %v426 = vsel %vm388, %v200, 0
  %v429 = vsel %vm388, %v203, 0
  %v432 = vsel %vm388, %v206, 0
  %v435 = vsel %vm388, %v209, 0
  %v438 = vsel %vm388, %v212, 0
  %v441 = vsel %vm388, %v215, 0
  %v444 = vsel %vm388, %v218, 0
  %v447 = vsel %vm388, %v221, 0
  %v450 = vsel %vm388, %v224, 0
  %v453 = vsel %vm388, %v227, 0
  %v456 = vsel %vm388, %v230, 0
  %v459 = vsel %vm388, %v233, 0
  %v462 = vsel %vm388, %v236, 0
  %464 = vmatprep.subr.bf16.mxu0 0
  %465 = vmatpush1.bf16.msra.mxu0 %v352
  %466 = vmatprep.subr.bf16.mxu0 0
  %467 = vmatpush1.bf16.msra.mxu0 %v353
  %468 = vmatprep.subr.bf16.mxu0 0
  %469 = vmatpush1.bf16.msra.mxu0 %v354
  %470 = vmatprep.subr.bf16.mxu0 0
  %471 = vmatpush1.bf16.msra.mxu0 %v355
  %472 = vmatprep.subr.bf16.mxu0 0
  %473 = vmatpush1.bf16.msra.mxu0 %v356
  %474 = vmatprep.subr.bf16.mxu0 0
  %475 = vmatpush1.bf16.msra.mxu0 %v357
  %476 = vmatprep.subr.bf16.mxu0 0
  %477 = vmatpush1.bf16.msra.mxu0 %v358
  %478 = vmatprep.subr.bf16.mxu0 0
  %479 = vmatpush1.bf16.msra.mxu0 %v359
  %480 = vmatprep.subr.bf16.mxu0 0
  %481 = vmatpush1.bf16.msra.mxu0 %v360
  %482 = vmatprep.subr.bf16.mxu0 0
  %483 = vmatpush1.bf16.msra.mxu0 %v361
  %484 = vmatprep.subr.bf16.mxu0 0
  %485 = vmatpush1.bf16.msra.mxu0 %v362
  %486 = vmatprep.subr.bf16.mxu0 0
  %487 = vmatpush1.bf16.msra.mxu0 %v363
  %488 = vmatprep.subr.bf16.mxu0 0
  %489 = vmatpush1.bf16.msra.mxu0 %v364
  %490 = vmatprep.subr.bf16.mxu0 0
  %491 = vmatpush1.bf16.msra.mxu0 %v365
  %492 = vmatprep.subr.bf16.mxu0 0
  %493 = vmatpush1.bf16.msra.mxu0 %v366
  %494 = vmatprep.subr.bf16.mxu0 0
  %495 = vmatpush1.bf16.msra.mxu0 %v367
  %496 = vmatprep.mubr.bf16.mxu0 %v163
  %497 = vmatmul.mubr.bf16.gmra.mrb[0].mxu0 %v162
  %v498 = vpop.f32.mrb[0].mxu0
  %v499 = vadd.f32 %v278, %v498
  %v500 = vpop.f32.mrb[0].mxu0
  %v501 = vpop.f32.mrb[0].mxu0
  %v502 = vadd.f32 %v278, %v501
  %v503 = vpop.f32.mrb[0].mxu0
  %504 = vmatprep.mubr.bf16.mxu0 %v166
  %505 = vmatmul.mubr.bf16.gmra.mrb[0].mxu0 %v165
  %v506 = vpop.f32.mrb[0].mxu0
  %v507 = vadd.f32 %v278, %v506
  %v508 = vpop.f32.mrb[0].mxu0
  %v509 = vpop.f32.mrb[0].mxu0
  %v510 = vadd.f32 %v278, %v509
  %v511 = vpop.f32.mrb[0].mxu0
  %512 = vmatprep.mubr.bf16.mxu0 %v169
  %513 = vmatmul.mubr.bf16.gmra.mrb[0].mxu0 %v168
  %v514 = vpop.f32.mrb[0].mxu0
  %v515 = vadd.f32 %v278, %v514
  %v516 = vpop.f32.mrb[0].mxu0
  %v517 = vpop.f32.mrb[0].mxu0
  %v518 = vadd.f32 %v278, %v517
  %v519 = vpop.f32.mrb[0].mxu0
  %520 = vmatprep.mubr.bf16.mxu0 %v172
  %521 = vmatmul.mubr.bf16.gmra.mrb[0].mxu0 %v171
  %v522 = vpop.f32.mrb[0].mxu0
  %v523 = vadd.f32 %v278, %v522
  %v524 = vpop.f32.mrb[0].mxu0
  %v525 = vpop.f32.mrb[0].mxu0
  %v526 = vadd.f32 %v278, %v525
  %v527 = vpop.f32.mrb[0].mxu0
  %528 = vmatprep.mubr.bf16.mxu0 %v175
  %529 = vmatmul.mubr.bf16.gmra.mrb[0].mxu0 %v174
  %v530 = vpop.f32.mrb[0].mxu0
  %v531 = vadd.f32 %v278, %v530
  %v532 = vpop.f32.mrb[0].mxu0
  %v533 = vpop.f32.mrb[0].mxu0
  %v534 = vadd.f32 %v278, %v533
  %v535 = vpop.f32.mrb[0].mxu0
  %536 = vmatprep.mubr.bf16.mxu0 %v178
  %537 = vmatmul.mubr.bf16.gmra.mrb[0].mxu0 %v177
  %v538 = vpop.f32.mrb[0].mxu0
  %v539 = vadd.f32 %v278, %v538
  %v540 = vpop.f32.mrb[0].mxu0
  %v541 = vpop.f32.mrb[0].mxu0
  %v542 = vadd.f32 %v278, %v541
  %v543 = vpop.f32.mrb[0].mxu0
  %544 = vmatprep.mubr.bf16.mxu0 %v181
  %545 = vmatmul.mubr.bf16.gmra.mrb[0].mxu0 %v180
  %v546 = vpop.f32.mrb[0].mxu0
  %v547 = vadd.f32 %v278, %v546
  %v548 = vpop.f32.mrb[0].mxu0
  %v549 = vpop.f32.mrb[0].mxu0
  %v550 = vadd.f32 %v278, %v549
  %v551 = vpop.f32.mrb[0].mxu0
  %552 = vmatprep.mubr.bf16.mxu0 %v184
  %553 = vmatmul.mubr.bf16.gmra.mrb[0].mxu0 %v183
  %v554 = vpop.f32.mrb[0].mxu0
  %v555 = vadd.f32 %v278, %v554
  %v556 = vpop.f32.mrb[0].mxu0
  %v557 = vpop.f32.mrb[0].mxu0
  %v558 = vadd.f32 %v278, %v557
  %v559 = vpop.f32.mrb[0].mxu0
  %560 = vmatprep.mubr.bf16.mxu0 %v187
  %561 = vmatmul.mubr.bf16.gmra.mrb[0].mxu0 %v186
  %v562 = vpop.f32.mrb[0].mxu0
  %v563 = vadd.f32 %v278, %v562
  %v564 = vpop.f32.mrb[0].mxu0
  %v565 = vpop.f32.mrb[0].mxu0
  %v566 = vadd.f32 %v278, %v565
  %v567 = vpop.f32.mrb[0].mxu0
  %568 = vmatprep.mubr.bf16.mxu0 %v190
  %569 = vmatmul.mubr.bf16.gmra.mrb[0].mxu0 %v189
  %v570 = vpop.f32.mrb[0].mxu0
  %v571 = vadd.f32 %v278, %v570
  %v572 = vpop.f32.mrb[0].mxu0
  %v573 = vpop.f32.mrb[0].mxu0
  %v574 = vadd.f32 %v278, %v573
  %v575 = vpop.f32.mrb[0].mxu0
  %576 = vmatprep.mubr.bf16.mxu0 %v193
  %577 = vmatmul.mubr.bf16.gmra.mrb[0].mxu0 %v192
  %v578 = vpop.f32.mrb[0].mxu0
  %v579 = vadd.f32 %v278, %v578
  %v580 = vpop.f32.mrb[0].mxu0
  %v581 = vpop.f32.mrb[0].mxu0
  %v582 = vadd.f32 %v278, %v581
  %v583 = vpop.f32.mrb[0].mxu0
  %584 = vmatprep.mubr.bf16.mxu0 %v196
  %585 = vmatmul.mubr.bf16.gmra.mrb[0].mxu0 %v195
  %v586 = vpop.f32.mrb[0].mxu0
  %v587 = vadd.f32 %v278, %v586
  %v588 = vpop.f32.mrb[0].mxu0
  %v589 = vpop.f32.mrb[0].mxu0
  %v590 = vadd.f32 %v278, %v589
  %v591 = vpop.f32.mrb[0].mxu0
  %592 = vmatprep.mubr.bf16.mxu0 %v199
  %593 = vmatmul.mubr.bf16.gmra.mrb[0].mxu0 %v198
  %v594 = vpop.f32.mrb[0].mxu0
  %v595 = vadd.f32 %v278, %v594
  %v596 = vpop.f32.mrb[0].mxu0
  %v597 = vpop.f32.mrb[0].mxu0
  %v598 = vadd.f32 %v278, %v597
  %v599 = vpop.f32.mrb[0].mxu0
  %600 = vmatprep.mubr.bf16.mxu0 %v202
  %601 = vmatmul.mubr.bf16.gmra.mrb[0].mxu0 %v201
  %v602 = vpop.f32.mrb[0].mxu0
  %v603 = vadd.f32 %v278, %v602
  %v604 = vpop.f32.mrb[0].mxu0
  %v605 = vpop.f32.mrb[0].mxu0
  %v606 = vadd.f32 %v278, %v605
  %v607 = vpop.f32.mrb[0].mxu0
  %608 = vmatprep.mubr.bf16.mxu0 %v205
  %609 = vmatmul.mubr.bf16.gmra.mrb[0].mxu0 %v204
  %v610 = vpop.f32.mrb[0].mxu0
  %v611 = vadd.f32 %v278, %v610
  %v612 = vpop.f32.mrb[0].mxu0
  %v613 = vpop.f32.mrb[0].mxu0
  %v614 = vadd.f32 %v278, %v613
  %v615 = vpop.f32.mrb[0].mxu0
  %616 = vmatprep.mubr.bf16.mxu0 %v208
  %617 = vmatmul.mubr.bf16.gmra.mrb[0].mxu0 %v207
  %v618 = vpop.f32.mrb[0].mxu0
  %v619 = vadd.f32 %v278, %v618
  %v620 = vpop.f32.mrb[0].mxu0
  %v621 = vpop.f32.mrb[0].mxu0
  %v622 = vadd.f32 %v278, %v621
  %v623 = vpop.f32.mrb[0].mxu0
  %624 = vmatprep.mubr.bf16.mxu0 %v211
  %625 = vmatmul.mubr.bf16.gmra.mrb[0].mxu0 %v210
  %v626 = vpop.f32.mrb[0].mxu0
  %v627 = vadd.f32 %v278, %v626
  %v628 = vpop.f32.mrb[0].mxu0
  %v629 = vpop.f32.mrb[0].mxu0
  %v630 = vadd.f32 %v278, %v629
  %v631 = vpop.f32.mrb[0].mxu0
  %632 = vmatprep.mubr.bf16.mxu0 %v214
  %633 = vmatmul.mubr.bf16.gmra.mrb[0].mxu0 %v213
  %v634 = vpop.f32.mrb[0].mxu0
  %v635 = vadd.f32 %v278, %v634
  %v636 = vpop.f32.mrb[0].mxu0
  %v637 = vpop.f32.mrb[0].mxu0
  %v638 = vadd.f32 %v278, %v637
  %v639 = vpop.f32.mrb[0].mxu0
  %640 = vmatprep.mubr.bf16.mxu0 %v217
  %641 = vmatmul.mubr.bf16.gmra.mrb[0].mxu0 %v216
  %v642 = vpop.f32.mrb[0].mxu0
  %v643 = vadd.f32 %v278, %v642
  %v644 = vpop.f32.mrb[0].mxu0
  %v645 = vpop.f32.mrb[0].mxu0
  %v646 = vadd.f32 %v278, %v645
  %v647 = vpop.f32.mrb[0].mxu0
  %648 = vmatprep.mubr.bf16.mxu0 %v220
  %649 = vmatmul.mubr.bf16.gmra.mrb[0].mxu0 %v219
  %v650 = vpop.f32.mrb[0].mxu0
  %v651 = vadd.f32 %v278, %v650
  %v652 = vpop.f32.mrb[0].mxu0
  %v653 = vpop.f32.mrb[0].mxu0
  %v654 = vadd.f32 %v278, %v653
  %v655 = vpop.f32.mrb[0].mxu0
  %656 = vmatprep.mubr.bf16.mxu0 %v223
  %657 = vmatmul.mubr.bf16.gmra.mrb[0].mxu0 %v222
  %v658 = vpop.f32.mrb[0].mxu0
  %v659 = vadd.f32 %v278, %v658
  %v660 = vpop.f32.mrb[0].mxu0
  %v661 = vpop.f32.mrb[0].mxu0
  %v662 = vadd.f32 %v278, %v661
  %v663 = vpop.f32.mrb[0].mxu0
  %664 = vmatprep.mubr.bf16.mxu0 %v226
  %665 = vmatmul.mubr.bf16.gmra.mrb[0].mxu0 %v225
  %v666 = vpop.f32.mrb[0].mxu0
  %v667 = vadd.f32 %v278, %v666
  %v668 = vpop.f32.mrb[0].mxu0
  %v669 = vpop.f32.mrb[0].mxu0
  %v670 = vadd.f32 %v278, %v669
  %v671 = vpop.f32.mrb[0].mxu0
  %672 = vmatprep.mubr.bf16.mxu0 %v229
  %673 = vmatmul.mubr.bf16.gmra.mrb[0].mxu0 %v228
  %v674 = vpop.f32.mrb[0].mxu0
  %v675 = vadd.f32 %v278, %v674
  %v676 = vpop.f32.mrb[0].mxu0
  %v677 = vpop.f32.mrb[0].mxu0
  %v678 = vadd.f32 %v278, %v677
  %v679 = vpop.f32.mrb[0].mxu0
  %680 = vmatprep.mubr.bf16.mxu0 %v232
  %681 = vmatmul.mubr.bf16.gmra.mrb[0].mxu0 %v231
  %v682 = vpop.f32.mrb[0].mxu0
  %v683 = vadd.f32 %v278, %v682
  %v684 = vpop.f32.mrb[0].mxu0
  %v685 = vpop.f32.mrb[0].mxu0
  %v686 = vadd.f32 %v278, %v685
  %v687 = vpop.f32.mrb[0].mxu0
  %688 = vmatprep.mubr.bf16.mxu0 %v235
  %689 = vmatmul.mubr.bf16.gmra.mrb[0].mxu0 %v234
  %v690 = vpop.f32.mrb[0].mxu0
  %v691 = vadd.f32 %v278, %v690
  %v692 = vpop.f32.mrb[0].mxu0
  %v693 = vpop.f32.mrb[0].mxu0
  %v694 = vpop.f32.mrb[0].mxu0
  %695 = vdwg.mxu0
  %696 = vmatprep.subr.bf16.mxu0 0
  %697 = vmatpush1.bf16.msra.mxu0 %v368
  %698 = vmatprep.subr.bf16.mxu0 0
  %699 = vmatpush1.bf16.msra.mxu0 %v369
  %700 = vmatprep.subr.bf16.mxu0 0
  %701 = vmatpush1.bf16.msra.mxu0 0
  %702 = vmatprep.subr.bf16.mxu0 0
  %703 = vmatpush1.bf16.msra.mxu0 0
  %704 = vmatprep.subr.bf16.mxu0 0
  %705 = vmatpush1.bf16.msra.mxu0 0
  %706 = vmatprep.subr.bf16.mxu0 0
  %707 = vmatpush1.bf16.msra.mxu0 0
  %708 = vmatprep.subr.bf16.mxu0 0
  %709 = vmatpush1.bf16.msra.mxu0 0
  %710 = vmatprep.subr.bf16.mxu0 0
  %711 = vmatpush1.bf16.msra.mxu0 0
  %712 = vmatprep.subr.bf16.mxu0 0
  %713 = vmatpush1.bf16.msra.mxu0 0
  %714 = vmatprep.subr.bf16.mxu0 0
  %715 = vmatpush1.bf16.msra.mxu0 0
  %716 = vmatprep.subr.bf16.mxu0 0
  %717 = vmatpush1.bf16.msra.mxu0 0
  %718 = vmatprep.subr.bf16.mxu0 0
  %719 = vmatpush1.bf16.msra.mxu0 0
  %720 = vmatprep.subr.bf16.mxu0 0
  %721 = vmatpush1.bf16.msra.mxu0 0
  %722 = vmatprep.subr.bf16.mxu0 0
  %723 = vmatpush1.bf16.msra.mxu0 0
  %724 = vmatprep.subr.bf16.mxu0 0
  %725 = vmatpush1.bf16.msra.mxu0 0
  %726 = vmatprep.subr.bf16.mxu0 0
  %727 = vmatpush1.bf16.msra.mxu0 0
  %728 = vmatprep.mubr.bf16.mxu0 0
  %729 = vmatmul.mubr.bf16.gmra.mrb[0].mxu0 %v390
  %v730 = vpop.f32.mrb[0].mxu0
  %v731 = vadd.f32 %v499, %v730
  %v732 = vpop.f32.mrb[0].mxu0
  %v733 = vpop.f32.mrb[0].mxu0
  %v734 = vadd.f32 %v502, %v733
  %v735 = vpop.f32.mrb[0].mxu0
  %736 = vmatprep.mubr.bf16.mxu0 0
  %737 = vmatmul.mubr.bf16.gmra.mrb[0].mxu0 %v393
  %v738 = vpop.f32.mrb[0].mxu0
  %v739 = vadd.f32 %v507, %v738
  %v740 = vpop.f32.mrb[0].mxu0
  %v741 = vpop.f32.mrb[0].mxu0
  %v742 = vadd.f32 %v510, %v741
  %v743 = vpop.f32.mrb[0].mxu0
  %744 = vmatprep.mubr.bf16.mxu0 0
  %745 = vmatmul.mubr.bf16.gmra.mrb[0].mxu0 %v396
  %v746 = vpop.f32.mrb[0].mxu0
  %v747 = vadd.f32 %v515, %v746
  %v748 = vpop.f32.mrb[0].mxu0
  %v749 = vpop.f32.mrb[0].mxu0
  %v750 = vadd.f32 %v518, %v749
  %v751 = vpop.f32.mrb[0].mxu0
  %752 = vmatprep.mubr.bf16.mxu0 0
  %753 = vmatmul.mubr.bf16.gmra.mrb[0].mxu0 %v399
  %v754 = vpop.f32.mrb[0].mxu0
  %v755 = vadd.f32 %v523, %v754
  %v756 = vpop.f32.mrb[0].mxu0
  %v757 = vpop.f32.mrb[0].mxu0
  %v758 = vadd.f32 %v526, %v757
  %v759 = vpop.f32.mrb[0].mxu0
  %760 = vmatprep.mubr.bf16.mxu0 0
  %761 = vmatmul.mubr.bf16.gmra.mrb[0].mxu0 %v402
  %v762 = vpop.f32.mrb[0].mxu0
  %v763 = vadd.f32 %v531, %v762
  %v764 = vpop.f32.mrb[0].mxu0
  %v765 = vpop.f32.mrb[0].mxu0
  %v766 = vadd.f32 %v534, %v765
  %v767 = vpop.f32.mrb[0].mxu0
  %768 = vmatprep.mubr.bf16.mxu0 0
  %769 = vmatmul.mubr.bf16.gmra.mrb[0].mxu0 %v405
  %v770 = vpop.f32.mrb[0].mxu0
  %v771 = vadd.f32 %v539, %v770
  %v772 = vpop.f32.mrb[0].mxu0
  %v773 = vpop.f32.mrb[0].mxu0
  %v774 = vadd.f32 %v542, %v773
  %v775 = vpop.f32.mrb[0].mxu0
  %776 = vmatprep.mubr.bf16.mxu0 0
  %777 = vmatmul.mubr.bf16.gmra.mrb[0].mxu0 %v408
  %v778 = vpop.f32.mrb[0].mxu0
  %v779 = vadd.f32 %v547, %v778
  %v780 = vpop.f32.mrb[0].mxu0
  %v781 = vpop.f32.mrb[0].mxu0
  %v782 = vadd.f32 %v550, %v781
  %v783 = vpop.f32.mrb[0].mxu0
  %784 = vmatprep.mubr.bf16.mxu0 0
  %785 = vmatmul.mubr.bf16.gmra.mrb[0].mxu0 %v411
  %v786 = vpop.f32.mrb[0].mxu0
  %v787 = vadd.f32 %v555, %v786
  %v788 = vpop.f32.mrb[0].mxu0
  %v789 = vpop.f32.mrb[0].mxu0
  %v790 = vadd.f32 %v558, %v789
  %v791 = vpop.f32.mrb[0].mxu0
  %792 = vmatprep.mubr.bf16.mxu0 0
  %793 = vmatmul.mubr.bf16.gmra.mrb[0].mxu0 %v414
  %v794 = vpop.f32.mrb[0].mxu0
  %v795 = vadd.f32 %v563, %v794
  %v796 = vpop.f32.mrb[0].mxu0
  %v797 = vpop.f32.mrb[0].mxu0
  %v798 = vadd.f32 %v566, %v797
  %v799 = vpop.f32.mrb[0].mxu0
  %800 = vmatprep.mubr.bf16.mxu0 0
  %801 = vmatmul.mubr.bf16.gmra.mrb[0].mxu0 %v417
  %v802 = vpop.f32.mrb[0].mxu0
  %v803 = vadd.f32 %v571, %v802
  %v804 = vpop.f32.mrb[0].mxu0
  %v805 = vpop.f32.mrb[0].mxu0
  %v806 = vadd.f32 %v574, %v805
  %v807 = vpop.f32.mrb[0].mxu0
  %808 = vmatprep.mubr.bf16.mxu0 0
  %809 = vmatmul.mubr.bf16.gmra.mrb[0].mxu0 %v420
  %v810 = vpop.f32.mrb[0].mxu0
  %v811 = vadd.f32 %v579, %v810
  %v812 = vpop.f32.mrb[0].mxu0
  %v813 = vpop.f32.mrb[0].mxu0
  %v814 = vadd.f32 %v582, %v813
  %v815 = vpop.f32.mrb[0].mxu0
  %816 = vmatprep.mubr.bf16.mxu0 0
  %817 = vmatmul.mubr.bf16.gmra.mrb[0].mxu0 %v423
  %v818 = vpop.f32.mrb[0].mxu0
  %v819 = vadd.f32 %v587, %v818
  %v820 = vpop.f32.mrb[0].mxu0
  %v821 = vpop.f32.mrb[0].mxu0
  %v822 = vadd.f32 %v590, %v821
  %v823 = vpop.f32.mrb[0].mxu0
  %824 = vmatprep.mubr.bf16.mxu0 0
  %825 = vmatmul.mubr.bf16.gmra.mrb[0].mxu0 %v426
  %v826 = vpop.f32.mrb[0].mxu0
  %v827 = vadd.f32 %v595, %v826
  %v828 = vpop.f32.mrb[0].mxu0
  %v829 = vpop.f32.mrb[0].mxu0
  %v830 = vadd.f32 %v598, %v829
  %v831 = vpop.f32.mrb[0].mxu0
  %832 = vmatprep.mubr.bf16.mxu0 0
  %833 = vmatmul.mubr.bf16.gmra.mrb[0].mxu0 %v429
  %v834 = vpop.f32.mrb[0].mxu0
  %v835 = vadd.f32 %v603, %v834
  %v836 = vpop.f32.mrb[0].mxu0
  %v837 = vpop.f32.mrb[0].mxu0
  %v838 = vadd.f32 %v606, %v837
  %v839 = vpop.f32.mrb[0].mxu0
  %840 = vmatprep.mubr.bf16.mxu0 0
  %841 = vmatmul.mubr.bf16.gmra.mrb[0].mxu0 %v432
  %v842 = vpop.f32.mrb[0].mxu0
  %v843 = vadd.f32 %v611, %v842
  %v844 = vpop.f32.mrb[0].mxu0
  %v845 = vpop.f32.mrb[0].mxu0
  %v846 = vadd.f32 %v614, %v845
  %v847 = vpop.f32.mrb[0].mxu0
  %848 = vmatprep.mubr.bf16.mxu0 0
  %849 = vmatmul.mubr.bf16.gmra.mrb[0].mxu0 %v435
  %v850 = vpop.f32.mrb[0].mxu0
  %v851 = vadd.f32 %v619, %v850
  %v852 = vpop.f32.mrb[0].mxu0
  %v853 = vpop.f32.mrb[0].mxu0
  %v854 = vadd.f32 %v622, %v853
  %v855 = vpop.f32.mrb[0].mxu0
  %856 = vmatprep.mubr.bf16.mxu0 0
  %857 = vmatmul.mubr.bf16.gmra.mrb[0].mxu0 %v438
  %v858 = vpop.f32.mrb[0].mxu0
  %v859 = vadd.f32 %v627, %v858
  %v860 = vpop.f32.mrb[0].mxu0
  %v861 = vpop.f32.mrb[0].mxu0
  %v862 = vadd.f32 %v630, %v861
  %v863 = vpop.f32.mrb[0].mxu0
  %864 = vmatprep.mubr.bf16.mxu0 0
  %865 = vmatmul.mubr.bf16.gmra.mrb[0].mxu0 %v441
  %v866 = vpop.f32.mrb[0].mxu0
  %v867 = vadd.f32 %v635, %v866
  %v868 = vpop.f32.mrb[0].mxu0
  %v869 = vpop.f32.mrb[0].mxu0
  %v870 = vadd.f32 %v638, %v869
  %v871 = vpop.f32.mrb[0].mxu0
  %872 = vmatprep.mubr.bf16.mxu0 0
  %873 = vmatmul.mubr.bf16.gmra.mrb[0].mxu0 %v444
  %v874 = vpop.f32.mrb[0].mxu0
  %v875 = vadd.f32 %v643, %v874
  %v876 = vpop.f32.mrb[0].mxu0
  %v877 = vpop.f32.mrb[0].mxu0
  %v878 = vadd.f32 %v646, %v877
  %v879 = vpop.f32.mrb[0].mxu0
  %880 = vmatprep.mubr.bf16.mxu0 0
  %881 = vmatmul.mubr.bf16.gmra.mrb[0].mxu0 %v447
  %v882 = vpop.f32.mrb[0].mxu0
  %v883 = vadd.f32 %v651, %v882
  %v884 = vpop.f32.mrb[0].mxu0
  %v885 = vpop.f32.mrb[0].mxu0
  %v886 = vadd.f32 %v654, %v885
  %v887 = vpop.f32.mrb[0].mxu0
  %888 = vmatprep.mubr.bf16.mxu0 0
  %889 = vmatmul.mubr.bf16.gmra.mrb[0].mxu0 %v450
  %v890 = vpop.f32.mrb[0].mxu0
  %v891 = vadd.f32 %v659, %v890
  %v892 = vpop.f32.mrb[0].mxu0
  %v893 = vpop.f32.mrb[0].mxu0
  %v894 = vadd.f32 %v662, %v893
  %v895 = vpop.f32.mrb[0].mxu0
  %896 = vmatprep.mubr.bf16.mxu0 0
  %897 = vmatmul.mubr.bf16.gmra.mrb[0].mxu0 %v453
  %v898 = vpop.f32.mrb[0].mxu0
  %v899 = vadd.f32 %v667, %v898
  %v900 = vpop.f32.mrb[0].mxu0
  %v901 = vpop.f32.mrb[0].mxu0
  %v902 = vadd.f32 %v670, %v901
  %v903 = vpop.f32.mrb[0].mxu0
  %904 = vmatprep.mubr.bf16.mxu0 0
  %905 = vmatmul.mubr.bf16.gmra.mrb[0].mxu0 %v456
  %v906 = vpop.f32.mrb[0].mxu0
  %v907 = vadd.f32 %v675, %v906
  %v908 = vpop.f32.mrb[0].mxu0
  %v909 = vpop.f32.mrb[0].mxu0
  %v910 = vadd.f32 %v678, %v909
  %v911 = vpop.f32.mrb[0].mxu0
  %912 = vmatprep.mubr.bf16.mxu0 0
  %913 = vmatmul.mubr.bf16.gmra.mrb[0].mxu0 %v459
  %v914 = vpop.f32.mrb[0].mxu0
  %v915 = vadd.f32 %v683, %v914
  %v916 = vpop.f32.mrb[0].mxu0
  %v917 = vpop.f32.mrb[0].mxu0
  %v918 = vadd.f32 %v686, %v917
  %v919 = vpop.f32.mrb[0].mxu0
  %920 = vmatprep.mubr.bf16.mxu0 0
  %921 = vmatmul.mubr.bf16.gmra.mrb[0].mxu0 %v462
  %v922 = vpop.f32.mrb[0].mxu0
  %v923 = vadd.f32 %v691, %v922
  %v924 = vpop.f32.mrb[0].mxu0
  %v925 = vpop.f32.mrb[0].mxu0
  %v926 = vpop.f32.mrb[0].mxu0
  %927 = vdwg.mxu0
  %v928 = vmax.f32 %v731, 0.0
  %v929 = vmax.f32 %v734, 0.0
  %v930 = vmax.f32 %v739, 0.0
  %v931 = vmax.f32 %v742, 0.0
  %v932 = vmax.f32 %v747, 0.0
  %v933 = vmax.f32 %v750, 0.0
  %v934 = vmax.f32 %v755, 0.0
  %v935 = vmax.f32 %v758, 0.0
  %v936 = vmax.f32 %v763, 0.0
  %v937 = vmax.f32 %v766, 0.0
  %v938 = vmax.f32 %v771, 0.0
  %v939 = vmax.f32 %v774, 0.0
  %v940 = vmax.f32 %v779, 0.0
  %v941 = vmax.f32 %v782, 0.0
  %v942 = vmax.f32 %v787, 0.0
  %v943 = vmax.f32 %v790, 0.0
  %v944 = vmax.f32 %v795, 0.0
  %v945 = vmax.f32 %v798, 0.0
  %v946 = vmax.f32 %v803, 0.0
  %v947 = vmax.f32 %v806, 0.0
  %v948 = vmax.f32 %v811, 0.0
  %v949 = vmax.f32 %v814, 0.0
  %v950 = vmax.f32 %v819, 0.0
  %v951 = vmax.f32 %v822, 0.0
  %v952 = vmax.f32 %v827, 0.0
  %v953 = vmax.f32 %v830, 0.0
  %v954 = vmax.f32 %v835, 0.0
  %v955 = vmax.f32 %v838, 0.0
  %v956 = vmax.f32 %v843, 0.0
  %v957 = vmax.f32 %v846, 0.0
  %v958 = vmax.f32 %v851, 0.0
  %v959 = vmax.f32 %v854, 0.0
  %v960 = vmax.f32 %v859, 0.0
  %v961 = vmax.f32 %v862, 0.0
  %v962 = vmax.f32 %v867, 0.0
  %v963 = vmax.f32 %v870, 0.0
  %v964 = vmax.f32 %v875, 0.0
  %v965 = vmax.f32 %v878, 0.0
  %v966 = vmax.f32 %v883, 0.0
  %v967 = vmax.f32 %v886, 0.0
  %v968 = vmax.f32 %v891, 0.0
  %v969 = vmax.f32 %v894, 0.0
  %v970 = vmax.f32 %v899, 0.0
  %v971 = vmax.f32 %v902, 0.0
  %v972 = vmax.f32 %v907, 0.0
  %v973 = vmax.f32 %v910, 0.0
  %v974 = vmax.f32 %v915, 0.0
  %v975 = vmax.f32 %v918, 0.0
  %v976 = vmax.f32 %v923, 0.0
  %vm977 = vcmask 31744
  %978 = vst.msk [vmem:[%s3] sm:$0xff] %vm977, %v928
  %979 = vst.msk [vmem:[%s3 + $0x8] sm:$0xff] %vm977, %v929
  %980 = vst.msk [vmem:[%s3 + $0x10] sm:$0xff] %vm977, %v930
  %981 = vst.msk [vmem:[%s3 + $0x18] sm:$0xff] %vm977, %v931
  %982 = vst.msk [vmem:[%s3 + $0x20] sm:$0xff] %vm977, %v932
  %983 = vst.msk [vmem:[%s3 + $0x28] sm:$0xff] %vm977, %v933
  %984 = vst.msk [vmem:[%s3 + $0x30] sm:$0xff] %vm977, %v934
  %985 = vst.msk [vmem:[%s3 + $0x38] sm:$0xff] %vm977, %v935
  %986 = vst.msk [vmem:[%s3 + $0x40] sm:$0xff] %vm977, %v936
  %987 = vst.msk [vmem:[%s3 + $0x48] sm:$0xff] %vm977, %v937
  %988 = vst.msk [vmem:[%s3 + $0x50] sm:$0xff] %vm977, %v938
  %989 = vst.msk [vmem:[%s3 + $0x58] sm:$0xff] %vm977, %v939
  %990 = vst.msk [vmem:[%s3 + $0x60] sm:$0xff] %vm977, %v940
  %991 = vst.msk [vmem:[%s3 + $0x68] sm:$0xff] %vm977, %v941
  %992 = vst.msk [vmem:[%s3 + $0x70] sm:$0xff] %vm977, %v942
  %993 = vst.msk [vmem:[%s3 + $0x78] sm:$0xff] %vm977, %v943
  %994 = vst.msk [vmem:[%s3 + $0x80] sm:$0xff] %vm977, %v944
  %995 = vst.msk [vmem:[%s3 + $0x88] sm:$0xff] %vm977, %v945
  %996 = vst.msk [vmem:[%s3 + $0x90] sm:$0xff] %vm977, %v946
  %997 = vst.msk [vmem:[%s3 + $0x98] sm:$0xff] %vm977, %v947
  %998 = vst.msk [vmem:[%s3 + $0xa0] sm:$0xff] %vm977, %v948
  %999 = vst.msk [vmem:[%s3 + $0xa8] sm:$0xff] %vm977, %v949
  %1000 = vst.msk [vmem:[%s3 + $0xb0] sm:$0xff] %vm977, %v950
  %1001 = vst.msk [vmem:[%s3 + $0xb8] sm:$0xff] %vm977, %v951
  %1002 = vst.msk [vmem:[%s3 + $0xc0] sm:$0xff] %vm977, %v952
  %1003 = vst.msk [vmem:[%s3 + $0xc8] sm:$0xff] %vm977, %v953
  %1004 = vst.msk [vmem:[%s3 + $0xd0] sm:$0xff] %vm977, %v954
  %1005 = vst.msk [vmem:[%s3 + $0xd8] sm:$0xff] %vm977, %v955
  %1006 = vst.msk [vmem:[%s3 + $0xe0] sm:$0xff] %vm977, %v956
  %1007 = vst.msk [vmem:[%s3 + $0xe8] sm:$0xff] %vm977, %v957
  %1008 = vst.msk [vmem:[%s3 + $0xf0] sm:$0xff] %vm977, %v958
  %1009 = vst.msk [vmem:[%s3 + $0xf8] sm:$0xff] %vm977, %v959
  %1010 = vst.msk [vmem:[%s3 + $0x100] sm:$0xff] %vm977, %v960
  %1011 = vst.msk [vmem:[%s3 + $0x108] sm:$0xff] %vm977, %v961
  %1012 = vst.msk [vmem:[%s3 + $0x110] sm:$0xff] %vm977, %v962
  %1013 = vst.msk [vmem:[%s3 + $0x118] sm:$0xff] %vm977, %v963
  %1014 = vst.msk [vmem:[%s3 + $0x120] sm:$0xff] %vm977, %v964
  %1015 = vst.msk [vmem:[%s3 + $0x128] sm:$0xff] %vm977, %v965
  %1016 = vst.msk [vmem:[%s3 + $0x130] sm:$0xff] %vm977, %v966
  %1017 = vst.msk [vmem:[%s3 + $0x138] sm:$0xff] %vm977, %v967
  %1018 = vst.msk [vmem:[%s3 + $0x140] sm:$0xff] %vm977, %v968
  %1019 = vst.msk [vmem:[%s3 + $0x148] sm:$0xff] %vm977, %v969
  %1020 = vst.msk [vmem:[%s3 + $0x150] sm:$0xff] %vm977, %v970
  %1021 = vst.msk [vmem:[%s3 + $0x158] sm:$0xff] %vm977, %v971
  %1022 = vst.msk [vmem:[%s3 + $0x160] sm:$0xff] %vm977, %v972
  %1023 = vst.msk [vmem:[%s3 + $0x168] sm:$0xff] %vm977, %v973
  %1024 = vst.msk [vmem:[%s3 + $0x170] sm:$0xff] %vm977, %v974
  %1025 = vst.msk [vmem:[%s3 + $0x178] sm:$0xff] %vm977, %v975
  %1026 = vst.msk [vmem:[%s3 + $0x180] sm:$0xff] %vm977, %v976
  // Predicated region
  $region14: #{conv_cvae_forward.9} parent=0 // pred_check
    _
  $region15: #{conv_cvae_forward.9} parent=0 // pred_check_branch
    %1028 = sbr.rel (0) target = $region17
  $region16: #{conv_cvae_forward.9} parent=0 // pred_region
    _
  $region17: #{conv_cvae_forward.9} parent=0 // pred_fallthru
    _
  // Predicated region
  $region18: #{conv_cvae_forward.9} parent=0 // pred_check
    _
  $region19: #{conv_cvae_forward.9} parent=0 // pred_check_branch
    %1030 = sbr.rel (0) target = $region21
  $region20: #{conv_cvae_forward.9} parent=0 // pred_region
    _
  $region21: #{conv_cvae_forward.9} parent=0 // pred_fallthru
    _

</llo_original>
